<compile_context>
chip_gen: v7x
topology: tpu7x:2x2x1
jax: 0.10.0
libtpu: 0.0.40
codegen_flags: <defaults>
</compile_context>

<pallas_src>
import functools

import jax
import jax.numpy as jnp
from jax import lax
from jax.experimental import pallas as pl
from jax.experimental.pallas import tpu as pltpu

LN_EPS = 1e-5  # torch.nn.LayerNorm default


def _layernorm(z, g, b, true_h):
    """LayerNorm over the last axis, correct even when the last axis is
    zero-padded beyond `true_h` (padded lanes must be exactly zero)."""
    inv_h = 1.0 / float(true_h)
    mu = jnp.sum(z, axis=-1, keepdims=True) * inv_h
    d = z - mu
    if z.shape[-1] != true_h:  # exclude padded lanes from the variance
        mask = lax.broadcasted_iota(jnp.int32, (1, z.shape[-1]), 1) < true_h
        d = jnp.where(mask, d, 0.0)
    var = jnp.sum(d * d, axis=-1, keepdims=True) * inv_h
    return d * lax.rsqrt(var + LN_EPS) * g + b


def audio_transformer_kernel(x_ref, wp_ref, bp_ref,
                             wv_ref, bv_ref, wo_ref, bo_ref,
                             ln1g_ref, ln1b_ref,
                             w1_ref, b1_ref, w2_ref, b2_ref,
                             ln2g_ref, ln2b_ref,
                             wfc_ref, bfc_ref,
                             o_ref,
                             *, true_h, n_tokens):
    bf = jnp.bfloat16
    # in-kernel fp32 -> bf16 cast (saves a separate wrapper-side XLA pass)
    x = x_ref[...].astype(bf)
    # input projection: (tn, Din)bf16 @ (Din, H)bf16 -> f32 accumulate
    h = jnp.dot(x, wp_ref[...], preferred_element_type=jnp.float32) + bp_ref[...]

    num_layers = wv_ref.shape[0]
    # Static unroll is fine at L=2; switch to lax.fori_loop with dynamic layer
    # indexing if L grows large (vreg-pressure guard).
    for l in range(num_layers):
        # --- self attention, seq_len == 1: softmax(single key) == 1 exactly,
        #     so attn(x) = out_proj(V) = (x Wv + bv) Wo + bo. Q/K drop out.
        v = jnp.dot(h.astype(bf), wv_ref[l],
                    preferred_element_type=jnp.float32) + bv_ref[l]
        attn = jnp.dot(v.astype(bf), wo_ref[l],
                       preferred_element_type=jnp.float32) + bo_ref[l]
        h = _layernorm(h + attn, ln1g_ref[l], ln1b_ref[l], true_h)

        # --- feed forward: relu(h W1 + b1) W2 + b2 (dropout = identity, eval)
        f = jnp.dot(h.astype(bf), w1_ref[l],
                    preferred_element_type=jnp.float32) + b1_ref[l]
        f = jnp.maximum(f, 0.0)
        f = jnp.dot(f.astype(bf), w2_ref[l],
                    preferred_element_type=jnp.float32) + b2_ref[l]
        h = _layernorm(h + f, ln2g_ref[l], ln2b_ref[l], true_h)

    # final fc as VPU multiply + lane-reduce (avoids a (H,1) MXU matmul and a
    # 1-lane-wide masked store); result stored lane-dense as (1, 1, tn).
    fc = jnp.sum(h * wfc_ref[...], axis=-1, keepdims=True) + bfc_ref[...]  # (tn,1)
    tn = fc.shape[0]
    if n_tokens % tn != 0:
        # zero the (discarded) rows past N in the boundary tile -> deterministic
        rows = pl.program_id(0) * tn + lax.broadcasted_iota(jnp.int32, (tn, 1), 0)
        fc = jnp.where(rows < n_tokens, fc, 0.0)
    o_ref[...] = fc.reshape(1, 1, tn)


_PARAM_ORDER = ("wp", "bp", "wv", "bv", "wo", "bo", "ln1g", "ln1b",
                "w1", "b1", "w2", "b2", "ln2g", "ln2b", "wfc", "bfc")
_MATMUL_KEYS = frozenset({"wp", "wv", "wo", "w1", "w2"})  # cast these to bf16


def _round_up(v, m):
    return ((v + m - 1) // m) * m


def _device_kind():
    try:
        return jax.devices()[0].device_kind.lower()
    except Exception:
        return ""


def _pad_axis(a, axis, new_size):
    pad = new_size - a.shape[axis]
    if pad <= 0:
        return a
    widths = [(0, 0)] * a.ndim
    widths[axis] = (0, pad)
    return jnp.pad(a, widths)  # zero pad (incl. LN gamma: padded lanes get 0)


def _pad_params(p, hp, ffp):
    """Zero-pad the H / FF axes of every parameter to lane-aligned sizes."""
    q = dict(p)
    q["wp"] = _pad_axis(p["wp"], 1, hp)
    q["bp"] = _pad_axis(p["bp"], 1, hp)
    q["wv"] = _pad_axis(_pad_axis(p["wv"], 1, hp), 2, hp)
    q["wo"] = _pad_axis(_pad_axis(p["wo"], 1, hp), 2, hp)
    q["w1"] = _pad_axis(_pad_axis(p["w1"], 1, hp), 2, ffp)
    q["w2"] = _pad_axis(_pad_axis(p["w2"], 1, ffp), 2, hp)
    for k in ("bv", "bo", "b2", "ln1g", "ln1b", "ln2g", "ln2b"):
        q[k] = _pad_axis(p[k], 2, hp)
    q["b1"] = _pad_axis(p["b1"], 2, ffp)
    q["wfc"] = _pad_axis(p["wfc"], 1, hp)
    return q


def _pick_token_tile(N, Din, H, FF, L, vmem_limit, *, tn_align, two_cores,
                     single_buffer_weights):
    """Largest aligned token tile that fits the VMEM budget (cap 1024 rows)."""
    # resident weights: bf16 matrices + fp32 vectors; 1x residency when
    # single-buffered (constant index_map), 2x under default double-buffering.
    mat_elems = Din * H + L * (2 * H * H + 2 * H * FF)
    vec_elems = L * (7 * H + FF) + 2 * H + 1
    wbuf = 1 if single_buffer_weights else 2
    weight_bytes = wbuf * (2 * mat_elems + 4 * vec_elems)
    # per-token-row bytes: fp32 x tile (double-buffered) + fp32/bf16 temps
    # + fp32 output lane (double-buffered)
    per_row = 2 * 4 * Din + 4 * (4 * H + 2 * FF) + 2 * (H + FF) + 2 * 4 + 64
    avail = max(vmem_limit - weight_bytes - (2 << 20), 8 * per_row)
    tn = min(avail // per_row, 1024)
    # tn is both the MXU M dim and the lane width of the (1,1,tn) output row:
    # keep it a multiple of 256 (v6e/v7x) / 128 (v5x) for an unmasked store.
    if tn >= tn_align:
        tn = (tn // tn_align) * tn_align
    elif tn >= 128:
        tn = (tn // 128) * 128
    else:
        tn = max(8, (tn // 8) * 8)
    if avail >= 128 * per_row:          # floor of 128 rows when budget allows
        tn = max(tn, 128)
    tn = max(8, min(tn, _round_up(N, 8)))
    # split across the two v7x TensorCores only when each half keeps >=256 rows;
    # on single-TC chips (v5e/v6e) the grid is serial and splitting is overhead.
    if two_cores and N >= 512:
        tn = min(tn, _round_up(pl.cdiv(N, 2), tn_align))
    return int(tn)


def audio_transformer_forward(x, params):
    B, F, Din = x.shape
    N = B * F
    H = params["wp"].shape[1]
    FF = params["w1"].shape[2]
    L = params["wv"].shape[0]

    kind = _device_kind()
    is_v7 = "v7" in kind
    is_v5 = "v5" in kind

    # MXU/VPU lane-width padding of H and FF when the model dims are small /
    # unaligned (exact: padded lanes are zero everywhere, LN divides by true H).
    hp = _round_up(H, 128)
    ffp = _round_up(FF, 128)
    p = _pad_params(params, hp, ffp) if (hp != H or ffp != FF) else params

    weights = [p[k].astype(jnp.bfloat16 if k in _MATMUL_KEYS else jnp.float32)
               for k in _PARAM_ORDER]

    # Device-kind-aware VMEM budget: per-TensorCore capacity where available,
    # explicit <= 48 MiB cap on v7x (64 MiB / TC), 128 MiB-class fallback else.
    try:
        vmem_cap = int(pltpu.get_tpu_info().vmem_capacity_bytes)
    except Exception:
        vmem_cap = (64 if is_v7 else 128) * 1024 * 1024
    vmem_limit = vmem_cap * 3 // 4
    if is_v7:
        vmem_limit = min(vmem_limit, 48 * 1024 * 1024)
    vmem_limit = max(16 * 1024 * 1024, min(vmem_limit, 100 * 1024 * 1024))

    xt = x.reshape(N, Din)  # stays fp32; per-tile bf16 cast happens in-kernel

    def build(single_buffer_weights):
        tn = _pick_token_tile(
            N, Din, hp, ffp, L, vmem_limit,
            tn_align=(128 if is_v5 else 256),
            two_cores=is_v7,
            single_buffer_weights=single_buffer_weights)
        grid = pl.cdiv(N, tn)  # no wrapper pad; boundary tile handled in-kernel

        def weight_spec(arr):
            nd = arr.ndim
            idx = lambda i, _nd=nd: (0,) * _nd
            if single_buffer_weights:
                # constant index_map: double-buffering buys nothing but 2x VMEM
                return pl.BlockSpec(arr.shape, idx, pipeline_mode=pl.Buffered(1))
            return pl.BlockSpec(arr.shape, idx)

        flops = 2 * N * (Din * hp + L * (2 * hp * hp + 2 * hp * ffp))
        bytes_accessed = (xt.size * xt.dtype.itemsize
                          + sum(int(w.size) * w.dtype.itemsize for w in weights)
                          + grid * tn * 4)
        cost = pl.CostEstimate(flops=int(flops),
                               transcendentals=int(2 * L * N),
                               bytes_accessed=int(bytes_accessed))

        kernel = functools.partial(audio_transformer_kernel,
                                   true_h=H, n_tokens=N)
        return pl.pallas_call(
            kernel,
            out_shape=jax.ShapeDtypeStruct((grid, 1, tn), jnp.float32),
            grid_spec=pltpu.PrefetchScalarGridSpec(
                num_scalar_prefetch=0,
                grid=(grid,),
                in_specs=[pl.BlockSpec((tn, Din), lambda i: (i, 0))]
                         + [weight_spec(w) for w in weights],
                out_specs=pl.BlockSpec((1, 1, tn), lambda i: (i, 0, 0)),
            ),
            compiler_params=pltpu.CompilerParams(
                dimension_semantics=("parallel",),
                vmem_limit_bytes=int(vmem_limit),
            ),
            cost_estimate=cost,
        )

    # Preferred path: single-buffered resident weights. If this JAX / Mosaic
    # build rejects pipeline_mode=Buffered(1), fall back to the default
    # (double-buffered) pipeline.  (Eager call -> lowering errors surface here.)
    try:
        out = build(True)(xt, *weights)
    except Exception:
        out = build(False)(xt, *weights)

    # lane-dense (grid, 1, tn) -> flat tokens -> (B, F, 1); boundary rows sliced
    return out.reshape(-1)[:N].reshape(B, F, 1)


def init_params(key, input_dim, hidden_dim, ff_dim, num_layers):
    """Deterministic synthetic parameters (shapes follow the nn.Module)."""
    keys = iter(jax.random.split(key, 16))

    def w(shape, scale=0.05):
        return (scale * jax.random.normal(next(keys), shape)).astype(jnp.float32)

    H, FF, L = hidden_dim, ff_dim, num_layers
    return {
        # nn.Linear(input_dim, hidden_dim): stored transposed (in, out)
        "wp": w((input_dim, H)), "bp": w((1, H)),
        # per-layer MHA V-projection (slice of in_proj) and out_proj, stacked
        "wv": w((L, H, H)), "bv": w((L, 1, H)),
        "wo": w((L, H, H)), "bo": w((L, 1, H)),
        # LayerNorms (torch init: gamma=1, beta=0)
        "ln1g": jnp.ones((L, 1, H), jnp.float32),
        "ln1b": jnp.zeros((L, 1, H), jnp.float32),
        "ln2g": jnp.ones((L, 1, H), jnp.float32),
        "ln2b": jnp.zeros((L, 1, H), jnp.float32),
        # feed-forward
        "w1": w((L, H, FF)), "b1": w((L, 1, FF)),
        "w2": w((L, FF, H)), "b2": w((L, 1, H)),
        # fc: nn.Linear(hidden_dim, 1), stored as a row vector for the VPU reduce
        "wfc": w((1, H)), "bfc": w((1, 1)),
    }


def reference_forward(x, p):
    """Pure-JAX reference mirroring the kernel math (bf16 matmuls, f32 accum)."""
    bf = jnp.bfloat16
    B, F, Din = x.shape
    H = p["wp"].shape[1]

    def mm(a, w):
        return jnp.dot(a.astype(bf), w.astype(bf),
                       preferred_element_type=jnp.float32)

    h = mm(x.reshape(B * F, Din), p["wp"]) + p["bp"]
    L = p["wv"].shape[0]
    for l in range(L):
        v = mm(h, p["wv"][l]) + p["bv"][l]
        attn = mm(v, p["wo"][l]) + p["bo"][l]   # softmax over 1 key == 1 exactly
        h = _layernorm(h + attn, p["ln1g"][l], p["ln1b"][l], H)
        f = jnp.maximum(mm(h, p["w1"][l]) + p["b1"][l], 0.0)
        f = mm(f, p["w2"][l]) + p["b2"][l]
        h = _layernorm(h + f, p["ln2g"][l], p["ln2b"][l], H)
    out = jnp.sum(h * p["wfc"], axis=-1, keepdims=True) + p["bfc"]
    return out.reshape(B, F, 1)


if __name__ == "__main__":
    # Module defaults: input_dim=41, hidden_dim=128, nhead=4, num_layers=2,
    # TransformerEncoderLayer dim_feedforward default 2048; small batch input.
    B, F, Din, H, FF, L = 2, 8, 41, 128, 2048, 2

    key = jax.random.PRNGKey(0)
    kx, kp = jax.random.split(key)
    x = jax.random.normal(kx, (B, F, Din), dtype=jnp.float32)
    params = init_params(kp, Din, H, FF, L)

    out = audio_transformer_forward(x, params)
    jax.block_until_ready(out)

    assert out.shape == (B, F, 1), out.shape
    ref = reference_forward(x, params)
    if not jnp.allclose(out, ref, atol=2e-3, rtol=2e-3):
        raise SystemExit("KERNEL_MISMATCH")
    print("KERNEL_OK")
</pallas_src>

<mosaic_0001>
module attributes {stable_mosaic.version = 11 : i64} {
  func.func @audio_transformer_kernel(%arg0: i32, %arg1: memref<16x41xf32, #tpu.memory_space<vmem>>, %arg2: memref<41x128xbf16, #tpu.memory_space<vmem>>, %arg3: memref<1x128xf32, #tpu.memory_space<vmem>>, %arg4: memref<2x128x128xbf16, #tpu.memory_space<vmem>>, %arg5: memref<2x1x128xf32, #tpu.memory_space<vmem>>, %arg6: memref<2x128x128xbf16, #tpu.memory_space<vmem>>, %arg7: memref<2x1x128xf32, #tpu.memory_space<vmem>>, %arg8: memref<2x1x128xf32, #tpu.memory_space<vmem>>, %arg9: memref<2x1x128xf32, #tpu.memory_space<vmem>>, %arg10: memref<2x128x2048xbf16, #tpu.memory_space<vmem>>, %arg11: memref<2x1x2048xf32, #tpu.memory_space<vmem>>, %arg12: memref<2x2048x128xbf16, #tpu.memory_space<vmem>>, %arg13: memref<2x1x128xf32, #tpu.memory_space<vmem>>, %arg14: memref<2x1x128xf32, #tpu.memory_space<vmem>>, %arg15: memref<2x1x128xf32, #tpu.memory_space<vmem>>, %arg16: memref<1x128xf32, #tpu.memory_space<vmem>>, %arg17: memref<1x1xf32, #tpu.memory_space<vmem>>, %arg18: memref<1x1x16xf32, #tpu.memory_space<vmem>>) attributes {dimension_semantics = [#tpu.dimension_semantics<parallel>], iteration_bounds = array<i64: 1>, scalar_prefetch = 0 : i64, scratch_operands = 0 : i64, tpu.core_type = #tpu.core_type<tc>, window_params = [{transform_indices = @transform_0, window_bounds = array<i64: 16, 41>}, {pipeline_mode = #tpu.pipeline_mode<synchronous>, transform_indices = @transform_1, window_bounds = array<i64: 41, 128>}, {pipeline_mode = #tpu.pipeline_mode<synchronous>, transform_indices = @transform_2, window_bounds = array<i64: 1, 128>}, {pipeline_mode = #tpu.pipeline_mode<synchronous>, transform_indices = @transform_3, window_bounds = array<i64: 2, 128, 128>}, {pipeline_mode = #tpu.pipeline_mode<synchronous>, transform_indices = @transform_4, window_bounds = array<i64: 2, 1, 128>}, {pipeline_mode = #tpu.pipeline_mode<synchronous>, transform_indices = @transform_5, window_bounds = array<i64: 2, 128, 128>}, {pipeline_mode = #tpu.pipeline_mode<synchronous>, transform_indices = @transform_6, window_bounds = array<i64: 2, 1, 128>}, {pipeline_mode = #tpu.pipeline_mode<synchronous>, transform_indices = @transform_7, window_bounds = array<i64: 2, 1, 128>}, {pipeline_mode = #tpu.pipeline_mode<synchronous>, transform_indices = @transform_8, window_bounds = array<i64: 2, 1, 128>}, {pipeline_mode = #tpu.pipeline_mode<synchronous>, transform_indices = @transform_9, window_bounds = array<i64: 2, 128, 2048>}, {pipeline_mode = #tpu.pipeline_mode<synchronous>, transform_indices = @transform_10, window_bounds = array<i64: 2, 1, 2048>}, {pipeline_mode = #tpu.pipeline_mode<synchronous>, transform_indices = @transform_11, window_bounds = array<i64: 2, 2048, 128>}, {pipeline_mode = #tpu.pipeline_mode<synchronous>, transform_indices = @transform_12, window_bounds = array<i64: 2, 1, 128>}, {pipeline_mode = #tpu.pipeline_mode<synchronous>, transform_indices = @transform_13, window_bounds = array<i64: 2, 1, 128>}, {pipeline_mode = #tpu.pipeline_mode<synchronous>, transform_indices = @transform_14, window_bounds = array<i64: 2, 1, 128>}, {pipeline_mode = #tpu.pipeline_mode<synchronous>, transform_indices = @transform_15, window_bounds = array<i64: 1, 128>}, {pipeline_mode = #tpu.pipeline_mode<synchronous>, transform_indices = @transform_16, window_bounds = array<i64: 1, 1>}, {transform_indices = @transform_17, window_bounds = array<i64: 1, 1, 16>}]} {
    %c0 = arith.constant 0 : index
    %c0_0 = arith.constant 0 : index
    %0 = vector.load %arg1[%c0, %c0_0] : memref<16x41xf32, #tpu.memory_space<vmem>>, vector<16x41xf32>
    %1 = arith.truncf %0 : vector<16x41xf32> to vector<16x41xbf16>
    %c0_1 = arith.constant 0 : index
    %c0_2 = arith.constant 0 : index
    %2 = vector.load %arg2[%c0_1, %c0_2] : memref<41x128xbf16, #tpu.memory_space<vmem>>, vector<41x128xbf16>
    %cst = arith.constant dense<0.000000e+00> : vector<16x128xf32>
    %3 = tpu.matmul %1, %2, %cst {dimension_numbers = #tpu.dot_dimension_numbers<[1], [0], [0], [1], [0, 0, 1, 1], [], []>} : vector<16x41xbf16>, vector<41x128xbf16>, vector<16x128xf32> -> vector<16x128xf32>
    %c0_3 = arith.constant 0 : index
    %c0_4 = arith.constant 0 : index
    %4 = vector.load %arg3[%c0_3, %c0_4] : memref<1x128xf32, #tpu.memory_space<vmem>>, vector<1x128xf32>
    %5 = vector.broadcast %4 : vector<1x128xf32> to vector<16x128xf32>
    %6 = arith.addf %3, %5 : vector<16x128xf32>
    %7 = arith.truncf %6 : vector<16x128xf32> to vector<16x128xbf16>
    %c0_5 = arith.constant 0 : index
    %c0_6 = arith.constant 0 : index
    %c0_7 = arith.constant 0 : index
    %8 = vector.load %arg4[%c0_5, %c0_6, %c0_7] : memref<2x128x128xbf16, #tpu.memory_space<vmem>>, vector<1x128x128xbf16>
    %9 = vector.shape_cast %8 : vector<1x128x128xbf16> to vector<128x128xbf16>
    %cst_8 = arith.constant dense<0.000000e+00> : vector<16x128xf32>
    %10 = tpu.matmul %7, %9, %cst_8 {dimension_numbers = #tpu.dot_dimension_numbers<[1], [0], [0], [1], [0, 0, 1, 1], [], []>} : vector<16x128xbf16>, vector<128x128xbf16>, vector<16x128xf32> -> vector<16x128xf32>
    %c0_9 = arith.constant 0 : index
    %c0_10 = arith.constant 0 : index
    %c0_11 = arith.constant 0 : index
    %11 = vector.load %arg5[%c0_9, %c0_10, %c0_11] : memref<2x1x128xf32, #tpu.memory_space<vmem>>, vector<1x1x128xf32>
    %12 = vector.shape_cast %11 : vector<1x1x128xf32> to vector<1x128xf32>
    %13 = vector.broadcast %12 : vector<1x128xf32> to vector<16x128xf32>
    %14 = arith.addf %10, %13 : vector<16x128xf32>
    %15 = arith.truncf %14 : vector<16x128xf32> to vector<16x128xbf16>
    %c0_12 = arith.constant 0 : index
    %c0_13 = arith.constant 0 : index
    %c0_14 = arith.constant 0 : index
    %16 = vector.load %arg6[%c0_12, %c0_13, %c0_14] : memref<2x128x128xbf16, #tpu.memory_space<vmem>>, vector<1x128x128xbf16>
    %17 = vector.shape_cast %16 : vector<1x128x128xbf16> to vector<128x128xbf16>
    %cst_15 = arith.constant dense<0.000000e+00> : vector<16x128xf32>
    %18 = tpu.matmul %15, %17, %cst_15 {dimension_numbers = #tpu.dot_dimension_numbers<[1], [0], [0], [1], [0, 0, 1, 1], [], []>} : vector<16x128xbf16>, vector<128x128xbf16>, vector<16x128xf32> -> vector<16x128xf32>
    %c0_16 = arith.constant 0 : index
    %c0_17 = arith.constant 0 : index
    %c0_18 = arith.constant 0 : index
    %19 = vector.load %arg7[%c0_16, %c0_17, %c0_18] : memref<2x1x128xf32, #tpu.memory_space<vmem>>, vector<1x1x128xf32>
    %20 = vector.shape_cast %19 : vector<1x1x128xf32> to vector<1x128xf32>
    %21 = vector.broadcast %20 : vector<1x128xf32> to vector<16x128xf32>
    %22 = arith.addf %18, %21 : vector<16x128xf32>
    %23 = arith.addf %6, %22 : vector<16x128xf32>
    %c0_19 = arith.constant 0 : index
    %c0_20 = arith.constant 0 : index
    %c0_21 = arith.constant 0 : index
    %24 = vector.load %arg8[%c0_19, %c0_20, %c0_21] : memref<2x1x128xf32, #tpu.memory_space<vmem>>, vector<1x1x128xf32>
    %25 = vector.shape_cast %24 : vector<1x1x128xf32> to vector<1x128xf32>
    %c0_22 = arith.constant 0 : index
    %c0_23 = arith.constant 0 : index
    %c0_24 = arith.constant 0 : index
    %26 = vector.load %arg9[%c0_22, %c0_23, %c0_24] : memref<2x1x128xf32, #tpu.memory_space<vmem>>, vector<1x1x128xf32>
    %27 = vector.shape_cast %26 : vector<1x1x128xf32> to vector<1x128xf32>
    %cst_25 = arith.constant dense<0.000000e+00> : vector<16xf32>
    %28 = vector.multi_reduction <add>, %23, %cst_25 [1] : vector<16x128xf32> to vector<16xf32>
    %29 = vector.shape_cast %28 : vector<16xf32> to vector<16x1xf32>
    %cst_26 = arith.constant 7.812500e-03 : f32
    %30 = vector.broadcast %cst_26 : f32 to vector<16x1xf32>
    %31 = arith.mulf %29, %30 : vector<16x1xf32>
    %32 = vector.broadcast %31 : vector<16x1xf32> to vector<16x128xf32>
    %33 = arith.subf %23, %32 : vector<16x128xf32>
    %34 = arith.mulf %33, %33 : vector<16x128xf32>
    %cst_27 = arith.constant dense<0.000000e+00> : vector<16xf32>
    %35 = vector.multi_reduction <add>, %34, %cst_27 [1] : vector<16x128xf32> to vector<16xf32>
    %36 = vector.shape_cast %35 : vector<16xf32> to vector<16x1xf32>
    %cst_28 = arith.constant 7.812500e-03 : f32
    %37 = vector.broadcast %cst_28 : f32 to vector<16x1xf32>
    %38 = arith.mulf %36, %37 : vector<16x1xf32>
    %cst_29 = arith.constant 9.99999974E-6 : f32
    %39 = vector.broadcast %cst_29 : f32 to vector<16x1xf32>
    %40 = arith.addf %38, %39 : vector<16x1xf32>
    %41 = math.rsqrt %40 : vector<16x1xf32>
    %42 = vector.broadcast %41 : vector<16x1xf32> to vector<16x128xf32>
    %43 = arith.mulf %33, %42 : vector<16x128xf32>
    %44 = vector.broadcast %25 : vector<1x128xf32> to vector<16x128xf32>
    %45 = arith.mulf %43, %44 : vector<16x128xf32>
    %46 = vector.broadcast %27 : vector<1x128xf32> to vector<16x128xf32>
    %47 = arith.addf %45, %46 : vector<16x128xf32>
    %48 = arith.truncf %47 : vector<16x128xf32> to vector<16x128xbf16>
    %c0_30 = arith.constant 0 : index
    %c0_31 = arith.constant 0 : index
    %c0_32 = arith.constant 0 : index
    %49 = vector.load %arg10[%c0_30, %c0_31, %c0_32] : memref<2x128x2048xbf16, #tpu.memory_space<vmem>>, vector<1x128x2048xbf16>
    %50 = vector.shape_cast %49 : vector<1x128x2048xbf16> to vector<128x2048xbf16>
    %cst_33 = arith.constant dense<0.000000e+00> : vector<16x2048xf32>
    %51 = tpu.matmul %48, %50, %cst_33 {dimension_numbers = #tpu.dot_dimension_numbers<[1], [0], [0], [1], [0, 0, 1, 1], [], []>} : vector<16x128xbf16>, vector<128x2048xbf16>, vector<16x2048xf32> -> vector<16x2048xf32>
    %c0_34 = arith.constant 0 : index
    %c0_35 = arith.constant 0 : index
    %c0_36 = arith.constant 0 : index
    %52 = vector.load %arg11[%c0_34, %c0_35, %c0_36] : memref<2x1x2048xf32, #tpu.memory_space<vmem>>, vector<1x1x2048xf32>
    %53 = vector.shape_cast %52 : vector<1x1x2048xf32> to vector<1x2048xf32>
    %54 = vector.broadcast %53 : vector<1x2048xf32> to vector<16x2048xf32>
    %55 = arith.addf %51, %54 : vector<16x2048xf32>
    %cst_37 = arith.constant 0.000000e+00 : f32
    %56 = vector.broadcast %cst_37 : f32 to vector<16x2048xf32>
    %57 = arith.maximumf %55, %56 : vector<16x2048xf32>
    %58 = arith.truncf %57 : vector<16x2048xf32> to vector<16x2048xbf16>
    %c0_38 = arith.constant 0 : index
    %c0_39 = arith.constant 0 : index
    %c0_40 = arith.constant 0 : index
    %59 = vector.load %arg12[%c0_38, %c0_39, %c0_40] : memref<2x2048x128xbf16, #tpu.memory_space<vmem>>, vector<1x2048x128xbf16>
    %60 = vector.shape_cast %59 : vector<1x2048x128xbf16> to vector<2048x128xbf16>
    %cst_41 = arith.constant dense<0.000000e+00> : vector<16x128xf32>
    %61 = tpu.matmul %58, %60, %cst_41 {dimension_numbers = #tpu.dot_dimension_numbers<[1], [0], [0], [1], [0, 0, 1, 1], [], []>} : vector<16x2048xbf16>, vector<2048x128xbf16>, vector<16x128xf32> -> vector<16x128xf32>
    %c0_42 = arith.constant 0 : index
    %c0_43 = arith.constant 0 : index
    %c0_44 = arith.constant 0 : index
    %62 = vector.load %arg13[%c0_42, %c0_43, %c0_44] : memref<2x1x128xf32, #tpu.memory_space<vmem>>, vector<1x1x128xf32>
    %63 = vector.shape_cast %62 : vector<1x1x128xf32> to vector<1x128xf32>
    %64 = vector.broadcast %63 : vector<1x128xf32> to vector<16x128xf32>
    %65 = arith.addf %61, %64 : vector<16x128xf32>
    %66 = arith.addf %47, %65 : vector<16x128xf32>
    %c0_45 = arith.constant 0 : index
    %c0_46 = arith.constant 0 : index
    %c0_47 = arith.constant 0 : index
    %67 = vector.load %arg14[%c0_45, %c0_46, %c0_47] : memref<2x1x128xf32, #tpu.memory_space<vmem>>, vector<1x1x128xf32>
    %68 = vector.shape_cast %67 : vector<1x1x128xf32> to vector<1x128xf32>
    %c0_48 = arith.constant 0 : index
    %c0_49 = arith.constant 0 : index
    %c0_50 = arith.constant 0 : index
    %69 = vector.load %arg15[%c0_48, %c0_49, %c0_50] : memref<2x1x128xf32, #tpu.memory_space<vmem>>, vector<1x1x128xf32>
    %70 = vector.shape_cast %69 : vector<1x1x128xf32> to vector<1x128xf32>
    %cst_51 = arith.constant dense<0.000000e+00> : vector<16xf32>
    %71 = vector.multi_reduction <add>, %66, %cst_51 [1] : vector<16x128xf32> to vector<16xf32>
    %72 = vector.shape_cast %71 : vector<16xf32> to vector<16x1xf32>
    %cst_52 = arith.constant 7.812500e-03 : f32
    %73 = vector.broadcast %cst_52 : f32 to vector<16x1xf32>
    %74 = arith.mulf %72, %73 : vector<16x1xf32>
    %75 = vector.broadcast %74 : vector<16x1xf32> to vector<16x128xf32>
    %76 = arith.subf %66, %75 : vector<16x128xf32>
    %77 = arith.mulf %76, %76 : vector<16x128xf32>
    %cst_53 = arith.constant dense<0.000000e+00> : vector<16xf32>
    %78 = vector.multi_reduction <add>, %77, %cst_53 [1] : vector<16x128xf32> to vector<16xf32>
    %79 = vector.shape_cast %78 : vector<16xf32> to vector<16x1xf32>
    %cst_54 = arith.constant 7.812500e-03 : f32
    %80 = vector.broadcast %cst_54 : f32 to vector<16x1xf32>
    %81 = arith.mulf %79, %80 : vector<16x1xf32>
    %cst_55 = arith.constant 9.99999974E-6 : f32
    %82 = vector.broadcast %cst_55 : f32 to vector<16x1xf32>
    %83 = arith.addf %81, %82 : vector<16x1xf32>
    %84 = math.rsqrt %83 : vector<16x1xf32>
    %85 = vector.broadcast %84 : vector<16x1xf32> to vector<16x128xf32>
    %86 = arith.mulf %76, %85 : vector<16x128xf32>
    %87 = vector.broadcast %68 : vector<1x128xf32> to vector<16x128xf32>
    %88 = arith.mulf %86, %87 : vector<16x128xf32>
    %89 = vector.broadcast %70 : vector<1x128xf32> to vector<16x128xf32>
    %90 = arith.addf %88, %89 : vector<16x128xf32>
    %91 = arith.truncf %90 : vector<16x128xf32> to vector<16x128xbf16>
    %c1 = arith.constant 1 : index
    %c0_56 = arith.constant 0 : index
    %c0_57 = arith.constant 0 : index
    %92 = vector.load %arg4[%c1, %c0_56, %c0_57] : memref<2x128x128xbf16, #tpu.memory_space<vmem>>, vector<1x128x128xbf16>
    %93 = vector.shape_cast %92 : vector<1x128x128xbf16> to vector<128x128xbf16>
    %cst_58 = arith.constant dense<0.000000e+00> : vector<16x128xf32>
    %94 = tpu.matmul %91, %93, %cst_58 {dimension_numbers = #tpu.dot_dimension_numbers<[1], [0], [0], [1], [0, 0, 1, 1], [], []>} : vector<16x128xbf16>, vector<128x128xbf16>, vector<16x128xf32> -> vector<16x128xf32>
    %c1_59 = arith.constant 1 : index
    %c0_60 = arith.constant 0 : index
    %c0_61 = arith.constant 0 : index
    %95 = vector.load %arg5[%c1_59, %c0_60, %c0_61] : memref<2x1x128xf32, #tpu.memory_space<vmem>>, vector<1x1x128xf32>
    %96 = vector.shape_cast %95 : vector<1x1x128xf32> to vector<1x128xf32>
    %97 = vector.broadcast %96 : vector<1x128xf32> to vector<16x128xf32>
    %98 = arith.addf %94, %97 : vector<16x128xf32>
    %99 = arith.truncf %98 : vector<16x128xf32> to vector<16x128xbf16>
    %c1_62 = arith.constant 1 : index
    %c0_63 = arith.constant 0 : index
    %c0_64 = arith.constant 0 : index
    %100 = vector.load %arg6[%c1_62, %c0_63, %c0_64] : memref<2x128x128xbf16, #tpu.memory_space<vmem>>, vector<1x128x128xbf16>
    %101 = vector.shape_cast %100 : vector<1x128x128xbf16> to vector<128x128xbf16>
    %cst_65 = arith.constant dense<0.000000e+00> : vector<16x128xf32>
    %102 = tpu.matmul %99, %101, %cst_65 {dimension_numbers = #tpu.dot_dimension_numbers<[1], [0], [0], [1], [0, 0, 1, 1], [], []>} : vector<16x128xbf16>, vector<128x128xbf16>, vector<16x128xf32> -> vector<16x128xf32>
    %c1_66 = arith.constant 1 : index
    %c0_67 = arith.constant 0 : index
    %c0_68 = arith.constant 0 : index
    %103 = vector.load %arg7[%c1_66, %c0_67, %c0_68] : memref<2x1x128xf32, #tpu.memory_space<vmem>>, vector<1x1x128xf32>
    %104 = vector.shape_cast %103 : vector<1x1x128xf32> to vector<1x128xf32>
    %105 = vector.broadcast %104 : vector<1x128xf32> to vector<16x128xf32>
    %106 = arith.addf %102, %105 : vector<16x128xf32>
    %107 = arith.addf %90, %106 : vector<16x128xf32>
    %c1_69 = arith.constant 1 : index
    %c0_70 = arith.constant 0 : index
    %c0_71 = arith.constant 0 : index
    %108 = vector.load %arg8[%c1_69, %c0_70, %c0_71] : memref<2x1x128xf32, #tpu.memory_space<vmem>>, vector<1x1x128xf32>
    %109 = vector.shape_cast %108 : vector<1x1x128xf32> to vector<1x128xf32>
    %c1_72 = arith.constant 1 : index
    %c0_73 = arith.constant 0 : index
    %c0_74 = arith.constant 0 : index
    %110 = vector.load %arg9[%c1_72, %c0_73, %c0_74] : memref<2x1x128xf32, #tpu.memory_space<vmem>>, vector<1x1x128xf32>
    %111 = vector.shape_cast %110 : vector<1x1x128xf32> to vector<1x128xf32>
    %cst_75 = arith.constant dense<0.000000e+00> : vector<16xf32>
    %112 = vector.multi_reduction <add>, %107, %cst_75 [1] : vector<16x128xf32> to vector<16xf32>
    %113 = vector.shape_cast %112 : vector<16xf32> to vector<16x1xf32>
    %cst_76 = arith.constant 7.812500e-03 : f32
    %114 = vector.broadcast %cst_76 : f32 to vector<16x1xf32>
    %115 = arith.mulf %113, %114 : vector<16x1xf32>
    %116 = vector.broadcast %115 : vector<16x1xf32> to vector<16x128xf32>
    %117 = arith.subf %107, %116 : vector<16x128xf32>
    %118 = arith.mulf %117, %117 : vector<16x128xf32>
    %cst_77 = arith.constant dense<0.000000e+00> : vector<16xf32>
    %119 = vector.multi_reduction <add>, %118, %cst_77 [1] : vector<16x128xf32> to vector<16xf32>
    %120 = vector.shape_cast %119 : vector<16xf32> to vector<16x1xf32>
    %cst_78 = arith.constant 7.812500e-03 : f32
    %121 = vector.broadcast %cst_78 : f32 to vector<16x1xf32>
    %122 = arith.mulf %120, %121 : vector<16x1xf32>
    %cst_79 = arith.constant 9.99999974E-6 : f32
    %123 = vector.broadcast %cst_79 : f32 to vector<16x1xf32>
    %124 = arith.addf %122, %123 : vector<16x1xf32>
    %125 = math.rsqrt %124 : vector<16x1xf32>
    %126 = vector.broadcast %125 : vector<16x1xf32> to vector<16x128xf32>
    %127 = arith.mulf %117, %126 : vector<16x128xf32>
    %128 = vector.broadcast %109 : vector<1x128xf32> to vector<16x128xf32>
    %129 = arith.mulf %127, %128 : vector<16x128xf32>
    %130 = vector.broadcast %111 : vector<1x128xf32> to vector<16x128xf32>
    %131 = arith.addf %129, %130 : vector<16x128xf32>
    %132 = arith.truncf %131 : vector<16x128xf32> to vector<16x128xbf16>
    %c1_80 = arith.constant 1 : index
    %c0_81 = arith.constant 0 : index
    %c0_82 = arith.constant 0 : index
    %133 = vector.load %arg10[%c1_80, %c0_81, %c0_82] : memref<2x128x2048xbf16, #tpu.memory_space<vmem>>, vector<1x128x2048xbf16>
    %134 = vector.shape_cast %133 : vector<1x128x2048xbf16> to vector<128x2048xbf16>
    %cst_83 = arith.constant dense<0.000000e+00> : vector<16x2048xf32>
    %135 = tpu.matmul %132, %134, %cst_83 {dimension_numbers = #tpu.dot_dimension_numbers<[1], [0], [0], [1], [0, 0, 1, 1], [], []>} : vector<16x128xbf16>, vector<128x2048xbf16>, vector<16x2048xf32> -> vector<16x2048xf32>
    %c1_84 = arith.constant 1 : index
    %c0_85 = arith.constant 0 : index
    %c0_86 = arith.constant 0 : index
    %136 = vector.load %arg11[%c1_84, %c0_85, %c0_86] : memref<2x1x2048xf32, #tpu.memory_space<vmem>>, vector<1x1x2048xf32>
    %137 = vector.shape_cast %136 : vector<1x1x2048xf32> to vector<1x2048xf32>
    %138 = vector.broadcast %137 : vector<1x2048xf32> to vector<16x2048xf32>
    %139 = arith.addf %135, %138 : vector<16x2048xf32>
    %cst_87 = arith.constant 0.000000e+00 : f32
    %140 = vector.broadcast %cst_87 : f32 to vector<16x2048xf32>
    %141 = arith.maximumf %139, %140 : vector<16x2048xf32>
    %142 = arith.truncf %141 : vector<16x2048xf32> to vector<16x2048xbf16>
    %c1_88 = arith.constant 1 : index
    %c0_89 = arith.constant 0 : index
    %c0_90 = arith.constant 0 : index
    %143 = vector.load %arg12[%c1_88, %c0_89, %c0_90] : memref<2x2048x128xbf16, #tpu.memory_space<vmem>>, vector<1x2048x128xbf16>
    %144 = vector.shape_cast %143 : vector<1x2048x128xbf16> to vector<2048x128xbf16>
    %cst_91 = arith.constant dense<0.000000e+00> : vector<16x128xf32>
    %145 = tpu.matmul %142, %144, %cst_91 {dimension_numbers = #tpu.dot_dimension_numbers<[1], [0], [0], [1], [0, 0, 1, 1], [], []>} : vector<16x2048xbf16>, vector<2048x128xbf16>, vector<16x128xf32> -> vector<16x128xf32>
    %c1_92 = arith.constant 1 : index
    %c0_93 = arith.constant 0 : index
    %c0_94 = arith.constant 0 : index
    %146 = vector.load %arg13[%c1_92, %c0_93, %c0_94] : memref<2x1x128xf32, #tpu.memory_space<vmem>>, vector<1x1x128xf32>
    %147 = vector.shape_cast %146 : vector<1x1x128xf32> to vector<1x128xf32>
    %148 = vector.broadcast %147 : vector<1x128xf32> to vector<16x128xf32>
    %149 = arith.addf %145, %148 : vector<16x128xf32>
    %150 = arith.addf %131, %149 : vector<16x128xf32>
    %c1_95 = arith.constant 1 : index
    %c0_96 = arith.constant 0 : index
    %c0_97 = arith.constant 0 : index
    %151 = vector.load %arg14[%c1_95, %c0_96, %c0_97] : memref<2x1x128xf32, #tpu.memory_space<vmem>>, vector<1x1x128xf32>
    %152 = vector.shape_cast %151 : vector<1x1x128xf32> to vector<1x128xf32>
    %c1_98 = arith.constant 1 : index
    %c0_99 = arith.constant 0 : index
    %c0_100 = arith.constant 0 : index
    %153 = vector.load %arg15[%c1_98, %c0_99, %c0_100] : memref<2x1x128xf32, #tpu.memory_space<vmem>>, vector<1x1x128xf32>
    %154 = vector.shape_cast %153 : vector<1x1x128xf32> to vector<1x128xf32>
    %cst_101 = arith.constant dense<0.000000e+00> : vector<16xf32>
    %155 = vector.multi_reduction <add>, %150, %cst_101 [1] : vector<16x128xf32> to vector<16xf32>
    %156 = vector.shape_cast %155 : vector<16xf32> to vector<16x1xf32>
    %cst_102 = arith.constant 7.812500e-03 : f32
    %157 = vector.broadcast %cst_102 : f32 to vector<16x1xf32>
    %158 = arith.mulf %156, %157 : vector<16x1xf32>
    %159 = vector.broadcast %158 : vector<16x1xf32> to vector<16x128xf32>
    %160 = arith.subf %150, %159 : vector<16x128xf32>
    %161 = arith.mulf %160, %160 : vector<16x128xf32>
    %cst_103 = arith.constant dense<0.000000e+00> : vector<16xf32>
    %162 = vector.multi_reduction <add>, %161, %cst_103 [1] : vector<16x128xf32> to vector<16xf32>
    %163 = vector.shape_cast %162 : vector<16xf32> to vector<16x1xf32>
    %cst_104 = arith.constant 7.812500e-03 : f32
    %164 = vector.broadcast %cst_104 : f32 to vector<16x1xf32>
    %165 = arith.mulf %163, %164 : vector<16x1xf32>
    %cst_105 = arith.constant 9.99999974E-6 : f32
    %166 = vector.broadcast %cst_105 : f32 to vector<16x1xf32>
    %167 = arith.addf %165, %166 : vector<16x1xf32>
    %168 = math.rsqrt %167 : vector<16x1xf32>
    %169 = vector.broadcast %168 : vector<16x1xf32> to vector<16x128xf32>
    %170 = arith.mulf %160, %169 : vector<16x128xf32>
    %171 = vector.broadcast %152 : vector<1x128xf32> to vector<16x128xf32>
    %172 = arith.mulf %170, %171 : vector<16x128xf32>
    %173 = vector.broadcast %154 : vector<1x128xf32> to vector<16x128xf32>
    %174 = arith.addf %172, %173 : vector<16x128xf32>
    %c0_106 = arith.constant 0 : index
    %c0_107 = arith.constant 0 : index
    %175 = vector.load %arg16[%c0_106, %c0_107] : memref<1x128xf32, #tpu.memory_space<vmem>>, vector<1x128xf32>
    %176 = vector.broadcast %175 : vector<1x128xf32> to vector<16x128xf32>
    %177 = arith.mulf %174, %176 : vector<16x128xf32>
    %cst_108 = arith.constant dense<0.000000e+00> : vector<16xf32>
    %178 = vector.multi_reduction <add>, %177, %cst_108 [1] : vector<16x128xf32> to vector<16xf32>
    %179 = vector.shape_cast %178 : vector<16xf32> to vector<16x1xf32>
    %c0_109 = arith.constant 0 : index
    %c0_110 = arith.constant 0 : index
    %180 = vector.load %arg17[%c0_109, %c0_110] : memref<1x1xf32, #tpu.memory_space<vmem>>, vector<1x1xf32>
    %181 = vector.broadcast %180 : vector<1x1xf32> to vector<16x1xf32>
    %182 = arith.addf %179, %181 : vector<16x1xf32>
    %183 = vector.shape_cast %182 : vector<16x1xf32> to vector<1x1x16xf32>
    %c0_111 = arith.constant 0 : index
    %c0_112 = arith.constant 0 : index
    %c0_113 = arith.constant 0 : index
    %184 = vector.load %arg18[%c0_111, %c0_112, %c0_113] : memref<1x1x16xf32, #tpu.memory_space<vmem>>, vector<1x1x16xf32>
    tpu.vector_store %arg18[%c0_111, %c0_112, %c0_113], %183 {strides = array<i32>} : memref<1x1x16xf32, #tpu.memory_space<vmem>>, vector<1x1x16xf32>,
    return
  }
  func.func @transform_0(%arg0: i32) -> (i32, i32) {
    %c0_i32 = arith.constant 0 : i32
    %c0_i32_0 = arith.constant 0 : i32
    return %arg0, %c0_i32 : i32, i32
  }
  func.func @transform_1(%arg0: i32) -> (i32, i32) {
    %c0_i32 = arith.constant 0 : i32
    %c0_i32_0 = arith.constant 0 : i32
    %c0_i32_1 = arith.constant 0 : i32
    return %c0_i32, %c0_i32_0 : i32, i32
  }
  func.func @transform_2(%arg0: i32) -> (i32, i32) {
    %c0_i32 = arith.constant 0 : i32
    %c0_i32_0 = arith.constant 0 : i32
    %c0_i32_1 = arith.constant 0 : i32
    return %c0_i32, %c0_i32_0 : i32, i32
  }
  func.func @transform_3(%arg0: i32) -> (i32, i32, i32) {
    %c0_i32 = arith.constant 0 : i32
    %c0_i32_0 = arith.constant 0 : i32
    %c0_i32_1 = arith.constant 0 : i32
    %c0_i32_2 = arith.constant 0 : i32
    return %c0_i32, %c0_i32_0, %c0_i32_1 : i32, i32, i32
  }
  func.func @transform_4(%arg0: i32) -> (i32, i32, i32) {
    %c0_i32 = arith.constant 0 : i32
    %c0_i32_0 = arith.constant 0 : i32
    %c0_i32_1 = arith.constant 0 : i32
    %c0_i32_2 = arith.constant 0 : i32
    return %c0_i32, %c0_i32_0, %c0_i32_1 : i32, i32, i32
  }
  func.func @transform_5(%arg0: i32) -> (i32, i32, i32) {
    %c0_i32 = arith.constant 0 : i32
    %c0_i32_0 = arith.constant 0 : i32
    %c0_i32_1 = arith.constant 0 : i32
    %c0_i32_2 = arith.constant 0 : i32
    return %c0_i32, %c0_i32_0, %c0_i32_1 : i32, i32, i32
  }
  func.func @transform_6(%arg0: i32) -> (i32, i32, i32) {
    %c0_i32 = arith.constant 0 : i32
    %c0_i32_0 = arith.constant 0 : i32
    %c0_i32_1 = arith.constant 0 : i32
    %c0_i32_2 = arith.constant 0 : i32
    return %c0_i32, %c0_i32_0, %c0_i32_1 : i32, i32, i32
  }
  func.func @transform_7(%arg0: i32) -> (i32, i32, i32) {
    %c0_i32 = arith.constant 0 : i32
    %c0_i32_0 = arith.constant 0 : i32
    %c0_i32_1 = arith.constant 0 : i32
    %c0_i32_2 = arith.constant 0 : i32
    return %c0_i32, %c0_i32_0, %c0_i32_1 : i32, i32, i32
  }
  func.func @transform_8(%arg0: i32) -> (i32, i32, i32) {
    %c0_i32 = arith.constant 0 : i32
    %c0_i32_0 = arith.constant 0 : i32
    %c0_i32_1 = arith.constant 0 : i32
    %c0_i32_2 = arith.constant 0 : i32
    return %c0_i32, %c0_i32_0, %c0_i32_1 : i32, i32, i32
  }
  func.func @transform_9(%arg0: i32) -> (i32, i32, i32) {
    %c0_i32 = arith.constant 0 : i32
    %c0_i32_0 = arith.constant 0 : i32
    %c0_i32_1 = arith.constant 0 : i32
    %c0_i32_2 = arith.constant 0 : i32
    return %c0_i32, %c0_i32_0, %c0_i32_1 : i32, i32, i32
  }
  func.func @transform_10(%arg0: i32) -> (i32, i32, i32) {
    %c0_i32 = arith.constant 0 : i32
    %c0_i32_0 = arith.constant 0 : i32
    %c0_i32_1 = arith.constant 0 : i32
    %c0_i32_2 = arith.constant 0 : i32
    return %c0_i32, %c0_i32_0, %c0_i32_1 : i32, i32, i32
  }
  func.func @transform_11(%arg0: i32) -> (i32, i32, i32) {
    %c0_i32 = arith.constant 0 : i32
    %c0_i32_0 = arith.constant 0 : i32
    %c0_i32_1 = arith.constant 0 : i32
    %c0_i32_2 = arith.constant 0 : i32
    return %c0_i32, %c0_i32_0, %c0_i32_1 : i32, i32, i32
  }
  func.func @transform_12(%arg0: i32) -> (i32, i32, i32) {
    %c0_i32 = arith.constant 0 : i32
    %c0_i32_0 = arith.constant 0 : i32
    %c0_i32_1 = arith.constant 0 : i32
    %c0_i32_2 = arith.constant 0 : i32
    return %c0_i32, %c0_i32_0, %c0_i32_1 : i32, i32, i32
  }
  func.func @transform_13(%arg0: i32) -> (i32, i32, i32) {
    %c0_i32 = arith.constant 0 : i32
    %c0_i32_0 = arith.constant 0 : i32
    %c0_i32_1 = arith.constant 0 : i32
    %c0_i32_2 = arith.constant 0 : i32
    return %c0_i32, %c0_i32_0, %c0_i32_1 : i32, i32, i32
  }
  func.func @transform_14(%arg0: i32) -> (i32, i32, i32) {
    %c0_i32 = arith.constant 0 : i32
    %c0_i32_0 = arith.constant 0 : i32
    %c0_i32_1 = arith.constant 0 : i32
    %c0_i32_2 = arith.constant 0 : i32
    return %c0_i32, %c0_i32_0, %c0_i32_1 : i32, i32, i32
  }
  func.func @transform_15(%arg0: i32) -> (i32, i32) {
    %c0_i32 = arith.constant 0 : i32
    %c0_i32_0 = arith.constant 0 : i32
    %c0_i32_1 = arith.constant 0 : i32
    return %c0_i32, %c0_i32_0 : i32, i32
  }
  func.func @transform_16(%arg0: i32) -> (i32, i32) {
    %c0_i32 = arith.constant 0 : i32
    %c0_i32_0 = arith.constant 0 : i32
    %c0_i32_1 = arith.constant 0 : i32
    return %c0_i32, %c0_i32_0 : i32, i32
  }
  func.func @transform_17(%arg0: i32) -> (i32, i32, i32) {
    %c0_i32 = arith.constant 0 : i32
    %c0_i32_0 = arith.constant 0 : i32
    %c0_i32_1 = arith.constant 0 : i32
    return %arg0, %c0_i32, %c0_i32_0 : i32, i32, i32
  }
}

module attributes {stable_mosaic.version = 11 : i64} {
  func.func @audio_transformer_kernel(%arg0: i32, %arg1: memref<16x41xf32, #tpu.memory_space<vmem>>, %arg2: memref<41x128xbf16, #tpu.memory_space<vmem>>, %arg3: memref<1x128xf32, #tpu.memory_space<vmem>>, %arg4: memref<2x128x128xbf16, #tpu.memory_space<vmem>>, %arg5: memref<2x1x128xf32, #tpu.memory_space<vmem>>, %arg6: memref<2x128x128xbf16, #tpu.memory_space<vmem>>, %arg7: memref<2x1x128xf32, #tpu.memory_space<vmem>>, %arg8: memref<2x1x128xf32, #tpu.memory_space<vmem>>, %arg9: memref<2x1x128xf32, #tpu.memory_space<vmem>>, %arg10: memref<2x128x2048xbf16, #tpu.memory_space<vmem>>, %arg11: memref<2x1x2048xf32, #tpu.memory_space<vmem>>, %arg12: memref<2x2048x128xbf16, #tpu.memory_space<vmem>>, %arg13: memref<2x1x128xf32, #tpu.memory_space<vmem>>, %arg14: memref<2x1x128xf32, #tpu.memory_space<vmem>>, %arg15: memref<2x1x128xf32, #tpu.memory_space<vmem>>, %arg16: memref<1x128xf32, #tpu.memory_space<vmem>>, %arg17: memref<1x1xf32, #tpu.memory_space<vmem>>, %arg18: memref<1x1x16xf32, #tpu.memory_space<vmem>>) attributes {dimension_semantics = [#tpu.dimension_semantics<parallel>], iteration_bounds = array<i64: 1>, scalar_prefetch = 0 : i64, scratch_operands = 0 : i64, tpu.core_type = #tpu.core_type<tc>, window_params = [{transform_indices = @transform_0, window_bounds = array<i64: 16, 41>}, {pipeline_mode = #tpu.pipeline_mode<synchronous>, transform_indices = @transform_1, window_bounds = array<i64: 41, 128>}, {pipeline_mode = #tpu.pipeline_mode<synchronous>, transform_indices = @transform_2, window_bounds = array<i64: 1, 128>}, {pipeline_mode = #tpu.pipeline_mode<synchronous>, transform_indices = @transform_3, window_bounds = array<i64: 2, 128, 128>}, {pipeline_mode = #tpu.pipeline_mode<synchronous>, transform_indices = @transform_4, window_bounds = array<i64: 2, 1, 128>}, {pipeline_mode = #tpu.pipeline_mode<synchronous>, transform_indices = @transform_5, window_bounds = array<i64: 2, 128, 128>}, {pipeline_mode = #tpu.pipeline_mode<synchronous>, transform_indices = @transform_6, window_bounds = array<i64: 2, 1, 128>}, {pipeline_mode = #tpu.pipeline_mode<synchronous>, transform_indices = @transform_7, window_bounds = array<i64: 2, 1, 128>}, {pipeline_mode = #tpu.pipeline_mode<synchronous>, transform_indices = @transform_8, window_bounds = array<i64: 2, 1, 128>}, {pipeline_mode = #tpu.pipeline_mode<synchronous>, transform_indices = @transform_9, window_bounds = array<i64: 2, 128, 2048>}, {pipeline_mode = #tpu.pipeline_mode<synchronous>, transform_indices = @transform_10, window_bounds = array<i64: 2, 1, 2048>}, {pipeline_mode = #tpu.pipeline_mode<synchronous>, transform_indices = @transform_11, window_bounds = array<i64: 2, 2048, 128>}, {pipeline_mode = #tpu.pipeline_mode<synchronous>, transform_indices = @transform_12, window_bounds = array<i64: 2, 1, 128>}, {pipeline_mode = #tpu.pipeline_mode<synchronous>, transform_indices = @transform_13, window_bounds = array<i64: 2, 1, 128>}, {pipeline_mode = #tpu.pipeline_mode<synchronous>, transform_indices = @transform_14, window_bounds = array<i64: 2, 1, 128>}, {pipeline_mode = #tpu.pipeline_mode<synchronous>, transform_indices = @transform_15, window_bounds = array<i64: 1, 128>}, {pipeline_mode = #tpu.pipeline_mode<synchronous>, transform_indices = @transform_16, window_bounds = array<i64: 1, 1>}, {transform_indices = @transform_17, window_bounds = array<i64: 1, 1, 16>}]} {
    %c0 = arith.constant 0 : index
    %c0_0 = arith.constant 0 : index
    %0 = vector.load %arg1[%c0, %c0_0] : memref<16x41xf32, #tpu.memory_space<vmem>>, vector<16x41xf32>
    %1 = arith.truncf %0 : vector<16x41xf32> to vector<16x41xbf16>
    %c0_1 = arith.constant 0 : index
    %c0_2 = arith.constant 0 : index
    %2 = vector.load %arg2[%c0_1, %c0_2] : memref<41x128xbf16, #tpu.memory_space<vmem>>, vector<41x128xbf16>
    %cst = arith.constant dense<0.000000e+00> : vector<16x128xf32>
    %3 = tpu.matmul %1, %2, %cst {dimension_numbers = #tpu.dot_dimension_numbers<[1], [0], [0], [1], [0, 0, 1, 1], [], []>} : vector<16x41xbf16>, vector<41x128xbf16>, vector<16x128xf32> -> vector<16x128xf32>
    %c0_3 = arith.constant 0 : index
    %c0_4 = arith.constant 0 : index
    %4 = vector.load %arg3[%c0_3, %c0_4] : memref<1x128xf32, #tpu.memory_space<vmem>>, vector<1x128xf32>
    %5 = vector.broadcast %4 : vector<1x128xf32> to vector<16x128xf32>
    %6 = arith.addf %3, %5 : vector<16x128xf32>
    %7 = arith.truncf %6 : vector<16x128xf32> to vector<16x128xbf16>
    %c0_5 = arith.constant 0 : index
    %c0_6 = arith.constant 0 : index
    %c0_7 = arith.constant 0 : index
    %8 = vector.load %arg4[%c0_5, %c0_6, %c0_7] : memref<2x128x128xbf16, #tpu.memory_space<vmem>>, vector<1x128x128xbf16>
    %9 = vector.shape_cast %8 : vector<1x128x128xbf16> to vector<128x128xbf16>
    %cst_8 = arith.constant dense<0.000000e+00> : vector<16x128xf32>
    %10 = tpu.matmul %7, %9, %cst_8 {dimension_numbers = #tpu.dot_dimension_numbers<[1], [0], [0], [1], [0, 0, 1, 1], [], []>} : vector<16x128xbf16>, vector<128x128xbf16>, vector<16x128xf32> -> vector<16x128xf32>
    %c0_9 = arith.constant 0 : index
    %c0_10 = arith.constant 0 : index
    %c0_11 = arith.constant 0 : index
    %11 = vector.load %arg5[%c0_9, %c0_10, %c0_11] : memref<2x1x128xf32, #tpu.memory_space<vmem>>, vector<1x1x128xf32>
    %12 = vector.shape_cast %11 : vector<1x1x128xf32> to vector<1x128xf32>
    %13 = vector.broadcast %12 : vector<1x128xf32> to vector<16x128xf32>
    %14 = arith.addf %10, %13 : vector<16x128xf32>
    %15 = arith.truncf %14 : vector<16x128xf32> to vector<16x128xbf16>
    %c0_12 = arith.constant 0 : index
    %c0_13 = arith.constant 0 : index
    %c0_14 = arith.constant 0 : index
    %16 = vector.load %arg6[%c0_12, %c0_13, %c0_14] : memref<2x128x128xbf16, #tpu.memory_space<vmem>>, vector<1x128x128xbf16>
    %17 = vector.shape_cast %16 : vector<1x128x128xbf16> to vector<128x128xbf16>
    %cst_15 = arith.constant dense<0.000000e+00> : vector<16x128xf32>
    %18 = tpu.matmul %15, %17, %cst_15 {dimension_numbers = #tpu.dot_dimension_numbers<[1], [0], [0], [1], [0, 0, 1, 1], [], []>} : vector<16x128xbf16>, vector<128x128xbf16>, vector<16x128xf32> -> vector<16x128xf32>
    %c0_16 = arith.constant 0 : index
    %c0_17 = arith.constant 0 : index
    %c0_18 = arith.constant 0 : index
    %19 = vector.load %arg7[%c0_16, %c0_17, %c0_18] : memref<2x1x128xf32, #tpu.memory_space<vmem>>, vector<1x1x128xf32>
    %20 = vector.shape_cast %19 : vector<1x1x128xf32> to vector<1x128xf32>
    %21 = vector.broadcast %20 : vector<1x128xf32> to vector<16x128xf32>
    %22 = arith.addf %18, %21 : vector<16x128xf32>
    %23 = arith.addf %6, %22 : vector<16x128xf32>
    %c0_19 = arith.constant 0 : index
    %c0_20 = arith.constant 0 : index
    %c0_21 = arith.constant 0 : index
    %24 = vector.load %arg8[%c0_19, %c0_20, %c0_21] : memref<2x1x128xf32, #tpu.memory_space<vmem>>, vector<1x1x128xf32>
    %25 = vector.shape_cast %24 : vector<1x1x128xf32> to vector<1x128xf32>
    %c0_22 = arith.constant 0 : index
    %c0_23 = arith.constant 0 : index
    %c0_24 = arith.constant 0 : index
    %26 = vector.load %arg9[%c0_22, %c0_23, %c0_24] : memref<2x1x128xf32, #tpu.memory_space<vmem>>, vector<1x1x128xf32>
    %27 = vector.shape_cast %26 : vector<1x1x128xf32> to vector<1x128xf32>
    %cst_25 = arith.constant dense<0.000000e+00> : vector<16xf32>
    %28 = vector.multi_reduction <add>, %23, %cst_25 [1] : vector<16x128xf32> to vector<16xf32>
    %29 = vector.shape_cast %28 : vector<16xf32> to vector<16x1xf32>
    %cst_26 = arith.constant 7.812500e-03 : f32
    %30 = vector.broadcast %cst_26 : f32 to vector<16x1xf32>
    %31 = arith.mulf %29, %30 : vector<16x1xf32>
    %32 = vector.broadcast %31 : vector<16x1xf32> to vector<16x128xf32>
    %33 = arith.subf %23, %32 : vector<16x128xf32>
    %34 = arith.mulf %33, %33 : vector<16x128xf32>
    %cst_27 = arith.constant dense<0.000000e+00> : vector<16xf32>
    %35 = vector.multi_reduction <add>, %34, %cst_27 [1] : vector<16x128xf32> to vector<16xf32>
    %36 = vector.shape_cast %35 : vector<16xf32> to vector<16x1xf32>
    %cst_28 = arith.constant 7.812500e-03 : f32
    %37 = vector.broadcast %cst_28 : f32 to vector<16x1xf32>
    %38 = arith.mulf %36, %37 : vector<16x1xf32>
    %cst_29 = arith.constant 9.99999974E-6 : f32
    %39 = vector.broadcast %cst_29 : f32 to vector<16x1xf32>
    %40 = arith.addf %38, %39 : vector<16x1xf32>
    %41 = math.rsqrt %40 : vector<16x1xf32>
    %42 = vector.broadcast %41 : vector<16x1xf32> to vector<16x128xf32>
    %43 = arith.mulf %33, %42 : vector<16x128xf32>
    %44 = vector.broadcast %25 : vector<1x128xf32> to vector<16x128xf32>
    %45 = arith.mulf %43, %44 : vector<16x128xf32>
    %46 = vector.broadcast %27 : vector<1x128xf32> to vector<16x128xf32>
    %47 = arith.addf %45, %46 : vector<16x128xf32>
    %48 = arith.truncf %47 : vector<16x128xf32> to vector<16x128xbf16>
    %c0_30 = arith.constant 0 : index
    %c0_31 = arith.constant 0 : index
    %c0_32 = arith.constant 0 : index
    %49 = vector.load %arg10[%c0_30, %c0_31, %c0_32] : memref<2x128x2048xbf16, #tpu.memory_space<vmem>>, vector<1x128x2048xbf16>
    %50 = vector.shape_cast %49 : vector<1x128x2048xbf16> to vector<128x2048xbf16>
    %cst_33 = arith.constant dense<0.000000e+00> : vector<16x2048xf32>
    %51 = tpu.matmul %48, %50, %cst_33 {dimension_numbers = #tpu.dot_dimension_numbers<[1], [0], [0], [1], [0, 0, 1, 1], [], []>} : vector<16x128xbf16>, vector<128x2048xbf16>, vector<16x2048xf32> -> vector<16x2048xf32>
    %c0_34 = arith.constant 0 : index
    %c0_35 = arith.constant 0 : index
    %c0_36 = arith.constant 0 : index
    %52 = vector.load %arg11[%c0_34, %c0_35, %c0_36] : memref<2x1x2048xf32, #tpu.memory_space<vmem>>, vector<1x1x2048xf32>
    %53 = vector.shape_cast %52 : vector<1x1x2048xf32> to vector<1x2048xf32>
    %54 = vector.broadcast %53 : vector<1x2048xf32> to vector<16x2048xf32>
    %55 = arith.addf %51, %54 : vector<16x2048xf32>
    %cst_37 = arith.constant 0.000000e+00 : f32
    %56 = vector.broadcast %cst_37 : f32 to vector<16x2048xf32>
    %57 = arith.maximumf %55, %56 : vector<16x2048xf32>
    %58 = arith.truncf %57 : vector<16x2048xf32> to vector<16x2048xbf16>
    %c0_38 = arith.constant 0 : index
    %c0_39 = arith.constant 0 : index
    %c0_40 = arith.constant 0 : index
    %59 = vector.load %arg12[%c0_38, %c0_39, %c0_40] : memref<2x2048x128xbf16, #tpu.memory_space<vmem>>, vector<1x2048x128xbf16>
    %60 = vector.shape_cast %59 : vector<1x2048x128xbf16> to vector<2048x128xbf16>
    %cst_41 = arith.constant dense<0.000000e+00> : vector<16x128xf32>
    %61 = tpu.matmul %58, %60, %cst_41 {dimension_numbers = #tpu.dot_dimension_numbers<[1], [0], [0], [1], [0, 0, 1, 1], [], []>} : vector<16x2048xbf16>, vector<2048x128xbf16>, vector<16x128xf32> -> vector<16x128xf32>
    %c0_42 = arith.constant 0 : index
    %c0_43 = arith.constant 0 : index
    %c0_44 = arith.constant 0 : index
    %62 = vector.load %arg13[%c0_42, %c0_43, %c0_44] : memref<2x1x128xf32, #tpu.memory_space<vmem>>, vector<1x1x128xf32>
    %63 = vector.shape_cast %62 : vector<1x1x128xf32> to vector<1x128xf32>
    %64 = vector.broadcast %63 : vector<1x128xf32> to vector<16x128xf32>
    %65 = arith.addf %61, %64 : vector<16x128xf32>
    %66 = arith.addf %47, %65 : vector<16x128xf32>
    %c0_45 = arith.constant 0 : index
    %c0_46 = arith.constant 0 : index
    %c0_47 = arith.constant 0 : index
    %67 = vector.load %arg14[%c0_45, %c0_46, %c0_47] : memref<2x1x128xf32, #tpu.memory_space<vmem>>, vector<1x1x128xf32>
    %68 = vector.shape_cast %67 : vector<1x1x128xf32> to vector<1x128xf32>
    %c0_48 = arith.constant 0 : index
    %c0_49 = arith.constant 0 : index
    %c0_50 = arith.constant 0 : index
    %69 = vector.load %arg15[%c0_48, %c0_49, %c0_50] : memref<2x1x128xf32, #tpu.memory_space<vmem>>, vector<1x1x128xf32>
    %70 = vector.shape_cast %69 : vector<1x1x128xf32> to vector<1x128xf32>
    %cst_51 = arith.constant dense<0.000000e+00> : vector<16xf32>
    %71 = vector.multi_reduction <add>, %66, %cst_51 [1] : vector<16x128xf32> to vector<16xf32>
    %72 = vector.shape_cast %71 : vector<16xf32> to vector<16x1xf32>
    %cst_52 = arith.constant 7.812500e-03 : f32
    %73 = vector.broadcast %cst_52 : f32 to vector<16x1xf32>
    %74 = arith.mulf %72, %73 : vector<16x1xf32>
    %75 = vector.broadcast %74 : vector<16x1xf32> to vector<16x128xf32>
    %76 = arith.subf %66, %75 : vector<16x128xf32>
    %77 = arith.mulf %76, %76 : vector<16x128xf32>
    %cst_53 = arith.constant dense<0.000000e+00> : vector<16xf32>
    %78 = vector.multi_reduction <add>, %77, %cst_53 [1] : vector<16x128xf32> to vector<16xf32>
    %79 = vector.shape_cast %78 : vector<16xf32> to vector<16x1xf32>
    %cst_54 = arith.constant 7.812500e-03 : f32
    %80 = vector.broadcast %cst_54 : f32 to vector<16x1xf32>
    %81 = arith.mulf %79, %80 : vector<16x1xf32>
    %cst_55 = arith.constant 9.99999974E-6 : f32
    %82 = vector.broadcast %cst_55 : f32 to vector<16x1xf32>
    %83 = arith.addf %81, %82 : vector<16x1xf32>
    %84 = math.rsqrt %83 : vector<16x1xf32>
    %85 = vector.broadcast %84 : vector<16x1xf32> to vector<16x128xf32>
    %86 = arith.mulf %76, %85 : vector<16x128xf32>
    %87 = vector.broadcast %68 : vector<1x128xf32> to vector<16x128xf32>
    %88 = arith.mulf %86, %87 : vector<16x128xf32>
    %89 = vector.broadcast %70 : vector<1x128xf32> to vector<16x128xf32>
    %90 = arith.addf %88, %89 : vector<16x128xf32>
    %91 = arith.truncf %90 : vector<16x128xf32> to vector<16x128xbf16>
    %c1 = arith.constant 1 : index
    %c0_56 = arith.constant 0 : index
    %c0_57 = arith.constant 0 : index
    %92 = vector.load %arg4[%c1, %c0_56, %c0_57] : memref<2x128x128xbf16, #tpu.memory_space<vmem>>, vector<1x128x128xbf16>
    %93 = vector.shape_cast %92 : vector<1x128x128xbf16> to vector<128x128xbf16>
    %cst_58 = arith.constant dense<0.000000e+00> : vector<16x128xf32>
    %94 = tpu.matmul %91, %93, %cst_58 {dimension_numbers = #tpu.dot_dimension_numbers<[1], [0], [0], [1], [0, 0, 1, 1], [], []>} : vector<16x128xbf16>, vector<128x128xbf16>, vector<16x128xf32> -> vector<16x128xf32>
    %c1_59 = arith.constant 1 : index
    %c0_60 = arith.constant 0 : index
    %c0_61 = arith.constant 0 : index
    %95 = vector.load %arg5[%c1_59, %c0_60, %c0_61] : memref<2x1x128xf32, #tpu.memory_space<vmem>>, vector<1x1x128xf32>
    %96 = vector.shape_cast %95 : vector<1x1x128xf32> to vector<1x128xf32>
    %97 = vector.broadcast %96 : vector<1x128xf32> to vector<16x128xf32>
    %98 = arith.addf %94, %97 : vector<16x128xf32>
    %99 = arith.truncf %98 : vector<16x128xf32> to vector<16x128xbf16>
    %c1_62 = arith.constant 1 : index
    %c0_63 = arith.constant 0 : index
    %c0_64 = arith.constant 0 : index
    %100 = vector.load %arg6[%c1_62, %c0_63, %c0_64] : memref<2x128x128xbf16, #tpu.memory_space<vmem>>, vector<1x128x128xbf16>
    %101 = vector.shape_cast %100 : vector<1x128x128xbf16> to vector<128x128xbf16>
    %cst_65 = arith.constant dense<0.000000e+00> : vector<16x128xf32>
    %102 = tpu.matmul %99, %101, %cst_65 {dimension_numbers = #tpu.dot_dimension_numbers<[1], [0], [0], [1], [0, 0, 1, 1], [], []>} : vector<16x128xbf16>, vector<128x128xbf16>, vector<16x128xf32> -> vector<16x128xf32>
    %c1_66 = arith.constant 1 : index
    %c0_67 = arith.constant 0 : index
    %c0_68 = arith.constant 0 : index
    %103 = vector.load %arg7[%c1_66, %c0_67, %c0_68] : memref<2x1x128xf32, #tpu.memory_space<vmem>>, vector<1x1x128xf32>
    %104 = vector.shape_cast %103 : vector<1x1x128xf32> to vector<1x128xf32>
    %105 = vector.broadcast %104 : vector<1x128xf32> to vector<16x128xf32>
    %106 = arith.addf %102, %105 : vector<16x128xf32>
    %107 = arith.addf %90, %106 : vector<16x128xf32>
    %c1_69 = arith.constant 1 : index
    %c0_70 = arith.constant 0 : index
    %c0_71 = arith.constant 0 : index
    %108 = vector.load %arg8[%c1_69, %c0_70, %c0_71] : memref<2x1x128xf32, #tpu.memory_space<vmem>>, vector<1x1x128xf32>
    %109 = vector.shape_cast %108 : vector<1x1x128xf32> to vector<1x128xf32>
    %c1_72 = arith.constant 1 : index
    %c0_73 = arith.constant 0 : index
    %c0_74 = arith.constant 0 : index
    %110 = vector.load %arg9[%c1_72, %c0_73, %c0_74] : memref<2x1x128xf32, #tpu.memory_space<vmem>>, vector<1x1x128xf32>
    %111 = vector.shape_cast %110 : vector<1x1x128xf32> to vector<1x128xf32>
    %cst_75 = arith.constant dense<0.000000e+00> : vector<16xf32>
    %112 = vector.multi_reduction <add>, %107, %cst_75 [1] : vector<16x128xf32> to vector<16xf32>
    %113 = vector.shape_cast %112 : vector<16xf32> to vector<16x1xf32>
    %cst_76 = arith.constant 7.812500e-03 : f32
    %114 = vector.broadcast %cst_76 : f32 to vector<16x1xf32>
    %115 = arith.mulf %113, %114 : vector<16x1xf32>
    %116 = vector.broadcast %115 : vector<16x1xf32> to vector<16x128xf32>
    %117 = arith.subf %107, %116 : vector<16x128xf32>
    %118 = arith.mulf %117, %117 : vector<16x128xf32>
    %cst_77 = arith.constant dense<0.000000e+00> : vector<16xf32>
    %119 = vector.multi_reduction <add>, %118, %cst_77 [1] : vector<16x128xf32> to vector<16xf32>
    %120 = vector.shape_cast %119 : vector<16xf32> to vector<16x1xf32>
    %cst_78 = arith.constant 7.812500e-03 : f32
    %121 = vector.broadcast %cst_78 : f32 to vector<16x1xf32>
    %122 = arith.mulf %120, %121 : vector<16x1xf32>
    %cst_79 = arith.constant 9.99999974E-6 : f32
    %123 = vector.broadcast %cst_79 : f32 to vector<16x1xf32>
    %124 = arith.addf %122, %123 : vector<16x1xf32>
    %125 = math.rsqrt %124 : vector<16x1xf32>
    %126 = vector.broadcast %125 : vector<16x1xf32> to vector<16x128xf32>
    %127 = arith.mulf %117, %126 : vector<16x128xf32>
    %128 = vector.broadcast %109 : vector<1x128xf32> to vector<16x128xf32>
    %129 = arith.mulf %127, %128 : vector<16x128xf32>
    %130 = vector.broadcast %111 : vector<1x128xf32> to vector<16x128xf32>
    %131 = arith.addf %129, %130 : vector<16x128xf32>
    %132 = arith.truncf %131 : vector<16x128xf32> to vector<16x128xbf16>
    %c1_80 = arith.constant 1 : index
    %c0_81 = arith.constant 0 : index
    %c0_82 = arith.constant 0 : index
    %133 = vector.load %arg10[%c1_80, %c0_81, %c0_82] : memref<2x128x2048xbf16, #tpu.memory_space<vmem>>, vector<1x128x2048xbf16>
    %134 = vector.shape_cast %133 : vector<1x128x2048xbf16> to vector<128x2048xbf16>
    %cst_83 = arith.constant dense<0.000000e+00> : vector<16x2048xf32>
    %135 = tpu.matmul %132, %134, %cst_83 {dimension_numbers = #tpu.dot_dimension_numbers<[1], [0], [0], [1], [0, 0, 1, 1], [], []>} : vector<16x128xbf16>, vector<128x2048xbf16>, vector<16x2048xf32> -> vector<16x2048xf32>
    %c1_84 = arith.constant 1 : index
    %c0_85 = arith.constant 0 : index
    %c0_86 = arith.constant 0 : index
    %136 = vector.load %arg11[%c1_84, %c0_85, %c0_86] : memref<2x1x2048xf32, #tpu.memory_space<vmem>>, vector<1x1x2048xf32>
    %137 = vector.shape_cast %136 : vector<1x1x2048xf32> to vector<1x2048xf32>
    %138 = vector.broadcast %137 : vector<1x2048xf32> to vector<16x2048xf32>
    %139 = arith.addf %135, %138 : vector<16x2048xf32>
    %cst_87 = arith.constant 0.000000e+00 : f32
    %140 = vector.broadcast %cst_87 : f32 to vector<16x2048xf32>
    %141 = arith.maximumf %139, %140 : vector<16x2048xf32>
    %142 = arith.truncf %141 : vector<16x2048xf32> to vector<16x2048xbf16>
    %c1_88 = arith.constant 1 : index
    %c0_89 = arith.constant 0 : index
    %c0_90 = arith.constant 0 : index
    %143 = vector.load %arg12[%c1_88, %c0_89, %c0_90] : memref<2x2048x128xbf16, #tpu.memory_space<vmem>>, vector<1x2048x128xbf16>
    %144 = vector.shape_cast %143 : vector<1x2048x128xbf16> to vector<2048x128xbf16>
    %cst_91 = arith.constant dense<0.000000e+00> : vector<16x128xf32>
    %145 = tpu.matmul %142, %144, %cst_91 {dimension_numbers = #tpu.dot_dimension_numbers<[1], [0], [0], [1], [0, 0, 1, 1], [], []>} : vector<16x2048xbf16>, vector<2048x128xbf16>, vector<16x128xf32> -> vector<16x128xf32>
    %c1_92 = arith.constant 1 : index
    %c0_93 = arith.constant 0 : index
    %c0_94 = arith.constant 0 : index
    %146 = vector.load %arg13[%c1_92, %c0_93, %c0_94] : memref<2x1x128xf32, #tpu.memory_space<vmem>>, vector<1x1x128xf32>
    %147 = vector.shape_cast %146 : vector<1x1x128xf32> to vector<1x128xf32>
    %148 = vector.broadcast %147 : vector<1x128xf32> to vector<16x128xf32>
    %149 = arith.addf %145, %148 : vector<16x128xf32>
    %150 = arith.addf %131, %149 : vector<16x128xf32>
    %c1_95 = arith.constant 1 : index
    %c0_96 = arith.constant 0 : index
    %c0_97 = arith.constant 0 : index
    %151 = vector.load %arg14[%c1_95, %c0_96, %c0_97] : memref<2x1x128xf32, #tpu.memory_space<vmem>>, vector<1x1x128xf32>
    %152 = vector.shape_cast %151 : vector<1x1x128xf32> to vector<1x128xf32>
    %c1_98 = arith.constant 1 : index
    %c0_99 = arith.constant 0 : index
    %c0_100 = arith.constant 0 : index
    %153 = vector.load %arg15[%c1_98, %c0_99, %c0_100] : memref<2x1x128xf32, #tpu.memory_space<vmem>>, vector<1x1x128xf32>
    %154 = vector.shape_cast %153 : vector<1x1x128xf32> to vector<1x128xf32>
    %cst_101 = arith.constant dense<0.000000e+00> : vector<16xf32>
    %155 = vector.multi_reduction <add>, %150, %cst_101 [1] : vector<16x128xf32> to vector<16xf32>
    %156 = vector.shape_cast %155 : vector<16xf32> to vector<16x1xf32>
    %cst_102 = arith.constant 7.812500e-03 : f32
    %157 = vector.broadcast %cst_102 : f32 to vector<16x1xf32>
    %158 = arith.mulf %156, %157 : vector<16x1xf32>
    %159 = vector.broadcast %158 : vector<16x1xf32> to vector<16x128xf32>
    %160 = arith.subf %150, %159 : vector<16x128xf32>
    %161 = arith.mulf %160, %160 : vector<16x128xf32>
    %cst_103 = arith.constant dense<0.000000e+00> : vector<16xf32>
    %162 = vector.multi_reduction <add>, %161, %cst_103 [1] : vector<16x128xf32> to vector<16xf32>
    %163 = vector.shape_cast %162 : vector<16xf32> to vector<16x1xf32>
    %cst_104 = arith.constant 7.812500e-03 : f32
    %164 = vector.broadcast %cst_104 : f32 to vector<16x1xf32>
    %165 = arith.mulf %163, %164 : vector<16x1xf32>
    %cst_105 = arith.constant 9.99999974E-6 : f32
    %166 = vector.broadcast %cst_105 : f32 to vector<16x1xf32>
    %167 = arith.addf %165, %166 : vector<16x1xf32>
    %168 = math.rsqrt %167 : vector<16x1xf32>
    %169 = vector.broadcast %168 : vector<16x1xf32> to vector<16x128xf32>
    %170 = arith.mulf %160, %169 : vector<16x128xf32>
    %171 = vector.broadcast %152 : vector<1x128xf32> to vector<16x128xf32>
    %172 = arith.mulf %170, %171 : vector<16x128xf32>
    %173 = vector.broadcast %154 : vector<1x128xf32> to vector<16x128xf32>
    %174 = arith.addf %172, %173 : vector<16x128xf32>
    %c0_106 = arith.constant 0 : index
    %c0_107 = arith.constant 0 : index
    %175 = vector.load %arg16[%c0_106, %c0_107] : memref<1x128xf32, #tpu.memory_space<vmem>>, vector<1x128xf32>
    %176 = vector.broadcast %175 : vector<1x128xf32> to vector<16x128xf32>
    %177 = arith.mulf %174, %176 : vector<16x128xf32>
    %cst_108 = arith.constant dense<0.000000e+00> : vector<16xf32>
    %178 = vector.multi_reduction <add>, %177, %cst_108 [1] : vector<16x128xf32> to vector<16xf32>
    %179 = vector.shape_cast %178 : vector<16xf32> to vector<16x1xf32>
    %c0_109 = arith.constant 0 : index
    %c0_110 = arith.constant 0 : index
    %180 = vector.load %arg17[%c0_109, %c0_110] : memref<1x1xf32, #tpu.memory_space<vmem>>, vector<1x1xf32>
    %181 = vector.broadcast %180 : vector<1x1xf32> to vector<16x1xf32>
    %182 = arith.addf %179, %181 : vector<16x1xf32>
    %183 = vector.shape_cast %182 : vector<16x1xf32> to vector<1x1x16xf32>
    %c0_111 = arith.constant 0 : index
    %c0_112 = arith.constant 0 : index
    %c0_113 = arith.constant 0 : index
    %184 = vector.load %arg18[%c0_111, %c0_112, %c0_113] : memref<1x1x16xf32, #tpu.memory_space<vmem>>, vector<1x1x16xf32>
    tpu.vector_store %arg18[%c0_111, %c0_112, %c0_113], %183 {strides = array<i32>} : memref<1x1x16xf32, #tpu.memory_space<vmem>>, vector<1x1x16xf32>,
    return
  }
  func.func @transform_0(%arg0: i32) -> (i32, i32) {
    %c0_i32 = arith.constant 0 : i32
    %c0_i32_0 = arith.constant 0 : i32
    return %arg0, %c0_i32 : i32, i32
  }
  func.func @transform_1(%arg0: i32) -> (i32, i32) {
    %c0_i32 = arith.constant 0 : i32
    %c0_i32_0 = arith.constant 0 : i32
    %c0_i32_1 = arith.constant 0 : i32
    return %c0_i32, %c0_i32_0 : i32, i32
  }
  func.func @transform_2(%arg0: i32) -> (i32, i32) {
    %c0_i32 = arith.constant 0 : i32
    %c0_i32_0 = arith.constant 0 : i32
    %c0_i32_1 = arith.constant 0 : i32
    return %c0_i32, %c0_i32_0 : i32, i32
  }
  func.func @transform_3(%arg0: i32) -> (i32, i32, i32) {
    %c0_i32 = arith.constant 0 : i32
    %c0_i32_0 = arith.constant 0 : i32
    %c0_i32_1 = arith.constant 0 : i32
    %c0_i32_2 = arith.constant 0 : i32
    return %c0_i32, %c0_i32_0, %c0_i32_1 : i32, i32, i32
  }
  func.func @transform_4(%arg0: i32) -> (i32, i32, i32) {
    %c0_i32 = arith.constant 0 : i32
    %c0_i32_0 = arith.constant 0 : i32
    %c0_i32_1 = arith.constant 0 : i32
    %c0_i32_2 = arith.constant 0 : i32
    return %c0_i32, %c0_i32_0, %c0_i32_1 : i32, i32, i32
  }
  func.func @transform_5(%arg0: i32) -> (i32, i32, i32) {
    %c0_i32 = arith.constant 0 : i32
    %c0_i32_0 = arith.constant 0 : i32
    %c0_i32_1 = arith.constant 0 : i32
    %c0_i32_2 = arith.constant 0 : i32
    return %c0_i32, %c0_i32_0, %c0_i32_1 : i32, i32, i32
  }
  func.func @transform_6(%arg0: i32) -> (i32, i32, i32) {
    %c0_i32 = arith.constant 0 : i32
    %c0_i32_0 = arith.constant 0 : i32
    %c0_i32_1 = arith.constant 0 : i32
    %c0_i32_2 = arith.constant 0 : i32
    return %c0_i32, %c0_i32_0, %c0_i32_1 : i32, i32, i32
  }
  func.func @transform_7(%arg0: i32) -> (i32, i32, i32) {
    %c0_i32 = arith.constant 0 : i32
    %c0_i32_0 = arith.constant 0 : i32
    %c0_i32_1 = arith.constant 0 : i32
    %c0_i32_2 = arith.constant 0 : i32
    return %c0_i32, %c0_i32_0, %c0_i32_1 : i32, i32, i32
  }
  func.func @transform_8(%arg0: i32) -> (i32, i32, i32) {
    %c0_i32 = arith.constant 0 : i32
    %c0_i32_0 = arith.constant 0 : i32
    %c0_i32_1 = arith.constant 0 : i32
    %c0_i32_2 = arith.constant 0 : i32
    return %c0_i32, %c0_i32_0, %c0_i32_1 : i32, i32, i32
  }
  func.func @transform_9(%arg0: i32) -> (i32, i32, i32) {
    %c0_i32 = arith.constant 0 : i32
    %c0_i32_0 = arith.constant 0 : i32
    %c0_i32_1 = arith.constant 0 : i32
    %c0_i32_2 = arith.constant 0 : i32
    return %c0_i32, %c0_i32_0, %c0_i32_1 : i32, i32, i32
  }
  func.func @transform_10(%arg0: i32) -> (i32, i32, i32) {
    %c0_i32 = arith.constant 0 : i32
    %c0_i32_0 = arith.constant 0 : i32
    %c0_i32_1 = arith.constant 0 : i32
    %c0_i32_2 = arith.constant 0 : i32
    return %c0_i32, %c0_i32_0, %c0_i32_1 : i32, i32, i32
  }
  func.func @transform_11(%arg0: i32) -> (i32, i32, i32) {
    %c0_i32 = arith.constant 0 : i32
    %c0_i32_0 = arith.constant 0 : i32
    %c0_i32_1 = arith.constant 0 : i32
    %c0_i32_2 = arith.constant 0 : i32
    return %c0_i32, %c0_i32_0, %c0_i32_1 : i32, i32, i32
  }
  func.func @transform_12(%arg0: i32) -> (i32, i32, i32) {
    %c0_i32 = arith.constant 0 : i32
    %c0_i32_0 = arith.constant 0 : i32
    %c0_i32_1 = arith.constant 0 : i32
    %c0_i32_2 = arith.constant 0 : i32
    return %c0_i32, %c0_i32_0, %c0_i32_1 : i32, i32, i32
  }
  func.func @transform_13(%arg0: i32) -> (i32, i32, i32) {
    %c0_i32 = arith.constant 0 : i32
    %c0_i32_0 = arith.constant 0 : i32
    %c0_i32_1 = arith.constant 0 : i32
    %c0_i32_2 = arith.constant 0 : i32
    return %c0_i32, %c0_i32_0, %c0_i32_1 : i32, i32, i32
  }
  func.func @transform_14(%arg0: i32) -> (i32, i32, i32) {
    %c0_i32 = arith.constant 0 : i32
    %c0_i32_0 = arith.constant 0 : i32
    %c0_i32_1 = arith.constant 0 : i32
    %c0_i32_2 = arith.constant 0 : i32
    return %c0_i32, %c0_i32_0, %c0_i32_1 : i32, i32, i32
  }
  func.func @transform_15(%arg0: i32) -> (i32, i32) {
    %c0_i32 = arith.constant 0 : i32
    %c0_i32_0 = arith.constant 0 : i32
    %c0_i32_1 = arith.constant 0 : i32
    return %c0_i32, %c0_i32_0 : i32, i32
  }
  func.func @transform_16(%arg0: i32) -> (i32, i32) {
    %c0_i32 = arith.constant 0 : i32
    %c0_i32_0 = arith.constant 0 : i32
    %c0_i32_1 = arith.constant 0 : i32
    return %c0_i32, %c0_i32_0 : i32, i32
  }
  func.func @transform_17(%arg0: i32) -> (i32, i32, i32) {
    %c0_i32 = arith.constant 0 : i32
    %c0_i32_0 = arith.constant 0 : i32
    %c0_i32_1 = arith.constant 0 : i32
    return %arg0, %c0_i32, %c0_i32_0 : i32, i32, i32
  }
}

</mosaic_0001>

<llo_original>
// kernel: tpu_custom_call.1
$region0: #{tpu_custom_call.1}
  #allocation0 [shape = 'u32[]', space=smem, size = 0x4, offset = 0x4, fixed_abs, tag = 'smem constant byte address 0x4 - core index']
  #allocation1 [shape = 'u32[144,128]{1,0:T(1,128)}', space=vmem, size = 0x12000, scoped, tag = 'internal scratch']
  #allocation2 [shape = 'f32[1,1]{1,0:T(1,128)S(1)}', space=vmem, size = 0x200, scoped, tag = 'scoped memory for tpu_custom_call.1']
  %s0 = inlined_call_operand.hbm [shape: f32[16,41], index: 0, kind: input, shape index: {}]
  %s1 = inlined_call_operand.hbm [shape: bf16[41,128], index: 1, kind: input, shape index: {}]
  %s2 = inlined_call_operand.hbm [shape: f32[1,128], index: 2, kind: input, shape index: {}]
  %s3 = inlined_call_operand.hbm [shape: bf16[2,128,128], index: 3, kind: input, shape index: {}]
  %s4 = inlined_call_operand.hbm [shape: f32[2,1,128], index: 4, kind: input, shape index: {}]
  %s5 = inlined_call_operand.hbm [shape: bf16[2,128,128], index: 5, kind: input, shape index: {}]
  %s6 = inlined_call_operand.hbm [shape: f32[2,1,128], index: 6, kind: input, shape index: {}]
  %s7 = inlined_call_operand.hbm [shape: f32[2,1,128], index: 7, kind: input, shape index: {}]
  %s8 = inlined_call_operand.hbm [shape: f32[2,1,128], index: 8, kind: input, shape index: {}]
  %s9 = inlined_call_operand.hbm [shape: bf16[2,128,2048], index: 9, kind: input, shape index: {}]
  %s10 = inlined_call_operand.hbm [shape: f32[2,1,2048], index: 10, kind: input, shape index: {}]
  %s11 = inlined_call_operand.hbm [shape: bf16[2,2048,128], index: 11, kind: input, shape index: {}]
  %s12 = inlined_call_operand.hbm [shape: f32[2,1,128], index: 12, kind: input, shape index: {}]
  %s13 = inlined_call_operand.hbm [shape: f32[2,1,128], index: 13, kind: input, shape index: {}]
  %s14 = inlined_call_operand.hbm [shape: f32[2,1,128], index: 14, kind: input, shape index: {}]
  %s15 = inlined_call_operand.hbm [shape: f32[1,128], index: 15, kind: input, shape index: {}]
  %s16 = inlined_call_operand.<no memory space> [shape: f32[1,1], index: 16, kind: input, shape index: {}]
  %s17 = inlined_call_operand.hbm [shape: f32[1,1,16], index: 17, kind: output, shape index: {}]
  %s18 = sld [smem:[#allocation0]]
  $region142: #{tpu_custom_call.1} parent=0
    _
  %s20 = ssub.s32 1, %s18
  %s21 = scalar_select 0, %s20, %s18
  %v22 = vstv %s16
  %23 = vst [vmem:[#allocation2] sm:$0x1] %v22
  $region1: #{tpu_custom_call.1} parent=0
    #allocation3 [shape = 'u8[8192]{0}', space=vmem, size = 0x2000, scoped, tag = 'input window, operand 0, single buffered']
    #allocation4 [shape = 's32[1]{0}', space=sflag, size = 0x4, scoped, tag = 'scoped memory for tpu_custom_call.1']
    #allocation5 [shape = 's32[1]{0}', space=sflag, size = 0x4, scoped, tag = 'scoped memory for tpu_custom_call.1']
    #allocation6 [shape = 'u8[12288]{0}', space=vmem, size = 0x3000, scoped, tag = 'input window, operand 1, single buffered']
    #allocation7 [shape = 's32[1]{0}', space=sflag, size = 0x4, scoped, tag = 'scoped memory for tpu_custom_call.1']
    #allocation8 [shape = 'u8[512]{0}', space=vmem, size = 0x400, scoped, tag = 'input window, operand 2, single buffered']
    #allocation9 [shape = 'u8[65536]{0}', space=vmem, size = 0x10000, scoped, tag = 'input window, operand 3, single buffered']
    #allocation10 [shape = 's32[1]{0}', space=sflag, size = 0x4, scoped, tag = 'scoped memory for tpu_custom_call.1']
    #allocation11 [shape = 'u8[1024]{0}', space=vmem, size = 0x400, scoped, tag = 'input window, operand 4, single buffered']
    #allocation12 [shape = 'u8[65536]{0}', space=vmem, size = 0x10000, scoped, tag = 'input window, operand 5, single buffered']
    #allocation13 [shape = 's32[1]{0}', space=sflag, size = 0x4, scoped, tag = 'scoped memory for tpu_custom_call.1']
    #allocation14 [shape = 'u8[1024]{0}', space=vmem, size = 0x400, scoped, tag = 'input window, operand 6, single buffered']
    #allocation15 [shape = 'u8[1024]{0}', space=vmem, size = 0x400, scoped, tag = 'input window, operand 7, single buffered']
    #allocation16 [shape = 's32[1]{0}', space=sflag, size = 0x4, scoped, tag = 'scoped memory for tpu_custom_call.1']
    #allocation17 [shape = 'u8[1024]{0}', space=vmem, size = 0x400, scoped, tag = 'input window, operand 8, single buffered']
    #allocation18 [shape = 'u8[1048576]{0}', space=vmem, size = 0x100000, scoped, tag = 'input window, operand 9, single buffered']
    #allocation19 [shape = 's32[1]{0}', space=sflag, size = 0x4, scoped, tag = 'scoped memory for tpu_custom_call.1']
    #allocation20 [shape = 'u8[16384]{0}', space=vmem, size = 0x4000, scoped, tag = 'input window, operand 10, single buffered']
    #allocation21 [shape = 'u8[1048576]{0}', space=vmem, size = 0x100000, scoped, tag = 'input window, operand 11, single buffered']
    #allocation22 [shape = 's32[1]{0}', space=sflag, size = 0x4, scoped, tag = 'scoped memory for tpu_custom_call.1']
    #allocation23 [shape = 'u8[1024]{0}', space=vmem, size = 0x400, scoped, tag = 'input window, operand 12, single buffered']
    #allocation24 [shape = 'u8[1024]{0}', space=vmem, size = 0x400, scoped, tag = 'input window, operand 13, single buffered']
    #allocation25 [shape = 's32[1]{0}', space=sflag, size = 0x4, scoped, tag = 'scoped memory for tpu_custom_call.1']
    #allocation26 [shape = 'u8[1024]{0}', space=vmem, size = 0x400, scoped, tag = 'input window, operand 14, single buffered']
    #allocation27 [shape = 'u8[512]{0}', space=vmem, size = 0x400, scoped, tag = 'input window, operand 15, single buffered']
    #allocation28 [shape = 's32[1]{0}', space=sflag, size = 0x4, scoped, tag = 'scoped memory for tpu_custom_call.1']
    #allocation29 [shape = 'u8[512]{0}', space=vmem, size = 0x400, scoped, tag = 'output window, operand 0, single buffered']
    %24 = vsyncpa [#allocation4], 0
    %25 = vsyncpa [#allocation7], 0
    %26 = vsyncpa [#allocation10], 0
    %27 = vsyncpa [#allocation13], 0
    %28 = vsyncpa [#allocation16], 0
    %29 = vsyncpa [#allocation19], 0
    %30 = vsyncpa [#allocation22], 0
    %31 = vsyncpa [#allocation25], 0
    %32 = vsyncpa [#allocation28], 0
    %33 = vsyncpa [#allocation5], 0
    // Predicated region
    $region2: #{tpu_custom_call.1} parent=1 // pred_check
      _
    $region3: #{tpu_custom_call.1} parent=1 // pred_check_branch
      %35 = sbr.rel (0) target = $region5
    $region4: #{tpu_custom_call.1} parent=1 // pred_region
      %s37 = ssub.s32 256, 256
      %38 = vsyncadd [#allocation4], %s37
      %s39 = sshll.u32 [#allocation3], 4
      %s40 = int_to_ptr.vmem [resolvable:$true] %s39
      %45 = dma.hbm_to_vmem [thread:$0]  %s0, 256, %s40, [#allocation4], 128, 128, 8
    $region5: #{tpu_custom_call.1} parent=1 // pred_fallthru
      _
    // Predicated region
    $region6: #{tpu_custom_call.1} parent=1 // pred_check
      _
    $region7: #{tpu_custom_call.1} parent=1 // pred_check_branch
      %47 = sbr.rel (0) target = $region9
    $region8: #{tpu_custom_call.1} parent=1 // pred_region
      %s49 = ssub.s32 384, 384
      %50 = vsyncadd [#allocation7], %s49
      %s51 = sshll.u32 [#allocation6], 4
      %s52 = int_to_ptr.vmem [resolvable:$true] %s51
      %57 = dma.hbm_to_vmem [thread:$0]  %s1, 384, %s52, [#allocation7], 64, 64, 4
    $region9: #{tpu_custom_call.1} parent=1 // pred_fallthru
      _
    // Predicated region
    $region10: #{tpu_custom_call.1} parent=1 // pred_check
      _
    $region11: #{tpu_custom_call.1} parent=1 // pred_check_branch
      %59 = sbr.rel (0) target = $region13
    $region12: #{tpu_custom_call.1} parent=1 // pred_region
      %s61 = ssub.s32 16, 16
      %62 = vsyncadd [#allocation7], %s61
      %s64 = sshll.u32 [#allocation8], 4
      %s65 = int_to_ptr.vmem [resolvable:$true] %s64
      %67 = dma.hbm_to_vmem [thread:$0]  %s2, 16, %s65, [#allocation7]
    $region13: #{tpu_custom_call.1} parent=1 // pred_fallthru
      _
    // Predicated region
    $region14: #{tpu_custom_call.1} parent=1 // pred_check
      _
    $region15: #{tpu_custom_call.1} parent=1 // pred_check_branch
      %69 = sbr.rel (0) target = $region17
    $region16: #{tpu_custom_call.1} parent=1 // pred_region
      %s71 = ssub.s32 2048, 2048
      %72 = vsyncadd [#allocation10], %s71
      %s73 = sshll.u32 [#allocation9], 4
      %s74 = int_to_ptr.vmem [resolvable:$true] %s73
      %79 = dma.hbm_to_vmem [thread:$0]  %s3, 2048, %s74, [#allocation10], 64, 64, 4
    $region17: #{tpu_custom_call.1} parent=1 // pred_fallthru
      _
    // Predicated region
    $region18: #{tpu_custom_call.1} parent=1 // pred_check
      _
    $region19: #{tpu_custom_call.1} parent=1 // pred_check_branch
      %81 = sbr.rel (0) target = $region21
    $region20: #{tpu_custom_call.1} parent=1 // pred_region
      %s83 = ssub.s32 32, 32
      %84 = vsyncadd [#allocation10], %s83
      %s85 = sshll.u32 [#allocation11], 4
      %s86 = int_to_ptr.vmem [resolvable:$true] %s85
      %91 = dma.hbm_to_vmem [thread:$0]  %s4, 32, %s86, [#allocation10], 16, 16, 1
    $region21: #{tpu_custom_call.1} parent=1 // pred_fallthru
      _
    // Predicated region
    $region22: #{tpu_custom_call.1} parent=1 // pred_check
      _
    $region23: #{tpu_custom_call.1} parent=1 // pred_check_branch
      %93 = sbr.rel (0) target = $region25
    $region24: #{tpu_custom_call.1} parent=1 // pred_region
      %s95 = ssub.s32 2048, 2048
      %96 = vsyncadd [#allocation13], %s95
      %s97 = sshll.u32 [#allocation12], 4
      %s98 = int_to_ptr.vmem [resolvable:$true] %s97
      %103 = dma.hbm_to_vmem [thread:$0]  %s5, 2048, %s98, [#allocation13], 64, 64, 4
    $region25: #{tpu_custom_call.1} parent=1 // pred_fallthru
      _
    // Predicated region
    $region26: #{tpu_custom_call.1} parent=1 // pred_check
      _
    $region27: #{tpu_custom_call.1} parent=1 // pred_check_branch
      %105 = sbr.rel (0) target = $region29
    $region28: #{tpu_custom_call.1} parent=1 // pred_region
      %s107 = ssub.s32 32, 32
      %108 = vsyncadd [#allocation13], %s107
      %s109 = sshll.u32 [#allocation14], 4
      %s110 = int_to_ptr.vmem [resolvable:$true] %s109
      %115 = dma.hbm_to_vmem [thread:$0]  %s6, 32, %s110, [#allocation13], 16, 16, 1
    $region29: #{tpu_custom_call.1} parent=1 // pred_fallthru
      _
    // Predicated region
    $region30: #{tpu_custom_call.1} parent=1 // pred_check
      _
    $region31: #{tpu_custom_call.1} parent=1 // pred_check_branch
      %117 = sbr.rel (0) target = $region33
    $region32: #{tpu_custom_call.1} parent=1 // pred_region
      %s119 = ssub.s32 32, 32
      %120 = vsyncadd [#allocation16], %s119
      %s121 = sshll.u32 [#allocation15], 4
      %s122 = int_to_ptr.vmem [resolvable:$true] %s121
      %127 = dma.hbm_to_vmem [thread:$0]  %s7, 32, %s122, [#allocation16], 16, 16, 1
    $region33: #{tpu_custom_call.1} parent=1 // pred_fallthru
      _
    // Predicated region
    $region34: #{tpu_custom_call.1} parent=1 // pred_check
      _
    $region35: #{tpu_custom_call.1} parent=1 // pred_check_branch
      %129 = sbr.rel (0) target = $region37
    $region36: #{tpu_custom_call.1} parent=1 // pred_region
      %s131 = ssub.s32 32, 32
      %132 = vsyncadd [#allocation16], %s131
      %s133 = sshll.u32 [#allocation17], 4
      %s134 = int_to_ptr.vmem [resolvable:$true] %s133
      %139 = dma.hbm_to_vmem [thread:$0]  %s8, 32, %s134, [#allocation16], 16, 16, 1
    $region37: #{tpu_custom_call.1} parent=1 // pred_fallthru
      _
    // Predicated region
    $region38: #{tpu_custom_call.1} parent=1 // pred_check
      _
    $region39: #{tpu_custom_call.1} parent=1 // pred_check_branch
      %141 = sbr.rel (0) target = $region41
    $region40: #{tpu_custom_call.1} parent=1 // pred_region
      %s143 = ssub.s32 32768, 32768
      %144 = vsyncadd [#allocation19], %s143
      %s145 = sshll.u32 [#allocation18], 4
      %s146 = int_to_ptr.vmem [resolvable:$true] %s145
      %151 = dma.hbm_to_vmem [thread:$0]  %s9, 32768, %s146, [#allocation19], 1024, 1024, 64
    $region41: #{tpu_custom_call.1} parent=1 // pred_fallthru
      _
    // Predicated region
    $region42: #{tpu_custom_call.1} parent=1 // pred_check
      _
    $region43: #{tpu_custom_call.1} parent=1 // pred_check_branch
      %153 = sbr.rel (0) target = $region45
    $region44: #{tpu_custom_call.1} parent=1 // pred_region
      %s155 = ssub.s32 512, 512
      %156 = vsyncadd [#allocation19], %s155
      %s157 = sshll.u32 [#allocation20], 4
      %s158 = int_to_ptr.vmem [resolvable:$true] %s157
      %163 = dma.hbm_to_vmem [thread:$0]  %s10, 512, %s158, [#allocation19], 256, 256, 16
    $region45: #{tpu_custom_call.1} parent=1 // pred_fallthru
      _
    // Predicated region
    $region46: #{tpu_custom_call.1} parent=1 // pred_check
      _
    $region47: #{tpu_custom_call.1} parent=1 // pred_check_branch
      %165 = sbr.rel (0) target = $region49
    $region48: #{tpu_custom_call.1} parent=1 // pred_region
      %s167 = ssub.s32 32768, 32768
      %168 = vsyncadd [#allocation22], %s167
      %s169 = sshll.u32 [#allocation21], 4
      %s170 = int_to_ptr.vmem [resolvable:$true] %s169
      %175 = dma.hbm_to_vmem [thread:$0]  %s11, 32768, %s170, [#allocation22], 64, 64, 4
    $region49: #{tpu_custom_call.1} parent=1 // pred_fallthru
      _
    // Predicated region
    $region50: #{tpu_custom_call.1} parent=1 // pred_check
      _
    $region51: #{tpu_custom_call.1} parent=1 // pred_check_branch
      %177 = sbr.rel (0) target = $region53
    $region52: #{tpu_custom_call.1} parent=1 // pred_region
      %s179 = ssub.s32 32, 32
      %180 = vsyncadd [#allocation22], %s179
      %s181 = sshll.u32 [#allocation23], 4
      %s182 = int_to_ptr.vmem [resolvable:$true] %s181
      %187 = dma.hbm_to_vmem [thread:$0]  %s12, 32, %s182, [#allocation22], 16, 16, 1
    $region53: #{tpu_custom_call.1} parent=1 // pred_fallthru
      _
    // Predicated region
    $region54: #{tpu_custom_call.1} parent=1 // pred_check
      _
    $region55: #{tpu_custom_call.1} parent=1 // pred_check_branch
      %189 = sbr.rel (0) target = $region57
    $region56: #{tpu_custom_call.1} parent=1 // pred_region
      %s191 = ssub.s32 32, 32
      %192 = vsyncadd [#allocation25], %s191
      %s193 = sshll.u32 [#allocation24], 4
      %s194 = int_to_ptr.vmem [resolvable:$true] %s193
      %199 = dma.hbm_to_vmem [thread:$0]  %s13, 32, %s194, [#allocation25], 16, 16, 1
    $region57: #{tpu_custom_call.1} parent=1 // pred_fallthru
      _
    // Predicated region
    $region58: #{tpu_custom_call.1} parent=1 // pred_check
      _
    $region59: #{tpu_custom_call.1} parent=1 // pred_check_branch
      %201 = sbr.rel (0) target = $region61
    $region60: #{tpu_custom_call.1} parent=1 // pred_region
      %s203 = ssub.s32 32, 32
      %204 = vsyncadd [#allocation25], %s203
      %s205 = sshll.u32 [#allocation26], 4
      %s206 = int_to_ptr.vmem [resolvable:$true] %s205
      %211 = dma.hbm_to_vmem [thread:$0]  %s14, 32, %s206, [#allocation25], 16, 16, 1
    $region61: #{tpu_custom_call.1} parent=1 // pred_fallthru
      _
    // Predicated region
    $region62: #{tpu_custom_call.1} parent=1 // pred_check
      _
    $region63: #{tpu_custom_call.1} parent=1 // pred_check_branch
      %213 = sbr.rel (0) target = $region65
    $region64: #{tpu_custom_call.1} parent=1 // pred_region
      %s215 = ssub.s32 16, 16
      %216 = vsyncadd [#allocation28], %s215
      %s218 = sshll.u32 [#allocation27], 4
      %s219 = int_to_ptr.vmem [resolvable:$true] %s218
      %221 = dma.hbm_to_vmem [thread:$0]  %s15, 16, %s219, [#allocation28]
    $region65: #{tpu_custom_call.1} parent=1 // pred_fallthru
      _
    // Predicated region
    $region66: #{tpu_custom_call.1} parent=1 // pred_check
      _
    $region67: #{tpu_custom_call.1} parent=1 // pred_check_branch
      %223 = sbr.rel (0) target = $region69
    $region68: #{tpu_custom_call.1} parent=1 // pred_region
      _
    $region69: #{tpu_custom_call.1} parent=1 // pred_fallthru
      _
    // Predicated region
    $region70: #{tpu_custom_call.1} parent=1 // pred_check
      _
    $region71: #{tpu_custom_call.1} parent=1 // pred_check_branch
      %225 = sbr.rel (0) target = $region73
    $region72: #{tpu_custom_call.1} parent=1 // pred_region
      %226 = dma.done [#allocation4], 256
    $region73: #{tpu_custom_call.1} parent=1 // pred_fallthru
      _
    // Predicated region
    $region74: #{tpu_custom_call.1} parent=1 // pred_check
      _
    $region75: #{tpu_custom_call.1} parent=1 // pred_check_branch
      %228 = sbr.rel (0) target = $region77
    $region76: #{tpu_custom_call.1} parent=1 // pred_region
      %229 = dma.done [#allocation7], 384
    $region77: #{tpu_custom_call.1} parent=1 // pred_fallthru
      _
    // Predicated region
    $region78: #{tpu_custom_call.1} parent=1 // pred_check
      _
    $region79: #{tpu_custom_call.1} parent=1 // pred_check_branch
      %231 = sbr.rel (0) target = $region81
    $region80: #{tpu_custom_call.1} parent=1 // pred_region
      %232 = dma.done [#allocation7], 16
    $region81: #{tpu_custom_call.1} parent=1 // pred_fallthru
      _
    // Predicated region
    $region82: #{tpu_custom_call.1} parent=1 // pred_check
      _
    $region83: #{tpu_custom_call.1} parent=1 // pred_check_branch
      %234 = sbr.rel (0) target = $region85
    $region84: #{tpu_custom_call.1} parent=1 // pred_region
      %235 = dma.done [#allocation10], 2048
    $region85: #{tpu_custom_call.1} parent=1 // pred_fallthru
      _
    // Predicated region
    $region86: #{tpu_custom_call.1} parent=1 // pred_check
      _
    $region87: #{tpu_custom_call.1} parent=1 // pred_check_branch
      %237 = sbr.rel (0) target = $region89
    $region88: #{tpu_custom_call.1} parent=1 // pred_region
      %238 = dma.done [#allocation10], 32
    $region89: #{tpu_custom_call.1} parent=1 // pred_fallthru
      _
    // Predicated region
    $region90: #{tpu_custom_call.1} parent=1 // pred_check
      _
    $region91: #{tpu_custom_call.1} parent=1 // pred_check_branch
      %240 = sbr.rel (0) target = $region93
    $region92: #{tpu_custom_call.1} parent=1 // pred_region
      %241 = dma.done [#allocation13], 2048
    $region93: #{tpu_custom_call.1} parent=1 // pred_fallthru
      _
    // Predicated region
    $region94: #{tpu_custom_call.1} parent=1 // pred_check
      _
    $region95: #{tpu_custom_call.1} parent=1 // pred_check_branch
      %243 = sbr.rel (0) target = $region97
    $region96: #{tpu_custom_call.1} parent=1 // pred_region
      %244 = dma.done [#allocation13], 32
    $region97: #{tpu_custom_call.1} parent=1 // pred_fallthru
      _
    // Predicated region
    $region98: #{tpu_custom_call.1} parent=1 // pred_check
      _
    $region99: #{tpu_custom_call.1} parent=1 // pred_check_branch
      %246 = sbr.rel (0) target = $region101
    $region100: #{tpu_custom_call.1} parent=1 // pred_region
      %247 = dma.done [#allocation16], 32
    $region101: #{tpu_custom_call.1} parent=1 // pred_fallthru
      _
    // Predicated region
    $region102: #{tpu_custom_call.1} parent=1 // pred_check
      _
    $region103: #{tpu_custom_call.1} parent=1 // pred_check_branch
      %249 = sbr.rel (0) target = $region105
    $region104: #{tpu_custom_call.1} parent=1 // pred_region
      %250 = dma.done [#allocation16], 32
    $region105: #{tpu_custom_call.1} parent=1 // pred_fallthru
      _
    // Predicated region
    $region106: #{tpu_custom_call.1} parent=1 // pred_check
      _
    $region107: #{tpu_custom_call.1} parent=1 // pred_check_branch
      %252 = sbr.rel (0) target = $region109
    $region108: #{tpu_custom_call.1} parent=1 // pred_region
      %253 = dma.done [#allocation19], 32768
    $region109: #{tpu_custom_call.1} parent=1 // pred_fallthru
      _
    // Predicated region
    $region110: #{tpu_custom_call.1} parent=1 // pred_check
      _
    $region111: #{tpu_custom_call.1} parent=1 // pred_check_branch
      %255 = sbr.rel (0) target = $region113
    $region112: #{tpu_custom_call.1} parent=1 // pred_region
      %256 = dma.done [#allocation19], 512
    $region113: #{tpu_custom_call.1} parent=1 // pred_fallthru
      _
    // Predicated region
    $region114: #{tpu_custom_call.1} parent=1 // pred_check
      _
    $region115: #{tpu_custom_call.1} parent=1 // pred_check_branch
      %258 = sbr.rel (0) target = $region117
    $region116: #{tpu_custom_call.1} parent=1 // pred_region
      %259 = dma.done [#allocation22], 32768
    $region117: #{tpu_custom_call.1} parent=1 // pred_fallthru
      _
    // Predicated region
    $region118: #{tpu_custom_call.1} parent=1 // pred_check
      _
    $region119: #{tpu_custom_call.1} parent=1 // pred_check_branch
      %261 = sbr.rel (0) target = $region121
    $region120: #{tpu_custom_call.1} parent=1 // pred_region
      %262 = dma.done [#allocation22], 32
    $region121: #{tpu_custom_call.1} parent=1 // pred_fallthru
      _
    // Predicated region
    $region122: #{tpu_custom_call.1} parent=1 // pred_check
      _
    $region123: #{tpu_custom_call.1} parent=1 // pred_check_branch
      %264 = sbr.rel (0) target = $region125
    $region124: #{tpu_custom_call.1} parent=1 // pred_region
      %265 = dma.done [#allocation25], 32
    $region125: #{tpu_custom_call.1} parent=1 // pred_fallthru
      _
    // Predicated region
    $region126: #{tpu_custom_call.1} parent=1 // pred_check
      _
    $region127: #{tpu_custom_call.1} parent=1 // pred_check_branch
      %267 = sbr.rel (0) target = $region129
    $region128: #{tpu_custom_call.1} parent=1 // pred_region
      %268 = dma.done [#allocation25], 32
    $region129: #{tpu_custom_call.1} parent=1 // pred_fallthru
      _
    // Predicated region
    $region130: #{tpu_custom_call.1} parent=1 // pred_check
      _
    $region131: #{tpu_custom_call.1} parent=1 // pred_check_branch
      %270 = sbr.rel (0) target = $region133
    $region132: #{tpu_custom_call.1} parent=1 // pred_region
      %271 = dma.done [#allocation28], 16
    $region133: #{tpu_custom_call.1} parent=1 // pred_fallthru
      _
    %v273 = vld [vmem:[#allocation3] sm:$0xff]
    %v274 = vld [vmem:[#allocation3 + $0x8] sm:$0xff]
    %v275 = vpack.c.bf16 %v274, %v273
    %v276 = vld [vmem:[#allocation6] sm:$0xf]
    %v277 = vld [vmem:[#allocation6 + $0x4] sm:$0xf]
    %v278 = vld [vmem:[#allocation6 + $0x8] sm:$0xf]
    %v279 = vld [vmem:[#allocation6 + $0xc] sm:$0xf]
    %v280 = vld [vmem:[#allocation6 + $0x10] sm:$0xf]
    %v281 = vld [vmem:[#allocation6 + $0x14] sm:$0x1]
    %v282 = vld [vmem:[#allocation8] sm:$0x1]
    %v284 = vlaneseq
    %v285 = vshrl.u32 %v284, 7
    %v286 = vsub.s32 0, %v285
    %v287 = vrot.slane %v282, %v286
    %v295 = vunpack.c.l.b16 %v276
    %v296 = vunpack.c.l.b16 %v277
    %v297 = vunpack.c.l.b16 %v278
    %v298 = vunpack.c.l.b16 %v279
    %v299 = vunpack.c.l.b16 %v280
    %v300 = vunpack.c.l.b16 %v281
    %v301 = vpack.c.b16 %v296, %v295
    %v302 = vpack.c.b16 %v298, %v297
    %v303 = vpack.c.b16 %v300, %v299
    %vm306 = vcmask 334848
    %v308 = vsel %vm306, %v275, 0
    %vm310 = vcmask 1043456
    %vm311 = vcmask 1044480
    %v312 = vsel %vm310, 4294967295, 65535
    %v313 = vsel %vm311, %v312, 0
    %v315 = vand.u32 %v303, %v313
    %317 = vmatprep.subr.bf16.mxu0 0
    %318 = vmatpush1.bf16.msra.mxu0 %v301
    %319 = vmatprep.subr.bf16.mxu0 0
    %320 = vmatpush1.bf16.msra.mxu0 %v302
    %321 = vmatprep.subr.bf16.mxu0 0
    %322 = vmatpush1.bf16.msra.mxu0 %v315
    %323 = vmatprep.subr.bf16.mxu0 0
    %324 = vmatpush1.bf16.msra.mxu0 0
    %325 = vmatprep.subr.bf16.mxu0 0
    %326 = vmatpush1.bf16.msra.mxu0 0
    %327 = vmatprep.subr.bf16.mxu0 0
    %328 = vmatpush1.bf16.msra.mxu0 0
    %329 = vmatprep.subr.bf16.mxu0 0
    %330 = vmatpush1.bf16.msra.mxu0 0
    %331 = vmatprep.subr.bf16.mxu0 0
    %332 = vmatpush1.bf16.msra.mxu0 0
    %333 = vmatprep.subr.bf16.mxu0 0
    %334 = vmatpush1.bf16.msra.mxu0 0
    %335 = vmatprep.subr.bf16.mxu0 0
    %336 = vmatpush1.bf16.msra.mxu0 0
    %337 = vmatprep.subr.bf16.mxu0 0
    %338 = vmatpush1.bf16.msra.mxu0 0
    %339 = vmatprep.subr.bf16.mxu0 0
    %340 = vmatpush1.bf16.msra.mxu0 0
    %341 = vmatprep.subr.bf16.mxu0 0
    %342 = vmatpush1.bf16.msra.mxu0 0
    %343 = vmatprep.subr.bf16.mxu0 0
    %344 = vmatpush1.bf16.msra.mxu0 0
    %345 = vmatprep.subr.bf16.mxu0 0
    %346 = vmatpush1.bf16.msra.mxu0 0
    %347 = vmatprep.subr.bf16.mxu0 0
    %348 = vmatpush1.bf16.msra.mxu0 0
    %349 = vmatprep.mubr.bf16.mxu0 0
    %350 = vmatmul.mubr.bf16.gmra.mrb[0].mxu0 %v308
    %v351 = vpop.f32.mrb[0].mxu0
    %v352 = vadd.f32 %v287, %v351
    %v353 = vpop.f32.mrb[0].mxu0
    %v354 = vpop.f32.mrb[0].mxu0
    %v355 = vadd.f32 %v287, %v354
    %v356 = vpop.f32.mrb[0].mxu0
    %357 = vdwg.mxu0
    %v358 = vpack.c.bf16 %v355, %v352
    %v359 = vld [vmem:[#allocation9] sm:$0xf]
    %v360 = vld [vmem:[#allocation9 + $0x4] sm:$0xf]
    %v361 = vld [vmem:[#allocation9 + $0x8] sm:$0xf]
    %v362 = vld [vmem:[#allocation9 + $0xc] sm:$0xf]
    %v363 = vld [vmem:[#allocation9 + $0x10] sm:$0xf]
    %v364 = vld [vmem:[#allocation9 + $0x14] sm:$0xf]
    %v365 = vld [vmem:[#allocation9 + $0x18] sm:$0xf]
    %v366 = vld [vmem:[#allocation9 + $0x1c] sm:$0xf]
    %v367 = vld [vmem:[#allocation9 + $0x20] sm:$0xf]
    %v368 = vld [vmem:[#allocation9 + $0x24] sm:$0xf]
    %v369 = vld [vmem:[#allocation9 + $0x28] sm:$0xf]
    %v370 = vld [vmem:[#allocation9 + $0x2c] sm:$0xf]
    %v371 = vld [vmem:[#allocation9 + $0x30] sm:$0xf]
    %v372 = vld [vmem:[#allocation9 + $0x34] sm:$0xf]
    %v373 = vld [vmem:[#allocation9 + $0x38] sm:$0xf]
    %v374 = vld [vmem:[#allocation9 + $0x3c] sm:$0xf]
    %v375 = vld [vmem:[#allocation11] sm:$0x1]
    %v377 = vlaneseq
    %v378 = vshrl.u32 %v377, 7
    %v379 = vsub.s32 0, %v378
    %v380 = vrot.slane %v375, %v379
    %v398 = vunpack.c.l.b16 %v359
    %v399 = vunpack.c.l.b16 %v360
    %v400 = vunpack.c.l.b16 %v361
    %v401 = vunpack.c.l.b16 %v362
    %v402 = vunpack.c.l.b16 %v363
    %v403 = vunpack.c.l.b16 %v364
    %v404 = vunpack.c.l.b16 %v365
    %v405 = vunpack.c.l.b16 %v366
    %v406 = vunpack.c.l.b16 %v367
    %v407 = vunpack.c.l.b16 %v368
    %v408 = vunpack.c.l.b16 %v369
    %v409 = vunpack.c.l.b16 %v370
    %v410 = vunpack.c.l.b16 %v371
    %v411 = vunpack.c.l.b16 %v372
    %v412 = vunpack.c.l.b16 %v373
    %v413 = vunpack.c.l.b16 %v374
    %v414 = vpack.c.b16 %v399, %v398
    %v415 = vpack.c.b16 %v401, %v400
    %v416 = vpack.c.b16 %v403, %v402
    %v417 = vpack.c.b16 %v405, %v404
    %v418 = vpack.c.b16 %v407, %v406
    %v419 = vpack.c.b16 %v409, %v408
    %v420 = vpack.c.b16 %v411, %v410
    %v421 = vpack.c.b16 %v413, %v412
    %430 = vmatprep.subr.bf16.mxu0 0
    %431 = vmatpush1.bf16.msra.mxu0 %v414
    %432 = vmatprep.subr.bf16.mxu0 0
    %433 = vmatpush1.bf16.msra.mxu0 %v415
    %434 = vmatprep.subr.bf16.mxu0 0
    %435 = vmatpush1.bf16.msra.mxu0 %v416
    %436 = vmatprep.subr.bf16.mxu0 0
    %437 = vmatpush1.bf16.msra.mxu0 %v417
    %438 = vmatprep.subr.bf16.mxu0 0
    %439 = vmatpush1.bf16.msra.mxu0 %v418
    %440 = vmatprep.subr.bf16.mxu0 0
    %441 = vmatpush1.bf16.msra.mxu0 %v419
    %442 = vmatprep.subr.bf16.mxu0 0
    %443 = vmatpush1.bf16.msra.mxu0 %v420
    %444 = vmatprep.subr.bf16.mxu0 0
    %445 = vmatpush1.bf16.msra.mxu0 %v421
    %446 = vmatprep.subr.bf16.mxu0 0
    %447 = vmatpush1.bf16.msra.mxu0 0
    %448 = vmatprep.subr.bf16.mxu0 0
    %449 = vmatpush1.bf16.msra.mxu0 0
    %450 = vmatprep.subr.bf16.mxu0 0
    %451 = vmatpush1.bf16.msra.mxu0 0
    %452 = vmatprep.subr.bf16.mxu0 0
    %453 = vmatpush1.bf16.msra.mxu0 0
    %454 = vmatprep.subr.bf16.mxu0 0
    %455 = vmatpush1.bf16.msra.mxu0 0
    %456 = vmatprep.subr.bf16.mxu0 0
    %457 = vmatpush1.bf16.msra.mxu0 0
    %458 = vmatprep.subr.bf16.mxu0 0
    %459 = vmatpush1.bf16.msra.mxu0 0
    %460 = vmatprep.subr.bf16.mxu0 0
    %461 = vmatpush1.bf16.msra.mxu0 0
    %462 = vmatprep.mubr.bf16.mxu0 0
    %463 = vmatmul.mubr.bf16.gmra.mrb[0].mxu0 %v358
    %v464 = vpop.f32.mrb[0].mxu0
    %v465 = vadd.f32 %v380, %v464
    %v466 = vpop.f32.mrb[0].mxu0
    %v467 = vpop.f32.mrb[0].mxu0
    %v468 = vadd.f32 %v380, %v467
    %v469 = vpop.f32.mrb[0].mxu0
    %470 = vdwg.mxu0
    %v471 = vpack.c.bf16 %v468, %v465
    %v472 = vld [vmem:[#allocation12] sm:$0xf]
    %v473 = vld [vmem:[#allocation12 + $0x4] sm:$0xf]
    %v474 = vld [vmem:[#allocation12 + $0x8] sm:$0xf]
    %v475 = vld [vmem:[#allocation12 + $0xc] sm:$0xf]
    %v476 = vld [vmem:[#allocation12 + $0x10] sm:$0xf]
    %v477 = vld [vmem:[#allocation12 + $0x14] sm:$0xf]
    %v478 = vld [vmem:[#allocation12 + $0x18] sm:$0xf]
    %v479 = vld [vmem:[#allocation12 + $0x1c] sm:$0xf]
    %v480 = vld [vmem:[#allocation12 + $0x20] sm:$0xf]
    %v481 = vld [vmem:[#allocation12 + $0x24] sm:$0xf]
    %v482 = vld [vmem:[#allocation12 + $0x28] sm:$0xf]
    %v483 = vld [vmem:[#allocation12 + $0x2c] sm:$0xf]
    %v484 = vld [vmem:[#allocation12 + $0x30] sm:$0xf]
    %v485 = vld [vmem:[#allocation12 + $0x34] sm:$0xf]
    %v486 = vld [vmem:[#allocation12 + $0x38] sm:$0xf]
    %v487 = vld [vmem:[#allocation12 + $0x3c] sm:$0xf]
    %v488 = vld [vmem:[#allocation14] sm:$0x1]
    %v490 = vlaneseq
    %v491 = vshrl.u32 %v490, 7
    %v492 = vsub.s32 0, %v491
    %v493 = vrot.slane %v488, %v492
    %v511 = vunpack.c.l.b16 %v472
    %v512 = vunpack.c.l.b16 %v473
    %v513 = vunpack.c.l.b16 %v474
    %v514 = vunpack.c.l.b16 %v475
    %v515 = vunpack.c.l.b16 %v476
    %v516 = vunpack.c.l.b16 %v477
    %v517 = vunpack.c.l.b16 %v478
    %v518 = vunpack.c.l.b16 %v479
    %v519 = vunpack.c.l.b16 %v480
    %v520 = vunpack.c.l.b16 %v481
    %v521 = vunpack.c.l.b16 %v482
    %v522 = vunpack.c.l.b16 %v483
    %v523 = vunpack.c.l.b16 %v484
    %v524 = vunpack.c.l.b16 %v485
    %v525 = vunpack.c.l.b16 %v486
    %v526 = vunpack.c.l.b16 %v487
    %v527 = vpack.c.b16 %v512, %v511
    %v528 = vpack.c.b16 %v514, %v513
    %v529 = vpack.c.b16 %v516, %v515
    %v530 = vpack.c.b16 %v518, %v517
    %v531 = vpack.c.b16 %v520, %v519
    %v532 = vpack.c.b16 %v522, %v521
    %v533 = vpack.c.b16 %v524, %v523
    %v534 = vpack.c.b16 %v526, %v525
    %543 = vmatprep.subr.bf16.mxu0 0
    %544 = vmatpush1.bf16.msra.mxu0 %v527
    %545 = vmatprep.subr.bf16.mxu0 0
    %546 = vmatpush1.bf16.msra.mxu0 %v528
    %547 = vmatprep.subr.bf16.mxu0 0
    %548 = vmatpush1.bf16.msra.mxu0 %v529
    %549 = vmatprep.subr.bf16.mxu0 0
    %550 = vmatpush1.bf16.msra.mxu0 %v530
    %551 = vmatprep.subr.bf16.mxu0 0
    %552 = vmatpush1.bf16.msra.mxu0 %v531
    %553 = vmatprep.subr.bf16.mxu0 0
    %554 = vmatpush1.bf16.msra.mxu0 %v532
    %555 = vmatprep.subr.bf16.mxu0 0
    %556 = vmatpush1.bf16.msra.mxu0 %v533
    %557 = vmatprep.subr.bf16.mxu0 0
    %558 = vmatpush1.bf16.msra.mxu0 %v534
    %559 = vmatprep.subr.bf16.mxu0 0
    %560 = vmatpush1.bf16.msra.mxu0 0
    %561 = vmatprep.subr.bf16.mxu0 0
    %562 = vmatpush1.bf16.msra.mxu0 0
    %563 = vmatprep.subr.bf16.mxu0 0
    %564 = vmatpush1.bf16.msra.mxu0 0
    %565 = vmatprep.subr.bf16.mxu0 0
    %566 = vmatpush1.bf16.msra.mxu0 0
    %567 = vmatprep.subr.bf16.mxu0 0
    %568 = vmatpush1.bf16.msra.mxu0 0
    %569 = vmatprep.subr.bf16.mxu0 0
    %570 = vmatpush1.bf16.msra.mxu0 0
    %571 = vmatprep.subr.bf16.mxu0 0
    %572 = vmatpush1.bf16.msra.mxu0 0
    %573 = vmatprep.subr.bf16.mxu0 0
    %574 = vmatpush1.bf16.msra.mxu0 0
    %575 = vmatprep.mubr.bf16.mxu0 0
    %576 = vmatmul.mubr.bf16.gmra.mrb[0].mxu0 %v471
    %v577 = vpop.f32.mrb[0].mxu0
    %v578 = vadd.f32 %v493, %v577
    %v579 = vpop.f32.mrb[0].mxu0
    %v580 = vpop.f32.mrb[0].mxu0
    %v581 = vadd.f32 %v493, %v580
    %v582 = vpop.f32.mrb[0].mxu0
    %583 = vdwg.mxu0
    %v584 = vadd.f32 %v352, %v578
    %v585 = vadd.f32 %v355, %v581
    %v586 = vld [vmem:[#allocation15] sm:$0x1]
    %v587 = vld [vmem:[#allocation17] sm:$0x1]
    %588 = vadd.xlane.f32.xlu0 %v584
    %v589 = vpop.xlane.xlu0 %588
    %590 = vadd.xlane.f32.xlu0 %v585
    %v591 = vpop.xlane.xlu0 %590
    %v592 = vmul.f32 %v589, 0.0078125
    %v593 = vmul.f32 %v591, 0.0078125
    %v594 = vsub.f32 %v584, %v592
    %v595 = vsub.f32 %v585, %v593
    %v596 = vmul.f32 %v594, %v594
    %v597 = vmul.f32 %v595, %v595
    %598 = vadd.xlane.f32.xlu0 %v596
    %v599 = vpop.xlane.xlu0 %598
    %600 = vadd.xlane.f32.xlu0 %v597
    %v601 = vpop.xlane.xlu0 %600
    %v602 = vmul.f32 %v599, 0.0078125
    %v603 = vmul.f32 %v601, 0.0078125
    %v604 = vadd.f32 %v602, 1e-05
    %v605 = vadd.f32 %v603, 1e-05
    %v606 = vrsqrt.pop %v604
    %v607 = vrsqrt.pop %v605
    %v608 = vmul.f32 %v594, %v606
    %v609 = vmul.f32 %v595, %v607
    %v611 = vlaneseq
    %v612 = vshrl.u32 %v611, 7
    %v613 = vsub.s32 0, %v612
    %v614 = vrot.slane %v586, %v613
    %v616 = vmul.f32 %v608, %v614
    %v617 = vmul.f32 %v609, %v614
    %v619 = vlaneseq
    %v620 = vshrl.u32 %v619, 7
    %v621 = vsub.s32 0, %v620
    %v622 = vrot.slane %v587, %v621
    %v624 = vadd.f32 %v616, %v622
    %v625 = vadd.f32 %v617, %v622
    %v626 = vpack.c.bf16 %v625, %v624
    %v627 = vld [vmem:[#allocation18] sm:$0xff]
    %v628 = vld [vmem:[#allocation18 + $0x8] sm:$0xff]
    %v629 = vld [vmem:[#allocation18 + $0x10] sm:$0xff]
    %v630 = vld [vmem:[#allocation18 + $0x18] sm:$0xff]
    %v631 = vld [vmem:[#allocation18 + $0x20] sm:$0xff]
    %v632 = vld [vmem:[#allocation18 + $0x28] sm:$0xff]
    %v633 = vld [vmem:[#allocation18 + $0x30] sm:$0xff]
    %v634 = vld [vmem:[#allocation18 + $0x38] sm:$0xff]
    %v635 = vld [vmem:[#allocation18 + $0x40] sm:$0xff]
    %v636 = vld [vmem:[#allocation18 + $0x48] sm:$0xff]
    %v637 = vld [vmem:[#allocation18 + $0x50] sm:$0xff]
    %v638 = vld [vmem:[#allocation18 + $0x58] sm:$0xff]
    %v639 = vld [vmem:[#allocation18 + $0x60] sm:$0xff]
    %v640 = vld [vmem:[#allocation18 + $0x68] sm:$0xff]
    %v641 = vld [vmem:[#allocation18 + $0x70] sm:$0xff]
    %v642 = vld [vmem:[#allocation18 + $0x78] sm:$0xff]
    %v643 = vld [vmem:[#allocation18 + $0x80] sm:$0xff]
    %v644 = vld [vmem:[#allocation18 + $0x88] sm:$0xff]
    %v645 = vld [vmem:[#allocation18 + $0x90] sm:$0xff]
    %v646 = vld [vmem:[#allocation18 + $0x98] sm:$0xff]
    %v647 = vld [vmem:[#allocation18 + $0xa0] sm:$0xff]
    %v648 = vld [vmem:[#allocation18 + $0xa8] sm:$0xff]
    %v649 = vld [vmem:[#allocation18 + $0xb0] sm:$0xff]
    %v650 = vld [vmem:[#allocation18 + $0xb8] sm:$0xff]
    %v651 = vld [vmem:[#allocation18 + $0xc0] sm:$0xff]
    %v652 = vld [vmem:[#allocation18 + $0xc8] sm:$0xff]
    %v653 = vld [vmem:[#allocation18 + $0xd0] sm:$0xff]
    %v654 = vld [vmem:[#allocation18 + $0xd8] sm:$0xff]
    %v655 = vld [vmem:[#allocation18 + $0xe0] sm:$0xff]
    %v656 = vld [vmem:[#allocation18 + $0xe8] sm:$0xff]
    %v657 = vld [vmem:[#allocation18 + $0xf0] sm:$0xff]
    %v658 = vld [vmem:[#allocation18 + $0xf8] sm:$0xff]
    %v659 = vld [vmem:[#allocation18 + $0x100] sm:$0xff]
    %v660 = vld [vmem:[#allocation18 + $0x108] sm:$0xff]
    %v661 = vld [vmem:[#allocation18 + $0x110] sm:$0xff]
    %v662 = vld [vmem:[#allocation18 + $0x118] sm:$0xff]
    %v663 = vld [vmem:[#allocation18 + $0x120] sm:$0xff]
    %v664 = vld [vmem:[#allocation18 + $0x128] sm:$0xff]
    %v665 = vld [vmem:[#allocation18 + $0x130] sm:$0xff]
    %v666 = vld [vmem:[#allocation18 + $0x138] sm:$0xff]
    %v667 = vld [vmem:[#allocation18 + $0x140] sm:$0xff]
    %v668 = vld [vmem:[#allocation18 + $0x148] sm:$0xff]
    %v669 = vld [vmem:[#allocation18 + $0x150] sm:$0xff]
    %v670 = vld [vmem:[#allocation18 + $0x158] sm:$0xff]
    %v671 = vld [vmem:[#allocation18 + $0x160] sm:$0xff]
    %v672 = vld [vmem:[#allocation18 + $0x168] sm:$0xff]
    %v673 = vld [vmem:[#allocation18 + $0x170] sm:$0xff]
    %v674 = vld [vmem:[#allocation18 + $0x178] sm:$0xff]
    %v675 = vld [vmem:[#allocation18 + $0x180] sm:$0xff]
    %v676 = vld [vmem:[#allocation18 + $0x188] sm:$0xff]
    %v677 = vld [vmem:[#allocation18 + $0x190] sm:$0xff]
    %v678 = vld [vmem:[#allocation18 + $0x198] sm:$0xff]
    %v679 = vld [vmem:[#allocation18 + $0x1a0] sm:$0xff]
    %v680 = vld [vmem:[#allocation18 + $0x1a8] sm:$0xff]
    %v681 = vld [vmem:[#allocation18 + $0x1b0] sm:$0xff]
    %v682 = vld [vmem:[#allocation18 + $0x1b8] sm:$0xff]
    %v683 = vld [vmem:[#allocation18 + $0x1c0] sm:$0xff]
    %v684 = vld [vmem:[#allocation18 + $0x1c8] sm:$0xff]
    %v685 = vld [vmem:[#allocation18 + $0x1d0] sm:$0xff]
    %v686 = vld [vmem:[#allocation18 + $0x1d8] sm:$0xff]
    %v687 = vld [vmem:[#allocation18 + $0x1e0] sm:$0xff]
    %v688 = vld [vmem:[#allocation18 + $0x1e8] sm:$0xff]
    %v689 = vld [vmem:[#allocation18 + $0x1f0] sm:$0xff]
    %v690 = vld [vmem:[#allocation18 + $0x1f8] sm:$0xff]
    %v691 = vld [vmem:[#allocation18 + $0x200] sm:$0xff]
    %v692 = vld [vmem:[#allocation18 + $0x208] sm:$0xff]
    %v693 = vld [vmem:[#allocation18 + $0x210] sm:$0xff]
    %v694 = vld [vmem:[#allocation18 + $0x218] sm:$0xff]
    %v695 = vld [vmem:[#allocation18 + $0x220] sm:$0xff]
    %v696 = vld [vmem:[#allocation18 + $0x228] sm:$0xff]
    %v697 = vld [vmem:[#allocation18 + $0x230] sm:$0xff]
    %v698 = vld [vmem:[#allocation18 + $0x238] sm:$0xff]
    %v699 = vld [vmem:[#allocation18 + $0x240] sm:$0xff]
    %v700 = vld [vmem:[#allocation18 + $0x248] sm:$0xff]
    %v701 = vld [vmem:[#allocation18 + $0x250] sm:$0xff]
    %v702 = vld [vmem:[#allocation18 + $0x258] sm:$0xff]
    %v703 = vld [vmem:[#allocation18 + $0x260] sm:$0xff]
    %v704 = vld [vmem:[#allocation18 + $0x268] sm:$0xff]
    %v705 = vld [vmem:[#allocation18 + $0x270] sm:$0xff]
    %v706 = vld [vmem:[#allocation18 + $0x278] sm:$0xff]
    %v707 = vld [vmem:[#allocation18 + $0x280] sm:$0xff]
    %v708 = vld [vmem:[#allocation18 + $0x288] sm:$0xff]
    %v709 = vld [vmem:[#allocation18 + $0x290] sm:$0xff]
    %v710 = vld [vmem:[#allocation18 + $0x298] sm:$0xff]
    %v711 = vld [vmem:[#allocation18 + $0x2a0] sm:$0xff]
    %v712 = vld [vmem:[#allocation18 + $0x2a8] sm:$0xff]
    %v713 = vld [vmem:[#allocation18 + $0x2b0] sm:$0xff]
    %v714 = vld [vmem:[#allocation18 + $0x2b8] sm:$0xff]
    %v715 = vld [vmem:[#allocation18 + $0x2c0] sm:$0xff]
    %v716 = vld [vmem:[#allocation18 + $0x2c8] sm:$0xff]
    %v717 = vld [vmem:[#allocation18 + $0x2d0] sm:$0xff]
    %v718 = vld [vmem:[#allocation18 + $0x2d8] sm:$0xff]
    %v719 = vld [vmem:[#allocation18 + $0x2e0] sm:$0xff]
    %v720 = vld [vmem:[#allocation18 + $0x2e8] sm:$0xff]
    %v721 = vld [vmem:[#allocation18 + $0x2f0] sm:$0xff]
    %v722 = vld [vmem:[#allocation18 + $0x2f8] sm:$0xff]
    %v723 = vld [vmem:[#allocation18 + $0x300] sm:$0xff]
    %v724 = vld [vmem:[#allocation18 + $0x308] sm:$0xff]
    %v725 = vld [vmem:[#allocation18 + $0x310] sm:$0xff]
    %v726 = vld [vmem:[#allocation18 + $0x318] sm:$0xff]
    %v727 = vld [vmem:[#allocation18 + $0x320] sm:$0xff]
    %v728 = vld [vmem:[#allocation18 + $0x328] sm:$0xff]
    %v729 = vld [vmem:[#allocation18 + $0x330] sm:$0xff]
    %v730 = vld [vmem:[#allocation18 + $0x338] sm:$0xff]
    %v731 = vld [vmem:[#allocation18 + $0x340] sm:$0xff]
    %v732 = vld [vmem:[#allocation18 + $0x348] sm:$0xff]
    %v733 = vld [vmem:[#allocation18 + $0x350] sm:$0xff]
    %v734 = vld [vmem:[#allocation18 + $0x358] sm:$0xff]
    %v735 = vld [vmem:[#allocation18 + $0x360] sm:$0xff]
    %v736 = vld [vmem:[#allocation18 + $0x368] sm:$0xff]
    %v737 = vld [vmem:[#allocation18 + $0x370] sm:$0xff]
    %v738 = vld [vmem:[#allocation18 + $0x378] sm:$0xff]
    %v739 = vld [vmem:[#allocation18 + $0x380] sm:$0xff]
    %v740 = vld [vmem:[#allocation18 + $0x388] sm:$0xff]
    %v741 = vld [vmem:[#allocation18 + $0x390] sm:$0xff]
    %v742 = vld [vmem:[#allocation18 + $0x398] sm:$0xff]
    %v743 = vld [vmem:[#allocation18 + $0x3a0] sm:$0xff]
    %v744 = vld [vmem:[#allocation18 + $0x3a8] sm:$0xff]
    %v745 = vld [vmem:[#allocation18 + $0x3b0] sm:$0xff]
    %v746 = vld [vmem:[#allocation18 + $0x3b8] sm:$0xff]
    %v747 = vld [vmem:[#allocation18 + $0x3c0] sm:$0xff]
    %v748 = vld [vmem:[#allocation18 + $0x3c8] sm:$0xff]
    %v749 = vld [vmem:[#allocation18 + $0x3d0] sm:$0xff]
    %v750 = vld [vmem:[#allocation18 + $0x3d8] sm:$0xff]
    %v751 = vld [vmem:[#allocation18 + $0x3e0] sm:$0xff]
    %v752 = vld [vmem:[#allocation18 + $0x3e8] sm:$0xff]
    %v753 = vld [vmem:[#allocation18 + $0x3f0] sm:$0xff]
    %v754 = vld [vmem:[#allocation18 + $0x3f8] sm:$0xff]
    %v755 = vld [vmem:[#allocation20] sm:$0xff]
    %v756 = vld [vmem:[#allocation20 + $0x8] sm:$0xff]
    %v759 = vlaneseq
    %v760 = vshrl.u32 %v759, 7
    %v761 = vsub.s32 0, %v760
    %v762 = vrot.slane %v755, %v761
    %v763 = vlaneseq
    %v764 = vshrl.u32 %v763, 7
    %v765 = vsub.s32 1, %v764
    %v766 = vrot.slane %v755, %v765
    %v767 = vlaneseq
    %v768 = vshrl.u32 %v767, 7
    %v769 = vsub.s32 2, %v768
    %v770 = vrot.slane %v755, %v769
    %v771 = vlaneseq
    %v772 = vshrl.u32 %v771, 7
    %v773 = vsub.s32 3, %v772
    %v774 = vrot.slane %v755, %v773
    %v775 = vlaneseq
    %v776 = vshrl.u32 %v775, 7
    %v777 = vsub.s32 4, %v776
    %v778 = vrot.slane %v755, %v777
    %v779 = vlaneseq
    %v780 = vshrl.u32 %v779, 7
    %v781 = vsub.s32 5, %v780
    %v782 = vrot.slane %v755, %v781
    %v783 = vlaneseq
    %v784 = vshrl.u32 %v783, 7
    %v785 = vsub.s32 6, %v784
    %v786 = vrot.slane %v755, %v785
    %v787 = vlaneseq
    %v788 = vshrl.u32 %v787, 7
    %v789 = vsub.s32 7, %v788
    %v790 = vrot.slane %v755, %v789
    %v791 = vlaneseq
    %v792 = vshrl.u32 %v791, 7
    %v793 = vsub.s32 0, %v792
    %v794 = vrot.slane %v756, %v793
    %v795 = vlaneseq
    %v796 = vshrl.u32 %v795, 7
    %v797 = vsub.s32 1, %v796
    %v798 = vrot.slane %v756, %v797
    %v799 = vlaneseq
    %v800 = vshrl.u32 %v799, 7
    %v801 = vsub.s32 2, %v800
    %v802 = vrot.slane %v756, %v801
    %v803 = vlaneseq
    %v804 = vshrl.u32 %v803, 7
    %v805 = vsub.s32 3, %v804
    %v806 = vrot.slane %v756, %v805
    %v807 = vlaneseq
    %v808 = vshrl.u32 %v807, 7
    %v809 = vsub.s32 4, %v808
    %v810 = vrot.slane %v756, %v809
    %v811 = vlaneseq
    %v812 = vshrl.u32 %v811, 7
    %v813 = vsub.s32 5, %v812
    %v814 = vrot.slane %v756, %v813
    %v815 = vlaneseq
    %v816 = vshrl.u32 %v815, 7
    %v817 = vsub.s32 6, %v816
    %v818 = vrot.slane %v756, %v817
    %v819 = vlaneseq
    %v820 = vshrl.u32 %v819, 7
    %v821 = vsub.s32 7, %v820
    %v822 = vrot.slane %v756, %v821
    %v967 = vunpack.c.l.b16 %v627
    %v968 = vunpack.c.h.b16 %v627
    %v969 = vunpack.c.l.b16 %v628
    %v970 = vunpack.c.h.b16 %v628
    %v971 = vunpack.c.l.b16 %v629
    %v972 = vunpack.c.h.b16 %v629
    %v973 = vunpack.c.l.b16 %v630
    %v974 = vunpack.c.h.b16 %v630
    %v975 = vunpack.c.l.b16 %v631
    %v976 = vunpack.c.h.b16 %v631
    %v977 = vunpack.c.l.b16 %v632
    %v978 = vunpack.c.h.b16 %v632
    %v979 = vunpack.c.l.b16 %v633
    %v980 = vunpack.c.h.b16 %v633
    %v981 = vunpack.c.l.b16 %v634
    %v982 = vunpack.c.h.b16 %v634
    %v983 = vunpack.c.l.b16 %v635
    %v984 = vunpack.c.h.b16 %v635
    %v985 = vunpack.c.l.b16 %v636
    %v986 = vunpack.c.h.b16 %v636
    %v987 = vunpack.c.l.b16 %v637
    %v988 = vunpack.c.h.b16 %v637
    %v989 = vunpack.c.l.b16 %v638
    %v990 = vunpack.c.h.b16 %v638
    %v991 = vunpack.c.l.b16 %v639
    %v992 = vunpack.c.h.b16 %v639
    %v993 = vunpack.c.l.b16 %v640
    %v994 = vunpack.c.h.b16 %v640
    %v995 = vunpack.c.l.b16 %v641
    %v996 = vunpack.c.h.b16 %v641
    %v997 = vunpack.c.l.b16 %v642
    %v998 = vunpack.c.h.b16 %v642
    %v999 = vunpack.c.l.b16 %v643
    %v1000 = vunpack.c.h.b16 %v643
    %v1001 = vunpack.c.l.b16 %v644
    %v1002 = vunpack.c.h.b16 %v644
    %v1003 = vunpack.c.l.b16 %v645
    %v1004 = vunpack.c.h.b16 %v645
    %v1005 = vunpack.c.l.b16 %v646
    %v1006 = vunpack.c.h.b16 %v646
    %v1007 = vunpack.c.l.b16 %v647
    %v1008 = vunpack.c.h.b16 %v647
    %v1009 = vunpack.c.l.b16 %v648
    %v1010 = vunpack.c.h.b16 %v648
    %v1011 = vunpack.c.l.b16 %v649
    %v1012 = vunpack.c.h.b16 %v649
    %v1013 = vunpack.c.l.b16 %v650
    %v1014 = vunpack.c.h.b16 %v650
    %v1015 = vunpack.c.l.b16 %v651
    %v1016 = vunpack.c.h.b16 %v651
    %v1017 = vunpack.c.l.b16 %v652
    %v1018 = vunpack.c.h.b16 %v652
    %v1019 = vunpack.c.l.b16 %v653
    %v1020 = vunpack.c.h.b16 %v653
    %v1021 = vunpack.c.l.b16 %v654
    %v1022 = vunpack.c.h.b16 %v654
    %v1023 = vunpack.c.l.b16 %v655
    %v1024 = vunpack.c.h.b16 %v655
    %v1025 = vunpack.c.l.b16 %v656
    %v1026 = vunpack.c.h.b16 %v656
    %v1027 = vunpack.c.l.b16 %v657
    %v1028 = vunpack.c.h.b16 %v657
    %v1029 = vunpack.c.l.b16 %v658
    %v1030 = vunpack.c.h.b16 %v658
    %v1031 = vunpack.c.l.b16 %v659
    %v1032 = vunpack.c.h.b16 %v659
    %v1033 = vunpack.c.l.b16 %v660
    %v1034 = vunpack.c.h.b16 %v660
    %v1035 = vunpack.c.l.b16 %v661
    %v1036 = vunpack.c.h.b16 %v661
    %v1037 = vunpack.c.l.b16 %v662
    %v1038 = vunpack.c.h.b16 %v662
    %v1039 = vunpack.c.l.b16 %v663
    %v1040 = vunpack.c.h.b16 %v663
    %v1041 = vunpack.c.l.b16 %v664
    %v1042 = vunpack.c.h.b16 %v664
    %v1043 = vunpack.c.l.b16 %v665
    %v1044 = vunpack.c.h.b16 %v665
    %v1045 = vunpack.c.l.b16 %v666
    %v1046 = vunpack.c.h.b16 %v666
    %v1047 = vunpack.c.l.b16 %v667
    %v1048 = vunpack.c.h.b16 %v667
    %v1049 = vunpack.c.l.b16 %v668
    %v1050 = vunpack.c.h.b16 %v668
    %v1051 = vunpack.c.l.b16 %v669
    %v1052 = vunpack.c.h.b16 %v669
    %v1053 = vunpack.c.l.b16 %v670
    %v1054 = vunpack.c.h.b16 %v670
    %v1055 = vunpack.c.l.b16 %v671
    %v1056 = vunpack.c.h.b16 %v671
    %v1057 = vunpack.c.l.b16 %v672
    %v1058 = vunpack.c.h.b16 %v672
    %v1059 = vunpack.c.l.b16 %v673
    %v1060 = vunpack.c.h.b16 %v673
    %v1061 = vunpack.c.l.b16 %v674
    %v1062 = vunpack.c.h.b16 %v674
    %v1063 = vunpack.c.l.b16 %v675
    %v1064 = vunpack.c.h.b16 %v675
    %v1065 = vunpack.c.l.b16 %v676
    %v1066 = vunpack.c.h.b16 %v676
    %v1067 = vunpack.c.l.b16 %v677
    %v1068 = vunpack.c.h.b16 %v677
    %v1069 = vunpack.c.l.b16 %v678
    %v1070 = vunpack.c.h.b16 %v678
    %v1071 = vunpack.c.l.b16 %v679
    %v1072 = vunpack.c.h.b16 %v679
    %v1073 = vunpack.c.l.b16 %v680
    %v1074 = vunpack.c.h.b16 %v680
    %v1075 = vunpack.c.l.b16 %v681
    %v1076 = vunpack.c.h.b16 %v681
    %v1077 = vunpack.c.l.b16 %v682
    %v1078 = vunpack.c.h.b16 %v682
    %v1079 = vunpack.c.l.b16 %v683
    %v1080 = vunpack.c.h.b16 %v683
    %v1081 = vunpack.c.l.b16 %v684
    %v1082 = vunpack.c.h.b16 %v684
    %v1083 = vunpack.c.l.b16 %v685
    %v1084 = vunpack.c.h.b16 %v685
    %v1085 = vunpack.c.l.b16 %v686
    %v1086 = vunpack.c.h.b16 %v686
    %v1087 = vunpack.c.l.b16 %v687
    %v1088 = vunpack.c.h.b16 %v687
    %v1089 = vunpack.c.l.b16 %v688
    %v1090 = vunpack.c.h.b16 %v688
    %v1091 = vunpack.c.l.b16 %v689
    %v1092 = vunpack.c.h.b16 %v689
    %v1093 = vunpack.c.l.b16 %v690
    %v1094 = vunpack.c.h.b16 %v690
    %v1095 = vunpack.c.l.b16 %v691
    %v1096 = vunpack.c.h.b16 %v691
    %v1097 = vunpack.c.l.b16 %v692
    %v1098 = vunpack.c.h.b16 %v692
    %v1099 = vunpack.c.l.b16 %v693
    %v1100 = vunpack.c.h.b16 %v693
    %v1101 = vunpack.c.l.b16 %v694
    %v1102 = vunpack.c.h.b16 %v694
    %v1103 = vunpack.c.l.b16 %v695
    %v1104 = vunpack.c.h.b16 %v695
    %v1105 = vunpack.c.l.b16 %v696
    %v1106 = vunpack.c.h.b16 %v696
    %v1107 = vunpack.c.l.b16 %v697
    %v1108 = vunpack.c.h.b16 %v697
    %v1109 = vunpack.c.l.b16 %v698
    %v1110 = vunpack.c.h.b16 %v698
    %v1111 = vunpack.c.l.b16 %v699
    %v1112 = vunpack.c.h.b16 %v699
    %v1113 = vunpack.c.l.b16 %v700
    %v1114 = vunpack.c.h.b16 %v700
    %v1115 = vunpack.c.l.b16 %v701
    %v1116 = vunpack.c.h.b16 %v701
    %v1117 = vunpack.c.l.b16 %v702
    %v1118 = vunpack.c.h.b16 %v702
    %v1119 = vunpack.c.l.b16 %v703
    %v1120 = vunpack.c.h.b16 %v703
    %v1121 = vunpack.c.l.b16 %v704
    %v1122 = vunpack.c.h.b16 %v704
    %v1123 = vunpack.c.l.b16 %v705
    %v1124 = vunpack.c.h.b16 %v705
    %v1125 = vunpack.c.l.b16 %v706
    %v1126 = vunpack.c.h.b16 %v706
    %v1127 = vunpack.c.l.b16 %v707
    %v1128 = vunpack.c.h.b16 %v707
    %v1129 = vunpack.c.l.b16 %v708
    %v1130 = vunpack.c.h.b16 %v708
    %v1131 = vunpack.c.l.b16 %v709
    %v1132 = vunpack.c.h.b16 %v709
    %v1133 = vunpack.c.l.b16 %v710
    %v1134 = vunpack.c.h.b16 %v710
    %v1135 = vunpack.c.l.b16 %v711
    %v1136 = vunpack.c.h.b16 %v711
    %v1137 = vunpack.c.l.b16 %v712
    %v1138 = vunpack.c.h.b16 %v712
    %v1139 = vunpack.c.l.b16 %v713
    %v1140 = vunpack.c.h.b16 %v713
    %v1141 = vunpack.c.l.b16 %v714
    %v1142 = vunpack.c.h.b16 %v714
    %v1143 = vunpack.c.l.b16 %v715
    %v1144 = vunpack.c.h.b16 %v715
    %v1145 = vunpack.c.l.b16 %v716
    %v1146 = vunpack.c.h.b16 %v716
    %v1147 = vunpack.c.l.b16 %v717
    %v1148 = vunpack.c.h.b16 %v717
    %v1149 = vunpack.c.l.b16 %v718
    %v1150 = vunpack.c.h.b16 %v718
    %v1151 = vunpack.c.l.b16 %v719
    %v1152 = vunpack.c.h.b16 %v719
    %v1153 = vunpack.c.l.b16 %v720
    %v1154 = vunpack.c.h.b16 %v720
    %v1155 = vunpack.c.l.b16 %v721
    %v1156 = vunpack.c.h.b16 %v721
    %v1157 = vunpack.c.l.b16 %v722
    %v1158 = vunpack.c.h.b16 %v722
    %v1159 = vunpack.c.l.b16 %v723
    %v1160 = vunpack.c.h.b16 %v723
    %v1161 = vunpack.c.l.b16 %v724
    %v1162 = vunpack.c.h.b16 %v724
    %v1163 = vunpack.c.l.b16 %v725
    %v1164 = vunpack.c.h.b16 %v725
    %v1165 = vunpack.c.l.b16 %v726
    %v1166 = vunpack.c.h.b16 %v726
    %v1167 = vunpack.c.l.b16 %v727
    %v1168 = vunpack.c.h.b16 %v727
    %v1169 = vunpack.c.l.b16 %v728
    %v1170 = vunpack.c.h.b16 %v728
    %v1171 = vunpack.c.l.b16 %v729
    %v1172 = vunpack.c.h.b16 %v729
    %v1173 = vunpack.c.l.b16 %v730
    %v1174 = vunpack.c.h.b16 %v730
    %v1175 = vunpack.c.l.b16 %v731
    %v1176 = vunpack.c.h.b16 %v731
    %v1177 = vunpack.c.l.b16 %v732
    %v1178 = vunpack.c.h.b16 %v732
    %v1179 = vunpack.c.l.b16 %v733
    %v1180 = vunpack.c.h.b16 %v733
    %v1181 = vunpack.c.l.b16 %v734
    %v1182 = vunpack.c.h.b16 %v734
    %v1183 = vunpack.c.l.b16 %v735
    %v1184 = vunpack.c.h.b16 %v735
    %v1185 = vunpack.c.l.b16 %v736
    %v1186 = vunpack.c.h.b16 %v736
    %v1187 = vunpack.c.l.b16 %v737
    %v1188 = vunpack.c.h.b16 %v737
    %v1189 = vunpack.c.l.b16 %v738
    %v1190 = vunpack.c.h.b16 %v738
    %v1191 = vunpack.c.l.b16 %v739
    %v1192 = vunpack.c.h.b16 %v739
    %v1193 = vunpack.c.l.b16 %v740
    %v1194 = vunpack.c.h.b16 %v740
    %v1195 = vunpack.c.l.b16 %v741
    %v1196 = vunpack.c.h.b16 %v741
    %v1197 = vunpack.c.l.b16 %v742
    %v1198 = vunpack.c.h.b16 %v742
    %v1199 = vunpack.c.l.b16 %v743
    %v1200 = vunpack.c.h.b16 %v743
    %v1201 = vunpack.c.l.b16 %v744
    %v1202 = vunpack.c.h.b16 %v744
    %v1203 = vunpack.c.l.b16 %v745
    %v1204 = vunpack.c.h.b16 %v745
    %v1205 = vunpack.c.l.b16 %v746
    %v1206 = vunpack.c.h.b16 %v746
    %v1207 = vunpack.c.l.b16 %v747
    %v1208 = vunpack.c.h.b16 %v747
    %v1209 = vunpack.c.l.b16 %v748
    %v1210 = vunpack.c.h.b16 %v748
    %v1211 = vunpack.c.l.b16 %v749
    %v1212 = vunpack.c.h.b16 %v749
    %v1213 = vunpack.c.l.b16 %v750
    %v1214 = vunpack.c.h.b16 %v750
    %v1215 = vunpack.c.l.b16 %v751
    %v1216 = vunpack.c.h.b16 %v751
    %v1217 = vunpack.c.l.b16 %v752
    %v1218 = vunpack.c.h.b16 %v752
    %v1219 = vunpack.c.l.b16 %v753
    %v1220 = vunpack.c.h.b16 %v753
    %v1221 = vunpack.c.l.b16 %v754
    %v1222 = vunpack.c.h.b16 %v754
    %v1223 = vpack.c.b16 %v983, %v967
    %v1224 = vpack.c.b16 %v984, %v968
    %v1225 = vpack.c.b16 %v985, %v969
    %v1226 = vpack.c.b16 %v986, %v970
    %v1227 = vpack.c.b16 %v987, %v971
    %v1228 = vpack.c.b16 %v988, %v972
    %v1229 = vpack.c.b16 %v989, %v973
    %v1230 = vpack.c.b16 %v990, %v974
    %v1231 = vpack.c.b16 %v991, %v975
    %v1232 = vpack.c.b16 %v992, %v976
    %v1233 = vpack.c.b16 %v993, %v977
    %v1234 = vpack.c.b16 %v994, %v978
    %v1235 = vpack.c.b16 %v995, %v979
    %v1236 = vpack.c.b16 %v996, %v980
    %v1237 = vpack.c.b16 %v997, %v981
    %v1238 = vpack.c.b16 %v998, %v982
    %v1239 = vpack.c.b16 %v1015, %v999
    %v1240 = vpack.c.b16 %v1016, %v1000
    %v1241 = vpack.c.b16 %v1017, %v1001
    %v1242 = vpack.c.b16 %v1018, %v1002
    %v1243 = vpack.c.b16 %v1019, %v1003
    %v1244 = vpack.c.b16 %v1020, %v1004
    %v1245 = vpack.c.b16 %v1021, %v1005
    %v1246 = vpack.c.b16 %v1022, %v1006
    %v1247 = vpack.c.b16 %v1023, %v1007
    %v1248 = vpack.c.b16 %v1024, %v1008
    %v1249 = vpack.c.b16 %v1025, %v1009
    %v1250 = vpack.c.b16 %v1026, %v1010
    %v1251 = vpack.c.b16 %v1027, %v1011
    %v1252 = vpack.c.b16 %v1028, %v1012
    %v1253 = vpack.c.b16 %v1029, %v1013
    %v1254 = vpack.c.b16 %v1030, %v1014
    %v1255 = vpack.c.b16 %v1047, %v1031
    %v1256 = vpack.c.b16 %v1048, %v1032
    %v1257 = vpack.c.b16 %v1049, %v1033
    %v1258 = vpack.c.b16 %v1050, %v1034
    %v1259 = vpack.c.b16 %v1051, %v1035
    %v1260 = vpack.c.b16 %v1052, %v1036
    %v1261 = vpack.c.b16 %v1053, %v1037
    %v1262 = vpack.c.b16 %v1054, %v1038
    %v1263 = vpack.c.b16 %v1055, %v1039
    %v1264 = vpack.c.b16 %v1056, %v1040
    %v1265 = vpack.c.b16 %v1057, %v1041
    %v1266 = vpack.c.b16 %v1058, %v1042
    %v1267 = vpack.c.b16 %v1059, %v1043
    %v1268 = vpack.c.b16 %v1060, %v1044
    %v1269 = vpack.c.b16 %v1061, %v1045
    %v1270 = vpack.c.b16 %v1062, %v1046
    %v1271 = vpack.c.b16 %v1079, %v1063
    %v1272 = vpack.c.b16 %v1080, %v1064
    %v1273 = vpack.c.b16 %v1081, %v1065
    %v1274 = vpack.c.b16 %v1082, %v1066
    %v1275 = vpack.c.b16 %v1083, %v1067
    %v1276 = vpack.c.b16 %v1084, %v1068
    %v1277 = vpack.c.b16 %v1085, %v1069
    %v1278 = vpack.c.b16 %v1086, %v1070
    %v1279 = vpack.c.b16 %v1087, %v1071
    %v1280 = vpack.c.b16 %v1088, %v1072
    %v1281 = vpack.c.b16 %v1089, %v1073
    %v1282 = vpack.c.b16 %v1090, %v1074
    %v1283 = vpack.c.b16 %v1091, %v1075
    %v1284 = vpack.c.b16 %v1092, %v1076
    %v1285 = vpack.c.b16 %v1093, %v1077
    %v1286 = vpack.c.b16 %v1094, %v1078
    %v1287 = vpack.c.b16 %v1111, %v1095
    %v1288 = vpack.c.b16 %v1112, %v1096
    %v1289 = vpack.c.b16 %v1113, %v1097
    %v1290 = vpack.c.b16 %v1114, %v1098
    %v1291 = vpack.c.b16 %v1115, %v1099
    %v1292 = vpack.c.b16 %v1116, %v1100
    %v1293 = vpack.c.b16 %v1117, %v1101
    %v1294 = vpack.c.b16 %v1118, %v1102
    %v1295 = vpack.c.b16 %v1119, %v1103
    %v1296 = vpack.c.b16 %v1120, %v1104
    %v1297 = vpack.c.b16 %v1121, %v1105
    %v1298 = vpack.c.b16 %v1122, %v1106
    %v1299 = vpack.c.b16 %v1123, %v1107
    %v1300 = vpack.c.b16 %v1124, %v1108
    %v1301 = vpack.c.b16 %v1125, %v1109
    %v1302 = vpack.c.b16 %v1126, %v1110
    %v1303 = vpack.c.b16 %v1143, %v1127
    %v1304 = vpack.c.b16 %v1144, %v1128
    %v1305 = vpack.c.b16 %v1145, %v1129
    %v1306 = vpack.c.b16 %v1146, %v1130
    %v1307 = vpack.c.b16 %v1147, %v1131
    %v1308 = vpack.c.b16 %v1148, %v1132
    %v1309 = vpack.c.b16 %v1149, %v1133
    %v1310 = vpack.c.b16 %v1150, %v1134
    %v1311 = vpack.c.b16 %v1151, %v1135
    %v1312 = vpack.c.b16 %v1152, %v1136
    %v1313 = vpack.c.b16 %v1153, %v1137
    %v1314 = vpack.c.b16 %v1154, %v1138
    %v1315 = vpack.c.b16 %v1155, %v1139
    %v1316 = vpack.c.b16 %v1156, %v1140
    %v1317 = vpack.c.b16 %v1157, %v1141
    %v1318 = vpack.c.b16 %v1158, %v1142
    %v1319 = vpack.c.b16 %v1175, %v1159
    %v1320 = vpack.c.b16 %v1176, %v1160
    %v1321 = vpack.c.b16 %v1177, %v1161
    %v1322 = vpack.c.b16 %v1178, %v1162
    %v1323 = vpack.c.b16 %v1179, %v1163
    %v1324 = vpack.c.b16 %v1180, %v1164
    %v1325 = vpack.c.b16 %v1181, %v1165
    %v1326 = vpack.c.b16 %v1182, %v1166
    %v1327 = vpack.c.b16 %v1183, %v1167
    %v1328 = vpack.c.b16 %v1184, %v1168
    %v1329 = vpack.c.b16 %v1185, %v1169
    %v1330 = vpack.c.b16 %v1186, %v1170
    %v1331 = vpack.c.b16 %v1187, %v1171
    %v1332 = vpack.c.b16 %v1188, %v1172
    %v1333 = vpack.c.b16 %v1189, %v1173
    %v1334 = vpack.c.b16 %v1190, %v1174
    %v1335 = vpack.c.b16 %v1207, %v1191
    %v1336 = vpack.c.b16 %v1208, %v1192
    %v1337 = vpack.c.b16 %v1209, %v1193
    %v1338 = vpack.c.b16 %v1210, %v1194
    %v1339 = vpack.c.b16 %v1211, %v1195
    %v1340 = vpack.c.b16 %v1212, %v1196
    %v1341 = vpack.c.b16 %v1213, %v1197
    %v1342 = vpack.c.b16 %v1214, %v1198
    %v1343 = vpack.c.b16 %v1215, %v1199
    %v1344 = vpack.c.b16 %v1216, %v1200
    %v1345 = vpack.c.b16 %v1217, %v1201
    %v1346 = vpack.c.b16 %v1218, %v1202
    %v1347 = vpack.c.b16 %v1219, %v1203
    %v1348 = vpack.c.b16 %v1220, %v1204
    %v1349 = vpack.c.b16 %v1221, %v1205
    %v1350 = vpack.c.b16 %v1222, %v1206
    %1479 = vmatprep.subr.bf16.mxu0 %v1224
    %1480 = vmatpush1.bf16.msra.mxu0 %v1223
    %1481 = vmatprep.subr.bf16.mxu0 %v1240
    %1482 = vmatpush1.bf16.msra.mxu0 %v1239
    %1483 = vmatprep.subr.bf16.mxu0 %v1256
    %1484 = vmatpush1.bf16.msra.mxu0 %v1255
    %1485 = vmatprep.subr.bf16.mxu0 %v1272
    %1486 = vmatpush1.bf16.msra.mxu0 %v1271
    %1487 = vmatprep.subr.bf16.mxu0 %v1288
    %1488 = vmatpush1.bf16.msra.mxu0 %v1287
    %1489 = vmatprep.subr.bf16.mxu0 %v1304
    %1490 = vmatpush1.bf16.msra.mxu0 %v1303
    %1491 = vmatprep.subr.bf16.mxu0 %v1320
    %1492 = vmatpush1.bf16.msra.mxu0 %v1319
    %1493 = vmatprep.subr.bf16.mxu0 %v1336
    %1494 = vmatpush1.bf16.msra.mxu0 %v1335
    %1495 = vmatprep.subr.bf16.mxu0 0
    %1496 = vmatpush1.bf16.msra.mxu0 0
    %1497 = vmatprep.subr.bf16.mxu0 0
    %1498 = vmatpush1.bf16.msra.mxu0 0
    %1499 = vmatprep.subr.bf16.mxu0 0
    %1500 = vmatpush1.bf16.msra.mxu0 0
    %1501 = vmatprep.subr.bf16.mxu0 0
    %1502 = vmatpush1.bf16.msra.mxu0 0
    %1503 = vmatprep.subr.bf16.mxu0 0
    %1504 = vmatpush1.bf16.msra.mxu0 0
    %1505 = vmatprep.subr.bf16.mxu0 0
    %1506 = vmatpush1.bf16.msra.mxu0 0
    %1507 = vmatprep.subr.bf16.mxu0 0
    %1508 = vmatpush1.bf16.msra.mxu0 0
    %1509 = vmatprep.subr.bf16.mxu0 0
    %1510 = vmatpush1.bf16.msra.mxu0 0
    %1511 = vmatprep.mubr.bf16.mxu0 0
    %1512 = vmatmul.mubr.bf16.gmra.mrb[0].mxu0 %v626
    %v1513 = vpop.f32.mrb[0].mxu0
    %v1514 = vadd.f32 %v762, %v1513
    %v1515 = vpop.f32.mrb[0].mxu0
    %v1516 = vadd.f32 %v766, %v1515
    %v1517 = vpop.f32.mrb[0].mxu0
    %v1518 = vadd.f32 %v762, %v1517
    %v1519 = vpop.f32.mrb[0].mxu0
    %v1520 = vadd.f32 %v766, %v1519
    %1521 = vdwg.mxu0
    %1522 = vmatprep.subr.bf16.mxu0 %v1226
    %1523 = vmatpush1.bf16.msra.mxu0 %v1225
    %1524 = vmatprep.subr.bf16.mxu0 %v1242
    %1525 = vmatpush1.bf16.msra.mxu0 %v1241
    %1526 = vmatprep.subr.bf16.mxu0 %v1258
    %1527 = vmatpush1.bf16.msra.mxu0 %v1257
    %1528 = vmatprep.subr.bf16.mxu0 %v1274
    %1529 = vmatpush1.bf16.msra.mxu0 %v1273
    %1530 = vmatprep.subr.bf16.mxu0 %v1290
    %1531 = vmatpush1.bf16.msra.mxu0 %v1289
    %1532 = vmatprep.subr.bf16.mxu0 %v1306
    %1533 = vmatpush1.bf16.msra.mxu0 %v1305
    %1534 = vmatprep.subr.bf16.mxu0 %v1322
    %1535 = vmatpush1.bf16.msra.mxu0 %v1321
    %1536 = vmatprep.subr.bf16.mxu0 %v1338
    %1537 = vmatpush1.bf16.msra.mxu0 %v1337
    %1538 = vmatprep.subr.bf16.mxu0 0
    %1539 = vmatpush1.bf16.msra.mxu0 0
    %1540 = vmatprep.subr.bf16.mxu0 0
    %1541 = vmatpush1.bf16.msra.mxu0 0
    %1542 = vmatprep.subr.bf16.mxu0 0
    %1543 = vmatpush1.bf16.msra.mxu0 0
    %1544 = vmatprep.subr.bf16.mxu0 0
    %1545 = vmatpush1.bf16.msra.mxu0 0
    %1546 = vmatprep.subr.bf16.mxu0 0
    %1547 = vmatpush1.bf16.msra.mxu0 0
    %1548 = vmatprep.subr.bf16.mxu0 0
    %1549 = vmatpush1.bf16.msra.mxu0 0
    %1550 = vmatprep.subr.bf16.mxu0 0
    %1551 = vmatpush1.bf16.msra.mxu0 0
    %1552 = vmatprep.subr.bf16.mxu0 0
    %1553 = vmatpush1.bf16.msra.mxu0 0
    %1554 = vmatprep.mubr.bf16.mxu0 0
    %1555 = vmatmul.mubr.bf16.gmra.mrb[0].mxu0 %v626
    %v1556 = vpop.f32.mrb[0].mxu0
    %v1557 = vadd.f32 %v770, %v1556
    %v1558 = vpop.f32.mrb[0].mxu0
    %v1559 = vadd.f32 %v774, %v1558
    %v1560 = vpop.f32.mrb[0].mxu0
    %v1561 = vadd.f32 %v770, %v1560
    %v1562 = vpop.f32.mrb[0].mxu0
    %v1563 = vadd.f32 %v774, %v1562
    %1564 = vdwg.mxu0
    %1565 = vmatprep.subr.bf16.mxu0 %v1228
    %1566 = vmatpush1.bf16.msra.mxu0 %v1227
    %1567 = vmatprep.subr.bf16.mxu0 %v1244
    %1568 = vmatpush1.bf16.msra.mxu0 %v1243
    %1569 = vmatprep.subr.bf16.mxu0 %v1260
    %1570 = vmatpush1.bf16.msra.mxu0 %v1259
    %1571 = vmatprep.subr.bf16.mxu0 %v1276
    %1572 = vmatpush1.bf16.msra.mxu0 %v1275
    %1573 = vmatprep.subr.bf16.mxu0 %v1292
    %1574 = vmatpush1.bf16.msra.mxu0 %v1291
    %1575 = vmatprep.subr.bf16.mxu0 %v1308
    %1576 = vmatpush1.bf16.msra.mxu0 %v1307
    %1577 = vmatprep.subr.bf16.mxu0 %v1324
    %1578 = vmatpush1.bf16.msra.mxu0 %v1323
    %1579 = vmatprep.subr.bf16.mxu0 %v1340
    %1580 = vmatpush1.bf16.msra.mxu0 %v1339
    %1581 = vmatprep.subr.bf16.mxu0 0
    %1582 = vmatpush1.bf16.msra.mxu0 0
    %1583 = vmatprep.subr.bf16.mxu0 0
    %1584 = vmatpush1.bf16.msra.mxu0 0
    %1585 = vmatprep.subr.bf16.mxu0 0
    %1586 = vmatpush1.bf16.msra.mxu0 0
    %1587 = vmatprep.subr.bf16.mxu0 0
    %1588 = vmatpush1.bf16.msra.mxu0 0
    %1589 = vmatprep.subr.bf16.mxu0 0
    %1590 = vmatpush1.bf16.msra.mxu0 0
    %1591 = vmatprep.subr.bf16.mxu0 0
    %1592 = vmatpush1.bf16.msra.mxu0 0
    %1593 = vmatprep.subr.bf16.mxu0 0
    %1594 = vmatpush1.bf16.msra.mxu0 0
    %1595 = vmatprep.subr.bf16.mxu0 0
    %1596 = vmatpush1.bf16.msra.mxu0 0
    %1597 = vmatprep.mubr.bf16.mxu0 0
    %1598 = vmatmul.mubr.bf16.gmra.mrb[0].mxu0 %v626
    %v1599 = vpop.f32.mrb[0].mxu0
    %v1600 = vadd.f32 %v778, %v1599
    %v1601 = vpop.f32.mrb[0].mxu0
    %v1602 = vadd.f32 %v782, %v1601
    %v1603 = vpop.f32.mrb[0].mxu0
    %v1604 = vadd.f32 %v778, %v1603
    %v1605 = vpop.f32.mrb[0].mxu0
    %v1606 = vadd.f32 %v782, %v1605
    %1607 = vdwg.mxu0
    %1608 = vmatprep.subr.bf16.mxu0 %v1230
    %1609 = vmatpush1.bf16.msra.mxu0 %v1229
    %1610 = vmatprep.subr.bf16.mxu0 %v1246
    %1611 = vmatpush1.bf16.msra.mxu0 %v1245
    %1612 = vmatprep.subr.bf16.mxu0 %v1262
    %1613 = vmatpush1.bf16.msra.mxu0 %v1261
    %1614 = vmatprep.subr.bf16.mxu0 %v1278
    %1615 = vmatpush1.bf16.msra.mxu0 %v1277
    %1616 = vmatprep.subr.bf16.mxu0 %v1294
    %1617 = vmatpush1.bf16.msra.mxu0 %v1293
    %1618 = vmatprep.subr.bf16.mxu0 %v1310
    %1619 = vmatpush1.bf16.msra.mxu0 %v1309
    %1620 = vmatprep.subr.bf16.mxu0 %v1326
    %1621 = vmatpush1.bf16.msra.mxu0 %v1325
    %1622 = vmatprep.subr.bf16.mxu0 %v1342
    %1623 = vmatpush1.bf16.msra.mxu0 %v1341
    %1624 = vmatprep.subr.bf16.mxu0 0
    %1625 = vmatpush1.bf16.msra.mxu0 0
    %1626 = vmatprep.subr.bf16.mxu0 0
    %1627 = vmatpush1.bf16.msra.mxu0 0
    %1628 = vmatprep.subr.bf16.mxu0 0
    %1629 = vmatpush1.bf16.msra.mxu0 0
    %1630 = vmatprep.subr.bf16.mxu0 0
    %1631 = vmatpush1.bf16.msra.mxu0 0
    %1632 = vmatprep.subr.bf16.mxu0 0
    %1633 = vmatpush1.bf16.msra.mxu0 0
    %1634 = vmatprep.subr.bf16.mxu0 0
    %1635 = vmatpush1.bf16.msra.mxu0 0
    %1636 = vmatprep.subr.bf16.mxu0 0
    %1637 = vmatpush1.bf16.msra.mxu0 0
    %1638 = vmatprep.subr.bf16.mxu0 0
    %1639 = vmatpush1.bf16.msra.mxu0 0
    %1640 = vmatprep.mubr.bf16.mxu0 0
    %1641 = vmatmul.mubr.bf16.gmra.mrb[0].mxu0 %v626
    %v1642 = vpop.f32.mrb[0].mxu0
    %v1643 = vadd.f32 %v786, %v1642
    %v1644 = vpop.f32.mrb[0].mxu0
    %v1645 = vadd.f32 %v790, %v1644
    %v1646 = vpop.f32.mrb[0].mxu0
    %v1647 = vadd.f32 %v786, %v1646
    %v1648 = vpop.f32.mrb[0].mxu0
    %v1649 = vadd.f32 %v790, %v1648
    %1650 = vdwg.mxu0
    %1651 = vmatprep.subr.bf16.mxu0 %v1232
    %1652 = vmatpush1.bf16.msra.mxu0 %v1231
    %1653 = vmatprep.subr.bf16.mxu0 %v1248
    %1654 = vmatpush1.bf16.msra.mxu0 %v1247
    %1655 = vmatprep.subr.bf16.mxu0 %v1264
    %1656 = vmatpush1.bf16.msra.mxu0 %v1263
    %1657 = vmatprep.subr.bf16.mxu0 %v1280
    %1658 = vmatpush1.bf16.msra.mxu0 %v1279
    %1659 = vmatprep.subr.bf16.mxu0 %v1296
    %1660 = vmatpush1.bf16.msra.mxu0 %v1295
    %1661 = vmatprep.subr.bf16.mxu0 %v1312
    %1662 = vmatpush1.bf16.msra.mxu0 %v1311
    %1663 = vmatprep.subr.bf16.mxu0 %v1328
    %1664 = vmatpush1.bf16.msra.mxu0 %v1327
    %1665 = vmatprep.subr.bf16.mxu0 %v1344
    %1666 = vmatpush1.bf16.msra.mxu0 %v1343
    %1667 = vmatprep.subr.bf16.mxu0 0
    %1668 = vmatpush1.bf16.msra.mxu0 0
    %1669 = vmatprep.subr.bf16.mxu0 0
    %1670 = vmatpush1.bf16.msra.mxu0 0
    %1671 = vmatprep.subr.bf16.mxu0 0
    %1672 = vmatpush1.bf16.msra.mxu0 0
    %1673 = vmatprep.subr.bf16.mxu0 0
    %1674 = vmatpush1.bf16.msra.mxu0 0
    %1675 = vmatprep.subr.bf16.mxu0 0
    %1676 = vmatpush1.bf16.msra.mxu0 0
    %1677 = vmatprep.subr.bf16.mxu0 0
    %1678 = vmatpush1.bf16.msra.mxu0 0
    %1679 = vmatprep.subr.bf16.mxu0 0
    %1680 = vmatpush1.bf16.msra.mxu0 0
    %1681 = vmatprep.subr.bf16.mxu0 0
    %1682 = vmatpush1.bf16.msra.mxu0 0
    %1683 = vmatprep.mubr.bf16.mxu0 0
    %1684 = vmatmul.mubr.bf16.gmra.mrb[0].mxu0 %v626
    %v1685 = vpop.f32.mrb[0].mxu0
    %v1686 = vadd.f32 %v794, %v1685
    %v1687 = vpop.f32.mrb[0].mxu0
    %v1688 = vadd.f32 %v798, %v1687
    %v1689 = vpop.f32.mrb[0].mxu0
    %v1690 = vadd.f32 %v794, %v1689
    %v1691 = vpop.f32.mrb[0].mxu0
    %v1692 = vadd.f32 %v798, %v1691
    %1693 = vdwg.mxu0
    %1694 = vmatprep.subr.bf16.mxu0 %v1234
    %1695 = vmatpush1.bf16.msra.mxu0 %v1233
    %1696 = vmatprep.subr.bf16.mxu0 %v1250
    %1697 = vmatpush1.bf16.msra.mxu0 %v1249
    %1698 = vmatprep.subr.bf16.mxu0 %v1266
    %1699 = vmatpush1.bf16.msra.mxu0 %v1265
    %1700 = vmatprep.subr.bf16.mxu0 %v1282
    %1701 = vmatpush1.bf16.msra.mxu0 %v1281
    %1702 = vmatprep.subr.bf16.mxu0 %v1298
    %1703 = vmatpush1.bf16.msra.mxu0 %v1297
    %1704 = vmatprep.subr.bf16.mxu0 %v1314
    %1705 = vmatpush1.bf16.msra.mxu0 %v1313
    %1706 = vmatprep.subr.bf16.mxu0 %v1330
    %1707 = vmatpush1.bf16.msra.mxu0 %v1329
    %1708 = vmatprep.subr.bf16.mxu0 %v1346
    %1709 = vmatpush1.bf16.msra.mxu0 %v1345
    %1710 = vmatprep.subr.bf16.mxu0 0
    %1711 = vmatpush1.bf16.msra.mxu0 0
    %1712 = vmatprep.subr.bf16.mxu0 0
    %1713 = vmatpush1.bf16.msra.mxu0 0
    %1714 = vmatprep.subr.bf16.mxu0 0
    %1715 = vmatpush1.bf16.msra.mxu0 0
    %1716 = vmatprep.subr.bf16.mxu0 0
    %1717 = vmatpush1.bf16.msra.mxu0 0
    %1718 = vmatprep.subr.bf16.mxu0 0
    %1719 = vmatpush1.bf16.msra.mxu0 0
    %1720 = vmatprep.subr.bf16.mxu0 0
    %1721 = vmatpush1.bf16.msra.mxu0 0
    %1722 = vmatprep.subr.bf16.mxu0 0
    %1723 = vmatpush1.bf16.msra.mxu0 0
    %1724 = vmatprep.subr.bf16.mxu0 0
    %1725 = vmatpush1.bf16.msra.mxu0 0
    %1726 = vmatprep.mubr.bf16.mxu0 0
    %1727 = vmatmul.mubr.bf16.gmra.mrb[0].mxu0 %v626
    %v1728 = vpop.f32.mrb[0].mxu0
    %v1729 = vadd.f32 %v802, %v1728
    %v1730 = vpop.f32.mrb[0].mxu0
    %v1731 = vadd.f32 %v806, %v1730
    %v1732 = vpop.f32.mrb[0].mxu0
    %v1733 = vadd.f32 %v802, %v1732
    %v1734 = vpop.f32.mrb[0].mxu0
    %v1735 = vadd.f32 %v806, %v1734
    %1736 = vdwg.mxu0
    %1737 = vmatprep.subr.bf16.mxu0 %v1236
    %1738 = vmatpush1.bf16.msra.mxu0 %v1235
    %1739 = vmatprep.subr.bf16.mxu0 %v1252
    %1740 = vmatpush1.bf16.msra.mxu0 %v1251
    %1741 = vmatprep.subr.bf16.mxu0 %v1268
    %1742 = vmatpush1.bf16.msra.mxu0 %v1267
    %1743 = vmatprep.subr.bf16.mxu0 %v1284
    %1744 = vmatpush1.bf16.msra.mxu0 %v1283
    %1745 = vmatprep.subr.bf16.mxu0 %v1300
    %1746 = vmatpush1.bf16.msra.mxu0 %v1299
    %1747 = vmatprep.subr.bf16.mxu0 %v1316
    %1748 = vmatpush1.bf16.msra.mxu0 %v1315
    %1749 = vmatprep.subr.bf16.mxu0 %v1332
    %1750 = vmatpush1.bf16.msra.mxu0 %v1331
    %1751 = vmatprep.subr.bf16.mxu0 %v1348
    %1752 = vmatpush1.bf16.msra.mxu0 %v1347
    %1753 = vmatprep.subr.bf16.mxu0 0
    %1754 = vmatpush1.bf16.msra.mxu0 0
    %1755 = vmatprep.subr.bf16.mxu0 0
    %1756 = vmatpush1.bf16.msra.mxu0 0
    %1757 = vmatprep.subr.bf16.mxu0 0
    %1758 = vmatpush1.bf16.msra.mxu0 0
    %1759 = vmatprep.subr.bf16.mxu0 0
    %1760 = vmatpush1.bf16.msra.mxu0 0
    %1761 = vmatprep.subr.bf16.mxu0 0
    %1762 = vmatpush1.bf16.msra.mxu0 0
    %1763 = vmatprep.subr.bf16.mxu0 0
    %1764 = vmatpush1.bf16.msra.mxu0 0
    %1765 = vmatprep.subr.bf16.mxu0 0
    %1766 = vmatpush1.bf16.msra.mxu0 0
    %1767 = vmatprep.subr.bf16.mxu0 0
    %1768 = vmatpush1.bf16.msra.mxu0 0
    %1769 = vmatprep.mubr.bf16.mxu0 0
    %1770 = vmatmul.mubr.bf16.gmra.mrb[0].mxu0 %v626
    %v1771 = vpop.f32.mrb[0].mxu0
    %v1772 = vadd.f32 %v810, %v1771
    %v1773 = vpop.f32.mrb[0].mxu0
    %v1774 = vadd.f32 %v814, %v1773
    %v1775 = vpop.f32.mrb[0].mxu0
    %v1776 = vadd.f32 %v810, %v1775
    %v1777 = vpop.f32.mrb[0].mxu0
    %v1778 = vadd.f32 %v814, %v1777
    %1779 = vdwg.mxu0
    %1780 = vmatprep.subr.bf16.mxu0 %v1238
    %1781 = vmatpush1.bf16.msra.mxu0 %v1237
    %1782 = vmatprep.subr.bf16.mxu0 %v1254
    %1783 = vmatpush1.bf16.msra.mxu0 %v1253
    %1784 = vmatprep.subr.bf16.mxu0 %v1270
    %1785 = vmatpush1.bf16.msra.mxu0 %v1269
    %1786 = vmatprep.subr.bf16.mxu0 %v1286
    %1787 = vmatpush1.bf16.msra.mxu0 %v1285
    %1788 = vmatprep.subr.bf16.mxu0 %v1302
    %1789 = vmatpush1.bf16.msra.mxu0 %v1301
    %1790 = vmatprep.subr.bf16.mxu0 %v1318
    %1791 = vmatpush1.bf16.msra.mxu0 %v1317
    %1792 = vmatprep.subr.bf16.mxu0 %v1334
    %1793 = vmatpush1.bf16.msra.mxu0 %v1333
    %1794 = vmatprep.subr.bf16.mxu0 %v1350
    %1795 = vmatpush1.bf16.msra.mxu0 %v1349
    %1796 = vmatprep.subr.bf16.mxu0 0
    %1797 = vmatpush1.bf16.msra.mxu0 0
    %1798 = vmatprep.subr.bf16.mxu0 0
    %1799 = vmatpush1.bf16.msra.mxu0 0
    %1800 = vmatprep.subr.bf16.mxu0 0
    %1801 = vmatpush1.bf16.msra.mxu0 0
    %1802 = vmatprep.subr.bf16.mxu0 0
    %1803 = vmatpush1.bf16.msra.mxu0 0
    %1804 = vmatprep.subr.bf16.mxu0 0
    %1805 = vmatpush1.bf16.msra.mxu0 0
    %1806 = vmatprep.subr.bf16.mxu0 0
    %1807 = vmatpush1.bf16.msra.mxu0 0
    %1808 = vmatprep.subr.bf16.mxu0 0
    %1809 = vmatpush1.bf16.msra.mxu0 0
    %1810 = vmatprep.subr.bf16.mxu0 0
    %1811 = vmatpush1.bf16.msra.mxu0 0
    %1812 = vmatprep.mubr.bf16.mxu0 0
    %1813 = vmatmul.mubr.bf16.gmra.mrb[0].mxu0 %v626
    %v1814 = vpop.f32.mrb[0].mxu0
    %v1815 = vadd.f32 %v818, %v1814
    %v1816 = vpop.f32.mrb[0].mxu0
    %v1817 = vadd.f32 %v822, %v1816
    %v1818 = vpop.f32.mrb[0].mxu0
    %v1819 = vadd.f32 %v818, %v1818
    %v1820 = vpop.f32.mrb[0].mxu0
    %v1821 = vadd.f32 %v822, %v1820
    %1822 = vdwg.mxu0
    %v1823 = vmax.f32 %v1514, 0.0
    %v1824 = vmax.f32 %v1516, 0.0
    %v1825 = vmax.f32 %v1557, 0.0
    %v1826 = vmax.f32 %v1559, 0.0
    %v1827 = vmax.f32 %v1600, 0.0
    %v1828 = vmax.f32 %v1602, 0.0
    %v1829 = vmax.f32 %v1643, 0.0
    %v1830 = vmax.f32 %v1645, 0.0
    %v1831 = vmax.f32 %v1686, 0.0
    %v1832 = vmax.f32 %v1688, 0.0
    %v1833 = vmax.f32 %v1729, 0.0
    %v1834 = vmax.f32 %v1731, 0.0
    %v1835 = vmax.f32 %v1772, 0.0
    %v1836 = vmax.f32 %v1774, 0.0
    %v1837 = vmax.f32 %v1815, 0.0
    %v1838 = vmax.f32 %v1817, 0.0
    %v1839 = vmax.f32 %v1518, 0.0
    %v1840 = vmax.f32 %v1520, 0.0
    %v1841 = vmax.f32 %v1561, 0.0
    %v1842 = vmax.f32 %v1563, 0.0
    %v1843 = vmax.f32 %v1604, 0.0
    %v1844 = vmax.f32 %v1606, 0.0
    %v1845 = vmax.f32 %v1647, 0.0
    %v1846 = vmax.f32 %v1649, 0.0
    %v1847 = vmax.f32 %v1690, 0.0
    %v1848 = vmax.f32 %v1692, 0.0
    %v1849 = vmax.f32 %v1733, 0.0
    %v1850 = vmax.f32 %v1735, 0.0
    %v1851 = vmax.f32 %v1776, 0.0
    %v1852 = vmax.f32 %v1778, 0.0
    %v1853 = vmax.f32 %v1819, 0.0
    %v1854 = vmax.f32 %v1821, 0.0
    %v1855 = vpack.c.bf16 %v1839, %v1823
    %v1856 = vpack.c.bf16 %v1840, %v1824
    %v1857 = vpack.c.bf16 %v1841, %v1825
    %v1858 = vpack.c.bf16 %v1842, %v1826
    %v1859 = vpack.c.bf16 %v1843, %v1827
    %v1860 = vpack.c.bf16 %v1844, %v1828
    %v1861 = vpack.c.bf16 %v1845, %v1829
    %v1862 = vpack.c.bf16 %v1846, %v1830
    %v1863 = vpack.c.bf16 %v1847, %v1831
    %v1864 = vpack.c.bf16 %v1848, %v1832
    %v1865 = vpack.c.bf16 %v1849, %v1833
    %v1866 = vpack.c.bf16 %v1850, %v1834
    %v1867 = vpack.c.bf16 %v1851, %v1835
    %v1868 = vpack.c.bf16 %v1852, %v1836
    %v1869 = vpack.c.bf16 %v1853, %v1837
    %v1870 = vpack.c.bf16 %v1854, %v1838
    %v1871 = vld [vmem:[#allocation21] sm:$0xf]
    %v1872 = vld [vmem:[#allocation21 + $0x4] sm:$0xf]
    %v1873 = vld [vmem:[#allocation21 + $0x8] sm:$0xf]
    %v1874 = vld [vmem:[#allocation21 + $0xc] sm:$0xf]
    %v1875 = vld [vmem:[#allocation21 + $0x10] sm:$0xf]
    %v1876 = vld [vmem:[#allocation21 + $0x14] sm:$0xf]
    %v1877 = vld [vmem:[#allocation21 + $0x18] sm:$0xf]
    %v1878 = vld [vmem:[#allocation21 + $0x1c] sm:$0xf]
    %v1879 = vld [vmem:[#allocation21 + $0x20] sm:$0xf]
    %v1880 = vld [vmem:[#allocation21 + $0x24] sm:$0xf]
    %v1881 = vld [vmem:[#allocation21 + $0x28] sm:$0xf]
    %v1882 = vld [vmem:[#allocation21 + $0x2c] sm:$0xf]
    %v1883 = vld [vmem:[#allocation21 + $0x30] sm:$0xf]
    %v1884 = vld [vmem:[#allocation21 + $0x34] sm:$0xf]
    %v1885 = vld [vmem:[#allocation21 + $0x38] sm:$0xf]
    %v1886 = vld [vmem:[#allocation21 + $0x3c] sm:$0xf]
    %v1887 = vld [vmem:[#allocation21 + $0x40] sm:$0xf]
    %v1888 = vld [vmem:[#allocation21 + $0x44] sm:$0xf]
    %v1889 = vld [vmem:[#allocation21 + $0x48] sm:$0xf]
    %v1890 = vld [vmem:[#allocation21 + $0x4c] sm:$0xf]
    %v1891 = vld [vmem:[#allocation21 + $0x50] sm:$0xf]
    %v1892 = vld [vmem:[#allocation21 + $0x54] sm:$0xf]
    %v1893 = vld [vmem:[#allocation21 + $0x58] sm:$0xf]
    %v1894 = vld [vmem:[#allocation21 + $0x5c] sm:$0xf]
    %v1895 = vld [vmem:[#allocation21 + $0x60] sm:$0xf]
    %v1896 = vld [vmem:[#allocation21 + $0x64] sm:$0xf]
    %v1897 = vld [vmem:[#allocation21 + $0x68] sm:$0xf]
    %v1898 = vld [vmem:[#allocation21 + $0x6c] sm:$0xf]
    %v1899 = vld [vmem:[#allocation21 + $0x70] sm:$0xf]
    %v1900 = vld [vmem:[#allocation21 + $0x74] sm:$0xf]
    %v1901 = vld [vmem:[#allocation21 + $0x78] sm:$0xf]
    %v1902 = vld [vmem:[#allocation21 + $0x7c] sm:$0xf]
    %v1903 = vld [vmem:[#allocation21 + $0x80] sm:$0xf]
    %v1904 = vld [vmem:[#allocation21 + $0x84] sm:$0xf]
    %v1905 = vld [vmem:[#allocation21 + $0x88] sm:$0xf]
    %v1906 = vld [vmem:[#allocation21 + $0x8c] sm:$0xf]
    %v1907 = vld [vmem:[#allocation21 + $0x90] sm:$0xf]
    %v1908 = vld [vmem:[#allocation21 + $0x94] sm:$0xf]
    %v1909 = vld [vmem:[#allocation21 + $0x98] sm:$0xf]
    %v1910 = vld [vmem:[#allocation21 + $0x9c] sm:$0xf]
    %v1911 = vld [vmem:[#allocation21 + $0xa0] sm:$0xf]
    %v1912 = vld [vmem:[#allocation21 + $0xa4] sm:$0xf]
    %v1913 = vld [vmem:[#allocation21 + $0xa8] sm:$0xf]
    %v1914 = vld [vmem:[#allocation21 + $0xac] sm:$0xf]
    %v1915 = vld [vmem:[#allocation21 + $0xb0] sm:$0xf]
    %v1916 = vld [vmem:[#allocation21 + $0xb4] sm:$0xf]
    %v1917 = vld [vmem:[#allocation21 + $0xb8] sm:$0xf]
    %v1918 = vld [vmem:[#allocation21 + $0xbc] sm:$0xf]
    %v1919 = vld [vmem:[#allocation21 + $0xc0] sm:$0xf]
    %v1920 = vld [vmem:[#allocation21 + $0xc4] sm:$0xf]
    %v1921 = vld [vmem:[#allocation21 + $0xc8] sm:$0xf]
    %v1922 = vld [vmem:[#allocation21 + $0xcc] sm:$0xf]
    %v1923 = vld [vmem:[#allocation21 + $0xd0] sm:$0xf]
    %v1924 = vld [vmem:[#allocation21 + $0xd4] sm:$0xf]
    %v1925 = vld [vmem:[#allocation21 + $0xd8] sm:$0xf]
    %v1926 = vld [vmem:[#allocation21 + $0xdc] sm:$0xf]
    %v1927 = vld [vmem:[#allocation21 + $0xe0] sm:$0xf]
    %v1928 = vld [vmem:[#allocation21 + $0xe4] sm:$0xf]
    %v1929 = vld [vmem:[#allocation21 + $0xe8] sm:$0xf]
    %v1930 = vld [vmem:[#allocation21 + $0xec] sm:$0xf]
    %v1931 = vld [vmem:[#allocation21 + $0xf0] sm:$0xf]
    %v1932 = vld [vmem:[#allocation21 + $0xf4] sm:$0xf]
    %v1933 = vld [vmem:[#allocation21 + $0xf8] sm:$0xf]
    %v1934 = vld [vmem:[#allocation21 + $0xfc] sm:$0xf]
    %v1935 = vld [vmem:[#allocation21 + $0x100] sm:$0xf]
    %v1936 = vld [vmem:[#allocation21 + $0x104] sm:$0xf]
    %v1937 = vld [vmem:[#allocation21 + $0x108] sm:$0xf]
    %v1938 = vld [vmem:[#allocation21 + $0x10c] sm:$0xf]
    %v1939 = vld [vmem:[#allocation21 + $0x110] sm:$0xf]
    %v1940 = vld [vmem:[#allocation21 + $0x114] sm:$0xf]
    %v1941 = vld [vmem:[#allocation21 + $0x118] sm:$0xf]
    %v1942 = vld [vmem:[#allocation21 + $0x11c] sm:$0xf]
    %v1943 = vld [vmem:[#allocation21 + $0x120] sm:$0xf]
    %v1944 = vld [vmem:[#allocation21 + $0x124] sm:$0xf]
    %v1945 = vld [vmem:[#allocation21 + $0x128] sm:$0xf]
    %v1946 = vld [vmem:[#allocation21 + $0x12c] sm:$0xf]
    %v1947 = vld [vmem:[#allocation21 + $0x130] sm:$0xf]
    %v1948 = vld [vmem:[#allocation21 + $0x134] sm:$0xf]
    %v1949 = vld [vmem:[#allocation21 + $0x138] sm:$0xf]
    %v1950 = vld [vmem:[#allocation21 + $0x13c] sm:$0xf]
    %v1951 = vld [vmem:[#allocation21 + $0x140] sm:$0xf]
    %v1952 = vld [vmem:[#allocation21 + $0x144] sm:$0xf]
    %v1953 = vld [vmem:[#allocation21 + $0x148] sm:$0xf]
    %v1954 = vld [vmem:[#allocation21 + $0x14c] sm:$0xf]
    %v1955 = vld [vmem:[#allocation21 + $0x150] sm:$0xf]
    %v1956 = vld [vmem:[#allocation21 + $0x154] sm:$0xf]
    %v1957 = vld [vmem:[#allocation21 + $0x158] sm:$0xf]
    %v1958 = vld [vmem:[#allocation21 + $0x15c] sm:$0xf]
    %v1959 = vld [vmem:[#allocation21 + $0x160] sm:$0xf]
    %v1960 = vld [vmem:[#allocation21 + $0x164] sm:$0xf]
    %v1961 = vld [vmem:[#allocation21 + $0x168] sm:$0xf]
    %v1962 = vld [vmem:[#allocation21 + $0x16c] sm:$0xf]
    %v1963 = vld [vmem:[#allocation21 + $0x170] sm:$0xf]
    %v1964 = vld [vmem:[#allocation21 + $0x174] sm:$0xf]
    %v1965 = vld [vmem:[#allocation21 + $0x178] sm:$0xf]
    %v1966 = vld [vmem:[#allocation21 + $0x17c] sm:$0xf]
    %v1967 = vld [vmem:[#allocation21 + $0x180] sm:$0xf]
    %v1968 = vld [vmem:[#allocation21 + $0x184] sm:$0xf]
    %v1969 = vld [vmem:[#allocation21 + $0x188] sm:$0xf]
    %v1970 = vld [vmem:[#allocation21 + $0x18c] sm:$0xf]
    %v1971 = vld [vmem:[#allocation21 + $0x190] sm:$0xf]
    %v1972 = vld [vmem:[#allocation21 + $0x194] sm:$0xf]
    %v1973 = vld [vmem:[#allocation21 + $0x198] sm:$0xf]
    %v1974 = vld [vmem:[#allocation21 + $0x19c] sm:$0xf]
    %v1975 = vld [vmem:[#allocation21 + $0x1a0] sm:$0xf]
    %v1976 = vld [vmem:[#allocation21 + $0x1a4] sm:$0xf]
    %v1977 = vld [vmem:[#allocation21 + $0x1a8] sm:$0xf]
    %v1978 = vld [vmem:[#allocation21 + $0x1ac] sm:$0xf]
    %v1979 = vld [vmem:[#allocation21 + $0x1b0] sm:$0xf]
    %v1980 = vld [vmem:[#allocation21 + $0x1b4] sm:$0xf]
    %v1981 = vld [vmem:[#allocation21 + $0x1b8] sm:$0xf]
    %v1982 = vld [vmem:[#allocation21 + $0x1bc] sm:$0xf]
    %v1983 = vld [vmem:[#allocation21 + $0x1c0] sm:$0xf]
    %v1984 = vld [vmem:[#allocation21 + $0x1c4] sm:$0xf]
    %v1985 = vld [vmem:[#allocation21 + $0x1c8] sm:$0xf]
    %v1986 = vld [vmem:[#allocation21 + $0x1cc] sm:$0xf]
    %v1987 = vld [vmem:[#allocation21 + $0x1d0] sm:$0xf]
    %v1988 = vld [vmem:[#allocation21 + $0x1d4] sm:$0xf]
    %v1989 = vld [vmem:[#allocation21 + $0x1d8] sm:$0xf]
    %v1990 = vld [vmem:[#allocation21 + $0x1dc] sm:$0xf]
    %v1991 = vld [vmem:[#allocation21 + $0x1e0] sm:$0xf]
    %v1992 = vld [vmem:[#allocation21 + $0x1e4] sm:$0xf]
    %v1993 = vld [vmem:[#allocation21 + $0x1e8] sm:$0xf]
    %v1994 = vld [vmem:[#allocation21 + $0x1ec] sm:$0xf]
    %v1995 = vld [vmem:[#allocation21 + $0x1f0] sm:$0xf]
    %v1996 = vld [vmem:[#allocation21 + $0x1f4] sm:$0xf]
    %v1997 = vld [vmem:[#allocation21 + $0x1f8] sm:$0xf]
    %v1998 = vld [vmem:[#allocation21 + $0x1fc] sm:$0xf]
    %v1999 = vld [vmem:[#allocation21 + $0x200] sm:$0xf]
    %v2000 = vld [vmem:[#allocation21 + $0x204] sm:$0xf]
    %v2001 = vld [vmem:[#allocation21 + $0x208] sm:$0xf]
    %v2002 = vld [vmem:[#allocation21 + $0x20c] sm:$0xf]
    %v2003 = vld [vmem:[#allocation21 + $0x210] sm:$0xf]
    %v2004 = vld [vmem:[#allocation21 + $0x214] sm:$0xf]
    %v2005 = vld [vmem:[#allocation21 + $0x218] sm:$0xf]
    %v2006 = vld [vmem:[#allocation21 + $0x21c] sm:$0xf]
    %v2007 = vld [vmem:[#allocation21 + $0x220] sm:$0xf]
    %v2008 = vld [vmem:[#allocation21 + $0x224] sm:$0xf]
    %v2009 = vld [vmem:[#allocation21 + $0x228] sm:$0xf]
    %v2010 = vld [vmem:[#allocation21 + $0x22c] sm:$0xf]
    %v2011 = vld [vmem:[#allocation21 + $0x230] sm:$0xf]
    %v2012 = vld [vmem:[#allocation21 + $0x234] sm:$0xf]
    %v2013 = vld [vmem:[#allocation21 + $0x238] sm:$0xf]
    %v2014 = vld [vmem:[#allocation21 + $0x23c] sm:$0xf]
    %v2015 = vld [vmem:[#allocation21 + $0x240] sm:$0xf]
    %v2016 = vld [vmem:[#allocation21 + $0x244] sm:$0xf]
    %v2017 = vld [vmem:[#allocation21 + $0x248] sm:$0xf]
    %v2018 = vld [vmem:[#allocation21 + $0x24c] sm:$0xf]
    %v2019 = vld [vmem:[#allocation21 + $0x250] sm:$0xf]
    %v2020 = vld [vmem:[#allocation21 + $0x254] sm:$0xf]
    %v2021 = vld [vmem:[#allocation21 + $0x258] sm:$0xf]
    %v2022 = vld [vmem:[#allocation21 + $0x25c] sm:$0xf]
    %v2023 = vld [vmem:[#allocation21 + $0x260] sm:$0xf]
    %v2024 = vld [vmem:[#allocation21 + $0x264] sm:$0xf]
    %v2025 = vld [vmem:[#allocation21 + $0x268] sm:$0xf]
    %v2026 = vld [vmem:[#allocation21 + $0x26c] sm:$0xf]
    %v2027 = vld [vmem:[#allocation21 + $0x270] sm:$0xf]
    %v2028 = vld [vmem:[#allocation21 + $0x274] sm:$0xf]
    %v2029 = vld [vmem:[#allocation21 + $0x278] sm:$0xf]
    %v2030 = vld [vmem:[#allocation21 + $0x27c] sm:$0xf]
    %v2031 = vld [vmem:[#allocation21 + $0x280] sm:$0xf]
    %v2032 = vld [vmem:[#allocation21 + $0x284] sm:$0xf]
    %v2033 = vld [vmem:[#allocation21 + $0x288] sm:$0xf]
    %v2034 = vld [vmem:[#allocation21 + $0x28c] sm:$0xf]
    %v2035 = vld [vmem:[#allocation21 + $0x290] sm:$0xf]
    %v2036 = vld [vmem:[#allocation21 + $0x294] sm:$0xf]
    %v2037 = vld [vmem:[#allocation21 + $0x298] sm:$0xf]
    %v2038 = vld [vmem:[#allocation21 + $0x29c] sm:$0xf]
    %v2039 = vld [vmem:[#allocation21 + $0x2a0] sm:$0xf]
    %v2040 = vld [vmem:[#allocation21 + $0x2a4] sm:$0xf]
    %v2041 = vld [vmem:[#allocation21 + $0x2a8] sm:$0xf]
    %v2042 = vld [vmem:[#allocation21 + $0x2ac] sm:$0xf]
    %v2043 = vld [vmem:[#allocation21 + $0x2b0] sm:$0xf]
    %v2044 = vld [vmem:[#allocation21 + $0x2b4] sm:$0xf]
    %v2045 = vld [vmem:[#allocation21 + $0x2b8] sm:$0xf]
    %v2046 = vld [vmem:[#allocation21 + $0x2bc] sm:$0xf]
    %v2047 = vld [vmem:[#allocation21 + $0x2c0] sm:$0xf]
    %v2048 = vld [vmem:[#allocation21 + $0x2c4] sm:$0xf]
    %v2049 = vld [vmem:[#allocation21 + $0x2c8] sm:$0xf]
    %v2050 = vld [vmem:[#allocation21 + $0x2cc] sm:$0xf]
    %v2051 = vld [vmem:[#allocation21 + $0x2d0] sm:$0xf]
    %v2052 = vld [vmem:[#allocation21 + $0x2d4] sm:$0xf]
    %v2053 = vld [vmem:[#allocation21 + $0x2d8] sm:$0xf]
    %v2054 = vld [vmem:[#allocation21 + $0x2dc] sm:$0xf]
    %v2055 = vld [vmem:[#allocation21 + $0x2e0] sm:$0xf]
    %v2056 = vld [vmem:[#allocation21 + $0x2e4] sm:$0xf]
    %v2057 = vld [vmem:[#allocation21 + $0x2e8] sm:$0xf]
    %v2058 = vld [vmem:[#allocation21 + $0x2ec] sm:$0xf]
    %v2059 = vld [vmem:[#allocation21 + $0x2f0] sm:$0xf]
    %v2060 = vld [vmem:[#allocation21 + $0x2f4] sm:$0xf]
    %v2061 = vld [vmem:[#allocation21 + $0x2f8] sm:$0xf]
    %v2062 = vld [vmem:[#allocation21 + $0x2fc] sm:$0xf]
    %v2063 = vld [vmem:[#allocation21 + $0x300] sm:$0xf]
    %v2064 = vld [vmem:[#allocation21 + $0x304] sm:$0xf]
    %v2065 = vld [vmem:[#allocation21 + $0x308] sm:$0xf]
    %v2066 = vld [vmem:[#allocation21 + $0x30c] sm:$0xf]
    %v2067 = vld [vmem:[#allocation21 + $0x310] sm:$0xf]
    %v2068 = vld [vmem:[#allocation21 + $0x314] sm:$0xf]
    %v2069 = vld [vmem:[#allocation21 + $0x318] sm:$0xf]
    %v2070 = vld [vmem:[#allocation21 + $0x31c] sm:$0xf]
    %v2071 = vld [vmem:[#allocation21 + $0x320] sm:$0xf]
    %v2072 = vld [vmem:[#allocation21 + $0x324] sm:$0xf]
    %v2073 = vld [vmem:[#allocation21 + $0x328] sm:$0xf]
    %v2074 = vld [vmem:[#allocation21 + $0x32c] sm:$0xf]
    %v2075 = vld [vmem:[#allocation21 + $0x330] sm:$0xf]
    %v2076 = vld [vmem:[#allocation21 + $0x334] sm:$0xf]
    %v2077 = vld [vmem:[#allocation21 + $0x338] sm:$0xf]
    %v2078 = vld [vmem:[#allocation21 + $0x33c] sm:$0xf]
    %v2079 = vld [vmem:[#allocation21 + $0x340] sm:$0xf]
    %v2080 = vld [vmem:[#allocation21 + $0x344] sm:$0xf]
    %v2081 = vld [vmem:[#allocation21 + $0x348] sm:$0xf]
    %v2082 = vld [vmem:[#allocation21 + $0x34c] sm:$0xf]
    %v2083 = vld [vmem:[#allocation21 + $0x350] sm:$0xf]
    %v2084 = vld [vmem:[#allocation21 + $0x354] sm:$0xf]
    %v2085 = vld [vmem:[#allocation21 + $0x358] sm:$0xf]
    %v2086 = vld [vmem:[#allocation21 + $0x35c] sm:$0xf]
    %v2087 = vld [vmem:[#allocation21 + $0x360] sm:$0xf]
    %v2088 = vld [vmem:[#allocation21 + $0x364] sm:$0xf]
    %v2089 = vld [vmem:[#allocation21 + $0x368] sm:$0xf]
    %v2090 = vld [vmem:[#allocation21 + $0x36c] sm:$0xf]
    %v2091 = vld [vmem:[#allocation21 + $0x370] sm:$0xf]
    %v2092 = vld [vmem:[#allocation21 + $0x374] sm:$0xf]
    %v2093 = vld [vmem:[#allocation21 + $0x378] sm:$0xf]
    %v2094 = vld [vmem:[#allocation21 + $0x37c] sm:$0xf]
    %v2095 = vld [vmem:[#allocation21 + $0x380] sm:$0xf]
    %v2096 = vld [vmem:[#allocation21 + $0x384] sm:$0xf]
    %v2097 = vld [vmem:[#allocation21 + $0x388] sm:$0xf]
    %v2098 = vld [vmem:[#allocation21 + $0x38c] sm:$0xf]
    %v2099 = vld [vmem:[#allocation21 + $0x390] sm:$0xf]
    %v2100 = vld [vmem:[#allocation21 + $0x394] sm:$0xf]
    %v2101 = vld [vmem:[#allocation21 + $0x398] sm:$0xf]
    %v2102 = vld [vmem:[#allocation21 + $0x39c] sm:$0xf]
    %v2103 = vld [vmem:[#allocation21 + $0x3a0] sm:$0xf]
    %v2104 = vld [vmem:[#allocation21 + $0x3a4] sm:$0xf]
    %v2105 = vld [vmem:[#allocation21 + $0x3a8] sm:$0xf]
    %v2106 = vld [vmem:[#allocation21 + $0x3ac] sm:$0xf]
    %v2107 = vld [vmem:[#allocation21 + $0x3b0] sm:$0xf]
    %v2108 = vld [vmem:[#allocation21 + $0x3b4] sm:$0xf]
    %v2109 = vld [vmem:[#allocation21 + $0x3b8] sm:$0xf]
    %v2110 = vld [vmem:[#allocation21 + $0x3bc] sm:$0xf]
    %v2111 = vld [vmem:[#allocation21 + $0x3c0] sm:$0xf]
    %v2112 = vld [vmem:[#allocation21 + $0x3c4] sm:$0xf]
    %v2113 = vld [vmem:[#allocation21 + $0x3c8] sm:$0xf]
    %v2114 = vld [vmem:[#allocation21 + $0x3cc] sm:$0xf]
    %v2115 = vld [vmem:[#allocation21 + $0x3d0] sm:$0xf]
    %v2116 = vld [vmem:[#allocation21 + $0x3d4] sm:$0xf]
    %v2117 = vld [vmem:[#allocation21 + $0x3d8] sm:$0xf]
    %v2118 = vld [vmem:[#allocation21 + $0x3dc] sm:$0xf]
    %v2119 = vld [vmem:[#allocation21 + $0x3e0] sm:$0xf]
    %v2120 = vld [vmem:[#allocation21 + $0x3e4] sm:$0xf]
    %v2121 = vld [vmem:[#allocation21 + $0x3e8] sm:$0xf]
    %v2122 = vld [vmem:[#allocation21 + $0x3ec] sm:$0xf]
    %v2123 = vld [vmem:[#allocation21 + $0x3f0] sm:$0xf]
    %v2124 = vld [vmem:[#allocation21 + $0x3f4] sm:$0xf]
    %v2125 = vld [vmem:[#allocation21 + $0x3f8] sm:$0xf]
    %v2126 = vld [vmem:[#allocation21 + $0x3fc] sm:$0xf]
    %v2127 = vld [vmem:[#allocation23] sm:$0x1]
    %v2129 = vlaneseq
    %v2130 = vshrl.u32 %v2129, 7
    %v2131 = vsub.s32 0, %v2130
    %v2132 = vrot.slane %v2127, %v2131
    %v2390 = vunpack.c.l.b16 %v1871
    %v2391 = vunpack.c.l.b16 %v1872
    %v2392 = vunpack.c.l.b16 %v1873
    %v2393 = vunpack.c.l.b16 %v1874
    %v2394 = vunpack.c.l.b16 %v1875
    %v2395 = vunpack.c.l.b16 %v1876
    %v2396 = vunpack.c.l.b16 %v1877
    %v2397 = vunpack.c.l.b16 %v1878
    %v2398 = vunpack.c.l.b16 %v1879
    %v2399 = vunpack.c.l.b16 %v1880
    %v2400 = vunpack.c.l.b16 %v1881
    %v2401 = vunpack.c.l.b16 %v1882
    %v2402 = vunpack.c.l.b16 %v1883
    %v2403 = vunpack.c.l.b16 %v1884
    %v2404 = vunpack.c.l.b16 %v1885
    %v2405 = vunpack.c.l.b16 %v1886
    %v2406 = vunpack.c.l.b16 %v1887
    %v2407 = vunpack.c.l.b16 %v1888
    %v2408 = vunpack.c.l.b16 %v1889
    %v2409 = vunpack.c.l.b16 %v1890
    %v2410 = vunpack.c.l.b16 %v1891
    %v2411 = vunpack.c.l.b16 %v1892
    %v2412 = vunpack.c.l.b16 %v1893
    %v2413 = vunpack.c.l.b16 %v1894
    %v2414 = vunpack.c.l.b16 %v1895
    %v2415 = vunpack.c.l.b16 %v1896
    %v2416 = vunpack.c.l.b16 %v1897
    %v2417 = vunpack.c.l.b16 %v1898
    %v2418 = vunpack.c.l.b16 %v1899
    %v2419 = vunpack.c.l.b16 %v1900
    %v2420 = vunpack.c.l.b16 %v1901
    %v2421 = vunpack.c.l.b16 %v1902
    %v2422 = vunpack.c.l.b16 %v1903
    %v2423 = vunpack.c.l.b16 %v1904
    %v2424 = vunpack.c.l.b16 %v1905
    %v2425 = vunpack.c.l.b16 %v1906
    %v2426 = vunpack.c.l.b16 %v1907
    %v2427 = vunpack.c.l.b16 %v1908
    %v2428 = vunpack.c.l.b16 %v1909
    %v2429 = vunpack.c.l.b16 %v1910
    %v2430 = vunpack.c.l.b16 %v1911
    %v2431 = vunpack.c.l.b16 %v1912
    %v2432 = vunpack.c.l.b16 %v1913
    %v2433 = vunpack.c.l.b16 %v1914
    %v2434 = vunpack.c.l.b16 %v1915
    %v2435 = vunpack.c.l.b16 %v1916
    %v2436 = vunpack.c.l.b16 %v1917
    %v2437 = vunpack.c.l.b16 %v1918
    %v2438 = vunpack.c.l.b16 %v1919
    %v2439 = vunpack.c.l.b16 %v1920
    %v2440 = vunpack.c.l.b16 %v1921
    %v2441 = vunpack.c.l.b16 %v1922
    %v2442 = vunpack.c.l.b16 %v1923
    %v2443 = vunpack.c.l.b16 %v1924
    %v2444 = vunpack.c.l.b16 %v1925
    %v2445 = vunpack.c.l.b16 %v1926
    %v2446 = vunpack.c.l.b16 %v1927
    %v2447 = vunpack.c.l.b16 %v1928
    %v2448 = vunpack.c.l.b16 %v1929
    %v2449 = vunpack.c.l.b16 %v1930
    %v2450 = vunpack.c.l.b16 %v1931
    %v2451 = vunpack.c.l.b16 %v1932
    %v2452 = vunpack.c.l.b16 %v1933
    %v2453 = vunpack.c.l.b16 %v1934
    %v2454 = vunpack.c.l.b16 %v1935
    %v2455 = vunpack.c.l.b16 %v1936
    %v2456 = vunpack.c.l.b16 %v1937
    %v2457 = vunpack.c.l.b16 %v1938
    %v2458 = vunpack.c.l.b16 %v1939
    %v2459 = vunpack.c.l.b16 %v1940
    %v2460 = vunpack.c.l.b16 %v1941
    %v2461 = vunpack.c.l.b16 %v1942
    %v2462 = vunpack.c.l.b16 %v1943
    %v2463 = vunpack.c.l.b16 %v1944
    %v2464 = vunpack.c.l.b16 %v1945
    %v2465 = vunpack.c.l.b16 %v1946
    %v2466 = vunpack.c.l.b16 %v1947
    %v2467 = vunpack.c.l.b16 %v1948
    %v2468 = vunpack.c.l.b16 %v1949
    %v2469 = vunpack.c.l.b16 %v1950
    %v2470 = vunpack.c.l.b16 %v1951
    %v2471 = vunpack.c.l.b16 %v1952
    %v2472 = vunpack.c.l.b16 %v1953
    %v2473 = vunpack.c.l.b16 %v1954
    %v2474 = vunpack.c.l.b16 %v1955
    %v2475 = vunpack.c.l.b16 %v1956
    %v2476 = vunpack.c.l.b16 %v1957
    %v2477 = vunpack.c.l.b16 %v1958
    %v2478 = vunpack.c.l.b16 %v1959
    %v2479 = vunpack.c.l.b16 %v1960
    %v2480 = vunpack.c.l.b16 %v1961
    %v2481 = vunpack.c.l.b16 %v1962
    %v2482 = vunpack.c.l.b16 %v1963
    %v2483 = vunpack.c.l.b16 %v1964
    %v2484 = vunpack.c.l.b16 %v1965
    %v2485 = vunpack.c.l.b16 %v1966
    %v2486 = vunpack.c.l.b16 %v1967
    %v2487 = vunpack.c.l.b16 %v1968
    %v2488 = vunpack.c.l.b16 %v1969
    %v2489 = vunpack.c.l.b16 %v1970
    %v2490 = vunpack.c.l.b16 %v1971
    %v2491 = vunpack.c.l.b16 %v1972
    %v2492 = vunpack.c.l.b16 %v1973
    %v2493 = vunpack.c.l.b16 %v1974
    %v2494 = vunpack.c.l.b16 %v1975
    %v2495 = vunpack.c.l.b16 %v1976
    %v2496 = vunpack.c.l.b16 %v1977
    %v2497 = vunpack.c.l.b16 %v1978
    %v2498 = vunpack.c.l.b16 %v1979
    %v2499 = vunpack.c.l.b16 %v1980
    %v2500 = vunpack.c.l.b16 %v1981
    %v2501 = vunpack.c.l.b16 %v1982
    %v2502 = vunpack.c.l.b16 %v1983
    %v2503 = vunpack.c.l.b16 %v1984
    %v2504 = vunpack.c.l.b16 %v1985
    %v2505 = vunpack.c.l.b16 %v1986
    %v2506 = vunpack.c.l.b16 %v1987
    %v2507 = vunpack.c.l.b16 %v1988
    %v2508 = vunpack.c.l.b16 %v1989
    %v2509 = vunpack.c.l.b16 %v1990
    %v2510 = vunpack.c.l.b16 %v1991
    %v2511 = vunpack.c.l.b16 %v1992
    %v2512 = vunpack.c.l.b16 %v1993
    %v2513 = vunpack.c.l.b16 %v1994
    %v2514 = vunpack.c.l.b16 %v1995
    %v2515 = vunpack.c.l.b16 %v1996
    %v2516 = vunpack.c.l.b16 %v1997
    %v2517 = vunpack.c.l.b16 %v1998
    %v2518 = vunpack.c.l.b16 %v1999
    %v2519 = vunpack.c.l.b16 %v2000
    %v2520 = vunpack.c.l.b16 %v2001
    %v2521 = vunpack.c.l.b16 %v2002
    %v2522 = vunpack.c.l.b16 %v2003
    %v2523 = vunpack.c.l.b16 %v2004
    %v2524 = vunpack.c.l.b16 %v2005
    %v2525 = vunpack.c.l.b16 %v2006
    %v2526 = vunpack.c.l.b16 %v2007
    %v2527 = vunpack.c.l.b16 %v2008
    %v2528 = vunpack.c.l.b16 %v2009
    %v2529 = vunpack.c.l.b16 %v2010
    %v2530 = vunpack.c.l.b16 %v2011
    %v2531 = vunpack.c.l.b16 %v2012
    %v2532 = vunpack.c.l.b16 %v2013
    %v2533 = vunpack.c.l.b16 %v2014
    %v2534 = vunpack.c.l.b16 %v2015
    %v2535 = vunpack.c.l.b16 %v2016
    %v2536 = vunpack.c.l.b16 %v2017
    %v2537 = vunpack.c.l.b16 %v2018
    %v2538 = vunpack.c.l.b16 %v2019
    %v2539 = vunpack.c.l.b16 %v2020
    %v2540 = vunpack.c.l.b16 %v2021
    %v2541 = vunpack.c.l.b16 %v2022
    %v2542 = vunpack.c.l.b16 %v2023
    %v2543 = vunpack.c.l.b16 %v2024
    %v2544 = vunpack.c.l.b16 %v2025
    %v2545 = vunpack.c.l.b16 %v2026
    %v2546 = vunpack.c.l.b16 %v2027
    %v2547 = vunpack.c.l.b16 %v2028
    %v2548 = vunpack.c.l.b16 %v2029
    %v2549 = vunpack.c.l.b16 %v2030
    %v2550 = vunpack.c.l.b16 %v2031
    %v2551 = vunpack.c.l.b16 %v2032
    %v2552 = vunpack.c.l.b16 %v2033
    %v2553 = vunpack.c.l.b16 %v2034
    %v2554 = vunpack.c.l.b16 %v2035
    %v2555 = vunpack.c.l.b16 %v2036
    %v2556 = vunpack.c.l.b16 %v2037
    %v2557 = vunpack.c.l.b16 %v2038
    %v2558 = vunpack.c.l.b16 %v2039
    %v2559 = vunpack.c.l.b16 %v2040
    %v2560 = vunpack.c.l.b16 %v2041
    %v2561 = vunpack.c.l.b16 %v2042
    %v2562 = vunpack.c.l.b16 %v2043
    %v2563 = vunpack.c.l.b16 %v2044
    %v2564 = vunpack.c.l.b16 %v2045
    %v2565 = vunpack.c.l.b16 %v2046
    %v2566 = vunpack.c.l.b16 %v2047
    %v2567 = vunpack.c.l.b16 %v2048
    %v2568 = vunpack.c.l.b16 %v2049
    %v2569 = vunpack.c.l.b16 %v2050
    %v2570 = vunpack.c.l.b16 %v2051
    %v2571 = vunpack.c.l.b16 %v2052
    %v2572 = vunpack.c.l.b16 %v2053
    %v2573 = vunpack.c.l.b16 %v2054
    %v2574 = vunpack.c.l.b16 %v2055
    %v2575 = vunpack.c.l.b16 %v2056
    %v2576 = vunpack.c.l.b16 %v2057
    %v2577 = vunpack.c.l.b16 %v2058
    %v2578 = vunpack.c.l.b16 %v2059
    %v2579 = vunpack.c.l.b16 %v2060
    %v2580 = vunpack.c.l.b16 %v2061
    %v2581 = vunpack.c.l.b16 %v2062
    %v2582 = vunpack.c.l.b16 %v2063
    %v2583 = vunpack.c.l.b16 %v2064
    %v2584 = vunpack.c.l.b16 %v2065
    %v2585 = vunpack.c.l.b16 %v2066
    %v2586 = vunpack.c.l.b16 %v2067
    %v2587 = vunpack.c.l.b16 %v2068
    %v2588 = vunpack.c.l.b16 %v2069
    %v2589 = vunpack.c.l.b16 %v2070
    %v2590 = vunpack.c.l.b16 %v2071
    %v2591 = vunpack.c.l.b16 %v2072
    %v2592 = vunpack.c.l.b16 %v2073
    %v2593 = vunpack.c.l.b16 %v2074
    %v2594 = vunpack.c.l.b16 %v2075
    %v2595 = vunpack.c.l.b16 %v2076
    %v2596 = vunpack.c.l.b16 %v2077
    %v2597 = vunpack.c.l.b16 %v2078
    %v2598 = vunpack.c.l.b16 %v2079
    %v2599 = vunpack.c.l.b16 %v2080
    %v2600 = vunpack.c.l.b16 %v2081
    %v2601 = vunpack.c.l.b16 %v2082
    %v2602 = vunpack.c.l.b16 %v2083
    %v2603 = vunpack.c.l.b16 %v2084
    %v2604 = vunpack.c.l.b16 %v2085
    %v2605 = vunpack.c.l.b16 %v2086
    %v2606 = vunpack.c.l.b16 %v2087
    %v2607 = vunpack.c.l.b16 %v2088
    %v2608 = vunpack.c.l.b16 %v2089
    %v2609 = vunpack.c.l.b16 %v2090
    %v2610 = vunpack.c.l.b16 %v2091
    %v2611 = vunpack.c.l.b16 %v2092
    %v2612 = vunpack.c.l.b16 %v2093
    %v2613 = vunpack.c.l.b16 %v2094
    %v2614 = vunpack.c.l.b16 %v2095
    %v2615 = vunpack.c.l.b16 %v2096
    %v2616 = vunpack.c.l.b16 %v2097
    %v2617 = vunpack.c.l.b16 %v2098
    %v2618 = vunpack.c.l.b16 %v2099
    %v2619 = vunpack.c.l.b16 %v2100
    %v2620 = vunpack.c.l.b16 %v2101
    %v2621 = vunpack.c.l.b16 %v2102
    %v2622 = vunpack.c.l.b16 %v2103
    %v2623 = vunpack.c.l.b16 %v2104
    %v2624 = vunpack.c.l.b16 %v2105
    %v2625 = vunpack.c.l.b16 %v2106
    %v2626 = vunpack.c.l.b16 %v2107
    %v2627 = vunpack.c.l.b16 %v2108
    %v2628 = vunpack.c.l.b16 %v2109
    %v2629 = vunpack.c.l.b16 %v2110
    %v2630 = vunpack.c.l.b16 %v2111
    %v2631 = vunpack.c.l.b16 %v2112
    %v2632 = vunpack.c.l.b16 %v2113
    %v2633 = vunpack.c.l.b16 %v2114
    %v2634 = vunpack.c.l.b16 %v2115
    %v2635 = vunpack.c.l.b16 %v2116
    %v2636 = vunpack.c.l.b16 %v2117
    %v2637 = vunpack.c.l.b16 %v2118
    %v2638 = vunpack.c.l.b16 %v2119
    %v2639 = vunpack.c.l.b16 %v2120
    %v2640 = vunpack.c.l.b16 %v2121
    %v2641 = vunpack.c.l.b16 %v2122
    %v2642 = vunpack.c.l.b16 %v2123
    %v2643 = vunpack.c.l.b16 %v2124
    %v2644 = vunpack.c.l.b16 %v2125
    %v2645 = vunpack.c.l.b16 %v2126
    %v2646 = vpack.c.b16 %v2391, %v2390
    %v2647 = vpack.c.b16 %v2393, %v2392
    %v2648 = vpack.c.b16 %v2395, %v2394
    %v2649 = vpack.c.b16 %v2397, %v2396
    %v2650 = vpack.c.b16 %v2399, %v2398
    %v2651 = vpack.c.b16 %v2401, %v2400
    %v2652 = vpack.c.b16 %v2403, %v2402
    %v2653 = vpack.c.b16 %v2405, %v2404
    %v2654 = vpack.c.b16 %v2407, %v2406
    %v2655 = vpack.c.b16 %v2409, %v2408
    %v2656 = vpack.c.b16 %v2411, %v2410
    %v2657 = vpack.c.b16 %v2413, %v2412
    %v2658 = vpack.c.b16 %v2415, %v2414
    %v2659 = vpack.c.b16 %v2417, %v2416
    %v2660 = vpack.c.b16 %v2419, %v2418
    %v2661 = vpack.c.b16 %v2421, %v2420
    %v2662 = vpack.c.b16 %v2423, %v2422
    %v2663 = vpack.c.b16 %v2425, %v2424
    %v2664 = vpack.c.b16 %v2427, %v2426
    %v2665 = vpack.c.b16 %v2429, %v2428
    %v2666 = vpack.c.b16 %v2431, %v2430
    %v2667 = vpack.c.b16 %v2433, %v2432
    %v2668 = vpack.c.b16 %v2435, %v2434
    %v2669 = vpack.c.b16 %v2437, %v2436
    %v2670 = vpack.c.b16 %v2439, %v2438
    %v2671 = vpack.c.b16 %v2441, %v2440
    %v2672 = vpack.c.b16 %v2443, %v2442
    %v2673 = vpack.c.b16 %v2445, %v2444
    %v2674 = vpack.c.b16 %v2447, %v2446
    %v2675 = vpack.c.b16 %v2449, %v2448
    %v2676 = vpack.c.b16 %v2451, %v2450
    %v2677 = vpack.c.b16 %v2453, %v2452
    %v2678 = vpack.c.b16 %v2455, %v2454
    %v2679 = vpack.c.b16 %v2457, %v2456
    %v2680 = vpack.c.b16 %v2459, %v2458
    %v2681 = vpack.c.b16 %v2461, %v2460
    %v2682 = vpack.c.b16 %v2463, %v2462
    %v2683 = vpack.c.b16 %v2465, %v2464
    %v2684 = vpack.c.b16 %v2467, %v2466
    %v2685 = vpack.c.b16 %v2469, %v2468
    %v2686 = vpack.c.b16 %v2471, %v2470
    %v2687 = vpack.c.b16 %v2473, %v2472
    %v2688 = vpack.c.b16 %v2475, %v2474
    %v2689 = vpack.c.b16 %v2477, %v2476
    %v2690 = vpack.c.b16 %v2479, %v2478
    %v2691 = vpack.c.b16 %v2481, %v2480
    %v2692 = vpack.c.b16 %v2483, %v2482
    %v2693 = vpack.c.b16 %v2485, %v2484
    %v2694 = vpack.c.b16 %v2487, %v2486
    %v2695 = vpack.c.b16 %v2489, %v2488
    %v2696 = vpack.c.b16 %v2491, %v2490
    %v2697 = vpack.c.b16 %v2493, %v2492
    %v2698 = vpack.c.b16 %v2495, %v2494
    %v2699 = vpack.c.b16 %v2497, %v2496
    %v2700 = vpack.c.b16 %v2499, %v2498
    %v2701 = vpack.c.b16 %v2501, %v2500
    %v2702 = vpack.c.b16 %v2503, %v2502
    %v2703 = vpack.c.b16 %v2505, %v2504
    %v2704 = vpack.c.b16 %v2507, %v2506
    %v2705 = vpack.c.b16 %v2509, %v2508
    %v2706 = vpack.c.b16 %v2511, %v2510
    %v2707 = vpack.c.b16 %v2513, %v2512
    %v2708 = vpack.c.b16 %v2515, %v2514
    %v2709 = vpack.c.b16 %v2517, %v2516
    %v2710 = vpack.c.b16 %v2519, %v2518
    %v2711 = vpack.c.b16 %v2521, %v2520
    %v2712 = vpack.c.b16 %v2523, %v2522
    %v2713 = vpack.c.b16 %v2525, %v2524
    %v2714 = vpack.c.b16 %v2527, %v2526
    %v2715 = vpack.c.b16 %v2529, %v2528
    %v2716 = vpack.c.b16 %v2531, %v2530
    %v2717 = vpack.c.b16 %v2533, %v2532
    %v2718 = vpack.c.b16 %v2535, %v2534
    %v2719 = vpack.c.b16 %v2537, %v2536
    %v2720 = vpack.c.b16 %v2539, %v2538
    %v2721 = vpack.c.b16 %v2541, %v2540
    %v2722 = vpack.c.b16 %v2543, %v2542
    %v2723 = vpack.c.b16 %v2545, %v2544
    %v2724 = vpack.c.b16 %v2547, %v2546
    %v2725 = vpack.c.b16 %v2549, %v2548
    %v2726 = vpack.c.b16 %v2551, %v2550
    %v2727 = vpack.c.b16 %v2553, %v2552
    %v2728 = vpack.c.b16 %v2555, %v2554
    %v2729 = vpack.c.b16 %v2557, %v2556
    %v2730 = vpack.c.b16 %v2559, %v2558
    %v2731 = vpack.c.b16 %v2561, %v2560
    %v2732 = vpack.c.b16 %v2563, %v2562
    %v2733 = vpack.c.b16 %v2565, %v2564
    %v2734 = vpack.c.b16 %v2567, %v2566
    %v2735 = vpack.c.b16 %v2569, %v2568
    %v2736 = vpack.c.b16 %v2571, %v2570
    %v2737 = vpack.c.b16 %v2573, %v2572
    %v2738 = vpack.c.b16 %v2575, %v2574
    %v2739 = vpack.c.b16 %v2577, %v2576
    %v2740 = vpack.c.b16 %v2579, %v2578
    %v2741 = vpack.c.b16 %v2581, %v2580
    %v2742 = vpack.c.b16 %v2583, %v2582
    %v2743 = vpack.c.b16 %v2585, %v2584
    %v2744 = vpack.c.b16 %v2587, %v2586
    %v2745 = vpack.c.b16 %v2589, %v2588
    %v2746 = vpack.c.b16 %v2591, %v2590
    %v2747 = vpack.c.b16 %v2593, %v2592
    %v2748 = vpack.c.b16 %v2595, %v2594
    %v2749 = vpack.c.b16 %v2597, %v2596
    %v2750 = vpack.c.b16 %v2599, %v2598
    %v2751 = vpack.c.b16 %v2601, %v2600
    %v2752 = vpack.c.b16 %v2603, %v2602
    %v2753 = vpack.c.b16 %v2605, %v2604
    %v2754 = vpack.c.b16 %v2607, %v2606
    %v2755 = vpack.c.b16 %v2609, %v2608
    %v2756 = vpack.c.b16 %v2611, %v2610
    %v2757 = vpack.c.b16 %v2613, %v2612
    %v2758 = vpack.c.b16 %v2615, %v2614
    %v2759 = vpack.c.b16 %v2617, %v2616
    %v2760 = vpack.c.b16 %v2619, %v2618
    %v2761 = vpack.c.b16 %v2621, %v2620
    %v2762 = vpack.c.b16 %v2623, %v2622
    %v2763 = vpack.c.b16 %v2625, %v2624
    %v2764 = vpack.c.b16 %v2627, %v2626
    %v2765 = vpack.c.b16 %v2629, %v2628
    %v2766 = vpack.c.b16 %v2631, %v2630
    %v2767 = vpack.c.b16 %v2633, %v2632
    %v2768 = vpack.c.b16 %v2635, %v2634
    %v2769 = vpack.c.b16 %v2637, %v2636
    %v2770 = vpack.c.b16 %v2639, %v2638
    %v2771 = vpack.c.b16 %v2641, %v2640
    %v2772 = vpack.c.b16 %v2643, %v2642
    %v2773 = vpack.c.b16 %v2645, %v2644
    %2902 = vmatprep.subr.bf16.mxu0 0
    %2903 = vmatpush1.bf16.msra.mxu0 %v2646
    %2904 = vmatprep.subr.bf16.mxu0 0
    %2905 = vmatpush1.bf16.msra.mxu0 %v2647
    %2906 = vmatprep.subr.bf16.mxu0 0
    %2907 = vmatpush1.bf16.msra.mxu0 %v2648
    %2908 = vmatprep.subr.bf16.mxu0 0
    %2909 = vmatpush1.bf16.msra.mxu0 %v2649
    %2910 = vmatprep.subr.bf16.mxu0 0
    %2911 = vmatpush1.bf16.msra.mxu0 %v2650
    %2912 = vmatprep.subr.bf16.mxu0 0
    %2913 = vmatpush1.bf16.msra.mxu0 %v2651
    %2914 = vmatprep.subr.bf16.mxu0 0
    %2915 = vmatpush1.bf16.msra.mxu0 %v2652
    %2916 = vmatprep.subr.bf16.mxu0 0
    %2917 = vmatpush1.bf16.msra.mxu0 %v2653
    %2918 = vmatprep.subr.bf16.mxu0 0
    %2919 = vmatpush1.bf16.msra.mxu0 %v2654
    %2920 = vmatprep.subr.bf16.mxu0 0
    %2921 = vmatpush1.bf16.msra.mxu0 %v2655
    %2922 = vmatprep.subr.bf16.mxu0 0
    %2923 = vmatpush1.bf16.msra.mxu0 %v2656
    %2924 = vmatprep.subr.bf16.mxu0 0
    %2925 = vmatpush1.bf16.msra.mxu0 %v2657
    %2926 = vmatprep.subr.bf16.mxu0 0
    %2927 = vmatpush1.bf16.msra.mxu0 %v2658
    %2928 = vmatprep.subr.bf16.mxu0 0
    %2929 = vmatpush1.bf16.msra.mxu0 %v2659
    %2930 = vmatprep.subr.bf16.mxu0 0
    %2931 = vmatpush1.bf16.msra.mxu0 %v2660
    %2932 = vmatprep.subr.bf16.mxu0 0
    %2933 = vmatpush1.bf16.msra.mxu0 %v2661
    %2934 = vmatprep.mubr.bf16.mxu0 %v1856
    %2935 = vmatmul.mubr.bf16.gmra.mrb[0].mxu0 %v1855
    %v2936 = vpop.f32.mrb[0].mxu0
    %v2937 = vadd.f32 %v2132, %v2936
    %v2938 = vpop.f32.mrb[0].mxu0
    %v2939 = vpop.f32.mrb[0].mxu0
    %v2940 = vadd.f32 %v2132, %v2939
    %v2941 = vpop.f32.mrb[0].mxu0
    %2942 = vdwg.mxu0
    %2943 = vmatprep.subr.bf16.mxu0 0
    %2944 = vmatpush1.bf16.msra.mxu0 %v2662
    %2945 = vmatprep.subr.bf16.mxu0 0
    %2946 = vmatpush1.bf16.msra.mxu0 %v2663
    %2947 = vmatprep.subr.bf16.mxu0 0
    %2948 = vmatpush1.bf16.msra.mxu0 %v2664
    %2949 = vmatprep.subr.bf16.mxu0 0
    %2950 = vmatpush1.bf16.msra.mxu0 %v2665
    %2951 = vmatprep.subr.bf16.mxu0 0
    %2952 = vmatpush1.bf16.msra.mxu0 %v2666
    %2953 = vmatprep.subr.bf16.mxu0 0
    %2954 = vmatpush1.bf16.msra.mxu0 %v2667
    %2955 = vmatprep.subr.bf16.mxu0 0
    %2956 = vmatpush1.bf16.msra.mxu0 %v2668
    %2957 = vmatprep.subr.bf16.mxu0 0
    %2958 = vmatpush1.bf16.msra.mxu0 %v2669
    %2959 = vmatprep.subr.bf16.mxu0 0
    %2960 = vmatpush1.bf16.msra.mxu0 %v2670
    %2961 = vmatprep.subr.bf16.mxu0 0
    %2962 = vmatpush1.bf16.msra.mxu0 %v2671
    %2963 = vmatprep.subr.bf16.mxu0 0
    %2964 = vmatpush1.bf16.msra.mxu0 %v2672
    %2965 = vmatprep.subr.bf16.mxu0 0
    %2966 = vmatpush1.bf16.msra.mxu0 %v2673
    %2967 = vmatprep.subr.bf16.mxu0 0
    %2968 = vmatpush1.bf16.msra.mxu0 %v2674
    %2969 = vmatprep.subr.bf16.mxu0 0
    %2970 = vmatpush1.bf16.msra.mxu0 %v2675
    %2971 = vmatprep.subr.bf16.mxu0 0
    %2972 = vmatpush1.bf16.msra.mxu0 %v2676
    %2973 = vmatprep.subr.bf16.mxu0 0
    %2974 = vmatpush1.bf16.msra.mxu0 %v2677
    %2975 = vmatprep.mubr.bf16.mxu0 %v1858
    %2976 = vmatmul.mubr.bf16.gmra.mrb[0].mxu0 %v1857
    %v2977 = vpop.f32.mrb[0].mxu0
    %v2978 = vadd.f32 %v2937, %v2977
    %v2979 = vpop.f32.mrb[0].mxu0
    %v2980 = vpop.f32.mrb[0].mxu0
    %v2981 = vadd.f32 %v2940, %v2980
    %v2982 = vpop.f32.mrb[0].mxu0
    %2983 = vdwg.mxu0
    %2984 = vmatprep.subr.bf16.mxu0 0
    %2985 = vmatpush1.bf16.msra.mxu0 %v2678
    %2986 = vmatprep.subr.bf16.mxu0 0
    %2987 = vmatpush1.bf16.msra.mxu0 %v2679
    %2988 = vmatprep.subr.bf16.mxu0 0
    %2989 = vmatpush1.bf16.msra.mxu0 %v2680
    %2990 = vmatprep.subr.bf16.mxu0 0
    %2991 = vmatpush1.bf16.msra.mxu0 %v2681
    %2992 = vmatprep.subr.bf16.mxu0 0
    %2993 = vmatpush1.bf16.msra.mxu0 %v2682
    %2994 = vmatprep.subr.bf16.mxu0 0
    %2995 = vmatpush1.bf16.msra.mxu0 %v2683
    %2996 = vmatprep.subr.bf16.mxu0 0
    %2997 = vmatpush1.bf16.msra.mxu0 %v2684
    %2998 = vmatprep.subr.bf16.mxu0 0
    %2999 = vmatpush1.bf16.msra.mxu0 %v2685
    %3000 = vmatprep.subr.bf16.mxu0 0
    %3001 = vmatpush1.bf16.msra.mxu0 %v2686
    %3002 = vmatprep.subr.bf16.mxu0 0
    %3003 = vmatpush1.bf16.msra.mxu0 %v2687
    %3004 = vmatprep.subr.bf16.mxu0 0
    %3005 = vmatpush1.bf16.msra.mxu0 %v2688
    %3006 = vmatprep.subr.bf16.mxu0 0
    %3007 = vmatpush1.bf16.msra.mxu0 %v2689
    %3008 = vmatprep.subr.bf16.mxu0 0
    %3009 = vmatpush1.bf16.msra.mxu0 %v2690
    %3010 = vmatprep.subr.bf16.mxu0 0
    %3011 = vmatpush1.bf16.msra.mxu0 %v2691
    %3012 = vmatprep.subr.bf16.mxu0 0
    %3013 = vmatpush1.bf16.msra.mxu0 %v2692
    %3014 = vmatprep.subr.bf16.mxu0 0
    %3015 = vmatpush1.bf16.msra.mxu0 %v2693
    %3016 = vmatprep.mubr.bf16.mxu0 %v1860
    %3017 = vmatmul.mubr.bf16.gmra.mrb[0].mxu0 %v1859
    %v3018 = vpop.f32.mrb[0].mxu0
    %v3019 = vadd.f32 %v2978, %v3018
    %v3020 = vpop.f32.mrb[0].mxu0
    %v3021 = vpop.f32.mrb[0].mxu0
    %v3022 = vadd.f32 %v2981, %v3021
    %v3023 = vpop.f32.mrb[0].mxu0
    %3024 = vdwg.mxu0
    %3025 = vmatprep.subr.bf16.mxu0 0
    %3026 = vmatpush1.bf16.msra.mxu0 %v2694
    %3027 = vmatprep.subr.bf16.mxu0 0
    %3028 = vmatpush1.bf16.msra.mxu0 %v2695
    %3029 = vmatprep.subr.bf16.mxu0 0
    %3030 = vmatpush1.bf16.msra.mxu0 %v2696
    %3031 = vmatprep.subr.bf16.mxu0 0
    %3032 = vmatpush1.bf16.msra.mxu0 %v2697
    %3033 = vmatprep.subr.bf16.mxu0 0
    %3034 = vmatpush1.bf16.msra.mxu0 %v2698
    %3035 = vmatprep.subr.bf16.mxu0 0
    %3036 = vmatpush1.bf16.msra.mxu0 %v2699
    %3037 = vmatprep.subr.bf16.mxu0 0
    %3038 = vmatpush1.bf16.msra.mxu0 %v2700
    %3039 = vmatprep.subr.bf16.mxu0 0
    %3040 = vmatpush1.bf16.msra.mxu0 %v2701
    %3041 = vmatprep.subr.bf16.mxu0 0
    %3042 = vmatpush1.bf16.msra.mxu0 %v2702
    %3043 = vmatprep.subr.bf16.mxu0 0
    %3044 = vmatpush1.bf16.msra.mxu0 %v2703
    %3045 = vmatprep.subr.bf16.mxu0 0
    %3046 = vmatpush1.bf16.msra.mxu0 %v2704
    %3047 = vmatprep.subr.bf16.mxu0 0
    %3048 = vmatpush1.bf16.msra.mxu0 %v2705
    %3049 = vmatprep.subr.bf16.mxu0 0
    %3050 = vmatpush1.bf16.msra.mxu0 %v2706
    %3051 = vmatprep.subr.bf16.mxu0 0
    %3052 = vmatpush1.bf16.msra.mxu0 %v2707
    %3053 = vmatprep.subr.bf16.mxu0 0
    %3054 = vmatpush1.bf16.msra.mxu0 %v2708
    %3055 = vmatprep.subr.bf16.mxu0 0
    %3056 = vmatpush1.bf16.msra.mxu0 %v2709
    %3057 = vmatprep.mubr.bf16.mxu0 %v1862
    %3058 = vmatmul.mubr.bf16.gmra.mrb[0].mxu0 %v1861
    %v3059 = vpop.f32.mrb[0].mxu0
    %v3060 = vadd.f32 %v3019, %v3059
    %v3061 = vpop.f32.mrb[0].mxu0
    %v3062 = vpop.f32.mrb[0].mxu0
    %v3063 = vadd.f32 %v3022, %v3062
    %v3064 = vpop.f32.mrb[0].mxu0
    %3065 = vdwg.mxu0
    %3066 = vmatprep.subr.bf16.mxu0 0
    %3067 = vmatpush1.bf16.msra.mxu0 %v2710
    %3068 = vmatprep.subr.bf16.mxu0 0
    %3069 = vmatpush1.bf16.msra.mxu0 %v2711
    %3070 = vmatprep.subr.bf16.mxu0 0
    %3071 = vmatpush1.bf16.msra.mxu0 %v2712
    %3072 = vmatprep.subr.bf16.mxu0 0
    %3073 = vmatpush1.bf16.msra.mxu0 %v2713
    %3074 = vmatprep.subr.bf16.mxu0 0
    %3075 = vmatpush1.bf16.msra.mxu0 %v2714
    %3076 = vmatprep.subr.bf16.mxu0 0
    %3077 = vmatpush1.bf16.msra.mxu0 %v2715
    %3078 = vmatprep.subr.bf16.mxu0 0
    %3079 = vmatpush1.bf16.msra.mxu0 %v2716
    %3080 = vmatprep.subr.bf16.mxu0 0
    %3081 = vmatpush1.bf16.msra.mxu0 %v2717
    %3082 = vmatprep.subr.bf16.mxu0 0
    %3083 = vmatpush1.bf16.msra.mxu0 %v2718
    %3084 = vmatprep.subr.bf16.mxu0 0
    %3085 = vmatpush1.bf16.msra.mxu0 %v2719
    %3086 = vmatprep.subr.bf16.mxu0 0
    %3087 = vmatpush1.bf16.msra.mxu0 %v2720
    %3088 = vmatprep.subr.bf16.mxu0 0
    %3089 = vmatpush1.bf16.msra.mxu0 %v2721
    %3090 = vmatprep.subr.bf16.mxu0 0
    %3091 = vmatpush1.bf16.msra.mxu0 %v2722
    %3092 = vmatprep.subr.bf16.mxu0 0
    %3093 = vmatpush1.bf16.msra.mxu0 %v2723
    %3094 = vmatprep.subr.bf16.mxu0 0
    %3095 = vmatpush1.bf16.msra.mxu0 %v2724
    %3096 = vmatprep.subr.bf16.mxu0 0
    %3097 = vmatpush1.bf16.msra.mxu0 %v2725
    %3098 = vmatprep.mubr.bf16.mxu0 %v1864
    %3099 = vmatmul.mubr.bf16.gmra.mrb[0].mxu0 %v1863
    %v3100 = vpop.f32.mrb[0].mxu0
    %v3101 = vadd.f32 %v3060, %v3100
    %v3102 = vpop.f32.mrb[0].mxu0
    %v3103 = vpop.f32.mrb[0].mxu0
    %v3104 = vadd.f32 %v3063, %v3103
    %v3105 = vpop.f32.mrb[0].mxu0
    %3106 = vdwg.mxu0
    %3107 = vmatprep.subr.bf16.mxu0 0
    %3108 = vmatpush1.bf16.msra.mxu0 %v2726
    %3109 = vmatprep.subr.bf16.mxu0 0
    %3110 = vmatpush1.bf16.msra.mxu0 %v2727
    %3111 = vmatprep.subr.bf16.mxu0 0
    %3112 = vmatpush1.bf16.msra.mxu0 %v2728
    %3113 = vmatprep.subr.bf16.mxu0 0
    %3114 = vmatpush1.bf16.msra.mxu0 %v2729
    %3115 = vmatprep.subr.bf16.mxu0 0
    %3116 = vmatpush1.bf16.msra.mxu0 %v2730
    %3117 = vmatprep.subr.bf16.mxu0 0
    %3118 = vmatpush1.bf16.msra.mxu0 %v2731
    %3119 = vmatprep.subr.bf16.mxu0 0
    %3120 = vmatpush1.bf16.msra.mxu0 %v2732
    %3121 = vmatprep.subr.bf16.mxu0 0
    %3122 = vmatpush1.bf16.msra.mxu0 %v2733
    %3123 = vmatprep.subr.bf16.mxu0 0
    %3124 = vmatpush1.bf16.msra.mxu0 %v2734
    %3125 = vmatprep.subr.bf16.mxu0 0
    %3126 = vmatpush1.bf16.msra.mxu0 %v2735
    %3127 = vmatprep.subr.bf16.mxu0 0
    %3128 = vmatpush1.bf16.msra.mxu0 %v2736
    %3129 = vmatprep.subr.bf16.mxu0 0
    %3130 = vmatpush1.bf16.msra.mxu0 %v2737
    %3131 = vmatprep.subr.bf16.mxu0 0
    %3132 = vmatpush1.bf16.msra.mxu0 %v2738
    %3133 = vmatprep.subr.bf16.mxu0 0
    %3134 = vmatpush1.bf16.msra.mxu0 %v2739
    %3135 = vmatprep.subr.bf16.mxu0 0
    %3136 = vmatpush1.bf16.msra.mxu0 %v2740
    %3137 = vmatprep.subr.bf16.mxu0 0
    %3138 = vmatpush1.bf16.msra.mxu0 %v2741
    %3139 = vmatprep.mubr.bf16.mxu0 %v1866
    %3140 = vmatmul.mubr.bf16.gmra.mrb[0].mxu0 %v1865
    %v3141 = vpop.f32.mrb[0].mxu0
    %v3142 = vadd.f32 %v3101, %v3141
    %v3143 = vpop.f32.mrb[0].mxu0
    %v3144 = vpop.f32.mrb[0].mxu0
    %v3145 = vadd.f32 %v3104, %v3144
    %v3146 = vpop.f32.mrb[0].mxu0
    %3147 = vdwg.mxu0
    %3148 = vmatprep.subr.bf16.mxu0 0
    %3149 = vmatpush1.bf16.msra.mxu0 %v2742
    %3150 = vmatprep.subr.bf16.mxu0 0
    %3151 = vmatpush1.bf16.msra.mxu0 %v2743
    %3152 = vmatprep.subr.bf16.mxu0 0
    %3153 = vmatpush1.bf16.msra.mxu0 %v2744
    %3154 = vmatprep.subr.bf16.mxu0 0
    %3155 = vmatpush1.bf16.msra.mxu0 %v2745
    %3156 = vmatprep.subr.bf16.mxu0 0
    %3157 = vmatpush1.bf16.msra.mxu0 %v2746
    %3158 = vmatprep.subr.bf16.mxu0 0
    %3159 = vmatpush1.bf16.msra.mxu0 %v2747
    %3160 = vmatprep.subr.bf16.mxu0 0
    %3161 = vmatpush1.bf16.msra.mxu0 %v2748
    %3162 = vmatprep.subr.bf16.mxu0 0
    %3163 = vmatpush1.bf16.msra.mxu0 %v2749
    %3164 = vmatprep.subr.bf16.mxu0 0
    %3165 = vmatpush1.bf16.msra.mxu0 %v2750
    %3166 = vmatprep.subr.bf16.mxu0 0
    %3167 = vmatpush1.bf16.msra.mxu0 %v2751
    %3168 = vmatprep.subr.bf16.mxu0 0
    %3169 = vmatpush1.bf16.msra.mxu0 %v2752
    %3170 = vmatprep.subr.bf16.mxu0 0
    %3171 = vmatpush1.bf16.msra.mxu0 %v2753
    %3172 = vmatprep.subr.bf16.mxu0 0
    %3173 = vmatpush1.bf16.msra.mxu0 %v2754
    %3174 = vmatprep.subr.bf16.mxu0 0
    %3175 = vmatpush1.bf16.msra.mxu0 %v2755
    %3176 = vmatprep.subr.bf16.mxu0 0
    %3177 = vmatpush1.bf16.msra.mxu0 %v2756
    %3178 = vmatprep.subr.bf16.mxu0 0
    %3179 = vmatpush1.bf16.msra.mxu0 %v2757
    %3180 = vmatprep.mubr.bf16.mxu0 %v1868
    %3181 = vmatmul.mubr.bf16.gmra.mrb[0].mxu0 %v1867
    %v3182 = vpop.f32.mrb[0].mxu0
    %v3183 = vadd.f32 %v3142, %v3182
    %v3184 = vpop.f32.mrb[0].mxu0
    %v3185 = vpop.f32.mrb[0].mxu0
    %v3186 = vadd.f32 %v3145, %v3185
    %v3187 = vpop.f32.mrb[0].mxu0
    %3188 = vdwg.mxu0
    %3189 = vmatprep.subr.bf16.mxu0 0
    %3190 = vmatpush1.bf16.msra.mxu0 %v2758
    %3191 = vmatprep.subr.bf16.mxu0 0
    %3192 = vmatpush1.bf16.msra.mxu0 %v2759
    %3193 = vmatprep.subr.bf16.mxu0 0
    %3194 = vmatpush1.bf16.msra.mxu0 %v2760
    %3195 = vmatprep.subr.bf16.mxu0 0
    %3196 = vmatpush1.bf16.msra.mxu0 %v2761
    %3197 = vmatprep.subr.bf16.mxu0 0
    %3198 = vmatpush1.bf16.msra.mxu0 %v2762
    %3199 = vmatprep.subr.bf16.mxu0 0
    %3200 = vmatpush1.bf16.msra.mxu0 %v2763
    %3201 = vmatprep.subr.bf16.mxu0 0
    %3202 = vmatpush1.bf16.msra.mxu0 %v2764
    %3203 = vmatprep.subr.bf16.mxu0 0
    %3204 = vmatpush1.bf16.msra.mxu0 %v2765
    %3205 = vmatprep.subr.bf16.mxu0 0
    %3206 = vmatpush1.bf16.msra.mxu0 %v2766
    %3207 = vmatprep.subr.bf16.mxu0 0
    %3208 = vmatpush1.bf16.msra.mxu0 %v2767
    %3209 = vmatprep.subr.bf16.mxu0 0
    %3210 = vmatpush1.bf16.msra.mxu0 %v2768
    %3211 = vmatprep.subr.bf16.mxu0 0
    %3212 = vmatpush1.bf16.msra.mxu0 %v2769
    %3213 = vmatprep.subr.bf16.mxu0 0
    %3214 = vmatpush1.bf16.msra.mxu0 %v2770
    %3215 = vmatprep.subr.bf16.mxu0 0
    %3216 = vmatpush1.bf16.msra.mxu0 %v2771
    %3217 = vmatprep.subr.bf16.mxu0 0
    %3218 = vmatpush1.bf16.msra.mxu0 %v2772
    %3219 = vmatprep.subr.bf16.mxu0 0
    %3220 = vmatpush1.bf16.msra.mxu0 %v2773
    %3221 = vmatprep.mubr.bf16.mxu0 %v1870
    %3222 = vmatmul.mubr.bf16.gmra.mrb[0].mxu0 %v1869
    %v3223 = vpop.f32.mrb[0].mxu0
    %v3224 = vadd.f32 %v3183, %v3223
    %v3225 = vpop.f32.mrb[0].mxu0
    %v3226 = vpop.f32.mrb[0].mxu0
    %v3227 = vadd.f32 %v3186, %v3226
    %v3228 = vpop.f32.mrb[0].mxu0
    %3229 = vdwg.mxu0
    %v3230 = vadd.f32 %v624, %v3224
    %v3231 = vadd.f32 %v625, %v3227
    %v3232 = vld [vmem:[#allocation24] sm:$0x1]
    %v3233 = vld [vmem:[#allocation26] sm:$0x1]
    %3234 = vadd.xlane.f32.xlu0 %v3230
    %v3235 = vpop.xlane.xlu0 %3234
    %3236 = vadd.xlane.f32.xlu0 %v3231
    %v3237 = vpop.xlane.xlu0 %3236
    %v3238 = vmul.f32 %v3235, 0.0078125
    %v3239 = vmul.f32 %v3237, 0.0078125
    %v3240 = vsub.f32 %v3230, %v3238
    %v3241 = vsub.f32 %v3231, %v3239
    %v3242 = vmul.f32 %v3240, %v3240
    %v3243 = vmul.f32 %v3241, %v3241
    %3244 = vadd.xlane.f32.xlu0 %v3242
    %v3245 = vpop.xlane.xlu0 %3244
    %3246 = vadd.xlane.f32.xlu0 %v3243
    %v3247 = vpop.xlane.xlu0 %3246
    %v3248 = vmul.f32 %v3245, 0.0078125
    %v3249 = vmul.f32 %v3247, 0.0078125
    %v3250 = vadd.f32 %v3248, 1e-05
    %v3251 = vadd.f32 %v3249, 1e-05
    %v3252 = vrsqrt.pop %v3250
    %v3253 = vrsqrt.pop %v3251
    %v3254 = vmul.f32 %v3240, %v3252
    %v3255 = vmul.f32 %v3241, %v3253
    %v3257 = vlaneseq
    %v3258 = vshrl.u32 %v3257, 7
    %v3259 = vsub.s32 0, %v3258
    %v3260 = vrot.slane %v3232, %v3259
    %v3262 = vmul.f32 %v3254, %v3260
    %v3263 = vmul.f32 %v3255, %v3260
    %v3265 = vlaneseq
    %v3266 = vshrl.u32 %v3265, 7
    %v3267 = vsub.s32 0, %v3266
    %v3268 = vrot.slane %v3233, %v3267
    %v3270 = vadd.f32 %v3262, %v3268
    %v3271 = vadd.f32 %v3263, %v3268
    %v3272 = vpack.c.bf16 %v3271, %v3270
    %s3273 = scalar_lea.vmem [#allocation9], 64
    %v3274 = vld [vmem:[%s3273] sm:$0xf]
    %v3275 = vld [vmem:[%s3273 + $0x4] sm:$0xf]
    %v3276 = vld [vmem:[%s3273 + $0x8] sm:$0xf]
    %v3277 = vld [vmem:[%s3273 + $0xc] sm:$0xf]
    %v3278 = vld [vmem:[%s3273 + $0x10] sm:$0xf]
    %v3279 = vld [vmem:[%s3273 + $0x14] sm:$0xf]
    %v3280 = vld [vmem:[%s3273 + $0x18] sm:$0xf]
    %v3281 = vld [vmem:[%s3273 + $0x1c] sm:$0xf]
    %v3282 = vld [vmem:[%s3273 + $0x20] sm:$0xf]
    %v3283 = vld [vmem:[%s3273 + $0x24] sm:$0xf]
    %v3284 = vld [vmem:[%s3273 + $0x28] sm:$0xf]
    %v3285 = vld [vmem:[%s3273 + $0x2c] sm:$0xf]
    %v3286 = vld [vmem:[%s3273 + $0x30] sm:$0xf]
    %v3287 = vld [vmem:[%s3273 + $0x34] sm:$0xf]
    %v3288 = vld [vmem:[%s3273 + $0x38] sm:$0xf]
    %v3289 = vld [vmem:[%s3273 + $0x3c] sm:$0xf]
    %s3290 = scalar_lea.vmem [#allocation11], 1
    %v3291 = vld [vmem:[%s3290] sm:$0x1]
    %v3293 = vlaneseq
    %v3294 = vshrl.u32 %v3293, 7
    %v3295 = vsub.s32 0, %v3294
    %v3296 = vrot.slane %v3291, %v3295
    %v3314 = vunpack.c.l.b16 %v3274
    %v3315 = vunpack.c.l.b16 %v3275
    %v3316 = vunpack.c.l.b16 %v3276
    %v3317 = vunpack.c.l.b16 %v3277
    %v3318 = vunpack.c.l.b16 %v3278
    %v3319 = vunpack.c.l.b16 %v3279
    %v3320 = vunpack.c.l.b16 %v3280
    %v3321 = vunpack.c.l.b16 %v3281
    %v3322 = vunpack.c.l.b16 %v3282
    %v3323 = vunpack.c.l.b16 %v3283
    %v3324 = vunpack.c.l.b16 %v3284
    %v3325 = vunpack.c.l.b16 %v3285
    %v3326 = vunpack.c.l.b16 %v3286
    %v3327 = vunpack.c.l.b16 %v3287
    %v3328 = vunpack.c.l.b16 %v3288
    %v3329 = vunpack.c.l.b16 %v3289
    %v3330 = vpack.c.b16 %v3315, %v3314
    %v3331 = vpack.c.b16 %v3317, %v3316
    %v3332 = vpack.c.b16 %v3319, %v3318
    %v3333 = vpack.c.b16 %v3321, %v3320
    %v3334 = vpack.c.b16 %v3323, %v3322
    %v3335 = vpack.c.b16 %v3325, %v3324
    %v3336 = vpack.c.b16 %v3327, %v3326
    %v3337 = vpack.c.b16 %v3329, %v3328
    %3346 = vmatprep.subr.bf16.mxu0 0
    %3347 = vmatpush1.bf16.msra.mxu0 %v3330
    %3348 = vmatprep.subr.bf16.mxu0 0
    %3349 = vmatpush1.bf16.msra.mxu0 %v3331
    %3350 = vmatprep.subr.bf16.mxu0 0
    %3351 = vmatpush1.bf16.msra.mxu0 %v3332
    %3352 = vmatprep.subr.bf16.mxu0 0
    %3353 = vmatpush1.bf16.msra.mxu0 %v3333
    %3354 = vmatprep.subr.bf16.mxu0 0
    %3355 = vmatpush1.bf16.msra.mxu0 %v3334
    %3356 = vmatprep.subr.bf16.mxu0 0
    %3357 = vmatpush1.bf16.msra.mxu0 %v3335
    %3358 = vmatprep.subr.bf16.mxu0 0
    %3359 = vmatpush1.bf16.msra.mxu0 %v3336
    %3360 = vmatprep.subr.bf16.mxu0 0
    %3361 = vmatpush1.bf16.msra.mxu0 %v3337
    %3362 = vmatprep.subr.bf16.mxu0 0
    %3363 = vmatpush1.bf16.msra.mxu0 0
    %3364 = vmatprep.subr.bf16.mxu0 0
    %3365 = vmatpush1.bf16.msra.mxu0 0
    %3366 = vmatprep.subr.bf16.mxu0 0
    %3367 = vmatpush1.bf16.msra.mxu0 0
    %3368 = vmatprep.subr.bf16.mxu0 0
    %3369 = vmatpush1.bf16.msra.mxu0 0
    %3370 = vmatprep.subr.bf16.mxu0 0
    %3371 = vmatpush1.bf16.msra.mxu0 0
    %3372 = vmatprep.subr.bf16.mxu0 0
    %3373 = vmatpush1.bf16.msra.mxu0 0
    %3374 = vmatprep.subr.bf16.mxu0 0
    %3375 = vmatpush1.bf16.msra.mxu0 0
    %3376 = vmatprep.subr.bf16.mxu0 0
    %3377 = vmatpush1.bf16.msra.mxu0 0
    %3378 = vmatprep.mubr.bf16.mxu0 0
    %3379 = vmatmul.mubr.bf16.gmra.mrb[0].mxu0 %v3272
    %v3380 = vpop.f32.mrb[0].mxu0
    %v3381 = vadd.f32 %v3296, %v3380
    %v3382 = vpop.f32.mrb[0].mxu0
    %v3383 = vpop.f32.mrb[0].mxu0
    %v3384 = vadd.f32 %v3296, %v3383
    %v3385 = vpop.f32.mrb[0].mxu0
    %3386 = vdwg.mxu0
    %v3387 = vpack.c.bf16 %v3384, %v3381
    %s3388 = scalar_lea.vmem [#allocation12], 64
    %v3389 = vld [vmem:[%s3388] sm:$0xf]
    %v3390 = vld [vmem:[%s3388 + $0x4] sm:$0xf]
    %v3391 = vld [vmem:[%s3388 + $0x8] sm:$0xf]
    %v3392 = vld [vmem:[%s3388 + $0xc] sm:$0xf]
    %v3393 = vld [vmem:[%s3388 + $0x10] sm:$0xf]
    %v3394 = vld [vmem:[%s3388 + $0x14] sm:$0xf]
    %v3395 = vld [vmem:[%s3388 + $0x18] sm:$0xf]
    %v3396 = vld [vmem:[%s3388 + $0x1c] sm:$0xf]
    %v3397 = vld [vmem:[%s3388 + $0x20] sm:$0xf]
    %v3398 = vld [vmem:[%s3388 + $0x24] sm:$0xf]
    %v3399 = vld [vmem:[%s3388 + $0x28] sm:$0xf]
    %v3400 = vld [vmem:[%s3388 + $0x2c] sm:$0xf]
    %v3401 = vld [vmem:[%s3388 + $0x30] sm:$0xf]
    %v3402 = vld [vmem:[%s3388 + $0x34] sm:$0xf]
    %v3403 = vld [vmem:[%s3388 + $0x38] sm:$0xf]
    %v3404 = vld [vmem:[%s3388 + $0x3c] sm:$0xf]
    %s3405 = scalar_lea.vmem [#allocation14], 1
    %v3406 = vld [vmem:[%s3405] sm:$0x1]
    %v3408 = vlaneseq
    %v3409 = vshrl.u32 %v3408, 7
    %v3410 = vsub.s32 0, %v3409
    %v3411 = vrot.slane %v3406, %v3410
    %v3429 = vunpack.c.l.b16 %v3389
    %v3430 = vunpack.c.l.b16 %v3390
    %v3431 = vunpack.c.l.b16 %v3391
    %v3432 = vunpack.c.l.b16 %v3392
    %v3433 = vunpack.c.l.b16 %v3393
    %v3434 = vunpack.c.l.b16 %v3394
    %v3435 = vunpack.c.l.b16 %v3395
    %v3436 = vunpack.c.l.b16 %v3396
    %v3437 = vunpack.c.l.b16 %v3397
    %v3438 = vunpack.c.l.b16 %v3398
    %v3439 = vunpack.c.l.b16 %v3399
    %v3440 = vunpack.c.l.b16 %v3400
    %v3441 = vunpack.c.l.b16 %v3401
    %v3442 = vunpack.c.l.b16 %v3402
    %v3443 = vunpack.c.l.b16 %v3403
    %v3444 = vunpack.c.l.b16 %v3404
    %v3445 = vpack.c.b16 %v3430, %v3429
    %v3446 = vpack.c.b16 %v3432, %v3431
    %v3447 = vpack.c.b16 %v3434, %v3433
    %v3448 = vpack.c.b16 %v3436, %v3435
    %v3449 = vpack.c.b16 %v3438, %v3437
    %v3450 = vpack.c.b16 %v3440, %v3439
    %v3451 = vpack.c.b16 %v3442, %v3441
    %v3452 = vpack.c.b16 %v3444, %v3443
    %3461 = vmatprep.subr.bf16.mxu0 0
    %3462 = vmatpush1.bf16.msra.mxu0 %v3445
    %3463 = vmatprep.subr.bf16.mxu0 0
    %3464 = vmatpush1.bf16.msra.mxu0 %v3446
    %3465 = vmatprep.subr.bf16.mxu0 0
    %3466 = vmatpush1.bf16.msra.mxu0 %v3447
    %3467 = vmatprep.subr.bf16.mxu0 0
    %3468 = vmatpush1.bf16.msra.mxu0 %v3448
    %3469 = vmatprep.subr.bf16.mxu0 0
    %3470 = vmatpush1.bf16.msra.mxu0 %v3449
    %3471 = vmatprep.subr.bf16.mxu0 0
    %3472 = vmatpush1.bf16.msra.mxu0 %v3450
    %3473 = vmatprep.subr.bf16.mxu0 0
    %3474 = vmatpush1.bf16.msra.mxu0 %v3451
    %3475 = vmatprep.subr.bf16.mxu0 0
    %3476 = vmatpush1.bf16.msra.mxu0 %v3452
    %3477 = vmatprep.subr.bf16.mxu0 0
    %3478 = vmatpush1.bf16.msra.mxu0 0
    %3479 = vmatprep.subr.bf16.mxu0 0
    %3480 = vmatpush1.bf16.msra.mxu0 0
    %3481 = vmatprep.subr.bf16.mxu0 0
    %3482 = vmatpush1.bf16.msra.mxu0 0
    %3483 = vmatprep.subr.bf16.mxu0 0
    %3484 = vmatpush1.bf16.msra.mxu0 0
    %3485 = vmatprep.subr.bf16.mxu0 0
    %3486 = vmatpush1.bf16.msra.mxu0 0
    %3487 = vmatprep.subr.bf16.mxu0 0
    %3488 = vmatpush1.bf16.msra.mxu0 0
    %3489 = vmatprep.subr.bf16.mxu0 0
    %3490 = vmatpush1.bf16.msra.mxu0 0
    %3491 = vmatprep.subr.bf16.mxu0 0
    %3492 = vmatpush1.bf16.msra.mxu0 0
    %3493 = vmatprep.mubr.bf16.mxu0 0
    %3494 = vmatmul.mubr.bf16.gmra.mrb[0].mxu0 %v3387
    %v3495 = vpop.f32.mrb[0].mxu0
    %v3496 = vadd.f32 %v3411, %v3495
    %v3497 = vpop.f32.mrb[0].mxu0
    %v3498 = vpop.f32.mrb[0].mxu0
    %v3499 = vadd.f32 %v3411, %v3498
    %v3500 = vpop.f32.mrb[0].mxu0
    %3501 = vdwg.mxu0
    %v3502 = vadd.f32 %v3270, %v3496
    %v3503 = vadd.f32 %v3271, %v3499
    %s3504 = scalar_lea.vmem [#allocation15], 1
    %v3505 = vld [vmem:[%s3504] sm:$0x1]
    %s3506 = scalar_lea.vmem [#allocation17], 1
    %v3507 = vld [vmem:[%s3506] sm:$0x1]
    %3508 = vadd.xlane.f32.xlu0 %v3502
    %v3509 = vpop.xlane.xlu0 %3508
    %3510 = vadd.xlane.f32.xlu0 %v3503
    %v3511 = vpop.xlane.xlu0 %3510
    %v3512 = vmul.f32 %v3509, 0.0078125
    %v3513 = vmul.f32 %v3511, 0.0078125
    %v3514 = vsub.f32 %v3502, %v3512
    %v3515 = vsub.f32 %v3503, %v3513
    %v3516 = vmul.f32 %v3514, %v3514
    %v3517 = vmul.f32 %v3515, %v3515
    %3518 = vadd.xlane.f32.xlu0 %v3516
    %v3519 = vpop.xlane.xlu0 %3518
    %3520 = vadd.xlane.f32.xlu0 %v3517
    %v3521 = vpop.xlane.xlu0 %3520
    %v3522 = vmul.f32 %v3519, 0.0078125
    %v3523 = vmul.f32 %v3521, 0.0078125
    %v3524 = vadd.f32 %v3522, 1e-05
    %v3525 = vadd.f32 %v3523, 1e-05
    %v3526 = vrsqrt.pop %v3524
    %v3527 = vrsqrt.pop %v3525
    %v3528 = vmul.f32 %v3514, %v3526
    %v3529 = vmul.f32 %v3515, %v3527
    %v3531 = vlaneseq
    %v3532 = vshrl.u32 %v3531, 7
    %v3533 = vsub.s32 0, %v3532
    %v3534 = vrot.slane %v3505, %v3533
    %v3536 = vmul.f32 %v3528, %v3534
    %v3537 = vmul.f32 %v3529, %v3534
    %v3539 = vlaneseq
    %v3540 = vshrl.u32 %v3539, 7
    %v3541 = vsub.s32 0, %v3540
    %v3542 = vrot.slane %v3507, %v3541
    %v3544 = vadd.f32 %v3536, %v3542
    %v3545 = vadd.f32 %v3537, %v3542
    %v3546 = vpack.c.bf16 %v3545, %v3544
    %s3547 = scalar_lea.vmem [#allocation18], 1024
    %v3548 = vld [vmem:[%s3547] sm:$0xff]
    %v3549 = vld [vmem:[%s3547 + $0x8] sm:$0xff]
    %v3550 = vld [vmem:[%s3547 + $0x10] sm:$0xff]
    %v3551 = vld [vmem:[%s3547 + $0x18] sm:$0xff]
    %v3552 = vld [vmem:[%s3547 + $0x20] sm:$0xff]
    %v3553 = vld [vmem:[%s3547 + $0x28] sm:$0xff]
    %v3554 = vld [vmem:[%s3547 + $0x30] sm:$0xff]
    %v3555 = vld [vmem:[%s3547 + $0x38] sm:$0xff]
    %v3556 = vld [vmem:[%s3547 + $0x40] sm:$0xff]
    %v3557 = vld [vmem:[%s3547 + $0x48] sm:$0xff]
    %v3558 = vld [vmem:[%s3547 + $0x50] sm:$0xff]
    %v3559 = vld [vmem:[%s3547 + $0x58] sm:$0xff]
    %v3560 = vld [vmem:[%s3547 + $0x60] sm:$0xff]
    %v3561 = vld [vmem:[%s3547 + $0x68] sm:$0xff]
    %v3562 = vld [vmem:[%s3547 + $0x70] sm:$0xff]
    %v3563 = vld [vmem:[%s3547 + $0x78] sm:$0xff]
    %v3564 = vld [vmem:[%s3547 + $0x80] sm:$0xff]
    %v3565 = vld [vmem:[%s3547 + $0x88] sm:$0xff]
    %v3566 = vld [vmem:[%s3547 + $0x90] sm:$0xff]
    %v3567 = vld [vmem:[%s3547 + $0x98] sm:$0xff]
    %v3568 = vld [vmem:[%s3547 + $0xa0] sm:$0xff]
    %v3569 = vld [vmem:[%s3547 + $0xa8] sm:$0xff]
    %v3570 = vld [vmem:[%s3547 + $0xb0] sm:$0xff]
    %v3571 = vld [vmem:[%s3547 + $0xb8] sm:$0xff]
    %v3572 = vld [vmem:[%s3547 + $0xc0] sm:$0xff]
    %v3573 = vld [vmem:[%s3547 + $0xc8] sm:$0xff]
    %v3574 = vld [vmem:[%s3547 + $0xd0] sm:$0xff]
    %v3575 = vld [vmem:[%s3547 + $0xd8] sm:$0xff]
    %v3576 = vld [vmem:[%s3547 + $0xe0] sm:$0xff]
    %v3577 = vld [vmem:[%s3547 + $0xe8] sm:$0xff]
    %v3578 = vld [vmem:[%s3547 + $0xf0] sm:$0xff]
    %v3579 = vld [vmem:[%s3547 + $0xf8] sm:$0xff]
    %v3580 = vld [vmem:[%s3547 + $0x100] sm:$0xff]
    %v3581 = vld [vmem:[%s3547 + $0x108] sm:$0xff]
    %v3582 = vld [vmem:[%s3547 + $0x110] sm:$0xff]
    %v3583 = vld [vmem:[%s3547 + $0x118] sm:$0xff]
    %v3584 = vld [vmem:[%s3547 + $0x120] sm:$0xff]
    %v3585 = vld [vmem:[%s3547 + $0x128] sm:$0xff]
    %v3586 = vld [vmem:[%s3547 + $0x130] sm:$0xff]
    %v3587 = vld [vmem:[%s3547 + $0x138] sm:$0xff]
    %v3588 = vld [vmem:[%s3547 + $0x140] sm:$0xff]
    %v3589 = vld [vmem:[%s3547 + $0x148] sm:$0xff]
    %v3590 = vld [vmem:[%s3547 + $0x150] sm:$0xff]
    %v3591 = vld [vmem:[%s3547 + $0x158] sm:$0xff]
    %v3592 = vld [vmem:[%s3547 + $0x160] sm:$0xff]
    %v3593 = vld [vmem:[%s3547 + $0x168] sm:$0xff]
    %v3594 = vld [vmem:[%s3547 + $0x170] sm:$0xff]
    %v3595 = vld [vmem:[%s3547 + $0x178] sm:$0xff]
    %v3596 = vld [vmem:[%s3547 + $0x180] sm:$0xff]
    %v3597 = vld [vmem:[%s3547 + $0x188] sm:$0xff]
    %v3598 = vld [vmem:[%s3547 + $0x190] sm:$0xff]
    %v3599 = vld [vmem:[%s3547 + $0x198] sm:$0xff]
    %v3600 = vld [vmem:[%s3547 + $0x1a0] sm:$0xff]
    %v3601 = vld [vmem:[%s3547 + $0x1a8] sm:$0xff]
    %v3602 = vld [vmem:[%s3547 + $0x1b0] sm:$0xff]
    %v3603 = vld [vmem:[%s3547 + $0x1b8] sm:$0xff]
    %v3604 = vld [vmem:[%s3547 + $0x1c0] sm:$0xff]
    %v3605 = vld [vmem:[%s3547 + $0x1c8] sm:$0xff]
    %v3606 = vld [vmem:[%s3547 + $0x1d0] sm:$0xff]
    %v3607 = vld [vmem:[%s3547 + $0x1d8] sm:$0xff]
    %v3608 = vld [vmem:[%s3547 + $0x1e0] sm:$0xff]
    %v3609 = vld [vmem:[%s3547 + $0x1e8] sm:$0xff]
    %v3610 = vld [vmem:[%s3547 + $0x1f0] sm:$0xff]
    %v3611 = vld [vmem:[%s3547 + $0x1f8] sm:$0xff]
    %v3612 = vld [vmem:[%s3547 + $0x200] sm:$0xff]
    %v3613 = vld [vmem:[%s3547 + $0x208] sm:$0xff]
    %v3614 = vld [vmem:[%s3547 + $0x210] sm:$0xff]
    %v3615 = vld [vmem:[%s3547 + $0x218] sm:$0xff]
    %v3616 = vld [vmem:[%s3547 + $0x220] sm:$0xff]
    %v3617 = vld [vmem:[%s3547 + $0x228] sm:$0xff]
    %v3618 = vld [vmem:[%s3547 + $0x230] sm:$0xff]
    %v3619 = vld [vmem:[%s3547 + $0x238] sm:$0xff]
    %v3620 = vld [vmem:[%s3547 + $0x240] sm:$0xff]
    %v3621 = vld [vmem:[%s3547 + $0x248] sm:$0xff]
    %v3622 = vld [vmem:[%s3547 + $0x250] sm:$0xff]
    %v3623 = vld [vmem:[%s3547 + $0x258] sm:$0xff]
    %v3624 = vld [vmem:[%s3547 + $0x260] sm:$0xff]
    %v3625 = vld [vmem:[%s3547 + $0x268] sm:$0xff]
    %v3626 = vld [vmem:[%s3547 + $0x270] sm:$0xff]
    %v3627 = vld [vmem:[%s3547 + $0x278] sm:$0xff]
    %v3628 = vld [vmem:[%s3547 + $0x280] sm:$0xff]
    %v3629 = vld [vmem:[%s3547 + $0x288] sm:$0xff]
    %v3630 = vld [vmem:[%s3547 + $0x290] sm:$0xff]
    %v3631 = vld [vmem:[%s3547 + $0x298] sm:$0xff]
    %v3632 = vld [vmem:[%s3547 + $0x2a0] sm:$0xff]
    %v3633 = vld [vmem:[%s3547 + $0x2a8] sm:$0xff]
    %v3634 = vld [vmem:[%s3547 + $0x2b0] sm:$0xff]
    %v3635 = vld [vmem:[%s3547 + $0x2b8] sm:$0xff]
    %v3636 = vld [vmem:[%s3547 + $0x2c0] sm:$0xff]
    %v3637 = vld [vmem:[%s3547 + $0x2c8] sm:$0xff]
    %v3638 = vld [vmem:[%s3547 + $0x2d0] sm:$0xff]
    %v3639 = vld [vmem:[%s3547 + $0x2d8] sm:$0xff]
    %v3640 = vld [vmem:[%s3547 + $0x2e0] sm:$0xff]
    %v3641 = vld [vmem:[%s3547 + $0x2e8] sm:$0xff]
    %v3642 = vld [vmem:[%s3547 + $0x2f0] sm:$0xff]
    %v3643 = vld [vmem:[%s3547 + $0x2f8] sm:$0xff]
    %v3644 = vld [vmem:[%s3547 + $0x300] sm:$0xff]
    %v3645 = vld [vmem:[%s3547 + $0x308] sm:$0xff]
    %v3646 = vld [vmem:[%s3547 + $0x310] sm:$0xff]
    %v3647 = vld [vmem:[%s3547 + $0x318] sm:$0xff]
    %v3648 = vld [vmem:[%s3547 + $0x320] sm:$0xff]
    %v3649 = vld [vmem:[%s3547 + $0x328] sm:$0xff]
    %v3650 = vld [vmem:[%s3547 + $0x330] sm:$0xff]
    %v3651 = vld [vmem:[%s3547 + $0x338] sm:$0xff]
    %v3652 = vld [vmem:[%s3547 + $0x340] sm:$0xff]
    %v3653 = vld [vmem:[%s3547 + $0x348] sm:$0xff]
    %v3654 = vld [vmem:[%s3547 + $0x350] sm:$0xff]
    %v3655 = vld [vmem:[%s3547 + $0x358] sm:$0xff]
    %v3656 = vld [vmem:[%s3547 + $0x360] sm:$0xff]
    %v3657 = vld [vmem:[%s3547 + $0x368] sm:$0xff]
    %v3658 = vld [vmem:[%s3547 + $0x370] sm:$0xff]
    %v3659 = vld [vmem:[%s3547 + $0x378] sm:$0xff]
    %v3660 = vld [vmem:[%s3547 + $0x380] sm:$0xff]
    %v3661 = vld [vmem:[%s3547 + $0x388] sm:$0xff]
    %v3662 = vld [vmem:[%s3547 + $0x390] sm:$0xff]
    %v3663 = vld [vmem:[%s3547 + $0x398] sm:$0xff]
    %v3664 = vld [vmem:[%s3547 + $0x3a0] sm:$0xff]
    %v3665 = vld [vmem:[%s3547 + $0x3a8] sm:$0xff]
    %v3666 = vld [vmem:[%s3547 + $0x3b0] sm:$0xff]
    %v3667 = vld [vmem:[%s3547 + $0x3b8] sm:$0xff]
    %v3668 = vld [vmem:[%s3547 + $0x3c0] sm:$0xff]
    %v3669 = vld [vmem:[%s3547 + $0x3c8] sm:$0xff]
    %v3670 = vld [vmem:[%s3547 + $0x3d0] sm:$0xff]
    %v3671 = vld [vmem:[%s3547 + $0x3d8] sm:$0xff]
    %v3672 = vld [vmem:[%s3547 + $0x3e0] sm:$0xff]
    %v3673 = vld [vmem:[%s3547 + $0x3e8] sm:$0xff]
    %v3674 = vld [vmem:[%s3547 + $0x3f0] sm:$0xff]
    %v3675 = vld [vmem:[%s3547 + $0x3f8] sm:$0xff]
    %s3676 = scalar_lea.vmem [#allocation20], 16
    %v3677 = vld [vmem:[%s3676] sm:$0xff]
    %v3678 = vld [vmem:[%s3676 + $0x8] sm:$0xff]
    %v3681 = vlaneseq
    %v3682 = vshrl.u32 %v3681, 7
    %v3683 = vsub.s32 0, %v3682
    %v3684 = vrot.slane %v3677, %v3683
    %v3685 = vlaneseq
    %v3686 = vshrl.u32 %v3685, 7
    %v3687 = vsub.s32 1, %v3686
    %v3688 = vrot.slane %v3677, %v3687
    %v3689 = vlaneseq
    %v3690 = vshrl.u32 %v3689, 7
    %v3691 = vsub.s32 2, %v3690
    %v3692 = vrot.slane %v3677, %v3691
    %v3693 = vlaneseq
    %v3694 = vshrl.u32 %v3693, 7
    %v3695 = vsub.s32 3, %v3694
    %v3696 = vrot.slane %v3677, %v3695
    %v3697 = vlaneseq
    %v3698 = vshrl.u32 %v3697, 7
    %v3699 = vsub.s32 4, %v3698
    %v3700 = vrot.slane %v3677, %v3699
    %v3701 = vlaneseq
    %v3702 = vshrl.u32 %v3701, 7
    %v3703 = vsub.s32 5, %v3702
    %v3704 = vrot.slane %v3677, %v3703
    %v3705 = vlaneseq
    %v3706 = vshrl.u32 %v3705, 7
    %v3707 = vsub.s32 6, %v3706
    %v3708 = vrot.slane %v3677, %v3707
    %v3709 = vlaneseq
    %v3710 = vshrl.u32 %v3709, 7
    %v3711 = vsub.s32 7, %v3710
    %v3712 = vrot.slane %v3677, %v3711
    %v3713 = vlaneseq
    %v3714 = vshrl.u32 %v3713, 7
    %v3715 = vsub.s32 0, %v3714
    %v3716 = vrot.slane %v3678, %v3715
    %v3717 = vlaneseq
    %v3718 = vshrl.u32 %v3717, 7
    %v3719 = vsub.s32 1, %v3718
    %v3720 = vrot.slane %v3678, %v3719
    %v3721 = vlaneseq
    %v3722 = vshrl.u32 %v3721, 7
    %v3723 = vsub.s32 2, %v3722
    %v3724 = vrot.slane %v3678, %v3723
    %v3725 = vlaneseq
    %v3726 = vshrl.u32 %v3725, 7
    %v3727 = vsub.s32 3, %v3726
    %v3728 = vrot.slane %v3678, %v3727
    %v3729 = vlaneseq
    %v3730 = vshrl.u32 %v3729, 7
    %v3731 = vsub.s32 4, %v3730
    %v3732 = vrot.slane %v3678, %v3731
    %v3733 = vlaneseq
    %v3734 = vshrl.u32 %v3733, 7
    %v3735 = vsub.s32 5, %v3734
    %v3736 = vrot.slane %v3678, %v3735
    %v3737 = vlaneseq
    %v3738 = vshrl.u32 %v3737, 7
    %v3739 = vsub.s32 6, %v3738
    %v3740 = vrot.slane %v3678, %v3739
    %v3741 = vlaneseq
    %v3742 = vshrl.u32 %v3741, 7
    %v3743 = vsub.s32 7, %v3742
    %v3744 = vrot.slane %v3678, %v3743
    %v3889 = vunpack.c.l.b16 %v3548
    %v3890 = vunpack.c.h.b16 %v3548
    %v3891 = vunpack.c.l.b16 %v3549
    %v3892 = vunpack.c.h.b16 %v3549
    %v3893 = vunpack.c.l.b16 %v3550
    %v3894 = vunpack.c.h.b16 %v3550
    %v3895 = vunpack.c.l.b16 %v3551
    %v3896 = vunpack.c.h.b16 %v3551
    %v3897 = vunpack.c.l.b16 %v3552
    %v3898 = vunpack.c.h.b16 %v3552
    %v3899 = vunpack.c.l.b16 %v3553
    %v3900 = vunpack.c.h.b16 %v3553
    %v3901 = vunpack.c.l.b16 %v3554
    %v3902 = vunpack.c.h.b16 %v3554
    %v3903 = vunpack.c.l.b16 %v3555
    %v3904 = vunpack.c.h.b16 %v3555
    %v3905 = vunpack.c.l.b16 %v3556
    %v3906 = vunpack.c.h.b16 %v3556
    %v3907 = vunpack.c.l.b16 %v3557
    %v3908 = vunpack.c.h.b16 %v3557
    %v3909 = vunpack.c.l.b16 %v3558
    %v3910 = vunpack.c.h.b16 %v3558
    %v3911 = vunpack.c.l.b16 %v3559
    %v3912 = vunpack.c.h.b16 %v3559
    %v3913 = vunpack.c.l.b16 %v3560
    %v3914 = vunpack.c.h.b16 %v3560
    %v3915 = vunpack.c.l.b16 %v3561
    %v3916 = vunpack.c.h.b16 %v3561
    %v3917 = vunpack.c.l.b16 %v3562
    %v3918 = vunpack.c.h.b16 %v3562
    %v3919 = vunpack.c.l.b16 %v3563
    %v3920 = vunpack.c.h.b16 %v3563
    %v3921 = vunpack.c.l.b16 %v3564
    %v3922 = vunpack.c.h.b16 %v3564
    %v3923 = vunpack.c.l.b16 %v3565
    %v3924 = vunpack.c.h.b16 %v3565
    %v3925 = vunpack.c.l.b16 %v3566
    %v3926 = vunpack.c.h.b16 %v3566
    %v3927 = vunpack.c.l.b16 %v3567
    %v3928 = vunpack.c.h.b16 %v3567
    %v3929 = vunpack.c.l.b16 %v3568
    %v3930 = vunpack.c.h.b16 %v3568
    %v3931 = vunpack.c.l.b16 %v3569
    %v3932 = vunpack.c.h.b16 %v3569
    %v3933 = vunpack.c.l.b16 %v3570
    %v3934 = vunpack.c.h.b16 %v3570
    %v3935 = vunpack.c.l.b16 %v3571
    %v3936 = vunpack.c.h.b16 %v3571
    %v3937 = vunpack.c.l.b16 %v3572
    %v3938 = vunpack.c.h.b16 %v3572
    %v3939 = vunpack.c.l.b16 %v3573
    %v3940 = vunpack.c.h.b16 %v3573
    %v3941 = vunpack.c.l.b16 %v3574
    %v3942 = vunpack.c.h.b16 %v3574
    %v3943 = vunpack.c.l.b16 %v3575
    %v3944 = vunpack.c.h.b16 %v3575
    %v3945 = vunpack.c.l.b16 %v3576
    %v3946 = vunpack.c.h.b16 %v3576
    %v3947 = vunpack.c.l.b16 %v3577
    %v3948 = vunpack.c.h.b16 %v3577
    %v3949 = vunpack.c.l.b16 %v3578
    %v3950 = vunpack.c.h.b16 %v3578
    %v3951 = vunpack.c.l.b16 %v3579
    %v3952 = vunpack.c.h.b16 %v3579
    %v3953 = vunpack.c.l.b16 %v3580
    %v3954 = vunpack.c.h.b16 %v3580
    %v3955 = vunpack.c.l.b16 %v3581
    %v3956 = vunpack.c.h.b16 %v3581
    %v3957 = vunpack.c.l.b16 %v3582
    %v3958 = vunpack.c.h.b16 %v3582
    %v3959 = vunpack.c.l.b16 %v3583
    %v3960 = vunpack.c.h.b16 %v3583
    %v3961 = vunpack.c.l.b16 %v3584
    %v3962 = vunpack.c.h.b16 %v3584
    %v3963 = vunpack.c.l.b16 %v3585
    %v3964 = vunpack.c.h.b16 %v3585
    %v3965 = vunpack.c.l.b16 %v3586
    %v3966 = vunpack.c.h.b16 %v3586
    %v3967 = vunpack.c.l.b16 %v3587
    %v3968 = vunpack.c.h.b16 %v3587
    %v3969 = vunpack.c.l.b16 %v3588
    %v3970 = vunpack.c.h.b16 %v3588
    %v3971 = vunpack.c.l.b16 %v3589
    %v3972 = vunpack.c.h.b16 %v3589
    %v3973 = vunpack.c.l.b16 %v3590
    %v3974 = vunpack.c.h.b16 %v3590
    %v3975 = vunpack.c.l.b16 %v3591
    %v3976 = vunpack.c.h.b16 %v3591
    %v3977 = vunpack.c.l.b16 %v3592
    %v3978 = vunpack.c.h.b16 %v3592
    %v3979 = vunpack.c.l.b16 %v3593
    %v3980 = vunpack.c.h.b16 %v3593
    %v3981 = vunpack.c.l.b16 %v3594
    %v3982 = vunpack.c.h.b16 %v3594
    %v3983 = vunpack.c.l.b16 %v3595
    %v3984 = vunpack.c.h.b16 %v3595
    %v3985 = vunpack.c.l.b16 %v3596
    %v3986 = vunpack.c.h.b16 %v3596
    %v3987 = vunpack.c.l.b16 %v3597
    %v3988 = vunpack.c.h.b16 %v3597
    %v3989 = vunpack.c.l.b16 %v3598
    %v3990 = vunpack.c.h.b16 %v3598
    %v3991 = vunpack.c.l.b16 %v3599
    %v3992 = vunpack.c.h.b16 %v3599
    %v3993 = vunpack.c.l.b16 %v3600
    %v3994 = vunpack.c.h.b16 %v3600
    %v3995 = vunpack.c.l.b16 %v3601
    %v3996 = vunpack.c.h.b16 %v3601
    %v3997 = vunpack.c.l.b16 %v3602
    %v3998 = vunpack.c.h.b16 %v3602
    %v3999 = vunpack.c.l.b16 %v3603
    %v4000 = vunpack.c.h.b16 %v3603
    %v4001 = vunpack.c.l.b16 %v3604
    %v4002 = vunpack.c.h.b16 %v3604
    %v4003 = vunpack.c.l.b16 %v3605
    %v4004 = vunpack.c.h.b16 %v3605
    %v4005 = vunpack.c.l.b16 %v3606
    %v4006 = vunpack.c.h.b16 %v3606
    %v4007 = vunpack.c.l.b16 %v3607
    %v4008 = vunpack.c.h.b16 %v3607
    %v4009 = vunpack.c.l.b16 %v3608
    %v4010 = vunpack.c.h.b16 %v3608
    %v4011 = vunpack.c.l.b16 %v3609
    %v4012 = vunpack.c.h.b16 %v3609
    %v4013 = vunpack.c.l.b16 %v3610
    %v4014 = vunpack.c.h.b16 %v3610
    %v4015 = vunpack.c.l.b16 %v3611
    %v4016 = vunpack.c.h.b16 %v3611
    %v4017 = vunpack.c.l.b16 %v3612
    %v4018 = vunpack.c.h.b16 %v3612
    %v4019 = vunpack.c.l.b16 %v3613
    %v4020 = vunpack.c.h.b16 %v3613
    %v4021 = vunpack.c.l.b16 %v3614
    %v4022 = vunpack.c.h.b16 %v3614
    %v4023 = vunpack.c.l.b16 %v3615
    %v4024 = vunpack.c.h.b16 %v3615
    %v4025 = vunpack.c.l.b16 %v3616
    %v4026 = vunpack.c.h.b16 %v3616
    %v4027 = vunpack.c.l.b16 %v3617
    %v4028 = vunpack.c.h.b16 %v3617
    %v4029 = vunpack.c.l.b16 %v3618
    %v4030 = vunpack.c.h.b16 %v3618
    %v4031 = vunpack.c.l.b16 %v3619
    %v4032 = vunpack.c.h.b16 %v3619
    %v4033 = vunpack.c.l.b16 %v3620
    %v4034 = vunpack.c.h.b16 %v3620
    %v4035 = vunpack.c.l.b16 %v3621
    %v4036 = vunpack.c.h.b16 %v3621
    %v4037 = vunpack.c.l.b16 %v3622
    %v4038 = vunpack.c.h.b16 %v3622
    %v4039 = vunpack.c.l.b16 %v3623
    %v4040 = vunpack.c.h.b16 %v3623
    %v4041 = vunpack.c.l.b16 %v3624
    %v4042 = vunpack.c.h.b16 %v3624
    %v4043 = vunpack.c.l.b16 %v3625
    %v4044 = vunpack.c.h.b16 %v3625
    %v4045 = vunpack.c.l.b16 %v3626
    %v4046 = vunpack.c.h.b16 %v3626
    %v4047 = vunpack.c.l.b16 %v3627
    %v4048 = vunpack.c.h.b16 %v3627
    %v4049 = vunpack.c.l.b16 %v3628
    %v4050 = vunpack.c.h.b16 %v3628
    %v4051 = vunpack.c.l.b16 %v3629
    %v4052 = vunpack.c.h.b16 %v3629
    %v4053 = vunpack.c.l.b16 %v3630
    %v4054 = vunpack.c.h.b16 %v3630
    %v4055 = vunpack.c.l.b16 %v3631
    %v4056 = vunpack.c.h.b16 %v3631
    %v4057 = vunpack.c.l.b16 %v3632
    %v4058 = vunpack.c.h.b16 %v3632
    %v4059 = vunpack.c.l.b16 %v3633
    %v4060 = vunpack.c.h.b16 %v3633
    %v4061 = vunpack.c.l.b16 %v3634
    %v4062 = vunpack.c.h.b16 %v3634
    %v4063 = vunpack.c.l.b16 %v3635
    %v4064 = vunpack.c.h.b16 %v3635
    %v4065 = vunpack.c.l.b16 %v3636
    %v4066 = vunpack.c.h.b16 %v3636
    %v4067 = vunpack.c.l.b16 %v3637
    %v4068 = vunpack.c.h.b16 %v3637
    %v4069 = vunpack.c.l.b16 %v3638
    %v4070 = vunpack.c.h.b16 %v3638
    %v4071 = vunpack.c.l.b16 %v3639
    %v4072 = vunpack.c.h.b16 %v3639
    %v4073 = vunpack.c.l.b16 %v3640
    %v4074 = vunpack.c.h.b16 %v3640
    %v4075 = vunpack.c.l.b16 %v3641
    %v4076 = vunpack.c.h.b16 %v3641
    %v4077 = vunpack.c.l.b16 %v3642
    %v4078 = vunpack.c.h.b16 %v3642
    %v4079 = vunpack.c.l.b16 %v3643
    %v4080 = vunpack.c.h.b16 %v3643
    %v4081 = vunpack.c.l.b16 %v3644
    %v4082 = vunpack.c.h.b16 %v3644
    %v4083 = vunpack.c.l.b16 %v3645
    %v4084 = vunpack.c.h.b16 %v3645
    %v4085 = vunpack.c.l.b16 %v3646
    %v4086 = vunpack.c.h.b16 %v3646
    %v4087 = vunpack.c.l.b16 %v3647
    %v4088 = vunpack.c.h.b16 %v3647
    %v4089 = vunpack.c.l.b16 %v3648
    %v4090 = vunpack.c.h.b16 %v3648
    %v4091 = vunpack.c.l.b16 %v3649
    %v4092 = vunpack.c.h.b16 %v3649
    %v4093 = vunpack.c.l.b16 %v3650
    %v4094 = vunpack.c.h.b16 %v3650
    %v4095 = vunpack.c.l.b16 %v3651
    %v4096 = vunpack.c.h.b16 %v3651
    %v4097 = vunpack.c.l.b16 %v3652
    %v4098 = vunpack.c.h.b16 %v3652
    %v4099 = vunpack.c.l.b16 %v3653
    %v4100 = vunpack.c.h.b16 %v3653
    %v4101 = vunpack.c.l.b16 %v3654
    %v4102 = vunpack.c.h.b16 %v3654
    %v4103 = vunpack.c.l.b16 %v3655
    %v4104 = vunpack.c.h.b16 %v3655
    %v4105 = vunpack.c.l.b16 %v3656
    %v4106 = vunpack.c.h.b16 %v3656
    %v4107 = vunpack.c.l.b16 %v3657
    %v4108 = vunpack.c.h.b16 %v3657
    %v4109 = vunpack.c.l.b16 %v3658
    %v4110 = vunpack.c.h.b16 %v3658
    %v4111 = vunpack.c.l.b16 %v3659
    %v4112 = vunpack.c.h.b16 %v3659
    %v4113 = vunpack.c.l.b16 %v3660
    %v4114 = vunpack.c.h.b16 %v3660
    %v4115 = vunpack.c.l.b16 %v3661
    %v4116 = vunpack.c.h.b16 %v3661
    %v4117 = vunpack.c.l.b16 %v3662
    %v4118 = vunpack.c.h.b16 %v3662
    %v4119 = vunpack.c.l.b16 %v3663
    %v4120 = vunpack.c.h.b16 %v3663
    %v4121 = vunpack.c.l.b16 %v3664
    %v4122 = vunpack.c.h.b16 %v3664
    %v4123 = vunpack.c.l.b16 %v3665
    %v4124 = vunpack.c.h.b16 %v3665
    %v4125 = vunpack.c.l.b16 %v3666
    %v4126 = vunpack.c.h.b16 %v3666
    %v4127 = vunpack.c.l.b16 %v3667
    %v4128 = vunpack.c.h.b16 %v3667
    %v4129 = vunpack.c.l.b16 %v3668
    %v4130 = vunpack.c.h.b16 %v3668
    %v4131 = vunpack.c.l.b16 %v3669
    %v4132 = vunpack.c.h.b16 %v3669
    %v4133 = vunpack.c.l.b16 %v3670
    %v4134 = vunpack.c.h.b16 %v3670
    %v4135 = vunpack.c.l.b16 %v3671
    %v4136 = vunpack.c.h.b16 %v3671
    %v4137 = vunpack.c.l.b16 %v3672
    %v4138 = vunpack.c.h.b16 %v3672
    %v4139 = vunpack.c.l.b16 %v3673
    %v4140 = vunpack.c.h.b16 %v3673
    %v4141 = vunpack.c.l.b16 %v3674
    %v4142 = vunpack.c.h.b16 %v3674
    %v4143 = vunpack.c.l.b16 %v3675
    %v4144 = vunpack.c.h.b16 %v3675
    %v4145 = vpack.c.b16 %v3905, %v3889
    %v4146 = vpack.c.b16 %v3906, %v3890
    %v4147 = vpack.c.b16 %v3907, %v3891
    %v4148 = vpack.c.b16 %v3908, %v3892
    %v4149 = vpack.c.b16 %v3909, %v3893
    %v4150 = vpack.c.b16 %v3910, %v3894
    %v4151 = vpack.c.b16 %v3911, %v3895
    %v4152 = vpack.c.b16 %v3912, %v3896
    %v4153 = vpack.c.b16 %v3913, %v3897
    %v4154 = vpack.c.b16 %v3914, %v3898
    %v4155 = vpack.c.b16 %v3915, %v3899
    %v4156 = vpack.c.b16 %v3916, %v3900
    %v4157 = vpack.c.b16 %v3917, %v3901
    %v4158 = vpack.c.b16 %v3918, %v3902
    %v4159 = vpack.c.b16 %v3919, %v3903
    %v4160 = vpack.c.b16 %v3920, %v3904
    %v4161 = vpack.c.b16 %v3937, %v3921
    %v4162 = vpack.c.b16 %v3938, %v3922
    %v4163 = vpack.c.b16 %v3939, %v3923
    %v4164 = vpack.c.b16 %v3940, %v3924
    %v4165 = vpack.c.b16 %v3941, %v3925
    %v4166 = vpack.c.b16 %v3942, %v3926
    %v4167 = vpack.c.b16 %v3943, %v3927
    %v4168 = vpack.c.b16 %v3944, %v3928
    %v4169 = vpack.c.b16 %v3945, %v3929
    %v4170 = vpack.c.b16 %v3946, %v3930
    %v4171 = vpack.c.b16 %v3947, %v3931
    %v4172 = vpack.c.b16 %v3948, %v3932
    %v4173 = vpack.c.b16 %v3949, %v3933
    %v4174 = vpack.c.b16 %v3950, %v3934
    %v4175 = vpack.c.b16 %v3951, %v3935
    %v4176 = vpack.c.b16 %v3952, %v3936
    %v4177 = vpack.c.b16 %v3969, %v3953
    %v4178 = vpack.c.b16 %v3970, %v3954
    %v4179 = vpack.c.b16 %v3971, %v3955
    %v4180 = vpack.c.b16 %v3972, %v3956
    %v4181 = vpack.c.b16 %v3973, %v3957
    %v4182 = vpack.c.b16 %v3974, %v3958
    %v4183 = vpack.c.b16 %v3975, %v3959
    %v4184 = vpack.c.b16 %v3976, %v3960
    %v4185 = vpack.c.b16 %v3977, %v3961
    %v4186 = vpack.c.b16 %v3978, %v3962
    %v4187 = vpack.c.b16 %v3979, %v3963
    %v4188 = vpack.c.b16 %v3980, %v3964
    %v4189 = vpack.c.b16 %v3981, %v3965
    %v4190 = vpack.c.b16 %v3982, %v3966
    %v4191 = vpack.c.b16 %v3983, %v3967
    %v4192 = vpack.c.b16 %v3984, %v3968
    %v4193 = vpack.c.b16 %v4001, %v3985
    %v4194 = vpack.c.b16 %v4002, %v3986
    %v4195 = vpack.c.b16 %v4003, %v3987
    %v4196 = vpack.c.b16 %v4004, %v3988
    %v4197 = vpack.c.b16 %v4005, %v3989
    %v4198 = vpack.c.b16 %v4006, %v3990
    %v4199 = vpack.c.b16 %v4007, %v3991
    %v4200 = vpack.c.b16 %v4008, %v3992
    %v4201 = vpack.c.b16 %v4009, %v3993
    %v4202 = vpack.c.b16 %v4010, %v3994
    %v4203 = vpack.c.b16 %v4011, %v3995
    %v4204 = vpack.c.b16 %v4012, %v3996
    %v4205 = vpack.c.b16 %v4013, %v3997
    %v4206 = vpack.c.b16 %v4014, %v3998
    %v4207 = vpack.c.b16 %v4015, %v3999
    %v4208 = vpack.c.b16 %v4016, %v4000
    %v4209 = vpack.c.b16 %v4033, %v4017
    %v4210 = vpack.c.b16 %v4034, %v4018
    %v4211 = vpack.c.b16 %v4035, %v4019
    %v4212 = vpack.c.b16 %v4036, %v4020
    %v4213 = vpack.c.b16 %v4037, %v4021
    %v4214 = vpack.c.b16 %v4038, %v4022
    %v4215 = vpack.c.b16 %v4039, %v4023
    %v4216 = vpack.c.b16 %v4040, %v4024
    %v4217 = vpack.c.b16 %v4041, %v4025
    %v4218 = vpack.c.b16 %v4042, %v4026
    %v4219 = vpack.c.b16 %v4043, %v4027
    %v4220 = vpack.c.b16 %v4044, %v4028
    %v4221 = vpack.c.b16 %v4045, %v4029
    %v4222 = vpack.c.b16 %v4046, %v4030
    %v4223 = vpack.c.b16 %v4047, %v4031
    %v4224 = vpack.c.b16 %v4048, %v4032
    %v4225 = vpack.c.b16 %v4065, %v4049
    %v4226 = vpack.c.b16 %v4066, %v4050
    %v4227 = vpack.c.b16 %v4067, %v4051
    %v4228 = vpack.c.b16 %v4068, %v4052
    %v4229 = vpack.c.b16 %v4069, %v4053
    %v4230 = vpack.c.b16 %v4070, %v4054
    %v4231 = vpack.c.b16 %v4071, %v4055
    %v4232 = vpack.c.b16 %v4072, %v4056
    %v4233 = vpack.c.b16 %v4073, %v4057
    %v4234 = vpack.c.b16 %v4074, %v4058
    %v4235 = vpack.c.b16 %v4075, %v4059
    %v4236 = vpack.c.b16 %v4076, %v4060
    %v4237 = vpack.c.b16 %v4077, %v4061
    %v4238 = vpack.c.b16 %v4078, %v4062
    %v4239 = vpack.c.b16 %v4079, %v4063
    %v4240 = vpack.c.b16 %v4080, %v4064
    %v4241 = vpack.c.b16 %v4097, %v4081
    %v4242 = vpack.c.b16 %v4098, %v4082
    %v4243 = vpack.c.b16 %v4099, %v4083
    %v4244 = vpack.c.b16 %v4100, %v4084
    %v4245 = vpack.c.b16 %v4101, %v4085
    %v4246 = vpack.c.b16 %v4102, %v4086
    %v4247 = vpack.c.b16 %v4103, %v4087
    %v4248 = vpack.c.b16 %v4104, %v4088
    %v4249 = vpack.c.b16 %v4105, %v4089
    %v4250 = vpack.c.b16 %v4106, %v4090
    %v4251 = vpack.c.b16 %v4107, %v4091
    %v4252 = vpack.c.b16 %v4108, %v4092
    %v4253 = vpack.c.b16 %v4109, %v4093
    %v4254 = vpack.c.b16 %v4110, %v4094
    %v4255 = vpack.c.b16 %v4111, %v4095
    %v4256 = vpack.c.b16 %v4112, %v4096
    %v4257 = vpack.c.b16 %v4129, %v4113
    %v4258 = vpack.c.b16 %v4130, %v4114
    %v4259 = vpack.c.b16 %v4131, %v4115
    %v4260 = vpack.c.b16 %v4132, %v4116
    %v4261 = vpack.c.b16 %v4133, %v4117
    %v4262 = vpack.c.b16 %v4134, %v4118
    %v4263 = vpack.c.b16 %v4135, %v4119
    %v4264 = vpack.c.b16 %v4136, %v4120
    %v4265 = vpack.c.b16 %v4137, %v4121
    %v4266 = vpack.c.b16 %v4138, %v4122
    %v4267 = vpack.c.b16 %v4139, %v4123
    %v4268 = vpack.c.b16 %v4140, %v4124
    %v4269 = vpack.c.b16 %v4141, %v4125
    %v4270 = vpack.c.b16 %v4142, %v4126
    %v4271 = vpack.c.b16 %v4143, %v4127
    %v4272 = vpack.c.b16 %v4144, %v4128
    %4401 = vmatprep.subr.bf16.mxu0 %v4146
    %4402 = vmatpush1.bf16.msra.mxu0 %v4145
    %4403 = vmatprep.subr.bf16.mxu0 %v4162
    %4404 = vmatpush1.bf16.msra.mxu0 %v4161
    %4405 = vmatprep.subr.bf16.mxu0 %v4178
    %4406 = vmatpush1.bf16.msra.mxu0 %v4177
    %4407 = vmatprep.subr.bf16.mxu0 %v4194
    %4408 = vmatpush1.bf16.msra.mxu0 %v4193
    %4409 = vmatprep.subr.bf16.mxu0 %v4210
    %4410 = vmatpush1.bf16.msra.mxu0 %v4209
    %4411 = vmatprep.subr.bf16.mxu0 %v4226
    %4412 = vmatpush1.bf16.msra.mxu0 %v4225
    %4413 = vmatprep.subr.bf16.mxu0 %v4242
    %4414 = vmatpush1.bf16.msra.mxu0 %v4241
    %4415 = vmatprep.subr.bf16.mxu0 %v4258
    %4416 = vmatpush1.bf16.msra.mxu0 %v4257
    %4417 = vmatprep.subr.bf16.mxu0 0
    %4418 = vmatpush1.bf16.msra.mxu0 0
    %4419 = vmatprep.subr.bf16.mxu0 0
    %4420 = vmatpush1.bf16.msra.mxu0 0
    %4421 = vmatprep.subr.bf16.mxu0 0
    %4422 = vmatpush1.bf16.msra.mxu0 0
    %4423 = vmatprep.subr.bf16.mxu0 0
    %4424 = vmatpush1.bf16.msra.mxu0 0
    %4425 = vmatprep.subr.bf16.mxu0 0
    %4426 = vmatpush1.bf16.msra.mxu0 0
    %4427 = vmatprep.subr.bf16.mxu0 0
    %4428 = vmatpush1.bf16.msra.mxu0 0
    %4429 = vmatprep.subr.bf16.mxu0 0
    %4430 = vmatpush1.bf16.msra.mxu0 0
    %4431 = vmatprep.subr.bf16.mxu0 0
    %4432 = vmatpush1.bf16.msra.mxu0 0
    %4433 = vmatprep.mubr.bf16.mxu0 0
    %4434 = vmatmul.mubr.bf16.gmra.mrb[0].mxu0 %v3546
    %v4435 = vpop.f32.mrb[0].mxu0
    %v4436 = vadd.f32 %v3684, %v4435
    %v4437 = vpop.f32.mrb[0].mxu0
    %v4438 = vadd.f32 %v3688, %v4437
    %v4439 = vpop.f32.mrb[0].mxu0
    %v4440 = vadd.f32 %v3684, %v4439
    %v4441 = vpop.f32.mrb[0].mxu0
    %v4442 = vadd.f32 %v3688, %v4441
    %4443 = vdwg.mxu0
    %4444 = vmatprep.subr.bf16.mxu0 %v4148
    %4445 = vmatpush1.bf16.msra.mxu0 %v4147
    %4446 = vmatprep.subr.bf16.mxu0 %v4164
    %4447 = vmatpush1.bf16.msra.mxu0 %v4163
    %4448 = vmatprep.subr.bf16.mxu0 %v4180
    %4449 = vmatpush1.bf16.msra.mxu0 %v4179
    %4450 = vmatprep.subr.bf16.mxu0 %v4196
    %4451 = vmatpush1.bf16.msra.mxu0 %v4195
    %4452 = vmatprep.subr.bf16.mxu0 %v4212
    %4453 = vmatpush1.bf16.msra.mxu0 %v4211
    %4454 = vmatprep.subr.bf16.mxu0 %v4228
    %4455 = vmatpush1.bf16.msra.mxu0 %v4227
    %4456 = vmatprep.subr.bf16.mxu0 %v4244
    %4457 = vmatpush1.bf16.msra.mxu0 %v4243
    %4458 = vmatprep.subr.bf16.mxu0 %v4260
    %4459 = vmatpush1.bf16.msra.mxu0 %v4259
    %4460 = vmatprep.subr.bf16.mxu0 0
    %4461 = vmatpush1.bf16.msra.mxu0 0
    %4462 = vmatprep.subr.bf16.mxu0 0
    %4463 = vmatpush1.bf16.msra.mxu0 0
    %4464 = vmatprep.subr.bf16.mxu0 0
    %4465 = vmatpush1.bf16.msra.mxu0 0
    %4466 = vmatprep.subr.bf16.mxu0 0
    %4467 = vmatpush1.bf16.msra.mxu0 0
    %4468 = vmatprep.subr.bf16.mxu0 0
    %4469 = vmatpush1.bf16.msra.mxu0 0
    %4470 = vmatprep.subr.bf16.mxu0 0
    %4471 = vmatpush1.bf16.msra.mxu0 0
    %4472 = vmatprep.subr.bf16.mxu0 0
    %4473 = vmatpush1.bf16.msra.mxu0 0
    %4474 = vmatprep.subr.bf16.mxu0 0
    %4475 = vmatpush1.bf16.msra.mxu0 0
    %4476 = vmatprep.mubr.bf16.mxu0 0
    %4477 = vmatmul.mubr.bf16.gmra.mrb[0].mxu0 %v3546
    %v4478 = vpop.f32.mrb[0].mxu0
    %v4479 = vadd.f32 %v3692, %v4478
    %v4480 = vpop.f32.mrb[0].mxu0
    %v4481 = vadd.f32 %v3696, %v4480
    %v4482 = vpop.f32.mrb[0].mxu0
    %v4483 = vadd.f32 %v3692, %v4482
    %v4484 = vpop.f32.mrb[0].mxu0
    %v4485 = vadd.f32 %v3696, %v4484
    %4486 = vdwg.mxu0
    %4487 = vmatprep.subr.bf16.mxu0 %v4150
    %4488 = vmatpush1.bf16.msra.mxu0 %v4149
    %4489 = vmatprep.subr.bf16.mxu0 %v4166
    %4490 = vmatpush1.bf16.msra.mxu0 %v4165
    %4491 = vmatprep.subr.bf16.mxu0 %v4182
    %4492 = vmatpush1.bf16.msra.mxu0 %v4181
    %4493 = vmatprep.subr.bf16.mxu0 %v4198
    %4494 = vmatpush1.bf16.msra.mxu0 %v4197
    %4495 = vmatprep.subr.bf16.mxu0 %v4214
    %4496 = vmatpush1.bf16.msra.mxu0 %v4213
    %4497 = vmatprep.subr.bf16.mxu0 %v4230
    %4498 = vmatpush1.bf16.msra.mxu0 %v4229
    %4499 = vmatprep.subr.bf16.mxu0 %v4246
    %4500 = vmatpush1.bf16.msra.mxu0 %v4245
    %4501 = vmatprep.subr.bf16.mxu0 %v4262
    %4502 = vmatpush1.bf16.msra.mxu0 %v4261
    %4503 = vmatprep.subr.bf16.mxu0 0
    %4504 = vmatpush1.bf16.msra.mxu0 0
    %4505 = vmatprep.subr.bf16.mxu0 0
    %4506 = vmatpush1.bf16.msra.mxu0 0
    %4507 = vmatprep.subr.bf16.mxu0 0
    %4508 = vmatpush1.bf16.msra.mxu0 0
    %4509 = vmatprep.subr.bf16.mxu0 0
    %4510 = vmatpush1.bf16.msra.mxu0 0
    %4511 = vmatprep.subr.bf16.mxu0 0
    %4512 = vmatpush1.bf16.msra.mxu0 0
    %4513 = vmatprep.subr.bf16.mxu0 0
    %4514 = vmatpush1.bf16.msra.mxu0 0
    %4515 = vmatprep.subr.bf16.mxu0 0
    %4516 = vmatpush1.bf16.msra.mxu0 0
    %4517 = vmatprep.subr.bf16.mxu0 0
    %4518 = vmatpush1.bf16.msra.mxu0 0
    %4519 = vmatprep.mubr.bf16.mxu0 0
    %4520 = vmatmul.mubr.bf16.gmra.mrb[0].mxu0 %v3546
    %v4521 = vpop.f32.mrb[0].mxu0
    %v4522 = vadd.f32 %v3700, %v4521
    %v4523 = vpop.f32.mrb[0].mxu0
    %v4524 = vadd.f32 %v3704, %v4523
    %v4525 = vpop.f32.mrb[0].mxu0
    %v4526 = vadd.f32 %v3700, %v4525
    %v4527 = vpop.f32.mrb[0].mxu0
    %v4528 = vadd.f32 %v3704, %v4527
    %4529 = vdwg.mxu0
    %4530 = vmatprep.subr.bf16.mxu0 %v4152
    %4531 = vmatpush1.bf16.msra.mxu0 %v4151
    %4532 = vmatprep.subr.bf16.mxu0 %v4168
    %4533 = vmatpush1.bf16.msra.mxu0 %v4167
    %4534 = vmatprep.subr.bf16.mxu0 %v4184
    %4535 = vmatpush1.bf16.msra.mxu0 %v4183
    %4536 = vmatprep.subr.bf16.mxu0 %v4200
    %4537 = vmatpush1.bf16.msra.mxu0 %v4199
    %4538 = vmatprep.subr.bf16.mxu0 %v4216
    %4539 = vmatpush1.bf16.msra.mxu0 %v4215
    %4540 = vmatprep.subr.bf16.mxu0 %v4232
    %4541 = vmatpush1.bf16.msra.mxu0 %v4231
    %4542 = vmatprep.subr.bf16.mxu0 %v4248
    %4543 = vmatpush1.bf16.msra.mxu0 %v4247
    %4544 = vmatprep.subr.bf16.mxu0 %v4264
    %4545 = vmatpush1.bf16.msra.mxu0 %v4263
    %4546 = vmatprep.subr.bf16.mxu0 0
    %4547 = vmatpush1.bf16.msra.mxu0 0
    %4548 = vmatprep.subr.bf16.mxu0 0
    %4549 = vmatpush1.bf16.msra.mxu0 0
    %4550 = vmatprep.subr.bf16.mxu0 0
    %4551 = vmatpush1.bf16.msra.mxu0 0
    %4552 = vmatprep.subr.bf16.mxu0 0
    %4553 = vmatpush1.bf16.msra.mxu0 0
    %4554 = vmatprep.subr.bf16.mxu0 0
    %4555 = vmatpush1.bf16.msra.mxu0 0
    %4556 = vmatprep.subr.bf16.mxu0 0
    %4557 = vmatpush1.bf16.msra.mxu0 0
    %4558 = vmatprep.subr.bf16.mxu0 0
    %4559 = vmatpush1.bf16.msra.mxu0 0
    %4560 = vmatprep.subr.bf16.mxu0 0
    %4561 = vmatpush1.bf16.msra.mxu0 0
    %4562 = vmatprep.mubr.bf16.mxu0 0
    %4563 = vmatmul.mubr.bf16.gmra.mrb[0].mxu0 %v3546
    %v4564 = vpop.f32.mrb[0].mxu0
    %v4565 = vadd.f32 %v3708, %v4564
    %v4566 = vpop.f32.mrb[0].mxu0
    %v4567 = vadd.f32 %v3712, %v4566
    %v4568 = vpop.f32.mrb[0].mxu0
    %v4569 = vadd.f32 %v3708, %v4568
    %v4570 = vpop.f32.mrb[0].mxu0
    %v4571 = vadd.f32 %v3712, %v4570
    %4572 = vdwg.mxu0
    %4573 = vmatprep.subr.bf16.mxu0 %v4154
    %4574 = vmatpush1.bf16.msra.mxu0 %v4153
    %4575 = vmatprep.subr.bf16.mxu0 %v4170
    %4576 = vmatpush1.bf16.msra.mxu0 %v4169
    %4577 = vmatprep.subr.bf16.mxu0 %v4186
    %4578 = vmatpush1.bf16.msra.mxu0 %v4185
    %4579 = vmatprep.subr.bf16.mxu0 %v4202
    %4580 = vmatpush1.bf16.msra.mxu0 %v4201
    %4581 = vmatprep.subr.bf16.mxu0 %v4218
    %4582 = vmatpush1.bf16.msra.mxu0 %v4217
    %4583 = vmatprep.subr.bf16.mxu0 %v4234
    %4584 = vmatpush1.bf16.msra.mxu0 %v4233
    %4585 = vmatprep.subr.bf16.mxu0 %v4250
    %4586 = vmatpush1.bf16.msra.mxu0 %v4249
    %4587 = vmatprep.subr.bf16.mxu0 %v4266
    %4588 = vmatpush1.bf16.msra.mxu0 %v4265
    %4589 = vmatprep.subr.bf16.mxu0 0
    %4590 = vmatpush1.bf16.msra.mxu0 0
    %4591 = vmatprep.subr.bf16.mxu0 0
    %4592 = vmatpush1.bf16.msra.mxu0 0
    %4593 = vmatprep.subr.bf16.mxu0 0
    %4594 = vmatpush1.bf16.msra.mxu0 0
    %4595 = vmatprep.subr.bf16.mxu0 0
    %4596 = vmatpush1.bf16.msra.mxu0 0
    %4597 = vmatprep.subr.bf16.mxu0 0
    %4598 = vmatpush1.bf16.msra.mxu0 0
    %4599 = vmatprep.subr.bf16.mxu0 0
    %4600 = vmatpush1.bf16.msra.mxu0 0
    %4601 = vmatprep.subr.bf16.mxu0 0
    %4602 = vmatpush1.bf16.msra.mxu0 0
    %4603 = vmatprep.subr.bf16.mxu0 0
    %4604 = vmatpush1.bf16.msra.mxu0 0
    %4605 = vmatprep.mubr.bf16.mxu0 0
    %4606 = vmatmul.mubr.bf16.gmra.mrb[0].mxu0 %v3546
    %v4607 = vpop.f32.mrb[0].mxu0
    %v4608 = vadd.f32 %v3716, %v4607
    %v4609 = vpop.f32.mrb[0].mxu0
    %v4610 = vadd.f32 %v3720, %v4609
    %v4611 = vpop.f32.mrb[0].mxu0
    %v4612 = vadd.f32 %v3716, %v4611
    %v4613 = vpop.f32.mrb[0].mxu0
    %v4614 = vadd.f32 %v3720, %v4613
    %4615 = vdwg.mxu0
    %4616 = vmatprep.subr.bf16.mxu0 %v4156
    %4617 = vmatpush1.bf16.msra.mxu0 %v4155
    %4618 = vmatprep.subr.bf16.mxu0 %v4172
    %4619 = vmatpush1.bf16.msra.mxu0 %v4171
    %4620 = vmatprep.subr.bf16.mxu0 %v4188
    %4621 = vmatpush1.bf16.msra.mxu0 %v4187
    %4622 = vmatprep.subr.bf16.mxu0 %v4204
    %4623 = vmatpush1.bf16.msra.mxu0 %v4203
    %4624 = vmatprep.subr.bf16.mxu0 %v4220
    %4625 = vmatpush1.bf16.msra.mxu0 %v4219
    %4626 = vmatprep.subr.bf16.mxu0 %v4236
    %4627 = vmatpush1.bf16.msra.mxu0 %v4235
    %4628 = vmatprep.subr.bf16.mxu0 %v4252
    %4629 = vmatpush1.bf16.msra.mxu0 %v4251
    %4630 = vmatprep.subr.bf16.mxu0 %v4268
    %4631 = vmatpush1.bf16.msra.mxu0 %v4267
    %4632 = vmatprep.subr.bf16.mxu0 0
    %4633 = vmatpush1.bf16.msra.mxu0 0
    %4634 = vmatprep.subr.bf16.mxu0 0
    %4635 = vmatpush1.bf16.msra.mxu0 0
    %4636 = vmatprep.subr.bf16.mxu0 0
    %4637 = vmatpush1.bf16.msra.mxu0 0
    %4638 = vmatprep.subr.bf16.mxu0 0
    %4639 = vmatpush1.bf16.msra.mxu0 0
    %4640 = vmatprep.subr.bf16.mxu0 0
    %4641 = vmatpush1.bf16.msra.mxu0 0
    %4642 = vmatprep.subr.bf16.mxu0 0
    %4643 = vmatpush1.bf16.msra.mxu0 0
    %4644 = vmatprep.subr.bf16.mxu0 0
    %4645 = vmatpush1.bf16.msra.mxu0 0
    %4646 = vmatprep.subr.bf16.mxu0 0
    %4647 = vmatpush1.bf16.msra.mxu0 0
    %4648 = vmatprep.mubr.bf16.mxu0 0
    %4649 = vmatmul.mubr.bf16.gmra.mrb[0].mxu0 %v3546
    %v4650 = vpop.f32.mrb[0].mxu0
    %v4651 = vadd.f32 %v3724, %v4650
    %v4652 = vpop.f32.mrb[0].mxu0
    %v4653 = vadd.f32 %v3728, %v4652
    %v4654 = vpop.f32.mrb[0].mxu0
    %v4655 = vadd.f32 %v3724, %v4654
    %v4656 = vpop.f32.mrb[0].mxu0
    %v4657 = vadd.f32 %v3728, %v4656
    %4658 = vdwg.mxu0
    %4659 = vmatprep.subr.bf16.mxu0 %v4158
    %4660 = vmatpush1.bf16.msra.mxu0 %v4157
    %4661 = vmatprep.subr.bf16.mxu0 %v4174
    %4662 = vmatpush1.bf16.msra.mxu0 %v4173
    %4663 = vmatprep.subr.bf16.mxu0 %v4190
    %4664 = vmatpush1.bf16.msra.mxu0 %v4189
    %4665 = vmatprep.subr.bf16.mxu0 %v4206
    %4666 = vmatpush1.bf16.msra.mxu0 %v4205
    %4667 = vmatprep.subr.bf16.mxu0 %v4222
    %4668 = vmatpush1.bf16.msra.mxu0 %v4221
    %4669 = vmatprep.subr.bf16.mxu0 %v4238
    %4670 = vmatpush1.bf16.msra.mxu0 %v4237
    %4671 = vmatprep.subr.bf16.mxu0 %v4254
    %4672 = vmatpush1.bf16.msra.mxu0 %v4253
    %4673 = vmatprep.subr.bf16.mxu0 %v4270
    %4674 = vmatpush1.bf16.msra.mxu0 %v4269
    %4675 = vmatprep.subr.bf16.mxu0 0
    %4676 = vmatpush1.bf16.msra.mxu0 0
    %4677 = vmatprep.subr.bf16.mxu0 0
    %4678 = vmatpush1.bf16.msra.mxu0 0
    %4679 = vmatprep.subr.bf16.mxu0 0
    %4680 = vmatpush1.bf16.msra.mxu0 0
    %4681 = vmatprep.subr.bf16.mxu0 0
    %4682 = vmatpush1.bf16.msra.mxu0 0
    %4683 = vmatprep.subr.bf16.mxu0 0
    %4684 = vmatpush1.bf16.msra.mxu0 0
    %4685 = vmatprep.subr.bf16.mxu0 0
    %4686 = vmatpush1.bf16.msra.mxu0 0
    %4687 = vmatprep.subr.bf16.mxu0 0
    %4688 = vmatpush1.bf16.msra.mxu0 0
    %4689 = vmatprep.subr.bf16.mxu0 0
    %4690 = vmatpush1.bf16.msra.mxu0 0
    %4691 = vmatprep.mubr.bf16.mxu0 0
    %4692 = vmatmul.mubr.bf16.gmra.mrb[0].mxu0 %v3546
    %v4693 = vpop.f32.mrb[0].mxu0
    %v4694 = vadd.f32 %v3732, %v4693
    %v4695 = vpop.f32.mrb[0].mxu0
    %v4696 = vadd.f32 %v3736, %v4695
    %v4697 = vpop.f32.mrb[0].mxu0
    %v4698 = vadd.f32 %v3732, %v4697
    %v4699 = vpop.f32.mrb[0].mxu0
    %v4700 = vadd.f32 %v3736, %v4699
    %4701 = vdwg.mxu0
    %4702 = vmatprep.subr.bf16.mxu0 %v4160
    %4703 = vmatpush1.bf16.msra.mxu0 %v4159
    %4704 = vmatprep.subr.bf16.mxu0 %v4176
    %4705 = vmatpush1.bf16.msra.mxu0 %v4175
    %4706 = vmatprep.subr.bf16.mxu0 %v4192
    %4707 = vmatpush1.bf16.msra.mxu0 %v4191
    %4708 = vmatprep.subr.bf16.mxu0 %v4208
    %4709 = vmatpush1.bf16.msra.mxu0 %v4207
    %4710 = vmatprep.subr.bf16.mxu0 %v4224
    %4711 = vmatpush1.bf16.msra.mxu0 %v4223
    %4712 = vmatprep.subr.bf16.mxu0 %v4240
    %4713 = vmatpush1.bf16.msra.mxu0 %v4239
    %4714 = vmatprep.subr.bf16.mxu0 %v4256
    %4715 = vmatpush1.bf16.msra.mxu0 %v4255
    %4716 = vmatprep.subr.bf16.mxu0 %v4272
    %4717 = vmatpush1.bf16.msra.mxu0 %v4271
    %4718 = vmatprep.subr.bf16.mxu0 0
    %4719 = vmatpush1.bf16.msra.mxu0 0
    %4720 = vmatprep.subr.bf16.mxu0 0
    %4721 = vmatpush1.bf16.msra.mxu0 0
    %4722 = vmatprep.subr.bf16.mxu0 0
    %4723 = vmatpush1.bf16.msra.mxu0 0
    %4724 = vmatprep.subr.bf16.mxu0 0
    %4725 = vmatpush1.bf16.msra.mxu0 0
    %4726 = vmatprep.subr.bf16.mxu0 0
    %4727 = vmatpush1.bf16.msra.mxu0 0
    %4728 = vmatprep.subr.bf16.mxu0 0
    %4729 = vmatpush1.bf16.msra.mxu0 0
    %4730 = vmatprep.subr.bf16.mxu0 0
    %4731 = vmatpush1.bf16.msra.mxu0 0
    %4732 = vmatprep.subr.bf16.mxu0 0
    %4733 = vmatpush1.bf16.msra.mxu0 0
    %4734 = vmatprep.mubr.bf16.mxu0 0
    %4735 = vmatmul.mubr.bf16.gmra.mrb[0].mxu0 %v3546
    %v4736 = vpop.f32.mrb[0].mxu0
    %v4737 = vadd.f32 %v3740, %v4736
    %v4738 = vpop.f32.mrb[0].mxu0
    %v4739 = vadd.f32 %v3744, %v4738
    %v4740 = vpop.f32.mrb[0].mxu0
    %v4741 = vadd.f32 %v3740, %v4740
    %v4742 = vpop.f32.mrb[0].mxu0
    %v4743 = vadd.f32 %v3744, %v4742
    %4744 = vdwg.mxu0
    %v4745 = vmax.f32 %v4436, 0.0
    %v4746 = vmax.f32 %v4438, 0.0
    %v4747 = vmax.f32 %v4479, 0.0
    %v4748 = vmax.f32 %v4481, 0.0
    %v4749 = vmax.f32 %v4522, 0.0
    %v4750 = vmax.f32 %v4524, 0.0
    %v4751 = vmax.f32 %v4565, 0.0
    %v4752 = vmax.f32 %v4567, 0.0
    %v4753 = vmax.f32 %v4608, 0.0
    %v4754 = vmax.f32 %v4610, 0.0
    %v4755 = vmax.f32 %v4651, 0.0
    %v4756 = vmax.f32 %v4653, 0.0
    %v4757 = vmax.f32 %v4694, 0.0
    %v4758 = vmax.f32 %v4696, 0.0
    %v4759 = vmax.f32 %v4737, 0.0
    %v4760 = vmax.f32 %v4739, 0.0
    %v4761 = vmax.f32 %v4440, 0.0
    %v4762 = vmax.f32 %v4442, 0.0
    %v4763 = vmax.f32 %v4483, 0.0
    %v4764 = vmax.f32 %v4485, 0.0
    %v4765 = vmax.f32 %v4526, 0.0
    %v4766 = vmax.f32 %v4528, 0.0
    %v4767 = vmax.f32 %v4569, 0.0
    %v4768 = vmax.f32 %v4571, 0.0
    %v4769 = vmax.f32 %v4612, 0.0
    %v4770 = vmax.f32 %v4614, 0.0
    %v4771 = vmax.f32 %v4655, 0.0
    %v4772 = vmax.f32 %v4657, 0.0
    %v4773 = vmax.f32 %v4698, 0.0
    %v4774 = vmax.f32 %v4700, 0.0
    %v4775 = vmax.f32 %v4741, 0.0
    %v4776 = vmax.f32 %v4743, 0.0
    %v4777 = vpack.c.bf16 %v4761, %v4745
    %v4778 = vpack.c.bf16 %v4762, %v4746
    %v4779 = vpack.c.bf16 %v4763, %v4747
    %v4780 = vpack.c.bf16 %v4764, %v4748
    %v4781 = vpack.c.bf16 %v4765, %v4749
    %v4782 = vpack.c.bf16 %v4766, %v4750
    %v4783 = vpack.c.bf16 %v4767, %v4751
    %v4784 = vpack.c.bf16 %v4768, %v4752
    %v4785 = vpack.c.bf16 %v4769, %v4753
    %v4786 = vpack.c.bf16 %v4770, %v4754
    %v4787 = vpack.c.bf16 %v4771, %v4755
    %v4788 = vpack.c.bf16 %v4772, %v4756
    %v4789 = vpack.c.bf16 %v4773, %v4757
    %v4790 = vpack.c.bf16 %v4774, %v4758
    %v4791 = vpack.c.bf16 %v4775, %v4759
    %v4792 = vpack.c.bf16 %v4776, %v4760
    %s4793 = scalar_lea.vmem [#allocation21], 1024
    %v4794 = vld [vmem:[%s4793] sm:$0xf]
    %v4795 = vld [vmem:[%s4793 + $0x4] sm:$0xf]
    %v4796 = vld [vmem:[%s4793 + $0x8] sm:$0xf]
    %v4797 = vld [vmem:[%s4793 + $0xc] sm:$0xf]
    %v4798 = vld [vmem:[%s4793 + $0x10] sm:$0xf]
    %v4799 = vld [vmem:[%s4793 + $0x14] sm:$0xf]
    %v4800 = vld [vmem:[%s4793 + $0x18] sm:$0xf]
    %v4801 = vld [vmem:[%s4793 + $0x1c] sm:$0xf]
    %v4802 = vld [vmem:[%s4793 + $0x20] sm:$0xf]
    %v4803 = vld [vmem:[%s4793 + $0x24] sm:$0xf]
    %v4804 = vld [vmem:[%s4793 + $0x28] sm:$0xf]
    %v4805 = vld [vmem:[%s4793 + $0x2c] sm:$0xf]
    %v4806 = vld [vmem:[%s4793 + $0x30] sm:$0xf]
    %v4807 = vld [vmem:[%s4793 + $0x34] sm:$0xf]
    %v4808 = vld [vmem:[%s4793 + $0x38] sm:$0xf]
    %v4809 = vld [vmem:[%s4793 + $0x3c] sm:$0xf]
    %v4810 = vld [vmem:[%s4793 + $0x40] sm:$0xf]
    %v4811 = vld [vmem:[%s4793 + $0x44] sm:$0xf]
    %v4812 = vld [vmem:[%s4793 + $0x48] sm:$0xf]
    %v4813 = vld [vmem:[%s4793 + $0x4c] sm:$0xf]
    %v4814 = vld [vmem:[%s4793 + $0x50] sm:$0xf]
    %v4815 = vld [vmem:[%s4793 + $0x54] sm:$0xf]
    %v4816 = vld [vmem:[%s4793 + $0x58] sm:$0xf]
    %v4817 = vld [vmem:[%s4793 + $0x5c] sm:$0xf]
    %v4818 = vld [vmem:[%s4793 + $0x60] sm:$0xf]
    %v4819 = vld [vmem:[%s4793 + $0x64] sm:$0xf]
    %v4820 = vld [vmem:[%s4793 + $0x68] sm:$0xf]
    %v4821 = vld [vmem:[%s4793 + $0x6c] sm:$0xf]
    %v4822 = vld [vmem:[%s4793 + $0x70] sm:$0xf]
    %v4823 = vld [vmem:[%s4793 + $0x74] sm:$0xf]
    %v4824 = vld [vmem:[%s4793 + $0x78] sm:$0xf]
    %v4825 = vld [vmem:[%s4793 + $0x7c] sm:$0xf]
    %v4826 = vld [vmem:[%s4793 + $0x80] sm:$0xf]
    %v4827 = vld [vmem:[%s4793 + $0x84] sm:$0xf]
    %v4828 = vld [vmem:[%s4793 + $0x88] sm:$0xf]
    %v4829 = vld [vmem:[%s4793 + $0x8c] sm:$0xf]
    %v4830 = vld [vmem:[%s4793 + $0x90] sm:$0xf]
    %v4831 = vld [vmem:[%s4793 + $0x94] sm:$0xf]
    %v4832 = vld [vmem:[%s4793 + $0x98] sm:$0xf]
    %v4833 = vld [vmem:[%s4793 + $0x9c] sm:$0xf]
    %v4834 = vld [vmem:[%s4793 + $0xa0] sm:$0xf]
    %v4835 = vld [vmem:[%s4793 + $0xa4] sm:$0xf]
    %v4836 = vld [vmem:[%s4793 + $0xa8] sm:$0xf]
    %v4837 = vld [vmem:[%s4793 + $0xac] sm:$0xf]
    %v4838 = vld [vmem:[%s4793 + $0xb0] sm:$0xf]
    %v4839 = vld [vmem:[%s4793 + $0xb4] sm:$0xf]
    %v4840 = vld [vmem:[%s4793 + $0xb8] sm:$0xf]
    %v4841 = vld [vmem:[%s4793 + $0xbc] sm:$0xf]
    %v4842 = vld [vmem:[%s4793 + $0xc0] sm:$0xf]
    %v4843 = vld [vmem:[%s4793 + $0xc4] sm:$0xf]
    %v4844 = vld [vmem:[%s4793 + $0xc8] sm:$0xf]
    %v4845 = vld [vmem:[%s4793 + $0xcc] sm:$0xf]
    %v4846 = vld [vmem:[%s4793 + $0xd0] sm:$0xf]
    %v4847 = vld [vmem:[%s4793 + $0xd4] sm:$0xf]
    %v4848 = vld [vmem:[%s4793 + $0xd8] sm:$0xf]
    %v4849 = vld [vmem:[%s4793 + $0xdc] sm:$0xf]
    %v4850 = vld [vmem:[%s4793 + $0xe0] sm:$0xf]
    %v4851 = vld [vmem:[%s4793 + $0xe4] sm:$0xf]
    %v4852 = vld [vmem:[%s4793 + $0xe8] sm:$0xf]
    %v4853 = vld [vmem:[%s4793 + $0xec] sm:$0xf]
    %v4854 = vld [vmem:[%s4793 + $0xf0] sm:$0xf]
    %v4855 = vld [vmem:[%s4793 + $0xf4] sm:$0xf]
    %v4856 = vld [vmem:[%s4793 + $0xf8] sm:$0xf]
    %v4857 = vld [vmem:[%s4793 + $0xfc] sm:$0xf]
    %v4858 = vld [vmem:[%s4793 + $0x100] sm:$0xf]
    %v4859 = vld [vmem:[%s4793 + $0x104] sm:$0xf]
    %v4860 = vld [vmem:[%s4793 + $0x108] sm:$0xf]
    %v4861 = vld [vmem:[%s4793 + $0x10c] sm:$0xf]
    %v4862 = vld [vmem:[%s4793 + $0x110] sm:$0xf]
    %v4863 = vld [vmem:[%s4793 + $0x114] sm:$0xf]
    %v4864 = vld [vmem:[%s4793 + $0x118] sm:$0xf]
    %v4865 = vld [vmem:[%s4793 + $0x11c] sm:$0xf]
    %v4866 = vld [vmem:[%s4793 + $0x120] sm:$0xf]
    %v4867 = vld [vmem:[%s4793 + $0x124] sm:$0xf]
    %v4868 = vld [vmem:[%s4793 + $0x128] sm:$0xf]
    %v4869 = vld [vmem:[%s4793 + $0x12c] sm:$0xf]
    %v4870 = vld [vmem:[%s4793 + $0x130] sm:$0xf]
    %v4871 = vld [vmem:[%s4793 + $0x134] sm:$0xf]
    %v4872 = vld [vmem:[%s4793 + $0x138] sm:$0xf]
    %v4873 = vld [vmem:[%s4793 + $0x13c] sm:$0xf]
    %v4874 = vld [vmem:[%s4793 + $0x140] sm:$0xf]
    %v4875 = vld [vmem:[%s4793 + $0x144] sm:$0xf]
    %v4876 = vld [vmem:[%s4793 + $0x148] sm:$0xf]
    %v4877 = vld [vmem:[%s4793 + $0x14c] sm:$0xf]
    %v4878 = vld [vmem:[%s4793 + $0x150] sm:$0xf]
    %v4879 = vld [vmem:[%s4793 + $0x154] sm:$0xf]
    %v4880 = vld [vmem:[%s4793 + $0x158] sm:$0xf]
    %v4881 = vld [vmem:[%s4793 + $0x15c] sm:$0xf]
    %v4882 = vld [vmem:[%s4793 + $0x160] sm:$0xf]
    %v4883 = vld [vmem:[%s4793 + $0x164] sm:$0xf]
    %v4884 = vld [vmem:[%s4793 + $0x168] sm:$0xf]
    %v4885 = vld [vmem:[%s4793 + $0x16c] sm:$0xf]
    %v4886 = vld [vmem:[%s4793 + $0x170] sm:$0xf]
    %v4887 = vld [vmem:[%s4793 + $0x174] sm:$0xf]
    %v4888 = vld [vmem:[%s4793 + $0x178] sm:$0xf]
    %v4889 = vld [vmem:[%s4793 + $0x17c] sm:$0xf]
    %v4890 = vld [vmem:[%s4793 + $0x180] sm:$0xf]
    %v4891 = vld [vmem:[%s4793 + $0x184] sm:$0xf]
    %v4892 = vld [vmem:[%s4793 + $0x188] sm:$0xf]
    %v4893 = vld [vmem:[%s4793 + $0x18c] sm:$0xf]
    %v4894 = vld [vmem:[%s4793 + $0x190] sm:$0xf]
    %v4895 = vld [vmem:[%s4793 + $0x194] sm:$0xf]
    %v4896 = vld [vmem:[%s4793 + $0x198] sm:$0xf]
    %v4897 = vld [vmem:[%s4793 + $0x19c] sm:$0xf]
    %v4898 = vld [vmem:[%s4793 + $0x1a0] sm:$0xf]
    %v4899 = vld [vmem:[%s4793 + $0x1a4] sm:$0xf]
    %v4900 = vld [vmem:[%s4793 + $0x1a8] sm:$0xf]
    %v4901 = vld [vmem:[%s4793 + $0x1ac] sm:$0xf]
    %v4902 = vld [vmem:[%s4793 + $0x1b0] sm:$0xf]
    %v4903 = vld [vmem:[%s4793 + $0x1b4] sm:$0xf]
    %v4904 = vld [vmem:[%s4793 + $0x1b8] sm:$0xf]
    %v4905 = vld [vmem:[%s4793 + $0x1bc] sm:$0xf]
    %v4906 = vld [vmem:[%s4793 + $0x1c0] sm:$0xf]
    %v4907 = vld [vmem:[%s4793 + $0x1c4] sm:$0xf]
    %v4908 = vld [vmem:[%s4793 + $0x1c8] sm:$0xf]
    %v4909 = vld [vmem:[%s4793 + $0x1cc] sm:$0xf]
    %v4910 = vld [vmem:[%s4793 + $0x1d0] sm:$0xf]
    %v4911 = vld [vmem:[%s4793 + $0x1d4] sm:$0xf]
    %v4912 = vld [vmem:[%s4793 + $0x1d8] sm:$0xf]
    %v4913 = vld [vmem:[%s4793 + $0x1dc] sm:$0xf]
    %v4914 = vld [vmem:[%s4793 + $0x1e0] sm:$0xf]
    %v4915 = vld [vmem:[%s4793 + $0x1e4] sm:$0xf]
    %v4916 = vld [vmem:[%s4793 + $0x1e8] sm:$0xf]
    %v4917 = vld [vmem:[%s4793 + $0x1ec] sm:$0xf]
    %v4918 = vld [vmem:[%s4793 + $0x1f0] sm:$0xf]
    %v4919 = vld [vmem:[%s4793 + $0x1f4] sm:$0xf]
    %v4920 = vld [vmem:[%s4793 + $0x1f8] sm:$0xf]
    %v4921 = vld [vmem:[%s4793 + $0x1fc] sm:$0xf]
    %v4922 = vld [vmem:[%s4793 + $0x200] sm:$0xf]
    %v4923 = vld [vmem:[%s4793 + $0x204] sm:$0xf]
    %v4924 = vld [vmem:[%s4793 + $0x208] sm:$0xf]
    %v4925 = vld [vmem:[%s4793 + $0x20c] sm:$0xf]
    %v4926 = vld [vmem:[%s4793 + $0x210] sm:$0xf]
    %v4927 = vld [vmem:[%s4793 + $0x214] sm:$0xf]
    %v4928 = vld [vmem:[%s4793 + $0x218] sm:$0xf]
    %v4929 = vld [vmem:[%s4793 + $0x21c] sm:$0xf]
    %v4930 = vld [vmem:[%s4793 + $0x220] sm:$0xf]
    %v4931 = vld [vmem:[%s4793 + $0x224] sm:$0xf]
    %v4932 = vld [vmem:[%s4793 + $0x228] sm:$0xf]
    %v4933 = vld [vmem:[%s4793 + $0x22c] sm:$0xf]
    %v4934 = vld [vmem:[%s4793 + $0x230] sm:$0xf]
    %v4935 = vld [vmem:[%s4793 + $0x234] sm:$0xf]
    %v4936 = vld [vmem:[%s4793 + $0x238] sm:$0xf]
    %v4937 = vld [vmem:[%s4793 + $0x23c] sm:$0xf]
    %v4938 = vld [vmem:[%s4793 + $0x240] sm:$0xf]
    %v4939 = vld [vmem:[%s4793 + $0x244] sm:$0xf]
    %v4940 = vld [vmem:[%s4793 + $0x248] sm:$0xf]
    %v4941 = vld [vmem:[%s4793 + $0x24c] sm:$0xf]
    %v4942 = vld [vmem:[%s4793 + $0x250] sm:$0xf]
    %v4943 = vld [vmem:[%s4793 + $0x254] sm:$0xf]
    %v4944 = vld [vmem:[%s4793 + $0x258] sm:$0xf]
    %v4945 = vld [vmem:[%s4793 + $0x25c] sm:$0xf]
    %v4946 = vld [vmem:[%s4793 + $0x260] sm:$0xf]
    %v4947 = vld [vmem:[%s4793 + $0x264] sm:$0xf]
    %v4948 = vld [vmem:[%s4793 + $0x268] sm:$0xf]
    %v4949 = vld [vmem:[%s4793 + $0x26c] sm:$0xf]
    %v4950 = vld [vmem:[%s4793 + $0x270] sm:$0xf]
    %v4951 = vld [vmem:[%s4793 + $0x274] sm:$0xf]
    %v4952 = vld [vmem:[%s4793 + $0x278] sm:$0xf]
    %v4953 = vld [vmem:[%s4793 + $0x27c] sm:$0xf]
    %v4954 = vld [vmem:[%s4793 + $0x280] sm:$0xf]
    %v4955 = vld [vmem:[%s4793 + $0x284] sm:$0xf]
    %v4956 = vld [vmem:[%s4793 + $0x288] sm:$0xf]
    %v4957 = vld [vmem:[%s4793 + $0x28c] sm:$0xf]
    %v4958 = vld [vmem:[%s4793 + $0x290] sm:$0xf]
    %v4959 = vld [vmem:[%s4793 + $0x294] sm:$0xf]
    %v4960 = vld [vmem:[%s4793 + $0x298] sm:$0xf]
    %v4961 = vld [vmem:[%s4793 + $0x29c] sm:$0xf]
    %v4962 = vld [vmem:[%s4793 + $0x2a0] sm:$0xf]
    %v4963 = vld [vmem:[%s4793 + $0x2a4] sm:$0xf]
    %v4964 = vld [vmem:[%s4793 + $0x2a8] sm:$0xf]
    %v4965 = vld [vmem:[%s4793 + $0x2ac] sm:$0xf]
    %v4966 = vld [vmem:[%s4793 + $0x2b0] sm:$0xf]
    %v4967 = vld [vmem:[%s4793 + $0x2b4] sm:$0xf]
    %v4968 = vld [vmem:[%s4793 + $0x2b8] sm:$0xf]
    %v4969 = vld [vmem:[%s4793 + $0x2bc] sm:$0xf]
    %v4970 = vld [vmem:[%s4793 + $0x2c0] sm:$0xf]
    %v4971 = vld [vmem:[%s4793 + $0x2c4] sm:$0xf]
    %v4972 = vld [vmem:[%s4793 + $0x2c8] sm:$0xf]
    %v4973 = vld [vmem:[%s4793 + $0x2cc] sm:$0xf]
    %v4974 = vld [vmem:[%s4793 + $0x2d0] sm:$0xf]
    %v4975 = vld [vmem:[%s4793 + $0x2d4] sm:$0xf]
    %v4976 = vld [vmem:[%s4793 + $0x2d8] sm:$0xf]
    %v4977 = vld [vmem:[%s4793 + $0x2dc] sm:$0xf]
    %v4978 = vld [vmem:[%s4793 + $0x2e0] sm:$0xf]
    %v4979 = vld [vmem:[%s4793 + $0x2e4] sm:$0xf]
    %v4980 = vld [vmem:[%s4793 + $0x2e8] sm:$0xf]
    %v4981 = vld [vmem:[%s4793 + $0x2ec] sm:$0xf]
    %v4982 = vld [vmem:[%s4793 + $0x2f0] sm:$0xf]
    %v4983 = vld [vmem:[%s4793 + $0x2f4] sm:$0xf]
    %v4984 = vld [vmem:[%s4793 + $0x2f8] sm:$0xf]
    %v4985 = vld [vmem:[%s4793 + $0x2fc] sm:$0xf]
    %v4986 = vld [vmem:[%s4793 + $0x300] sm:$0xf]
    %v4987 = vld [vmem:[%s4793 + $0x304] sm:$0xf]
    %v4988 = vld [vmem:[%s4793 + $0x308] sm:$0xf]
    %v4989 = vld [vmem:[%s4793 + $0x30c] sm:$0xf]
    %v4990 = vld [vmem:[%s4793 + $0x310] sm:$0xf]
    %v4991 = vld [vmem:[%s4793 + $0x314] sm:$0xf]
    %v4992 = vld [vmem:[%s4793 + $0x318] sm:$0xf]
    %v4993 = vld [vmem:[%s4793 + $0x31c] sm:$0xf]
    %v4994 = vld [vmem:[%s4793 + $0x320] sm:$0xf]
    %v4995 = vld [vmem:[%s4793 + $0x324] sm:$0xf]
    %v4996 = vld [vmem:[%s4793 + $0x328] sm:$0xf]
    %v4997 = vld [vmem:[%s4793 + $0x32c] sm:$0xf]
    %v4998 = vld [vmem:[%s4793 + $0x330] sm:$0xf]
    %v4999 = vld [vmem:[%s4793 + $0x334] sm:$0xf]
    %v5000 = vld [vmem:[%s4793 + $0x338] sm:$0xf]
    %v5001 = vld [vmem:[%s4793 + $0x33c] sm:$0xf]
    %v5002 = vld [vmem:[%s4793 + $0x340] sm:$0xf]
    %v5003 = vld [vmem:[%s4793 + $0x344] sm:$0xf]
    %v5004 = vld [vmem:[%s4793 + $0x348] sm:$0xf]
    %v5005 = vld [vmem:[%s4793 + $0x34c] sm:$0xf]
    %v5006 = vld [vmem:[%s4793 + $0x350] sm:$0xf]
    %v5007 = vld [vmem:[%s4793 + $0x354] sm:$0xf]
    %v5008 = vld [vmem:[%s4793 + $0x358] sm:$0xf]
    %v5009 = vld [vmem:[%s4793 + $0x35c] sm:$0xf]
    %v5010 = vld [vmem:[%s4793 + $0x360] sm:$0xf]
    %v5011 = vld [vmem:[%s4793 + $0x364] sm:$0xf]
    %v5012 = vld [vmem:[%s4793 + $0x368] sm:$0xf]
    %v5013 = vld [vmem:[%s4793 + $0x36c] sm:$0xf]
    %v5014 = vld [vmem:[%s4793 + $0x370] sm:$0xf]
    %v5015 = vld [vmem:[%s4793 + $0x374] sm:$0xf]
    %v5016 = vld [vmem:[%s4793 + $0x378] sm:$0xf]
    %v5017 = vld [vmem:[%s4793 + $0x37c] sm:$0xf]
    %v5018 = vld [vmem:[%s4793 + $0x380] sm:$0xf]
    %v5019 = vld [vmem:[%s4793 + $0x384] sm:$0xf]
    %v5020 = vld [vmem:[%s4793 + $0x388] sm:$0xf]
    %v5021 = vld [vmem:[%s4793 + $0x38c] sm:$0xf]
    %v5022 = vld [vmem:[%s4793 + $0x390] sm:$0xf]
    %v5023 = vld [vmem:[%s4793 + $0x394] sm:$0xf]
    %v5024 = vld [vmem:[%s4793 + $0x398] sm:$0xf]
    %v5025 = vld [vmem:[%s4793 + $0x39c] sm:$0xf]
    %v5026 = vld [vmem:[%s4793 + $0x3a0] sm:$0xf]
    %v5027 = vld [vmem:[%s4793 + $0x3a4] sm:$0xf]
    %v5028 = vld [vmem:[%s4793 + $0x3a8] sm:$0xf]
    %v5029 = vld [vmem:[%s4793 + $0x3ac] sm:$0xf]
    %v5030 = vld [vmem:[%s4793 + $0x3b0] sm:$0xf]
    %v5031 = vld [vmem:[%s4793 + $0x3b4] sm:$0xf]
    %v5032 = vld [vmem:[%s4793 + $0x3b8] sm:$0xf]
    %v5033 = vld [vmem:[%s4793 + $0x3bc] sm:$0xf]
    %v5034 = vld [vmem:[%s4793 + $0x3c0] sm:$0xf]
    %v5035 = vld [vmem:[%s4793 + $0x3c4] sm:$0xf]
    %v5036 = vld [vmem:[%s4793 + $0x3c8] sm:$0xf]
    %v5037 = vld [vmem:[%s4793 + $0x3cc] sm:$0xf]
    %v5038 = vld [vmem:[%s4793 + $0x3d0] sm:$0xf]
    %v5039 = vld [vmem:[%s4793 + $0x3d4] sm:$0xf]
    %v5040 = vld [vmem:[%s4793 + $0x3d8] sm:$0xf]
    %v5041 = vld [vmem:[%s4793 + $0x3dc] sm:$0xf]
    %v5042 = vld [vmem:[%s4793 + $0x3e0] sm:$0xf]
    %v5043 = vld [vmem:[%s4793 + $0x3e4] sm:$0xf]
    %v5044 = vld [vmem:[%s4793 + $0x3e8] sm:$0xf]
    %v5045 = vld [vmem:[%s4793 + $0x3ec] sm:$0xf]
    %v5046 = vld [vmem:[%s4793 + $0x3f0] sm:$0xf]
    %v5047 = vld [vmem:[%s4793 + $0x3f4] sm:$0xf]
    %v5048 = vld [vmem:[%s4793 + $0x3f8] sm:$0xf]
    %v5049 = vld [vmem:[%s4793 + $0x3fc] sm:$0xf]
    %s5050 = scalar_lea.vmem [#allocation23], 1
    %v5051 = vld [vmem:[%s5050] sm:$0x1]
    %v5053 = vlaneseq
    %v5054 = vshrl.u32 %v5053, 7
    %v5055 = vsub.s32 0, %v5054
    %v5056 = vrot.slane %v5051, %v5055
    %v5314 = vunpack.c.l.b16 %v4794
    %v5315 = vunpack.c.l.b16 %v4795
    %v5316 = vunpack.c.l.b16 %v4796
    %v5317 = vunpack.c.l.b16 %v4797
    %v5318 = vunpack.c.l.b16 %v4798
    %v5319 = vunpack.c.l.b16 %v4799
    %v5320 = vunpack.c.l.b16 %v4800
    %v5321 = vunpack.c.l.b16 %v4801
    %v5322 = vunpack.c.l.b16 %v4802
    %v5323 = vunpack.c.l.b16 %v4803
    %v5324 = vunpack.c.l.b16 %v4804
    %v5325 = vunpack.c.l.b16 %v4805
    %v5326 = vunpack.c.l.b16 %v4806
    %v5327 = vunpack.c.l.b16 %v4807
    %v5328 = vunpack.c.l.b16 %v4808
    %v5329 = vunpack.c.l.b16 %v4809
    %v5330 = vunpack.c.l.b16 %v4810
    %v5331 = vunpack.c.l.b16 %v4811
    %v5332 = vunpack.c.l.b16 %v4812
    %v5333 = vunpack.c.l.b16 %v4813
    %v5334 = vunpack.c.l.b16 %v4814
    %v5335 = vunpack.c.l.b16 %v4815
    %v5336 = vunpack.c.l.b16 %v4816
    %v5337 = vunpack.c.l.b16 %v4817
    %v5338 = vunpack.c.l.b16 %v4818
    %v5339 = vunpack.c.l.b16 %v4819
    %v5340 = vunpack.c.l.b16 %v4820
    %v5341 = vunpack.c.l.b16 %v4821
    %v5342 = vunpack.c.l.b16 %v4822
    %v5343 = vunpack.c.l.b16 %v4823
    %v5344 = vunpack.c.l.b16 %v4824
    %v5345 = vunpack.c.l.b16 %v4825
    %v5346 = vunpack.c.l.b16 %v4826
    %v5347 = vunpack.c.l.b16 %v4827
    %v5348 = vunpack.c.l.b16 %v4828
    %v5349 = vunpack.c.l.b16 %v4829
    %v5350 = vunpack.c.l.b16 %v4830
    %v5351 = vunpack.c.l.b16 %v4831
    %v5352 = vunpack.c.l.b16 %v4832
    %v5353 = vunpack.c.l.b16 %v4833
    %v5354 = vunpack.c.l.b16 %v4834
    %v5355 = vunpack.c.l.b16 %v4835
    %v5356 = vunpack.c.l.b16 %v4836
    %v5357 = vunpack.c.l.b16 %v4837
    %v5358 = vunpack.c.l.b16 %v4838
    %v5359 = vunpack.c.l.b16 %v4839
    %v5360 = vunpack.c.l.b16 %v4840
    %v5361 = vunpack.c.l.b16 %v4841
    %v5362 = vunpack.c.l.b16 %v4842
    %v5363 = vunpack.c.l.b16 %v4843
    %v5364 = vunpack.c.l.b16 %v4844
    %v5365 = vunpack.c.l.b16 %v4845
    %v5366 = vunpack.c.l.b16 %v4846
    %v5367 = vunpack.c.l.b16 %v4847
    %v5368 = vunpack.c.l.b16 %v4848
    %v5369 = vunpack.c.l.b16 %v4849
    %v5370 = vunpack.c.l.b16 %v4850
    %v5371 = vunpack.c.l.b16 %v4851
    %v5372 = vunpack.c.l.b16 %v4852
    %v5373 = vunpack.c.l.b16 %v4853
    %v5374 = vunpack.c.l.b16 %v4854
    %v5375 = vunpack.c.l.b16 %v4855
    %v5376 = vunpack.c.l.b16 %v4856
    %v5377 = vunpack.c.l.b16 %v4857
    %v5378 = vunpack.c.l.b16 %v4858
    %v5379 = vunpack.c.l.b16 %v4859
    %v5380 = vunpack.c.l.b16 %v4860
    %v5381 = vunpack.c.l.b16 %v4861
    %v5382 = vunpack.c.l.b16 %v4862
    %v5383 = vunpack.c.l.b16 %v4863
    %v5384 = vunpack.c.l.b16 %v4864
    %v5385 = vunpack.c.l.b16 %v4865
    %v5386 = vunpack.c.l.b16 %v4866
    %v5387 = vunpack.c.l.b16 %v4867
    %v5388 = vunpack.c.l.b16 %v4868
    %v5389 = vunpack.c.l.b16 %v4869
    %v5390 = vunpack.c.l.b16 %v4870
    %v5391 = vunpack.c.l.b16 %v4871
    %v5392 = vunpack.c.l.b16 %v4872
    %v5393 = vunpack.c.l.b16 %v4873
    %v5394 = vunpack.c.l.b16 %v4874
    %v5395 = vunpack.c.l.b16 %v4875
    %v5396 = vunpack.c.l.b16 %v4876
    %v5397 = vunpack.c.l.b16 %v4877
    %v5398 = vunpack.c.l.b16 %v4878
    %v5399 = vunpack.c.l.b16 %v4879
    %v5400 = vunpack.c.l.b16 %v4880
    %v5401 = vunpack.c.l.b16 %v4881
    %v5402 = vunpack.c.l.b16 %v4882
    %v5403 = vunpack.c.l.b16 %v4883
    %v5404 = vunpack.c.l.b16 %v4884
    %v5405 = vunpack.c.l.b16 %v4885
    %v5406 = vunpack.c.l.b16 %v4886
    %v5407 = vunpack.c.l.b16 %v4887
    %v5408 = vunpack.c.l.b16 %v4888
    %v5409 = vunpack.c.l.b16 %v4889
    %v5410 = vunpack.c.l.b16 %v4890
    %v5411 = vunpack.c.l.b16 %v4891
    %v5412 = vunpack.c.l.b16 %v4892
    %v5413 = vunpack.c.l.b16 %v4893
    %v5414 = vunpack.c.l.b16 %v4894
    %v5415 = vunpack.c.l.b16 %v4895
    %v5416 = vunpack.c.l.b16 %v4896
    %v5417 = vunpack.c.l.b16 %v4897
    %v5418 = vunpack.c.l.b16 %v4898
    %v5419 = vunpack.c.l.b16 %v4899
    %v5420 = vunpack.c.l.b16 %v4900
    %v5421 = vunpack.c.l.b16 %v4901
    %v5422 = vunpack.c.l.b16 %v4902
    %v5423 = vunpack.c.l.b16 %v4903
    %v5424 = vunpack.c.l.b16 %v4904
    %v5425 = vunpack.c.l.b16 %v4905
    %v5426 = vunpack.c.l.b16 %v4906
    %v5427 = vunpack.c.l.b16 %v4907
    %v5428 = vunpack.c.l.b16 %v4908
    %v5429 = vunpack.c.l.b16 %v4909
    %v5430 = vunpack.c.l.b16 %v4910
    %v5431 = vunpack.c.l.b16 %v4911
    %v5432 = vunpack.c.l.b16 %v4912
    %v5433 = vunpack.c.l.b16 %v4913
    %v5434 = vunpack.c.l.b16 %v4914
    %v5435 = vunpack.c.l.b16 %v4915
    %v5436 = vunpack.c.l.b16 %v4916
    %v5437 = vunpack.c.l.b16 %v4917
    %v5438 = vunpack.c.l.b16 %v4918
    %v5439 = vunpack.c.l.b16 %v4919
    %v5440 = vunpack.c.l.b16 %v4920
    %v5441 = vunpack.c.l.b16 %v4921
    %v5442 = vunpack.c.l.b16 %v4922
    %v5443 = vunpack.c.l.b16 %v4923
    %v5444 = vunpack.c.l.b16 %v4924
    %v5445 = vunpack.c.l.b16 %v4925
    %v5446 = vunpack.c.l.b16 %v4926
    %v5447 = vunpack.c.l.b16 %v4927
    %v5448 = vunpack.c.l.b16 %v4928
    %v5449 = vunpack.c.l.b16 %v4929
    %v5450 = vunpack.c.l.b16 %v4930
    %v5451 = vunpack.c.l.b16 %v4931
    %v5452 = vunpack.c.l.b16 %v4932
    %v5453 = vunpack.c.l.b16 %v4933
    %v5454 = vunpack.c.l.b16 %v4934
    %v5455 = vunpack.c.l.b16 %v4935
    %v5456 = vunpack.c.l.b16 %v4936
    %v5457 = vunpack.c.l.b16 %v4937
    %v5458 = vunpack.c.l.b16 %v4938
    %v5459 = vunpack.c.l.b16 %v4939
    %v5460 = vunpack.c.l.b16 %v4940
    %v5461 = vunpack.c.l.b16 %v4941
    %v5462 = vunpack.c.l.b16 %v4942
    %v5463 = vunpack.c.l.b16 %v4943
    %v5464 = vunpack.c.l.b16 %v4944
    %v5465 = vunpack.c.l.b16 %v4945
    %v5466 = vunpack.c.l.b16 %v4946
    %v5467 = vunpack.c.l.b16 %v4947
    %v5468 = vunpack.c.l.b16 %v4948
    %v5469 = vunpack.c.l.b16 %v4949
    %v5470 = vunpack.c.l.b16 %v4950
    %v5471 = vunpack.c.l.b16 %v4951
    %v5472 = vunpack.c.l.b16 %v4952
    %v5473 = vunpack.c.l.b16 %v4953
    %v5474 = vunpack.c.l.b16 %v4954
    %v5475 = vunpack.c.l.b16 %v4955
    %v5476 = vunpack.c.l.b16 %v4956
    %v5477 = vunpack.c.l.b16 %v4957
    %v5478 = vunpack.c.l.b16 %v4958
    %v5479 = vunpack.c.l.b16 %v4959
    %v5480 = vunpack.c.l.b16 %v4960
    %v5481 = vunpack.c.l.b16 %v4961
    %v5482 = vunpack.c.l.b16 %v4962
    %v5483 = vunpack.c.l.b16 %v4963
    %v5484 = vunpack.c.l.b16 %v4964
    %v5485 = vunpack.c.l.b16 %v4965
    %v5486 = vunpack.c.l.b16 %v4966
    %v5487 = vunpack.c.l.b16 %v4967
    %v5488 = vunpack.c.l.b16 %v4968
    %v5489 = vunpack.c.l.b16 %v4969
    %v5490 = vunpack.c.l.b16 %v4970
    %v5491 = vunpack.c.l.b16 %v4971
    %v5492 = vunpack.c.l.b16 %v4972
    %v5493 = vunpack.c.l.b16 %v4973
    %v5494 = vunpack.c.l.b16 %v4974
    %v5495 = vunpack.c.l.b16 %v4975
    %v5496 = vunpack.c.l.b16 %v4976
    %v5497 = vunpack.c.l.b16 %v4977
    %v5498 = vunpack.c.l.b16 %v4978
    %v5499 = vunpack.c.l.b16 %v4979
    %v5500 = vunpack.c.l.b16 %v4980
    %v5501 = vunpack.c.l.b16 %v4981
    %v5502 = vunpack.c.l.b16 %v4982
    %v5503 = vunpack.c.l.b16 %v4983
    %v5504 = vunpack.c.l.b16 %v4984
    %v5505 = vunpack.c.l.b16 %v4985
    %v5506 = vunpack.c.l.b16 %v4986
    %v5507 = vunpack.c.l.b16 %v4987
    %v5508 = vunpack.c.l.b16 %v4988
    %v5509 = vunpack.c.l.b16 %v4989
    %v5510 = vunpack.c.l.b16 %v4990
    %v5511 = vunpack.c.l.b16 %v4991
    %v5512 = vunpack.c.l.b16 %v4992
    %v5513 = vunpack.c.l.b16 %v4993
    %v5514 = vunpack.c.l.b16 %v4994
    %v5515 = vunpack.c.l.b16 %v4995
    %v5516 = vunpack.c.l.b16 %v4996
    %v5517 = vunpack.c.l.b16 %v4997
    %v5518 = vunpack.c.l.b16 %v4998
    %v5519 = vunpack.c.l.b16 %v4999
    %v5520 = vunpack.c.l.b16 %v5000
    %v5521 = vunpack.c.l.b16 %v5001
    %v5522 = vunpack.c.l.b16 %v5002
    %v5523 = vunpack.c.l.b16 %v5003
    %v5524 = vunpack.c.l.b16 %v5004
    %v5525 = vunpack.c.l.b16 %v5005
    %v5526 = vunpack.c.l.b16 %v5006
    %v5527 = vunpack.c.l.b16 %v5007
    %v5528 = vunpack.c.l.b16 %v5008
    %v5529 = vunpack.c.l.b16 %v5009
    %v5530 = vunpack.c.l.b16 %v5010
    %v5531 = vunpack.c.l.b16 %v5011
    %v5532 = vunpack.c.l.b16 %v5012
    %v5533 = vunpack.c.l.b16 %v5013
    %v5534 = vunpack.c.l.b16 %v5014
    %v5535 = vunpack.c.l.b16 %v5015
    %v5536 = vunpack.c.l.b16 %v5016
    %v5537 = vunpack.c.l.b16 %v5017
    %v5538 = vunpack.c.l.b16 %v5018
    %v5539 = vunpack.c.l.b16 %v5019
    %v5540 = vunpack.c.l.b16 %v5020
    %v5541 = vunpack.c.l.b16 %v5021
    %v5542 = vunpack.c.l.b16 %v5022
    %v5543 = vunpack.c.l.b16 %v5023
    %v5544 = vunpack.c.l.b16 %v5024
    %v5545 = vunpack.c.l.b16 %v5025
    %v5546 = vunpack.c.l.b16 %v5026
    %v5547 = vunpack.c.l.b16 %v5027
    %v5548 = vunpack.c.l.b16 %v5028
    %v5549 = vunpack.c.l.b16 %v5029
    %v5550 = vunpack.c.l.b16 %v5030
    %v5551 = vunpack.c.l.b16 %v5031
    %v5552 = vunpack.c.l.b16 %v5032
    %v5553 = vunpack.c.l.b16 %v5033
    %v5554 = vunpack.c.l.b16 %v5034
    %v5555 = vunpack.c.l.b16 %v5035
    %v5556 = vunpack.c.l.b16 %v5036
    %v5557 = vunpack.c.l.b16 %v5037
    %v5558 = vunpack.c.l.b16 %v5038
    %v5559 = vunpack.c.l.b16 %v5039
    %v5560 = vunpack.c.l.b16 %v5040
    %v5561 = vunpack.c.l.b16 %v5041
    %v5562 = vunpack.c.l.b16 %v5042
    %v5563 = vunpack.c.l.b16 %v5043
    %v5564 = vunpack.c.l.b16 %v5044
    %v5565 = vunpack.c.l.b16 %v5045
    %v5566 = vunpack.c.l.b16 %v5046
    %v5567 = vunpack.c.l.b16 %v5047
    %v5568 = vunpack.c.l.b16 %v5048
    %v5569 = vunpack.c.l.b16 %v5049
    %v5570 = vpack.c.b16 %v5315, %v5314
    %v5571 = vpack.c.b16 %v5317, %v5316
    %v5572 = vpack.c.b16 %v5319, %v5318
    %v5573 = vpack.c.b16 %v5321, %v5320
    %v5574 = vpack.c.b16 %v5323, %v5322
    %v5575 = vpack.c.b16 %v5325, %v5324
    %v5576 = vpack.c.b16 %v5327, %v5326
    %v5577 = vpack.c.b16 %v5329, %v5328
    %v5578 = vpack.c.b16 %v5331, %v5330
    %v5579 = vpack.c.b16 %v5333, %v5332
    %v5580 = vpack.c.b16 %v5335, %v5334
    %v5581 = vpack.c.b16 %v5337, %v5336
    %v5582 = vpack.c.b16 %v5339, %v5338
    %v5583 = vpack.c.b16 %v5341, %v5340
    %v5584 = vpack.c.b16 %v5343, %v5342
    %v5585 = vpack.c.b16 %v5345, %v5344
    %v5586 = vpack.c.b16 %v5347, %v5346
    %v5587 = vpack.c.b16 %v5349, %v5348
    %v5588 = vpack.c.b16 %v5351, %v5350
    %v5589 = vpack.c.b16 %v5353, %v5352
    %v5590 = vpack.c.b16 %v5355, %v5354
    %v5591 = vpack.c.b16 %v5357, %v5356
    %v5592 = vpack.c.b16 %v5359, %v5358
    %v5593 = vpack.c.b16 %v5361, %v5360
    %v5594 = vpack.c.b16 %v5363, %v5362
    %v5595 = vpack.c.b16 %v5365, %v5364
    %v5596 = vpack.c.b16 %v5367, %v5366
    %v5597 = vpack.c.b16 %v5369, %v5368
    %v5598 = vpack.c.b16 %v5371, %v5370
    %v5599 = vpack.c.b16 %v5373, %v5372
    %v5600 = vpack.c.b16 %v5375, %v5374
    %v5601 = vpack.c.b16 %v5377, %v5376
    %v5602 = vpack.c.b16 %v5379, %v5378
    %v5603 = vpack.c.b16 %v5381, %v5380
    %v5604 = vpack.c.b16 %v5383, %v5382
    %v5605 = vpack.c.b16 %v5385, %v5384
    %v5606 = vpack.c.b16 %v5387, %v5386
    %v5607 = vpack.c.b16 %v5389, %v5388
    %v5608 = vpack.c.b16 %v5391, %v5390
    %v5609 = vpack.c.b16 %v5393, %v5392
    %v5610 = vpack.c.b16 %v5395, %v5394
    %v5611 = vpack.c.b16 %v5397, %v5396
    %v5612 = vpack.c.b16 %v5399, %v5398
    %v5613 = vpack.c.b16 %v5401, %v5400
    %v5614 = vpack.c.b16 %v5403, %v5402
    %v5615 = vpack.c.b16 %v5405, %v5404
    %v5616 = vpack.c.b16 %v5407, %v5406
    %v5617 = vpack.c.b16 %v5409, %v5408
    %v5618 = vpack.c.b16 %v5411, %v5410
    %v5619 = vpack.c.b16 %v5413, %v5412
    %v5620 = vpack.c.b16 %v5415, %v5414
    %v5621 = vpack.c.b16 %v5417, %v5416
    %v5622 = vpack.c.b16 %v5419, %v5418
    %v5623 = vpack.c.b16 %v5421, %v5420
    %v5624 = vpack.c.b16 %v5423, %v5422
    %v5625 = vpack.c.b16 %v5425, %v5424
    %v5626 = vpack.c.b16 %v5427, %v5426
    %v5627 = vpack.c.b16 %v5429, %v5428
    %v5628 = vpack.c.b16 %v5431, %v5430
    %v5629 = vpack.c.b16 %v5433, %v5432
    %v5630 = vpack.c.b16 %v5435, %v5434
    %v5631 = vpack.c.b16 %v5437, %v5436
    %v5632 = vpack.c.b16 %v5439, %v5438
    %v5633 = vpack.c.b16 %v5441, %v5440
    %v5634 = vpack.c.b16 %v5443, %v5442
    %v5635 = vpack.c.b16 %v5445, %v5444
    %v5636 = vpack.c.b16 %v5447, %v5446
    %v5637 = vpack.c.b16 %v5449, %v5448
    %v5638 = vpack.c.b16 %v5451, %v5450
    %v5639 = vpack.c.b16 %v5453, %v5452
    %v5640 = vpack.c.b16 %v5455, %v5454
    %v5641 = vpack.c.b16 %v5457, %v5456
    %v5642 = vpack.c.b16 %v5459, %v5458
    %v5643 = vpack.c.b16 %v5461, %v5460
    %v5644 = vpack.c.b16 %v5463, %v5462
    %v5645 = vpack.c.b16 %v5465, %v5464
    %v5646 = vpack.c.b16 %v5467, %v5466
    %v5647 = vpack.c.b16 %v5469, %v5468
    %v5648 = vpack.c.b16 %v5471, %v5470
    %v5649 = vpack.c.b16 %v5473, %v5472
    %v5650 = vpack.c.b16 %v5475, %v5474
    %v5651 = vpack.c.b16 %v5477, %v5476
    %v5652 = vpack.c.b16 %v5479, %v5478
    %v5653 = vpack.c.b16 %v5481, %v5480
    %v5654 = vpack.c.b16 %v5483, %v5482
    %v5655 = vpack.c.b16 %v5485, %v5484
    %v5656 = vpack.c.b16 %v5487, %v5486
    %v5657 = vpack.c.b16 %v5489, %v5488
    %v5658 = vpack.c.b16 %v5491, %v5490
    %v5659 = vpack.c.b16 %v5493, %v5492
    %v5660 = vpack.c.b16 %v5495, %v5494
    %v5661 = vpack.c.b16 %v5497, %v5496
    %v5662 = vpack.c.b16 %v5499, %v5498
    %v5663 = vpack.c.b16 %v5501, %v5500
    %v5664 = vpack.c.b16 %v5503, %v5502
    %v5665 = vpack.c.b16 %v5505, %v5504
    %v5666 = vpack.c.b16 %v5507, %v5506
    %v5667 = vpack.c.b16 %v5509, %v5508
    %v5668 = vpack.c.b16 %v5511, %v5510
    %v5669 = vpack.c.b16 %v5513, %v5512
    %v5670 = vpack.c.b16 %v5515, %v5514
    %v5671 = vpack.c.b16 %v5517, %v5516
    %v5672 = vpack.c.b16 %v5519, %v5518
    %v5673 = vpack.c.b16 %v5521, %v5520
    %v5674 = vpack.c.b16 %v5523, %v5522
    %v5675 = vpack.c.b16 %v5525, %v5524
    %v5676 = vpack.c.b16 %v5527, %v5526
    %v5677 = vpack.c.b16 %v5529, %v5528
    %v5678 = vpack.c.b16 %v5531, %v5530
    %v5679 = vpack.c.b16 %v5533, %v5532
    %v5680 = vpack.c.b16 %v5535, %v5534
    %v5681 = vpack.c.b16 %v5537, %v5536
    %v5682 = vpack.c.b16 %v5539, %v5538
    %v5683 = vpack.c.b16 %v5541, %v5540
    %v5684 = vpack.c.b16 %v5543, %v5542
    %v5685 = vpack.c.b16 %v5545, %v5544
    %v5686 = vpack.c.b16 %v5547, %v5546
    %v5687 = vpack.c.b16 %v5549, %v5548
    %v5688 = vpack.c.b16 %v5551, %v5550
    %v5689 = vpack.c.b16 %v5553, %v5552
    %v5690 = vpack.c.b16 %v5555, %v5554
    %v5691 = vpack.c.b16 %v5557, %v5556
    %v5692 = vpack.c.b16 %v5559, %v5558
    %v5693 = vpack.c.b16 %v5561, %v5560
    %v5694 = vpack.c.b16 %v5563, %v5562
    %v5695 = vpack.c.b16 %v5565, %v5564
    %v5696 = vpack.c.b16 %v5567, %v5566
    %v5697 = vpack.c.b16 %v5569, %v5568
    %5826 = vmatprep.subr.bf16.mxu0 0
    %5827 = vmatpush1.bf16.msra.mxu0 %v5570
    %5828 = vmatprep.subr.bf16.mxu0 0
    %5829 = vmatpush1.bf16.msra.mxu0 %v5571
    %5830 = vmatprep.subr.bf16.mxu0 0
    %5831 = vmatpush1.bf16.msra.mxu0 %v5572
    %5832 = vmatprep.subr.bf16.mxu0 0
    %5833 = vmatpush1.bf16.msra.mxu0 %v5573
    %5834 = vmatprep.subr.bf16.mxu0 0
    %5835 = vmatpush1.bf16.msra.mxu0 %v5574
    %5836 = vmatprep.subr.bf16.mxu0 0
    %5837 = vmatpush1.bf16.msra.mxu0 %v5575
    %5838 = vmatprep.subr.bf16.mxu0 0
    %5839 = vmatpush1.bf16.msra.mxu0 %v5576
    %5840 = vmatprep.subr.bf16.mxu0 0
    %5841 = vmatpush1.bf16.msra.mxu0 %v5577
    %5842 = vmatprep.subr.bf16.mxu0 0
    %5843 = vmatpush1.bf16.msra.mxu0 %v5578
    %5844 = vmatprep.subr.bf16.mxu0 0
    %5845 = vmatpush1.bf16.msra.mxu0 %v5579
    %5846 = vmatprep.subr.bf16.mxu0 0
    %5847 = vmatpush1.bf16.msra.mxu0 %v5580
    %5848 = vmatprep.subr.bf16.mxu0 0
    %5849 = vmatpush1.bf16.msra.mxu0 %v5581
    %5850 = vmatprep.subr.bf16.mxu0 0
    %5851 = vmatpush1.bf16.msra.mxu0 %v5582
    %5852 = vmatprep.subr.bf16.mxu0 0
    %5853 = vmatpush1.bf16.msra.mxu0 %v5583
    %5854 = vmatprep.subr.bf16.mxu0 0
    %5855 = vmatpush1.bf16.msra.mxu0 %v5584
    %5856 = vmatprep.subr.bf16.mxu0 0
    %5857 = vmatpush1.bf16.msra.mxu0 %v5585
    %5858 = vmatprep.mubr.bf16.mxu0 %v4778
    %5859 = vmatmul.mubr.bf16.gmra.mrb[0].mxu0 %v4777
    %v5860 = vpop.f32.mrb[0].mxu0
    %v5861 = vadd.f32 %v5056, %v5860
    %v5862 = vpop.f32.mrb[0].mxu0
    %v5863 = vpop.f32.mrb[0].mxu0
    %v5864 = vadd.f32 %v5056, %v5863
    %v5865 = vpop.f32.mrb[0].mxu0
    %5866 = vdwg.mxu0
    %5867 = vmatprep.subr.bf16.mxu0 0
    %5868 = vmatpush1.bf16.msra.mxu0 %v5586
    %5869 = vmatprep.subr.bf16.mxu0 0
    %5870 = vmatpush1.bf16.msra.mxu0 %v5587
    %5871 = vmatprep.subr.bf16.mxu0 0
    %5872 = vmatpush1.bf16.msra.mxu0 %v5588
    %5873 = vmatprep.subr.bf16.mxu0 0
    %5874 = vmatpush1.bf16.msra.mxu0 %v5589
    %5875 = vmatprep.subr.bf16.mxu0 0
    %5876 = vmatpush1.bf16.msra.mxu0 %v5590
    %5877 = vmatprep.subr.bf16.mxu0 0
    %5878 = vmatpush1.bf16.msra.mxu0 %v5591
    %5879 = vmatprep.subr.bf16.mxu0 0
    %5880 = vmatpush1.bf16.msra.mxu0 %v5592
    %5881 = vmatprep.subr.bf16.mxu0 0
    %5882 = vmatpush1.bf16.msra.mxu0 %v5593
    %5883 = vmatprep.subr.bf16.mxu0 0
    %5884 = vmatpush1.bf16.msra.mxu0 %v5594
    %5885 = vmatprep.subr.bf16.mxu0 0
    %5886 = vmatpush1.bf16.msra.mxu0 %v5595
    %5887 = vmatprep.subr.bf16.mxu0 0
    %5888 = vmatpush1.bf16.msra.mxu0 %v5596
    %5889 = vmatprep.subr.bf16.mxu0 0
    %5890 = vmatpush1.bf16.msra.mxu0 %v5597
    %5891 = vmatprep.subr.bf16.mxu0 0
    %5892 = vmatpush1.bf16.msra.mxu0 %v5598
    %5893 = vmatprep.subr.bf16.mxu0 0
    %5894 = vmatpush1.bf16.msra.mxu0 %v5599
    %5895 = vmatprep.subr.bf16.mxu0 0
    %5896 = vmatpush1.bf16.msra.mxu0 %v5600
    %5897 = vmatprep.subr.bf16.mxu0 0
    %5898 = vmatpush1.bf16.msra.mxu0 %v5601
    %5899 = vmatprep.mubr.bf16.mxu0 %v4780
    %5900 = vmatmul.mubr.bf16.gmra.mrb[0].mxu0 %v4779
    %v5901 = vpop.f32.mrb[0].mxu0
    %v5902 = vadd.f32 %v5861, %v5901
    %v5903 = vpop.f32.mrb[0].mxu0
    %v5904 = vpop.f32.mrb[0].mxu0
    %v5905 = vadd.f32 %v5864, %v5904
    %v5906 = vpop.f32.mrb[0].mxu0
    %5907 = vdwg.mxu0
    %5908 = vmatprep.subr.bf16.mxu0 0
    %5909 = vmatpush1.bf16.msra.mxu0 %v5602
    %5910 = vmatprep.subr.bf16.mxu0 0
    %5911 = vmatpush1.bf16.msra.mxu0 %v5603
    %5912 = vmatprep.subr.bf16.mxu0 0
    %5913 = vmatpush1.bf16.msra.mxu0 %v5604
    %5914 = vmatprep.subr.bf16.mxu0 0
    %5915 = vmatpush1.bf16.msra.mxu0 %v5605
    %5916 = vmatprep.subr.bf16.mxu0 0
    %5917 = vmatpush1.bf16.msra.mxu0 %v5606
    %5918 = vmatprep.subr.bf16.mxu0 0
    %5919 = vmatpush1.bf16.msra.mxu0 %v5607
    %5920 = vmatprep.subr.bf16.mxu0 0
    %5921 = vmatpush1.bf16.msra.mxu0 %v5608
    %5922 = vmatprep.subr.bf16.mxu0 0
    %5923 = vmatpush1.bf16.msra.mxu0 %v5609
    %5924 = vmatprep.subr.bf16.mxu0 0
    %5925 = vmatpush1.bf16.msra.mxu0 %v5610
    %5926 = vmatprep.subr.bf16.mxu0 0
    %5927 = vmatpush1.bf16.msra.mxu0 %v5611
    %5928 = vmatprep.subr.bf16.mxu0 0
    %5929 = vmatpush1.bf16.msra.mxu0 %v5612
    %5930 = vmatprep.subr.bf16.mxu0 0
    %5931 = vmatpush1.bf16.msra.mxu0 %v5613
    %5932 = vmatprep.subr.bf16.mxu0 0
    %5933 = vmatpush1.bf16.msra.mxu0 %v5614
    %5934 = vmatprep.subr.bf16.mxu0 0
    %5935 = vmatpush1.bf16.msra.mxu0 %v5615
    %5936 = vmatprep.subr.bf16.mxu0 0
    %5937 = vmatpush1.bf16.msra.mxu0 %v5616
    %5938 = vmatprep.subr.bf16.mxu0 0
    %5939 = vmatpush1.bf16.msra.mxu0 %v5617
    %5940 = vmatprep.mubr.bf16.mxu0 %v4782
    %5941 = vmatmul.mubr.bf16.gmra.mrb[0].mxu0 %v4781
    %v5942 = vpop.f32.mrb[0].mxu0
    %v5943 = vadd.f32 %v5902, %v5942
    %v5944 = vpop.f32.mrb[0].mxu0
    %v5945 = vpop.f32.mrb[0].mxu0
    %v5946 = vadd.f32 %v5905, %v5945
    %v5947 = vpop.f32.mrb[0].mxu0
    %5948 = vdwg.mxu0
    %5949 = vmatprep.subr.bf16.mxu0 0
    %5950 = vmatpush1.bf16.msra.mxu0 %v5618
    %5951 = vmatprep.subr.bf16.mxu0 0
    %5952 = vmatpush1.bf16.msra.mxu0 %v5619
    %5953 = vmatprep.subr.bf16.mxu0 0
    %5954 = vmatpush1.bf16.msra.mxu0 %v5620
    %5955 = vmatprep.subr.bf16.mxu0 0
    %5956 = vmatpush1.bf16.msra.mxu0 %v5621
    %5957 = vmatprep.subr.bf16.mxu0 0
    %5958 = vmatpush1.bf16.msra.mxu0 %v5622
    %5959 = vmatprep.subr.bf16.mxu0 0
    %5960 = vmatpush1.bf16.msra.mxu0 %v5623
    %5961 = vmatprep.subr.bf16.mxu0 0
    %5962 = vmatpush1.bf16.msra.mxu0 %v5624
    %5963 = vmatprep.subr.bf16.mxu0 0
    %5964 = vmatpush1.bf16.msra.mxu0 %v5625
    %5965 = vmatprep.subr.bf16.mxu0 0
    %5966 = vmatpush1.bf16.msra.mxu0 %v5626
    %5967 = vmatprep.subr.bf16.mxu0 0
    %5968 = vmatpush1.bf16.msra.mxu0 %v5627
    %5969 = vmatprep.subr.bf16.mxu0 0
    %5970 = vmatpush1.bf16.msra.mxu0 %v5628
    %5971 = vmatprep.subr.bf16.mxu0 0
    %5972 = vmatpush1.bf16.msra.mxu0 %v5629
    %5973 = vmatprep.subr.bf16.mxu0 0
    %5974 = vmatpush1.bf16.msra.mxu0 %v5630
    %5975 = vmatprep.subr.bf16.mxu0 0
    %5976 = vmatpush1.bf16.msra.mxu0 %v5631
    %5977 = vmatprep.subr.bf16.mxu0 0
    %5978 = vmatpush1.bf16.msra.mxu0 %v5632
    %5979 = vmatprep.subr.bf16.mxu0 0
    %5980 = vmatpush1.bf16.msra.mxu0 %v5633
    %5981 = vmatprep.mubr.bf16.mxu0 %v4784
    %5982 = vmatmul.mubr.bf16.gmra.mrb[0].mxu0 %v4783
    %v5983 = vpop.f32.mrb[0].mxu0
    %v5984 = vadd.f32 %v5943, %v5983
    %v5985 = vpop.f32.mrb[0].mxu0
    %v5986 = vpop.f32.mrb[0].mxu0
    %v5987 = vadd.f32 %v5946, %v5986
    %v5988 = vpop.f32.mrb[0].mxu0
    %5989 = vdwg.mxu0
    %5990 = vmatprep.subr.bf16.mxu0 0
    %5991 = vmatpush1.bf16.msra.mxu0 %v5634
    %5992 = vmatprep.subr.bf16.mxu0 0
    %5993 = vmatpush1.bf16.msra.mxu0 %v5635
    %5994 = vmatprep.subr.bf16.mxu0 0
    %5995 = vmatpush1.bf16.msra.mxu0 %v5636
    %5996 = vmatprep.subr.bf16.mxu0 0
    %5997 = vmatpush1.bf16.msra.mxu0 %v5637
    %5998 = vmatprep.subr.bf16.mxu0 0
    %5999 = vmatpush1.bf16.msra.mxu0 %v5638
    %6000 = vmatprep.subr.bf16.mxu0 0
    %6001 = vmatpush1.bf16.msra.mxu0 %v5639
    %6002 = vmatprep.subr.bf16.mxu0 0
    %6003 = vmatpush1.bf16.msra.mxu0 %v5640
    %6004 = vmatprep.subr.bf16.mxu0 0
    %6005 = vmatpush1.bf16.msra.mxu0 %v5641
    %6006 = vmatprep.subr.bf16.mxu0 0
    %6007 = vmatpush1.bf16.msra.mxu0 %v5642
    %6008 = vmatprep.subr.bf16.mxu0 0
    %6009 = vmatpush1.bf16.msra.mxu0 %v5643
    %6010 = vmatprep.subr.bf16.mxu0 0
    %6011 = vmatpush1.bf16.msra.mxu0 %v5644
    %6012 = vmatprep.subr.bf16.mxu0 0
    %6013 = vmatpush1.bf16.msra.mxu0 %v5645
    %6014 = vmatprep.subr.bf16.mxu0 0
    %6015 = vmatpush1.bf16.msra.mxu0 %v5646
    %6016 = vmatprep.subr.bf16.mxu0 0
    %6017 = vmatpush1.bf16.msra.mxu0 %v5647
    %6018 = vmatprep.subr.bf16.mxu0 0
    %6019 = vmatpush1.bf16.msra.mxu0 %v5648
    %6020 = vmatprep.subr.bf16.mxu0 0
    %6021 = vmatpush1.bf16.msra.mxu0 %v5649
    %6022 = vmatprep.mubr.bf16.mxu0 %v4786
    %6023 = vmatmul.mubr.bf16.gmra.mrb[0].mxu0 %v4785
    %v6024 = vpop.f32.mrb[0].mxu0
    %v6025 = vadd.f32 %v5984, %v6024
    %v6026 = vpop.f32.mrb[0].mxu0
    %v6027 = vpop.f32.mrb[0].mxu0
    %v6028 = vadd.f32 %v5987, %v6027
    %v6029 = vpop.f32.mrb[0].mxu0
    %6030 = vdwg.mxu0
    %6031 = vmatprep.subr.bf16.mxu0 0
    %6032 = vmatpush1.bf16.msra.mxu0 %v5650
    %6033 = vmatprep.subr.bf16.mxu0 0
    %6034 = vmatpush1.bf16.msra.mxu0 %v5651
    %6035 = vmatprep.subr.bf16.mxu0 0
    %6036 = vmatpush1.bf16.msra.mxu0 %v5652
    %6037 = vmatprep.subr.bf16.mxu0 0
    %6038 = vmatpush1.bf16.msra.mxu0 %v5653
    %6039 = vmatprep.subr.bf16.mxu0 0
    %6040 = vmatpush1.bf16.msra.mxu0 %v5654
    %6041 = vmatprep.subr.bf16.mxu0 0
    %6042 = vmatpush1.bf16.msra.mxu0 %v5655
    %6043 = vmatprep.subr.bf16.mxu0 0
    %6044 = vmatpush1.bf16.msra.mxu0 %v5656
    %6045 = vmatprep.subr.bf16.mxu0 0
    %6046 = vmatpush1.bf16.msra.mxu0 %v5657
    %6047 = vmatprep.subr.bf16.mxu0 0
    %6048 = vmatpush1.bf16.msra.mxu0 %v5658
    %6049 = vmatprep.subr.bf16.mxu0 0
    %6050 = vmatpush1.bf16.msra.mxu0 %v5659
    %6051 = vmatprep.subr.bf16.mxu0 0
    %6052 = vmatpush1.bf16.msra.mxu0 %v5660
    %6053 = vmatprep.subr.bf16.mxu0 0
    %6054 = vmatpush1.bf16.msra.mxu0 %v5661
    %6055 = vmatprep.subr.bf16.mxu0 0
    %6056 = vmatpush1.bf16.msra.mxu0 %v5662
    %6057 = vmatprep.subr.bf16.mxu0 0
    %6058 = vmatpush1.bf16.msra.mxu0 %v5663
    %6059 = vmatprep.subr.bf16.mxu0 0
    %6060 = vmatpush1.bf16.msra.mxu0 %v5664
    %6061 = vmatprep.subr.bf16.mxu0 0
    %6062 = vmatpush1.bf16.msra.mxu0 %v5665
    %6063 = vmatprep.mubr.bf16.mxu0 %v4788
    %6064 = vmatmul.mubr.bf16.gmra.mrb[0].mxu0 %v4787
    %v6065 = vpop.f32.mrb[0].mxu0
    %v6066 = vadd.f32 %v6025, %v6065
    %v6067 = vpop.f32.mrb[0].mxu0
    %v6068 = vpop.f32.mrb[0].mxu0
    %v6069 = vadd.f32 %v6028, %v6068
    %v6070 = vpop.f32.mrb[0].mxu0
    %6071 = vdwg.mxu0
    %6072 = vmatprep.subr.bf16.mxu0 0
    %6073 = vmatpush1.bf16.msra.mxu0 %v5666
    %6074 = vmatprep.subr.bf16.mxu0 0
    %6075 = vmatpush1.bf16.msra.mxu0 %v5667
    %6076 = vmatprep.subr.bf16.mxu0 0
    %6077 = vmatpush1.bf16.msra.mxu0 %v5668
    %6078 = vmatprep.subr.bf16.mxu0 0
    %6079 = vmatpush1.bf16.msra.mxu0 %v5669
    %6080 = vmatprep.subr.bf16.mxu0 0
    %6081 = vmatpush1.bf16.msra.mxu0 %v5670
    %6082 = vmatprep.subr.bf16.mxu0 0
    %6083 = vmatpush1.bf16.msra.mxu0 %v5671
    %6084 = vmatprep.subr.bf16.mxu0 0
    %6085 = vmatpush1.bf16.msra.mxu0 %v5672
    %6086 = vmatprep.subr.bf16.mxu0 0
    %6087 = vmatpush1.bf16.msra.mxu0 %v5673
    %6088 = vmatprep.subr.bf16.mxu0 0
    %6089 = vmatpush1.bf16.msra.mxu0 %v5674
    %6090 = vmatprep.subr.bf16.mxu0 0
    %6091 = vmatpush1.bf16.msra.mxu0 %v5675
    %6092 = vmatprep.subr.bf16.mxu0 0
    %6093 = vmatpush1.bf16.msra.mxu0 %v5676
    %6094 = vmatprep.subr.bf16.mxu0 0
    %6095 = vmatpush1.bf16.msra.mxu0 %v5677
    %6096 = vmatprep.subr.bf16.mxu0 0
    %6097 = vmatpush1.bf16.msra.mxu0 %v5678
    %6098 = vmatprep.subr.bf16.mxu0 0
    %6099 = vmatpush1.bf16.msra.mxu0 %v5679
    %6100 = vmatprep.subr.bf16.mxu0 0
    %6101 = vmatpush1.bf16.msra.mxu0 %v5680
    %6102 = vmatprep.subr.bf16.mxu0 0
    %6103 = vmatpush1.bf16.msra.mxu0 %v5681
    %6104 = vmatprep.mubr.bf16.mxu0 %v4790
    %6105 = vmatmul.mubr.bf16.gmra.mrb[0].mxu0 %v4789
    %v6106 = vpop.f32.mrb[0].mxu0
    %v6107 = vadd.f32 %v6066, %v6106
    %v6108 = vpop.f32.mrb[0].mxu0
    %v6109 = vpop.f32.mrb[0].mxu0
    %v6110 = vadd.f32 %v6069, %v6109
    %v6111 = vpop.f32.mrb[0].mxu0
    %6112 = vdwg.mxu0
    %6113 = vmatprep.subr.bf16.mxu0 0
    %6114 = vmatpush1.bf16.msra.mxu0 %v5682
    %6115 = vmatprep.subr.bf16.mxu0 0
    %6116 = vmatpush1.bf16.msra.mxu0 %v5683
    %6117 = vmatprep.subr.bf16.mxu0 0
    %6118 = vmatpush1.bf16.msra.mxu0 %v5684
    %6119 = vmatprep.subr.bf16.mxu0 0
    %6120 = vmatpush1.bf16.msra.mxu0 %v5685
    %6121 = vmatprep.subr.bf16.mxu0 0
    %6122 = vmatpush1.bf16.msra.mxu0 %v5686
    %6123 = vmatprep.subr.bf16.mxu0 0
    %6124 = vmatpush1.bf16.msra.mxu0 %v5687
    %6125 = vmatprep.subr.bf16.mxu0 0
    %6126 = vmatpush1.bf16.msra.mxu0 %v5688
    %6127 = vmatprep.subr.bf16.mxu0 0
    %6128 = vmatpush1.bf16.msra.mxu0 %v5689
    %6129 = vmatprep.subr.bf16.mxu0 0
    %6130 = vmatpush1.bf16.msra.mxu0 %v5690
    %6131 = vmatprep.subr.bf16.mxu0 0
    %6132 = vmatpush1.bf16.msra.mxu0 %v5691
    %6133 = vmatprep.subr.bf16.mxu0 0
    %6134 = vmatpush1.bf16.msra.mxu0 %v5692
    %6135 = vmatprep.subr.bf16.mxu0 0
    %6136 = vmatpush1.bf16.msra.mxu0 %v5693
    %6137 = vmatprep.subr.bf16.mxu0 0
    %6138 = vmatpush1.bf16.msra.mxu0 %v5694
    %6139 = vmatprep.subr.bf16.mxu0 0
    %6140 = vmatpush1.bf16.msra.mxu0 %v5695
    %6141 = vmatprep.subr.bf16.mxu0 0
    %6142 = vmatpush1.bf16.msra.mxu0 %v5696
    %6143 = vmatprep.subr.bf16.mxu0 0
    %6144 = vmatpush1.bf16.msra.mxu0 %v5697
    %6145 = vmatprep.mubr.bf16.mxu0 %v4792
    %6146 = vmatmul.mubr.bf16.gmra.mrb[0].mxu0 %v4791
    %v6147 = vpop.f32.mrb[0].mxu0
    %v6148 = vadd.f32 %v6107, %v6147
    %v6149 = vpop.f32.mrb[0].mxu0
    %v6150 = vpop.f32.mrb[0].mxu0
    %v6151 = vadd.f32 %v6110, %v6150
    %v6152 = vpop.f32.mrb[0].mxu0
    %6153 = vdwg.mxu0
    %v6154 = vadd.f32 %v3544, %v6148
    %v6155 = vadd.f32 %v3545, %v6151
    %s6156 = scalar_lea.vmem [#allocation24], 1
    %v6157 = vld [vmem:[%s6156] sm:$0x1]
    %s6158 = scalar_lea.vmem [#allocation26], 1
    %v6159 = vld [vmem:[%s6158] sm:$0x1]
    %6160 = vadd.xlane.f32.xlu0 %v6154
    %v6161 = vpop.xlane.xlu0 %6160
    %6162 = vadd.xlane.f32.xlu0 %v6155
    %v6163 = vpop.xlane.xlu0 %6162
    %v6164 = vmul.f32 %v6161, 0.0078125
    %v6165 = vmul.f32 %v6163, 0.0078125
    %v6166 = vsub.f32 %v6154, %v6164
    %v6167 = vsub.f32 %v6155, %v6165
    %v6168 = vmul.f32 %v6166, %v6166
    %v6169 = vmul.f32 %v6167, %v6167
    %6170 = vadd.xlane.f32.xlu0 %v6168
    %v6171 = vpop.xlane.xlu0 %6170
    %6172 = vadd.xlane.f32.xlu0 %v6169
    %v6173 = vpop.xlane.xlu0 %6172
    %v6174 = vmul.f32 %v6171, 0.0078125
    %v6175 = vmul.f32 %v6173, 0.0078125
    %v6176 = vadd.f32 %v6174, 1e-05
    %v6177 = vadd.f32 %v6175, 1e-05
    %v6178 = vrsqrt.pop %v6176
    %v6179 = vrsqrt.pop %v6177
    %v6180 = vmul.f32 %v6166, %v6178
    %v6181 = vmul.f32 %v6167, %v6179
    %v6183 = vlaneseq
    %v6184 = vshrl.u32 %v6183, 7
    %v6185 = vsub.s32 0, %v6184
    %v6186 = vrot.slane %v6157, %v6185
    %v6188 = vmul.f32 %v6180, %v6186
    %v6189 = vmul.f32 %v6181, %v6186
    %v6191 = vlaneseq
    %v6192 = vshrl.u32 %v6191, 7
    %v6193 = vsub.s32 0, %v6192
    %v6194 = vrot.slane %v6159, %v6193
    %v6196 = vadd.f32 %v6188, %v6194
    %v6197 = vadd.f32 %v6189, %v6194
    %v6198 = vld [vmem:[#allocation27] sm:$0x1]
    %v6200 = vlaneseq
    %v6201 = vshrl.u32 %v6200, 7
    %v6202 = vsub.s32 0, %v6201
    %v6203 = vrot.slane %v6198, %v6202
    %v6205 = vmul.f32 %v6196, %v6203
    %v6206 = vmul.f32 %v6197, %v6203
    %6207 = vadd.xlane.f32.xlu0 %v6205
    %v6208 = vpop.xlane.xlu0 %6207
    %6209 = vadd.xlane.f32.xlu0 %v6206
    %v6210 = vpop.xlane.xlu0 %6209
    %v6211 = vld [vmem:[#allocation2] sm:$0x1]
    %v6213 = vlaneseq
    %v6214 = vshrl.u32 %v6213, 7
    %v6215 = vsub.s32 0, %v6214
    %v6216 = vrot.slane %v6211, %v6215
    %v6218 = vadd.f32 %v6208, %v6216
    %v6219 = vadd.f32 %v6210, %v6216
    %6222 = vset.pattern.permute.xlu0 0
    %6223 = vperm.xlu0 %6222, %v6218
    %v6224 = vpop.permute.xlu0 %6223
    %6225 = vset.pattern.permute.xlu0 0
    %6226 = vperm.xlu0 %6225, %v6219
    %v6227 = vpop.permute.xlu0 %6226
    %v6228 = vlaneseq
    %v6229 = vand.u32 %v6228, 127
    %v6230 = vlaneseq
    %v6231 = vshrl.u32 %v6230, 7
    %v6232 = vsub.s32 %v6229, %v6231
    %v6233 = vrot.slane %v6224, %v6232
    %v6234 = vadd.s32 %v6229, 4294967288
    %v6235 = vlaneseq
    %v6236 = vshrl.u32 %v6235, 7
    %v6237 = vsub.s32 %v6234, %v6236
    %v6238 = vrot.slane %v6227, %v6237
    %vm6239 = vcmask 130112
    %v6240 = vsel %vm6239, %v6238, %v6233
    %vm6242 = vcmask 122880
    %6243 = vst.msk [vmem:[#allocation29] sm:$0x1] %vm6242, %v6240
    // Predicated region
    $region134: #{tpu_custom_call.1} parent=1 // pred_check
      _
    $region135: #{tpu_custom_call.1} parent=1 // pred_check_branch
      %6245 = sbr.rel (0) target = $region137
    $region136: #{tpu_custom_call.1} parent=1 // pred_region
      %s6247 = ssub.s32 16, 16
      %6248 = vsyncadd [#allocation5], %s6247
      %s6250 = sshll.u32 [#allocation29], 4
      %s6251 = int_to_ptr.vmem [resolvable:$true] %s6250
      %6253 = dma.vmem_to_hbm [thread:$0]  %s6251, 16, %s17, [#allocation5]
    $region137: #{tpu_custom_call.1} parent=1 // pred_fallthru
      _
    // Predicated region
    $region138: #{tpu_custom_call.1} parent=1 // pred_check
      _
    $region139: #{tpu_custom_call.1} parent=1 // pred_check_branch
      %6255 = sbr.rel (0) target = $region141
    $region140: #{tpu_custom_call.1} parent=1 // pred_region
      %6256 = dma.done [#allocation5], 16
    $region141: #{tpu_custom_call.1} parent=1 // pred_fallthru
      _
    %6257 = vsyncpa [#allocation4], 1
    %6258 = vsyncpa [#allocation7], 1
    %6259 = vsyncpa [#allocation10], 1
    %6260 = vsyncpa [#allocation13], 1
    %6261 = vsyncpa [#allocation16], 1
    %6262 = vsyncpa [#allocation19], 1
    %6263 = vsyncpa [#allocation22], 1
    %6264 = vsyncpa [#allocation25], 1
    %6265 = vsyncpa [#allocation28], 1
    %6266 = vsyncpa [#allocation5], 1

// kernel: tpu_custom_call.1
$region0: #{tpu_custom_call.1}
  #allocation0 [shape = 'u32[]', space=smem, size = 0x4, offset = 0x4, fixed_abs, tag = 'smem constant byte address 0x4 - core index']
  #allocation1 [shape = 'u32[144,128]{1,0:T(1,128)}', space=vmem, size = 0x12000, scoped, tag = 'internal scratch']
  #allocation2 [shape = 'f32[1,1]{1,0:T(1,128)S(1)}', space=vmem, size = 0x200, scoped, tag = 'scoped memory for tpu_custom_call.1']
  %s0 = inlined_call_operand.hbm [shape: f32[16,41], index: 0, kind: input, shape index: {}]
  %s1 = inlined_call_operand.hbm [shape: bf16[41,128], index: 1, kind: input, shape index: {}]
  %s2 = inlined_call_operand.hbm [shape: f32[1,128], index: 2, kind: input, shape index: {}]
  %s3 = inlined_call_operand.hbm [shape: bf16[2,128,128], index: 3, kind: input, shape index: {}]
  %s4 = inlined_call_operand.hbm [shape: f32[2,1,128], index: 4, kind: input, shape index: {}]
  %s5 = inlined_call_operand.hbm [shape: bf16[2,128,128], index: 5, kind: input, shape index: {}]
  %s6 = inlined_call_operand.hbm [shape: f32[2,1,128], index: 6, kind: input, shape index: {}]
  %s7 = inlined_call_operand.hbm [shape: f32[2,1,128], index: 7, kind: input, shape index: {}]
  %s8 = inlined_call_operand.hbm [shape: f32[2,1,128], index: 8, kind: input, shape index: {}]
  %s9 = inlined_call_operand.hbm [shape: bf16[2,128,2048], index: 9, kind: input, shape index: {}]
  %s10 = inlined_call_operand.hbm [shape: f32[2,1,2048], index: 10, kind: input, shape index: {}]
  %s11 = inlined_call_operand.hbm [shape: bf16[2,2048,128], index: 11, kind: input, shape index: {}]
  %s12 = inlined_call_operand.hbm [shape: f32[2,1,128], index: 12, kind: input, shape index: {}]
  %s13 = inlined_call_operand.hbm [shape: f32[2,1,128], index: 13, kind: input, shape index: {}]
  %s14 = inlined_call_operand.hbm [shape: f32[2,1,128], index: 14, kind: input, shape index: {}]
  %s15 = inlined_call_operand.hbm [shape: f32[1,128], index: 15, kind: input, shape index: {}]
  %s16 = inlined_call_operand.<no memory space> [shape: f32[1,1], index: 16, kind: input, shape index: {}]
  %s17 = inlined_call_operand.hbm [shape: f32[1,1,16], index: 17, kind: output, shape index: {}]
  %s18 = sld [smem:[#allocation0]]
  $region142: #{tpu_custom_call.1} parent=0
    _
  %s20 = ssub.s32 1, %s18
  %s21 = scalar_select 0, %s20, %s18
  %v22 = vstv %s16
  %23 = vst [vmem:[#allocation2] sm:$0x1] %v22
  $region1: #{tpu_custom_call.1} parent=0
    #allocation3 [shape = 'u8[8192]{0}', space=vmem, size = 0x2000, scoped, tag = 'input window, operand 0, single buffered']
    #allocation4 [shape = 's32[1]{0}', space=sflag, size = 0x4, scoped, tag = 'scoped memory for tpu_custom_call.1']
    #allocation5 [shape = 's32[1]{0}', space=sflag, size = 0x4, scoped, tag = 'scoped memory for tpu_custom_call.1']
    #allocation6 [shape = 'u8[12288]{0}', space=vmem, size = 0x3000, scoped, tag = 'input window, operand 1, single buffered']
    #allocation7 [shape = 's32[1]{0}', space=sflag, size = 0x4, scoped, tag = 'scoped memory for tpu_custom_call.1']
    #allocation8 [shape = 'u8[512]{0}', space=vmem, size = 0x400, scoped, tag = 'input window, operand 2, single buffered']
    #allocation9 [shape = 'u8[65536]{0}', space=vmem, size = 0x10000, scoped, tag = 'input window, operand 3, single buffered']
    #allocation10 [shape = 's32[1]{0}', space=sflag, size = 0x4, scoped, tag = 'scoped memory for tpu_custom_call.1']
    #allocation11 [shape = 'u8[1024]{0}', space=vmem, size = 0x400, scoped, tag = 'input window, operand 4, single buffered']
    #allocation12 [shape = 'u8[65536]{0}', space=vmem, size = 0x10000, scoped, tag = 'input window, operand 5, single buffered']
    #allocation13 [shape = 's32[1]{0}', space=sflag, size = 0x4, scoped, tag = 'scoped memory for tpu_custom_call.1']
    #allocation14 [shape = 'u8[1024]{0}', space=vmem, size = 0x400, scoped, tag = 'input window, operand 6, single buffered']
    #allocation15 [shape = 'u8[1024]{0}', space=vmem, size = 0x400, scoped, tag = 'input window, operand 7, single buffered']
    #allocation16 [shape = 's32[1]{0}', space=sflag, size = 0x4, scoped, tag = 'scoped memory for tpu_custom_call.1']
    #allocation17 [shape = 'u8[1024]{0}', space=vmem, size = 0x400, scoped, tag = 'input window, operand 8, single buffered']
    #allocation18 [shape = 'u8[1048576]{0}', space=vmem, size = 0x100000, scoped, tag = 'input window, operand 9, single buffered']
    #allocation19 [shape = 's32[1]{0}', space=sflag, size = 0x4, scoped, tag = 'scoped memory for tpu_custom_call.1']
    #allocation20 [shape = 'u8[16384]{0}', space=vmem, size = 0x4000, scoped, tag = 'input window, operand 10, single buffered']
    #allocation21 [shape = 'u8[1048576]{0}', space=vmem, size = 0x100000, scoped, tag = 'input window, operand 11, single buffered']
    #allocation22 [shape = 's32[1]{0}', space=sflag, size = 0x4, scoped, tag = 'scoped memory for tpu_custom_call.1']
    #allocation23 [shape = 'u8[1024]{0}', space=vmem, size = 0x400, scoped, tag = 'input window, operand 12, single buffered']
    #allocation24 [shape = 'u8[1024]{0}', space=vmem, size = 0x400, scoped, tag = 'input window, operand 13, single buffered']
    #allocation25 [shape = 's32[1]{0}', space=sflag, size = 0x4, scoped, tag = 'scoped memory for tpu_custom_call.1']
    #allocation26 [shape = 'u8[1024]{0}', space=vmem, size = 0x400, scoped, tag = 'input window, operand 14, single buffered']
    #allocation27 [shape = 'u8[512]{0}', space=vmem, size = 0x400, scoped, tag = 'input window, operand 15, single buffered']
    #allocation28 [shape = 's32[1]{0}', space=sflag, size = 0x4, scoped, tag = 'scoped memory for tpu_custom_call.1']
    #allocation29 [shape = 'u8[512]{0}', space=vmem, size = 0x400, scoped, tag = 'output window, operand 0, single buffered']
    %24 = vsyncpa [#allocation4], 0
    %25 = vsyncpa [#allocation7], 0
    %26 = vsyncpa [#allocation10], 0
    %27 = vsyncpa [#allocation13], 0
    %28 = vsyncpa [#allocation16], 0
    %29 = vsyncpa [#allocation19], 0
    %30 = vsyncpa [#allocation22], 0
    %31 = vsyncpa [#allocation25], 0
    %32 = vsyncpa [#allocation28], 0
    %33 = vsyncpa [#allocation5], 0
    // Predicated region
    $region2: #{tpu_custom_call.1} parent=1 // pred_check
      _
    $region3: #{tpu_custom_call.1} parent=1 // pred_check_branch
      %35 = sbr.rel (0) target = $region5
    $region4: #{tpu_custom_call.1} parent=1 // pred_region
      %s37 = ssub.s32 256, 256
      %38 = vsyncadd [#allocation4], %s37
      %s39 = sshll.u32 [#allocation3], 4
      %s40 = int_to_ptr.vmem [resolvable:$true] %s39
      %45 = dma.hbm_to_vmem [thread:$0]  %s0, 256, %s40, [#allocation4], 128, 128, 8
    $region5: #{tpu_custom_call.1} parent=1 // pred_fallthru
      _
    // Predicated region
    $region6: #{tpu_custom_call.1} parent=1 // pred_check
      _
    $region7: #{tpu_custom_call.1} parent=1 // pred_check_branch
      %47 = sbr.rel (0) target = $region9
    $region8: #{tpu_custom_call.1} parent=1 // pred_region
      %s49 = ssub.s32 384, 384
      %50 = vsyncadd [#allocation7], %s49
      %s51 = sshll.u32 [#allocation6], 4
      %s52 = int_to_ptr.vmem [resolvable:$true] %s51
      %57 = dma.hbm_to_vmem [thread:$0]  %s1, 384, %s52, [#allocation7], 64, 64, 4
    $region9: #{tpu_custom_call.1} parent=1 // pred_fallthru
      _
    // Predicated region
    $region10: #{tpu_custom_call.1} parent=1 // pred_check
      _
    $region11: #{tpu_custom_call.1} parent=1 // pred_check_branch
      %59 = sbr.rel (0) target = $region13
    $region12: #{tpu_custom_call.1} parent=1 // pred_region
      %s61 = ssub.s32 16, 16
      %62 = vsyncadd [#allocation7], %s61
      %s64 = sshll.u32 [#allocation8], 4
      %s65 = int_to_ptr.vmem [resolvable:$true] %s64
      %67 = dma.hbm_to_vmem [thread:$0]  %s2, 16, %s65, [#allocation7]
    $region13: #{tpu_custom_call.1} parent=1 // pred_fallthru
      _
    // Predicated region
    $region14: #{tpu_custom_call.1} parent=1 // pred_check
      _
    $region15: #{tpu_custom_call.1} parent=1 // pred_check_branch
      %69 = sbr.rel (0) target = $region17
    $region16: #{tpu_custom_call.1} parent=1 // pred_region
      %s71 = ssub.s32 2048, 2048
      %72 = vsyncadd [#allocation10], %s71
      %s73 = sshll.u32 [#allocation9], 4
      %s74 = int_to_ptr.vmem [resolvable:$true] %s73
      %79 = dma.hbm_to_vmem [thread:$0]  %s3, 2048, %s74, [#allocation10], 64, 64, 4
    $region17: #{tpu_custom_call.1} parent=1 // pred_fallthru
      _
    // Predicated region
    $region18: #{tpu_custom_call.1} parent=1 // pred_check
      _
    $region19: #{tpu_custom_call.1} parent=1 // pred_check_branch
      %81 = sbr.rel (0) target = $region21
    $region20: #{tpu_custom_call.1} parent=1 // pred_region
      %s83 = ssub.s32 32, 32
      %84 = vsyncadd [#allocation10], %s83
      %s85 = sshll.u32 [#allocation11], 4
      %s86 = int_to_ptr.vmem [resolvable:$true] %s85
      %91 = dma.hbm_to_vmem [thread:$0]  %s4, 32, %s86, [#allocation10], 16, 16, 1
    $region21: #{tpu_custom_call.1} parent=1 // pred_fallthru
      _
    // Predicated region
    $region22: #{tpu_custom_call.1} parent=1 // pred_check
      _
    $region23: #{tpu_custom_call.1} parent=1 // pred_check_branch
      %93 = sbr.rel (0) target = $region25
    $region24: #{tpu_custom_call.1} parent=1 // pred_region
      %s95 = ssub.s32 2048, 2048
      %96 = vsyncadd [#allocation13], %s95
      %s97 = sshll.u32 [#allocation12], 4
      %s98 = int_to_ptr.vmem [resolvable:$true] %s97
      %103 = dma.hbm_to_vmem [thread:$0]  %s5, 2048, %s98, [#allocation13], 64, 64, 4
    $region25: #{tpu_custom_call.1} parent=1 // pred_fallthru
      _
    // Predicated region
    $region26: #{tpu_custom_call.1} parent=1 // pred_check
      _
    $region27: #{tpu_custom_call.1} parent=1 // pred_check_branch
      %105 = sbr.rel (0) target = $region29
    $region28: #{tpu_custom_call.1} parent=1 // pred_region
      %s107 = ssub.s32 32, 32
      %108 = vsyncadd [#allocation13], %s107
      %s109 = sshll.u32 [#allocation14], 4
      %s110 = int_to_ptr.vmem [resolvable:$true] %s109
      %115 = dma.hbm_to_vmem [thread:$0]  %s6, 32, %s110, [#allocation13], 16, 16, 1
    $region29: #{tpu_custom_call.1} parent=1 // pred_fallthru
      _
    // Predicated region
    $region30: #{tpu_custom_call.1} parent=1 // pred_check
      _
    $region31: #{tpu_custom_call.1} parent=1 // pred_check_branch
      %117 = sbr.rel (0) target = $region33
    $region32: #{tpu_custom_call.1} parent=1 // pred_region
      %s119 = ssub.s32 32, 32
      %120 = vsyncadd [#allocation16], %s119
      %s121 = sshll.u32 [#allocation15], 4
      %s122 = int_to_ptr.vmem [resolvable:$true] %s121
      %127 = dma.hbm_to_vmem [thread:$0]  %s7, 32, %s122, [#allocation16], 16, 16, 1
    $region33: #{tpu_custom_call.1} parent=1 // pred_fallthru
      _
    // Predicated region
    $region34: #{tpu_custom_call.1} parent=1 // pred_check
      _
    $region35: #{tpu_custom_call.1} parent=1 // pred_check_branch
      %129 = sbr.rel (0) target = $region37
    $region36: #{tpu_custom_call.1} parent=1 // pred_region
      %s131 = ssub.s32 32, 32
      %132 = vsyncadd [#allocation16], %s131
      %s133 = sshll.u32 [#allocation17], 4
      %s134 = int_to_ptr.vmem [resolvable:$true] %s133
      %139 = dma.hbm_to_vmem [thread:$0]  %s8, 32, %s134, [#allocation16], 16, 16, 1
    $region37: #{tpu_custom_call.1} parent=1 // pred_fallthru
      _
    // Predicated region
    $region38: #{tpu_custom_call.1} parent=1 // pred_check
      _
    $region39: #{tpu_custom_call.1} parent=1 // pred_check_branch
      %141 = sbr.rel (0) target = $region41
    $region40: #{tpu_custom_call.1} parent=1 // pred_region
      %s143 = ssub.s32 32768, 32768
      %144 = vsyncadd [#allocation19], %s143
      %s145 = sshll.u32 [#allocation18], 4
      %s146 = int_to_ptr.vmem [resolvable:$true] %s145
      %151 = dma.hbm_to_vmem [thread:$0]  %s9, 32768, %s146, [#allocation19], 1024, 1024, 64
    $region41: #{tpu_custom_call.1} parent=1 // pred_fallthru
      _
    // Predicated region
    $region42: #{tpu_custom_call.1} parent=1 // pred_check
      _
    $region43: #{tpu_custom_call.1} parent=1 // pred_check_branch
      %153 = sbr.rel (0) target = $region45
    $region44: #{tpu_custom_call.1} parent=1 // pred_region
      %s155 = ssub.s32 512, 512
      %156 = vsyncadd [#allocation19], %s155
      %s157 = sshll.u32 [#allocation20], 4
      %s158 = int_to_ptr.vmem [resolvable:$true] %s157
      %163 = dma.hbm_to_vmem [thread:$0]  %s10, 512, %s158, [#allocation19], 256, 256, 16
    $region45: #{tpu_custom_call.1} parent=1 // pred_fallthru
      _
    // Predicated region
    $region46: #{tpu_custom_call.1} parent=1 // pred_check
      _
    $region47: #{tpu_custom_call.1} parent=1 // pred_check_branch
      %165 = sbr.rel (0) target = $region49
    $region48: #{tpu_custom_call.1} parent=1 // pred_region
      %s167 = ssub.s32 32768, 32768
      %168 = vsyncadd [#allocation22], %s167
      %s169 = sshll.u32 [#allocation21], 4
      %s170 = int_to_ptr.vmem [resolvable:$true] %s169
      %175 = dma.hbm_to_vmem [thread:$0]  %s11, 32768, %s170, [#allocation22], 64, 64, 4
    $region49: #{tpu_custom_call.1} parent=1 // pred_fallthru
      _
    // Predicated region
    $region50: #{tpu_custom_call.1} parent=1 // pred_check
      _
    $region51: #{tpu_custom_call.1} parent=1 // pred_check_branch
      %177 = sbr.rel (0) target = $region53
    $region52: #{tpu_custom_call.1} parent=1 // pred_region
      %s179 = ssub.s32 32, 32
      %180 = vsyncadd [#allocation22], %s179
      %s181 = sshll.u32 [#allocation23], 4
      %s182 = int_to_ptr.vmem [resolvable:$true] %s181
      %187 = dma.hbm_to_vmem [thread:$0]  %s12, 32, %s182, [#allocation22], 16, 16, 1
    $region53: #{tpu_custom_call.1} parent=1 // pred_fallthru
      _
    // Predicated region
    $region54: #{tpu_custom_call.1} parent=1 // pred_check
      _
    $region55: #{tpu_custom_call.1} parent=1 // pred_check_branch
      %189 = sbr.rel (0) target = $region57
    $region56: #{tpu_custom_call.1} parent=1 // pred_region
      %s191 = ssub.s32 32, 32
      %192 = vsyncadd [#allocation25], %s191
      %s193 = sshll.u32 [#allocation24], 4
      %s194 = int_to_ptr.vmem [resolvable:$true] %s193
      %199 = dma.hbm_to_vmem [thread:$0]  %s13, 32, %s194, [#allocation25], 16, 16, 1
    $region57: #{tpu_custom_call.1} parent=1 // pred_fallthru
      _
    // Predicated region
    $region58: #{tpu_custom_call.1} parent=1 // pred_check
      _
    $region59: #{tpu_custom_call.1} parent=1 // pred_check_branch
      %201 = sbr.rel (0) target = $region61
    $region60: #{tpu_custom_call.1} parent=1 // pred_region
      %s203 = ssub.s32 32, 32
      %204 = vsyncadd [#allocation25], %s203
      %s205 = sshll.u32 [#allocation26], 4
      %s206 = int_to_ptr.vmem [resolvable:$true] %s205
      %211 = dma.hbm_to_vmem [thread:$0]  %s14, 32, %s206, [#allocation25], 16, 16, 1
    $region61: #{tpu_custom_call.1} parent=1 // pred_fallthru
      _
    // Predicated region
    $region62: #{tpu_custom_call.1} parent=1 // pred_check
      _
    $region63: #{tpu_custom_call.1} parent=1 // pred_check_branch
      %213 = sbr.rel (0) target = $region65
    $region64: #{tpu_custom_call.1} parent=1 // pred_region
      %s215 = ssub.s32 16, 16
      %216 = vsyncadd [#allocation28], %s215
      %s218 = sshll.u32 [#allocation27], 4
      %s219 = int_to_ptr.vmem [resolvable:$true] %s218
      %221 = dma.hbm_to_vmem [thread:$0]  %s15, 16, %s219, [#allocation28]
    $region65: #{tpu_custom_call.1} parent=1 // pred_fallthru
      _
    // Predicated region
    $region66: #{tpu_custom_call.1} parent=1 // pred_check
      _
    $region67: #{tpu_custom_call.1} parent=1 // pred_check_branch
      %223 = sbr.rel (0) target = $region69
    $region68: #{tpu_custom_call.1} parent=1 // pred_region
      _
    $region69: #{tpu_custom_call.1} parent=1 // pred_fallthru
      _
    // Predicated region
    $region70: #{tpu_custom_call.1} parent=1 // pred_check
      _
    $region71: #{tpu_custom_call.1} parent=1 // pred_check_branch
      %225 = sbr.rel (0) target = $region73
    $region72: #{tpu_custom_call.1} parent=1 // pred_region
      %226 = dma.done [#allocation4], 256
    $region73: #{tpu_custom_call.1} parent=1 // pred_fallthru
      _
    // Predicated region
    $region74: #{tpu_custom_call.1} parent=1 // pred_check
      _
    $region75: #{tpu_custom_call.1} parent=1 // pred_check_branch
      %228 = sbr.rel (0) target = $region77
    $region76: #{tpu_custom_call.1} parent=1 // pred_region
      %229 = dma.done [#allocation7], 384
    $region77: #{tpu_custom_call.1} parent=1 // pred_fallthru
      _
    // Predicated region
    $region78: #{tpu_custom_call.1} parent=1 // pred_check
      _
    $region79: #{tpu_custom_call.1} parent=1 // pred_check_branch
      %231 = sbr.rel (0) target = $region81
    $region80: #{tpu_custom_call.1} parent=1 // pred_region
      %232 = dma.done [#allocation7], 16
    $region81: #{tpu_custom_call.1} parent=1 // pred_fallthru
      _
    // Predicated region
    $region82: #{tpu_custom_call.1} parent=1 // pred_check
      _
    $region83: #{tpu_custom_call.1} parent=1 // pred_check_branch
      %234 = sbr.rel (0) target = $region85
    $region84: #{tpu_custom_call.1} parent=1 // pred_region
      %235 = dma.done [#allocation10], 2048
    $region85: #{tpu_custom_call.1} parent=1 // pred_fallthru
      _
    // Predicated region
    $region86: #{tpu_custom_call.1} parent=1 // pred_check
      _
    $region87: #{tpu_custom_call.1} parent=1 // pred_check_branch
      %237 = sbr.rel (0) target = $region89
    $region88: #{tpu_custom_call.1} parent=1 // pred_region
      %238 = dma.done [#allocation10], 32
    $region89: #{tpu_custom_call.1} parent=1 // pred_fallthru
      _
    // Predicated region
    $region90: #{tpu_custom_call.1} parent=1 // pred_check
      _
    $region91: #{tpu_custom_call.1} parent=1 // pred_check_branch
      %240 = sbr.rel (0) target = $region93
    $region92: #{tpu_custom_call.1} parent=1 // pred_region
      %241 = dma.done [#allocation13], 2048
    $region93: #{tpu_custom_call.1} parent=1 // pred_fallthru
      _
    // Predicated region
    $region94: #{tpu_custom_call.1} parent=1 // pred_check
      _
    $region95: #{tpu_custom_call.1} parent=1 // pred_check_branch
      %243 = sbr.rel (0) target = $region97
    $region96: #{tpu_custom_call.1} parent=1 // pred_region
      %244 = dma.done [#allocation13], 32
    $region97: #{tpu_custom_call.1} parent=1 // pred_fallthru
      _
    // Predicated region
    $region98: #{tpu_custom_call.1} parent=1 // pred_check
      _
    $region99: #{tpu_custom_call.1} parent=1 // pred_check_branch
      %246 = sbr.rel (0) target = $region101
    $region100: #{tpu_custom_call.1} parent=1 // pred_region
      %247 = dma.done [#allocation16], 32
    $region101: #{tpu_custom_call.1} parent=1 // pred_fallthru
      _
    // Predicated region
    $region102: #{tpu_custom_call.1} parent=1 // pred_check
      _
    $region103: #{tpu_custom_call.1} parent=1 // pred_check_branch
      %249 = sbr.rel (0) target = $region105
    $region104: #{tpu_custom_call.1} parent=1 // pred_region
      %250 = dma.done [#allocation16], 32
    $region105: #{tpu_custom_call.1} parent=1 // pred_fallthru
      _
    // Predicated region
    $region106: #{tpu_custom_call.1} parent=1 // pred_check
      _
    $region107: #{tpu_custom_call.1} parent=1 // pred_check_branch
      %252 = sbr.rel (0) target = $region109
    $region108: #{tpu_custom_call.1} parent=1 // pred_region
      %253 = dma.done [#allocation19], 32768
    $region109: #{tpu_custom_call.1} parent=1 // pred_fallthru
      _
    // Predicated region
    $region110: #{tpu_custom_call.1} parent=1 // pred_check
      _
    $region111: #{tpu_custom_call.1} parent=1 // pred_check_branch
      %255 = sbr.rel (0) target = $region113
    $region112: #{tpu_custom_call.1} parent=1 // pred_region
      %256 = dma.done [#allocation19], 512
    $region113: #{tpu_custom_call.1} parent=1 // pred_fallthru
      _
    // Predicated region
    $region114: #{tpu_custom_call.1} parent=1 // pred_check
      _
    $region115: #{tpu_custom_call.1} parent=1 // pred_check_branch
      %258 = sbr.rel (0) target = $region117
    $region116: #{tpu_custom_call.1} parent=1 // pred_region
      %259 = dma.done [#allocation22], 32768
    $region117: #{tpu_custom_call.1} parent=1 // pred_fallthru
      _
    // Predicated region
    $region118: #{tpu_custom_call.1} parent=1 // pred_check
      _
    $region119: #{tpu_custom_call.1} parent=1 // pred_check_branch
      %261 = sbr.rel (0) target = $region121
    $region120: #{tpu_custom_call.1} parent=1 // pred_region
      %262 = dma.done [#allocation22], 32
    $region121: #{tpu_custom_call.1} parent=1 // pred_fallthru
      _
    // Predicated region
    $region122: #{tpu_custom_call.1} parent=1 // pred_check
      _
    $region123: #{tpu_custom_call.1} parent=1 // pred_check_branch
      %264 = sbr.rel (0) target = $region125
    $region124: #{tpu_custom_call.1} parent=1 // pred_region
      %265 = dma.done [#allocation25], 32
    $region125: #{tpu_custom_call.1} parent=1 // pred_fallthru
      _
    // Predicated region
    $region126: #{tpu_custom_call.1} parent=1 // pred_check
      _
    $region127: #{tpu_custom_call.1} parent=1 // pred_check_branch
      %267 = sbr.rel (0) target = $region129
    $region128: #{tpu_custom_call.1} parent=1 // pred_region
      %268 = dma.done [#allocation25], 32
    $region129: #{tpu_custom_call.1} parent=1 // pred_fallthru
      _
    // Predicated region
    $region130: #{tpu_custom_call.1} parent=1 // pred_check
      _
    $region131: #{tpu_custom_call.1} parent=1 // pred_check_branch
      %270 = sbr.rel (0) target = $region133
    $region132: #{tpu_custom_call.1} parent=1 // pred_region
      %271 = dma.done [#allocation28], 16
    $region133: #{tpu_custom_call.1} parent=1 // pred_fallthru
      _
    %v273 = vld [vmem:[#allocation3] sm:$0xff]
    %v274 = vld [vmem:[#allocation3 + $0x8] sm:$0xff]
    %v275 = vpack.c.bf16 %v274, %v273
    %v276 = vld [vmem:[#allocation6] sm:$0xf]
    %v277 = vld [vmem:[#allocation6 + $0x4] sm:$0xf]
    %v278 = vld [vmem:[#allocation6 + $0x8] sm:$0xf]
    %v279 = vld [vmem:[#allocation6 + $0xc] sm:$0xf]
    %v280 = vld [vmem:[#allocation6 + $0x10] sm:$0xf]
    %v281 = vld [vmem:[#allocation6 + $0x14] sm:$0x1]
    %v282 = vld [vmem:[#allocation8] sm:$0x1]
    %v284 = vlaneseq
    %v285 = vshrl.u32 %v284, 7
    %v286 = vsub.s32 0, %v285
    %v287 = vrot.slane %v282, %v286
    %v295 = vunpack.c.l.b16 %v276
    %v296 = vunpack.c.l.b16 %v277
    %v297 = vunpack.c.l.b16 %v278
    %v298 = vunpack.c.l.b16 %v279
    %v299 = vunpack.c.l.b16 %v280
    %v300 = vunpack.c.l.b16 %v281
    %v301 = vpack.c.b16 %v296, %v295
    %v302 = vpack.c.b16 %v298, %v297
    %v303 = vpack.c.b16 %v300, %v299
    %vm306 = vcmask 334848
    %v308 = vsel %vm306, %v275, 0
    %vm310 = vcmask 1043456
    %vm311 = vcmask 1044480
    %v312 = vsel %vm310, 4294967295, 65535
    %v313 = vsel %vm311, %v312, 0
    %v315 = vand.u32 %v303, %v313
    %317 = vmatprep.subr.bf16.mxu0 0
    %318 = vmatpush1.bf16.msra.mxu0 %v301
    %319 = vmatprep.subr.bf16.mxu0 0
    %320 = vmatpush1.bf16.msra.mxu0 %v302
    %321 = vmatprep.subr.bf16.mxu0 0
    %322 = vmatpush1.bf16.msra.mxu0 %v315
    %323 = vmatprep.subr.bf16.mxu0 0
    %324 = vmatpush1.bf16.msra.mxu0 0
    %325 = vmatprep.subr.bf16.mxu0 0
    %326 = vmatpush1.bf16.msra.mxu0 0
    %327 = vmatprep.subr.bf16.mxu0 0
    %328 = vmatpush1.bf16.msra.mxu0 0
    %329 = vmatprep.subr.bf16.mxu0 0
    %330 = vmatpush1.bf16.msra.mxu0 0
    %331 = vmatprep.subr.bf16.mxu0 0
    %332 = vmatpush1.bf16.msra.mxu0 0
    %333 = vmatprep.subr.bf16.mxu0 0
    %334 = vmatpush1.bf16.msra.mxu0 0
    %335 = vmatprep.subr.bf16.mxu0 0
    %336 = vmatpush1.bf16.msra.mxu0 0
    %337 = vmatprep.subr.bf16.mxu0 0
    %338 = vmatpush1.bf16.msra.mxu0 0
    %339 = vmatprep.subr.bf16.mxu0 0
    %340 = vmatpush1.bf16.msra.mxu0 0
    %341 = vmatprep.subr.bf16.mxu0 0
    %342 = vmatpush1.bf16.msra.mxu0 0
    %343 = vmatprep.subr.bf16.mxu0 0
    %344 = vmatpush1.bf16.msra.mxu0 0
    %345 = vmatprep.subr.bf16.mxu0 0
    %346 = vmatpush1.bf16.msra.mxu0 0
    %347 = vmatprep.subr.bf16.mxu0 0
    %348 = vmatpush1.bf16.msra.mxu0 0
    %349 = vmatprep.mubr.bf16.mxu0 0
    %350 = vmatmul.mubr.bf16.gmra.mrb[0].mxu0 %v308
    %v351 = vpop.f32.mrb[0].mxu0
    %v352 = vadd.f32 %v287, %v351
    %v353 = vpop.f32.mrb[0].mxu0
    %v354 = vpop.f32.mrb[0].mxu0
    %v355 = vadd.f32 %v287, %v354
    %v356 = vpop.f32.mrb[0].mxu0
    %357 = vdwg.mxu0
    %v358 = vpack.c.bf16 %v355, %v352
    %v359 = vld [vmem:[#allocation9] sm:$0xf]
    %v360 = vld [vmem:[#allocation9 + $0x4] sm:$0xf]
    %v361 = vld [vmem:[#allocation9 + $0x8] sm:$0xf]
    %v362 = vld [vmem:[#allocation9 + $0xc] sm:$0xf]
    %v363 = vld [vmem:[#allocation9 + $0x10] sm:$0xf]
    %v364 = vld [vmem:[#allocation9 + $0x14] sm:$0xf]
    %v365 = vld [vmem:[#allocation9 + $0x18] sm:$0xf]
    %v366 = vld [vmem:[#allocation9 + $0x1c] sm:$0xf]
    %v367 = vld [vmem:[#allocation9 + $0x20] sm:$0xf]
    %v368 = vld [vmem:[#allocation9 + $0x24] sm:$0xf]
    %v369 = vld [vmem:[#allocation9 + $0x28] sm:$0xf]
    %v370 = vld [vmem:[#allocation9 + $0x2c] sm:$0xf]
    %v371 = vld [vmem:[#allocation9 + $0x30] sm:$0xf]
    %v372 = vld [vmem:[#allocation9 + $0x34] sm:$0xf]
    %v373 = vld [vmem:[#allocation9 + $0x38] sm:$0xf]
    %v374 = vld [vmem:[#allocation9 + $0x3c] sm:$0xf]
    %v375 = vld [vmem:[#allocation11] sm:$0x1]
    %v377 = vlaneseq
    %v378 = vshrl.u32 %v377, 7
    %v379 = vsub.s32 0, %v378
    %v380 = vrot.slane %v375, %v379
    %v398 = vunpack.c.l.b16 %v359
    %v399 = vunpack.c.l.b16 %v360
    %v400 = vunpack.c.l.b16 %v361
    %v401 = vunpack.c.l.b16 %v362
    %v402 = vunpack.c.l.b16 %v363
    %v403 = vunpack.c.l.b16 %v364
    %v404 = vunpack.c.l.b16 %v365
    %v405 = vunpack.c.l.b16 %v366
    %v406 = vunpack.c.l.b16 %v367
    %v407 = vunpack.c.l.b16 %v368
    %v408 = vunpack.c.l.b16 %v369
    %v409 = vunpack.c.l.b16 %v370
    %v410 = vunpack.c.l.b16 %v371
    %v411 = vunpack.c.l.b16 %v372
    %v412 = vunpack.c.l.b16 %v373
    %v413 = vunpack.c.l.b16 %v374
    %v414 = vpack.c.b16 %v399, %v398
    %v415 = vpack.c.b16 %v401, %v400
    %v416 = vpack.c.b16 %v403, %v402
    %v417 = vpack.c.b16 %v405, %v404
    %v418 = vpack.c.b16 %v407, %v406
    %v419 = vpack.c.b16 %v409, %v408
    %v420 = vpack.c.b16 %v411, %v410
    %v421 = vpack.c.b16 %v413, %v412
    %430 = vmatprep.subr.bf16.mxu0 0
    %431 = vmatpush1.bf16.msra.mxu0 %v414
    %432 = vmatprep.subr.bf16.mxu0 0
    %433 = vmatpush1.bf16.msra.mxu0 %v415
    %434 = vmatprep.subr.bf16.mxu0 0
    %435 = vmatpush1.bf16.msra.mxu0 %v416
    %436 = vmatprep.subr.bf16.mxu0 0
    %437 = vmatpush1.bf16.msra.mxu0 %v417
    %438 = vmatprep.subr.bf16.mxu0 0
    %439 = vmatpush1.bf16.msra.mxu0 %v418
    %440 = vmatprep.subr.bf16.mxu0 0
    %441 = vmatpush1.bf16.msra.mxu0 %v419
    %442 = vmatprep.subr.bf16.mxu0 0
    %443 = vmatpush1.bf16.msra.mxu0 %v420
    %444 = vmatprep.subr.bf16.mxu0 0
    %445 = vmatpush1.bf16.msra.mxu0 %v421
    %446 = vmatprep.subr.bf16.mxu0 0
    %447 = vmatpush1.bf16.msra.mxu0 0
    %448 = vmatprep.subr.bf16.mxu0 0
    %449 = vmatpush1.bf16.msra.mxu0 0
    %450 = vmatprep.subr.bf16.mxu0 0
    %451 = vmatpush1.bf16.msra.mxu0 0
    %452 = vmatprep.subr.bf16.mxu0 0
    %453 = vmatpush1.bf16.msra.mxu0 0
    %454 = vmatprep.subr.bf16.mxu0 0
    %455 = vmatpush1.bf16.msra.mxu0 0
    %456 = vmatprep.subr.bf16.mxu0 0
    %457 = vmatpush1.bf16.msra.mxu0 0
    %458 = vmatprep.subr.bf16.mxu0 0
    %459 = vmatpush1.bf16.msra.mxu0 0
    %460 = vmatprep.subr.bf16.mxu0 0
    %461 = vmatpush1.bf16.msra.mxu0 0
    %462 = vmatprep.mubr.bf16.mxu0 0
    %463 = vmatmul.mubr.bf16.gmra.mrb[0].mxu0 %v358
    %v464 = vpop.f32.mrb[0].mxu0
    %v465 = vadd.f32 %v380, %v464
    %v466 = vpop.f32.mrb[0].mxu0
    %v467 = vpop.f32.mrb[0].mxu0
    %v468 = vadd.f32 %v380, %v467
    %v469 = vpop.f32.mrb[0].mxu0
    %470 = vdwg.mxu0
    %v471 = vpack.c.bf16 %v468, %v465
    %v472 = vld [vmem:[#allocation12] sm:$0xf]
    %v473 = vld [vmem:[#allocation12 + $0x4] sm:$0xf]
    %v474 = vld [vmem:[#allocation12 + $0x8] sm:$0xf]
    %v475 = vld [vmem:[#allocation12 + $0xc] sm:$0xf]
    %v476 = vld [vmem:[#allocation12 + $0x10] sm:$0xf]
    %v477 = vld [vmem:[#allocation12 + $0x14] sm:$0xf]
    %v478 = vld [vmem:[#allocation12 + $0x18] sm:$0xf]
    %v479 = vld [vmem:[#allocation12 + $0x1c] sm:$0xf]
    %v480 = vld [vmem:[#allocation12 + $0x20] sm:$0xf]
    %v481 = vld [vmem:[#allocation12 + $0x24] sm:$0xf]
    %v482 = vld [vmem:[#allocation12 + $0x28] sm:$0xf]
    %v483 = vld [vmem:[#allocation12 + $0x2c] sm:$0xf]
    %v484 = vld [vmem:[#allocation12 + $0x30] sm:$0xf]
    %v485 = vld [vmem:[#allocation12 + $0x34] sm:$0xf]
    %v486 = vld [vmem:[#allocation12 + $0x38] sm:$0xf]
    %v487 = vld [vmem:[#allocation12 + $0x3c] sm:$0xf]
    %v488 = vld [vmem:[#allocation14] sm:$0x1]
    %v490 = vlaneseq
    %v491 = vshrl.u32 %v490, 7
    %v492 = vsub.s32 0, %v491
    %v493 = vrot.slane %v488, %v492
    %v511 = vunpack.c.l.b16 %v472
    %v512 = vunpack.c.l.b16 %v473
    %v513 = vunpack.c.l.b16 %v474
    %v514 = vunpack.c.l.b16 %v475
    %v515 = vunpack.c.l.b16 %v476
    %v516 = vunpack.c.l.b16 %v477
    %v517 = vunpack.c.l.b16 %v478
    %v518 = vunpack.c.l.b16 %v479
    %v519 = vunpack.c.l.b16 %v480
    %v520 = vunpack.c.l.b16 %v481
    %v521 = vunpack.c.l.b16 %v482
    %v522 = vunpack.c.l.b16 %v483
    %v523 = vunpack.c.l.b16 %v484
    %v524 = vunpack.c.l.b16 %v485
    %v525 = vunpack.c.l.b16 %v486
    %v526 = vunpack.c.l.b16 %v487
    %v527 = vpack.c.b16 %v512, %v511
    %v528 = vpack.c.b16 %v514, %v513
    %v529 = vpack.c.b16 %v516, %v515
    %v530 = vpack.c.b16 %v518, %v517
    %v531 = vpack.c.b16 %v520, %v519
    %v532 = vpack.c.b16 %v522, %v521
    %v533 = vpack.c.b16 %v524, %v523
    %v534 = vpack.c.b16 %v526, %v525
    %543 = vmatprep.subr.bf16.mxu0 0
    %544 = vmatpush1.bf16.msra.mxu0 %v527
    %545 = vmatprep.subr.bf16.mxu0 0
    %546 = vmatpush1.bf16.msra.mxu0 %v528
    %547 = vmatprep.subr.bf16.mxu0 0
    %548 = vmatpush1.bf16.msra.mxu0 %v529
    %549 = vmatprep.subr.bf16.mxu0 0
    %550 = vmatpush1.bf16.msra.mxu0 %v530
    %551 = vmatprep.subr.bf16.mxu0 0
    %552 = vmatpush1.bf16.msra.mxu0 %v531
    %553 = vmatprep.subr.bf16.mxu0 0
    %554 = vmatpush1.bf16.msra.mxu0 %v532
    %555 = vmatprep.subr.bf16.mxu0 0
    %556 = vmatpush1.bf16.msra.mxu0 %v533
    %557 = vmatprep.subr.bf16.mxu0 0
    %558 = vmatpush1.bf16.msra.mxu0 %v534
    %559 = vmatprep.subr.bf16.mxu0 0
    %560 = vmatpush1.bf16.msra.mxu0 0
    %561 = vmatprep.subr.bf16.mxu0 0
    %562 = vmatpush1.bf16.msra.mxu0 0
    %563 = vmatprep.subr.bf16.mxu0 0
    %564 = vmatpush1.bf16.msra.mxu0 0
    %565 = vmatprep.subr.bf16.mxu0 0
    %566 = vmatpush1.bf16.msra.mxu0 0
    %567 = vmatprep.subr.bf16.mxu0 0
    %568 = vmatpush1.bf16.msra.mxu0 0
    %569 = vmatprep.subr.bf16.mxu0 0
    %570 = vmatpush1.bf16.msra.mxu0 0
    %571 = vmatprep.subr.bf16.mxu0 0
    %572 = vmatpush1.bf16.msra.mxu0 0
    %573 = vmatprep.subr.bf16.mxu0 0
    %574 = vmatpush1.bf16.msra.mxu0 0
    %575 = vmatprep.mubr.bf16.mxu0 0
    %576 = vmatmul.mubr.bf16.gmra.mrb[0].mxu0 %v471
    %v577 = vpop.f32.mrb[0].mxu0
    %v578 = vadd.f32 %v493, %v577
    %v579 = vpop.f32.mrb[0].mxu0
    %v580 = vpop.f32.mrb[0].mxu0
    %v581 = vadd.f32 %v493, %v580
    %v582 = vpop.f32.mrb[0].mxu0
    %583 = vdwg.mxu0
    %v584 = vadd.f32 %v352, %v578
    %v585 = vadd.f32 %v355, %v581
    %v586 = vld [vmem:[#allocation15] sm:$0x1]
    %v587 = vld [vmem:[#allocation17] sm:$0x1]
    %588 = vadd.xlane.f32.xlu0 %v584
    %v589 = vpop.xlane.xlu0 %588
    %590 = vadd.xlane.f32.xlu0 %v585
    %v591 = vpop.xlane.xlu0 %590
    %v592 = vmul.f32 %v589, 0.0078125
    %v593 = vmul.f32 %v591, 0.0078125
    %v594 = vsub.f32 %v584, %v592
    %v595 = vsub.f32 %v585, %v593
    %v596 = vmul.f32 %v594, %v594
    %v597 = vmul.f32 %v595, %v595
    %598 = vadd.xlane.f32.xlu0 %v596
    %v599 = vpop.xlane.xlu0 %598
    %600 = vadd.xlane.f32.xlu0 %v597
    %v601 = vpop.xlane.xlu0 %600
    %v602 = vmul.f32 %v599, 0.0078125
    %v603 = vmul.f32 %v601, 0.0078125
    %v604 = vadd.f32 %v602, 1e-05
    %v605 = vadd.f32 %v603, 1e-05
    %v606 = vrsqrt.pop %v604
    %v607 = vrsqrt.pop %v605
    %v608 = vmul.f32 %v594, %v606
    %v609 = vmul.f32 %v595, %v607
    %v611 = vlaneseq
    %v612 = vshrl.u32 %v611, 7
    %v613 = vsub.s32 0, %v612
    %v614 = vrot.slane %v586, %v613
    %v616 = vmul.f32 %v608, %v614
    %v617 = vmul.f32 %v609, %v614
    %v619 = vlaneseq
    %v620 = vshrl.u32 %v619, 7
    %v621 = vsub.s32 0, %v620
    %v622 = vrot.slane %v587, %v621
    %v624 = vadd.f32 %v616, %v622
    %v625 = vadd.f32 %v617, %v622
    %v626 = vpack.c.bf16 %v625, %v624
    %v627 = vld [vmem:[#allocation18] sm:$0xff]
    %v628 = vld [vmem:[#allocation18 + $0x8] sm:$0xff]
    %v629 = vld [vmem:[#allocation18 + $0x10] sm:$0xff]
    %v630 = vld [vmem:[#allocation18 + $0x18] sm:$0xff]
    %v631 = vld [vmem:[#allocation18 + $0x20] sm:$0xff]
    %v632 = vld [vmem:[#allocation18 + $0x28] sm:$0xff]
    %v633 = vld [vmem:[#allocation18 + $0x30] sm:$0xff]
    %v634 = vld [vmem:[#allocation18 + $0x38] sm:$0xff]
    %v635 = vld [vmem:[#allocation18 + $0x40] sm:$0xff]
    %v636 = vld [vmem:[#allocation18 + $0x48] sm:$0xff]
    %v637 = vld [vmem:[#allocation18 + $0x50] sm:$0xff]
    %v638 = vld [vmem:[#allocation18 + $0x58] sm:$0xff]
    %v639 = vld [vmem:[#allocation18 + $0x60] sm:$0xff]
    %v640 = vld [vmem:[#allocation18 + $0x68] sm:$0xff]
    %v641 = vld [vmem:[#allocation18 + $0x70] sm:$0xff]
    %v642 = vld [vmem:[#allocation18 + $0x78] sm:$0xff]
    %v643 = vld [vmem:[#allocation18 + $0x80] sm:$0xff]
    %v644 = vld [vmem:[#allocation18 + $0x88] sm:$0xff]
    %v645 = vld [vmem:[#allocation18 + $0x90] sm:$0xff]
    %v646 = vld [vmem:[#allocation18 + $0x98] sm:$0xff]
    %v647 = vld [vmem:[#allocation18 + $0xa0] sm:$0xff]
    %v648 = vld [vmem:[#allocation18 + $0xa8] sm:$0xff]
    %v649 = vld [vmem:[#allocation18 + $0xb0] sm:$0xff]
    %v650 = vld [vmem:[#allocation18 + $0xb8] sm:$0xff]
    %v651 = vld [vmem:[#allocation18 + $0xc0] sm:$0xff]
    %v652 = vld [vmem:[#allocation18 + $0xc8] sm:$0xff]
    %v653 = vld [vmem:[#allocation18 + $0xd0] sm:$0xff]
    %v654 = vld [vmem:[#allocation18 + $0xd8] sm:$0xff]
    %v655 = vld [vmem:[#allocation18 + $0xe0] sm:$0xff]
    %v656 = vld [vmem:[#allocation18 + $0xe8] sm:$0xff]
    %v657 = vld [vmem:[#allocation18 + $0xf0] sm:$0xff]
    %v658 = vld [vmem:[#allocation18 + $0xf8] sm:$0xff]
    %v659 = vld [vmem:[#allocation18 + $0x100] sm:$0xff]
    %v660 = vld [vmem:[#allocation18 + $0x108] sm:$0xff]
    %v661 = vld [vmem:[#allocation18 + $0x110] sm:$0xff]
    %v662 = vld [vmem:[#allocation18 + $0x118] sm:$0xff]
    %v663 = vld [vmem:[#allocation18 + $0x120] sm:$0xff]
    %v664 = vld [vmem:[#allocation18 + $0x128] sm:$0xff]
    %v665 = vld [vmem:[#allocation18 + $0x130] sm:$0xff]
    %v666 = vld [vmem:[#allocation18 + $0x138] sm:$0xff]
    %v667 = vld [vmem:[#allocation18 + $0x140] sm:$0xff]
    %v668 = vld [vmem:[#allocation18 + $0x148] sm:$0xff]
    %v669 = vld [vmem:[#allocation18 + $0x150] sm:$0xff]
    %v670 = vld [vmem:[#allocation18 + $0x158] sm:$0xff]
    %v671 = vld [vmem:[#allocation18 + $0x160] sm:$0xff]
    %v672 = vld [vmem:[#allocation18 + $0x168] sm:$0xff]
    %v673 = vld [vmem:[#allocation18 + $0x170] sm:$0xff]
    %v674 = vld [vmem:[#allocation18 + $0x178] sm:$0xff]
    %v675 = vld [vmem:[#allocation18 + $0x180] sm:$0xff]
    %v676 = vld [vmem:[#allocation18 + $0x188] sm:$0xff]
    %v677 = vld [vmem:[#allocation18 + $0x190] sm:$0xff]
    %v678 = vld [vmem:[#allocation18 + $0x198] sm:$0xff]
    %v679 = vld [vmem:[#allocation18 + $0x1a0] sm:$0xff]
    %v680 = vld [vmem:[#allocation18 + $0x1a8] sm:$0xff]
    %v681 = vld [vmem:[#allocation18 + $0x1b0] sm:$0xff]
    %v682 = vld [vmem:[#allocation18 + $0x1b8] sm:$0xff]
    %v683 = vld [vmem:[#allocation18 + $0x1c0] sm:$0xff]
    %v684 = vld [vmem:[#allocation18 + $0x1c8] sm:$0xff]
    %v685 = vld [vmem:[#allocation18 + $0x1d0] sm:$0xff]
    %v686 = vld [vmem:[#allocation18 + $0x1d8] sm:$0xff]
    %v687 = vld [vmem:[#allocation18 + $0x1e0] sm:$0xff]
    %v688 = vld [vmem:[#allocation18 + $0x1e8] sm:$0xff]
    %v689 = vld [vmem:[#allocation18 + $0x1f0] sm:$0xff]
    %v690 = vld [vmem:[#allocation18 + $0x1f8] sm:$0xff]
    %v691 = vld [vmem:[#allocation18 + $0x200] sm:$0xff]
    %v692 = vld [vmem:[#allocation18 + $0x208] sm:$0xff]
    %v693 = vld [vmem:[#allocation18 + $0x210] sm:$0xff]
    %v694 = vld [vmem:[#allocation18 + $0x218] sm:$0xff]
    %v695 = vld [vmem:[#allocation18 + $0x220] sm:$0xff]
    %v696 = vld [vmem:[#allocation18 + $0x228] sm:$0xff]
    %v697 = vld [vmem:[#allocation18 + $0x230] sm:$0xff]
    %v698 = vld [vmem:[#allocation18 + $0x238] sm:$0xff]
    %v699 = vld [vmem:[#allocation18 + $0x240] sm:$0xff]
    %v700 = vld [vmem:[#allocation18 + $0x248] sm:$0xff]
    %v701 = vld [vmem:[#allocation18 + $0x250] sm:$0xff]
    %v702 = vld [vmem:[#allocation18 + $0x258] sm:$0xff]
    %v703 = vld [vmem:[#allocation18 + $0x260] sm:$0xff]
    %v704 = vld [vmem:[#allocation18 + $0x268] sm:$0xff]
    %v705 = vld [vmem:[#allocation18 + $0x270] sm:$0xff]
    %v706 = vld [vmem:[#allocation18 + $0x278] sm:$0xff]
    %v707 = vld [vmem:[#allocation18 + $0x280] sm:$0xff]
    %v708 = vld [vmem:[#allocation18 + $0x288] sm:$0xff]
    %v709 = vld [vmem:[#allocation18 + $0x290] sm:$0xff]
    %v710 = vld [vmem:[#allocation18 + $0x298] sm:$0xff]
    %v711 = vld [vmem:[#allocation18 + $0x2a0] sm:$0xff]
    %v712 = vld [vmem:[#allocation18 + $0x2a8] sm:$0xff]
    %v713 = vld [vmem:[#allocation18 + $0x2b0] sm:$0xff]
    %v714 = vld [vmem:[#allocation18 + $0x2b8] sm:$0xff]
    %v715 = vld [vmem:[#allocation18 + $0x2c0] sm:$0xff]
    %v716 = vld [vmem:[#allocation18 + $0x2c8] sm:$0xff]
    %v717 = vld [vmem:[#allocation18 + $0x2d0] sm:$0xff]
    %v718 = vld [vmem:[#allocation18 + $0x2d8] sm:$0xff]
    %v719 = vld [vmem:[#allocation18 + $0x2e0] sm:$0xff]
    %v720 = vld [vmem:[#allocation18 + $0x2e8] sm:$0xff]
    %v721 = vld [vmem:[#allocation18 + $0x2f0] sm:$0xff]
    %v722 = vld [vmem:[#allocation18 + $0x2f8] sm:$0xff]
    %v723 = vld [vmem:[#allocation18 + $0x300] sm:$0xff]
    %v724 = vld [vmem:[#allocation18 + $0x308] sm:$0xff]
    %v725 = vld [vmem:[#allocation18 + $0x310] sm:$0xff]
    %v726 = vld [vmem:[#allocation18 + $0x318] sm:$0xff]
    %v727 = vld [vmem:[#allocation18 + $0x320] sm:$0xff]
    %v728 = vld [vmem:[#allocation18 + $0x328] sm:$0xff]
    %v729 = vld [vmem:[#allocation18 + $0x330] sm:$0xff]
    %v730 = vld [vmem:[#allocation18 + $0x338] sm:$0xff]
    %v731 = vld [vmem:[#allocation18 + $0x340] sm:$0xff]
    %v732 = vld [vmem:[#allocation18 + $0x348] sm:$0xff]
    %v733 = vld [vmem:[#allocation18 + $0x350] sm:$0xff]
    %v734 = vld [vmem:[#allocation18 + $0x358] sm:$0xff]
    %v735 = vld [vmem:[#allocation18 + $0x360] sm:$0xff]
    %v736 = vld [vmem:[#allocation18 + $0x368] sm:$0xff]
    %v737 = vld [vmem:[#allocation18 + $0x370] sm:$0xff]
    %v738 = vld [vmem:[#allocation18 + $0x378] sm:$0xff]
    %v739 = vld [vmem:[#allocation18 + $0x380] sm:$0xff]
    %v740 = vld [vmem:[#allocation18 + $0x388] sm:$0xff]
    %v741 = vld [vmem:[#allocation18 + $0x390] sm:$0xff]
    %v742 = vld [vmem:[#allocation18 + $0x398] sm:$0xff]
    %v743 = vld [vmem:[#allocation18 + $0x3a0] sm:$0xff]
    %v744 = vld [vmem:[#allocation18 + $0x3a8] sm:$0xff]
    %v745 = vld [vmem:[#allocation18 + $0x3b0] sm:$0xff]
    %v746 = vld [vmem:[#allocation18 + $0x3b8] sm:$0xff]
    %v747 = vld [vmem:[#allocation18 + $0x3c0] sm:$0xff]
    %v748 = vld [vmem:[#allocation18 + $0x3c8] sm:$0xff]
    %v749 = vld [vmem:[#allocation18 + $0x3d0] sm:$0xff]
    %v750 = vld [vmem:[#allocation18 + $0x3d8] sm:$0xff]
    %v751 = vld [vmem:[#allocation18 + $0x3e0] sm:$0xff]
    %v752 = vld [vmem:[#allocation18 + $0x3e8] sm:$0xff]
    %v753 = vld [vmem:[#allocation18 + $0x3f0] sm:$0xff]
    %v754 = vld [vmem:[#allocation18 + $0x3f8] sm:$0xff]
    %v755 = vld [vmem:[#allocation20] sm:$0xff]
    %v756 = vld [vmem:[#allocation20 + $0x8] sm:$0xff]
    %v759 = vlaneseq
    %v760 = vshrl.u32 %v759, 7
    %v761 = vsub.s32 0, %v760
    %v762 = vrot.slane %v755, %v761
    %v763 = vlaneseq
    %v764 = vshrl.u32 %v763, 7
    %v765 = vsub.s32 1, %v764
    %v766 = vrot.slane %v755, %v765
    %v767 = vlaneseq
    %v768 = vshrl.u32 %v767, 7
    %v769 = vsub.s32 2, %v768
    %v770 = vrot.slane %v755, %v769
    %v771 = vlaneseq
    %v772 = vshrl.u32 %v771, 7
    %v773 = vsub.s32 3, %v772
    %v774 = vrot.slane %v755, %v773
    %v775 = vlaneseq
    %v776 = vshrl.u32 %v775, 7
    %v777 = vsub.s32 4, %v776
    %v778 = vrot.slane %v755, %v777
    %v779 = vlaneseq
    %v780 = vshrl.u32 %v779, 7
    %v781 = vsub.s32 5, %v780
    %v782 = vrot.slane %v755, %v781
    %v783 = vlaneseq
    %v784 = vshrl.u32 %v783, 7
    %v785 = vsub.s32 6, %v784
    %v786 = vrot.slane %v755, %v785
    %v787 = vlaneseq
    %v788 = vshrl.u32 %v787, 7
    %v789 = vsub.s32 7, %v788
    %v790 = vrot.slane %v755, %v789
    %v791 = vlaneseq
    %v792 = vshrl.u32 %v791, 7
    %v793 = vsub.s32 0, %v792
    %v794 = vrot.slane %v756, %v793
    %v795 = vlaneseq
    %v796 = vshrl.u32 %v795, 7
    %v797 = vsub.s32 1, %v796
    %v798 = vrot.slane %v756, %v797
    %v799 = vlaneseq
    %v800 = vshrl.u32 %v799, 7
    %v801 = vsub.s32 2, %v800
    %v802 = vrot.slane %v756, %v801
    %v803 = vlaneseq
    %v804 = vshrl.u32 %v803, 7
    %v805 = vsub.s32 3, %v804
    %v806 = vrot.slane %v756, %v805
    %v807 = vlaneseq
    %v808 = vshrl.u32 %v807, 7
    %v809 = vsub.s32 4, %v808
    %v810 = vrot.slane %v756, %v809
    %v811 = vlaneseq
    %v812 = vshrl.u32 %v811, 7
    %v813 = vsub.s32 5, %v812
    %v814 = vrot.slane %v756, %v813
    %v815 = vlaneseq
    %v816 = vshrl.u32 %v815, 7
    %v817 = vsub.s32 6, %v816
    %v818 = vrot.slane %v756, %v817
    %v819 = vlaneseq
    %v820 = vshrl.u32 %v819, 7
    %v821 = vsub.s32 7, %v820
    %v822 = vrot.slane %v756, %v821
    %v967 = vunpack.c.l.b16 %v627
    %v968 = vunpack.c.h.b16 %v627
    %v969 = vunpack.c.l.b16 %v628
    %v970 = vunpack.c.h.b16 %v628
    %v971 = vunpack.c.l.b16 %v629
    %v972 = vunpack.c.h.b16 %v629
    %v973 = vunpack.c.l.b16 %v630
    %v974 = vunpack.c.h.b16 %v630
    %v975 = vunpack.c.l.b16 %v631
    %v976 = vunpack.c.h.b16 %v631
    %v977 = vunpack.c.l.b16 %v632
    %v978 = vunpack.c.h.b16 %v632
    %v979 = vunpack.c.l.b16 %v633
    %v980 = vunpack.c.h.b16 %v633
    %v981 = vunpack.c.l.b16 %v634
    %v982 = vunpack.c.h.b16 %v634
    %v983 = vunpack.c.l.b16 %v635
    %v984 = vunpack.c.h.b16 %v635
    %v985 = vunpack.c.l.b16 %v636
    %v986 = vunpack.c.h.b16 %v636
    %v987 = vunpack.c.l.b16 %v637
    %v988 = vunpack.c.h.b16 %v637
    %v989 = vunpack.c.l.b16 %v638
    %v990 = vunpack.c.h.b16 %v638
    %v991 = vunpack.c.l.b16 %v639
    %v992 = vunpack.c.h.b16 %v639
    %v993 = vunpack.c.l.b16 %v640
    %v994 = vunpack.c.h.b16 %v640
    %v995 = vunpack.c.l.b16 %v641
    %v996 = vunpack.c.h.b16 %v641
    %v997 = vunpack.c.l.b16 %v642
    %v998 = vunpack.c.h.b16 %v642
    %v999 = vunpack.c.l.b16 %v643
    %v1000 = vunpack.c.h.b16 %v643
    %v1001 = vunpack.c.l.b16 %v644
    %v1002 = vunpack.c.h.b16 %v644
    %v1003 = vunpack.c.l.b16 %v645
    %v1004 = vunpack.c.h.b16 %v645
    %v1005 = vunpack.c.l.b16 %v646
    %v1006 = vunpack.c.h.b16 %v646
    %v1007 = vunpack.c.l.b16 %v647
    %v1008 = vunpack.c.h.b16 %v647
    %v1009 = vunpack.c.l.b16 %v648
    %v1010 = vunpack.c.h.b16 %v648
    %v1011 = vunpack.c.l.b16 %v649
    %v1012 = vunpack.c.h.b16 %v649
    %v1013 = vunpack.c.l.b16 %v650
    %v1014 = vunpack.c.h.b16 %v650
    %v1015 = vunpack.c.l.b16 %v651
    %v1016 = vunpack.c.h.b16 %v651
    %v1017 = vunpack.c.l.b16 %v652
    %v1018 = vunpack.c.h.b16 %v652
    %v1019 = vunpack.c.l.b16 %v653
    %v1020 = vunpack.c.h.b16 %v653
    %v1021 = vunpack.c.l.b16 %v654
    %v1022 = vunpack.c.h.b16 %v654
    %v1023 = vunpack.c.l.b16 %v655
    %v1024 = vunpack.c.h.b16 %v655
    %v1025 = vunpack.c.l.b16 %v656
    %v1026 = vunpack.c.h.b16 %v656
    %v1027 = vunpack.c.l.b16 %v657
    %v1028 = vunpack.c.h.b16 %v657
    %v1029 = vunpack.c.l.b16 %v658
    %v1030 = vunpack.c.h.b16 %v658
    %v1031 = vunpack.c.l.b16 %v659
    %v1032 = vunpack.c.h.b16 %v659
    %v1033 = vunpack.c.l.b16 %v660
    %v1034 = vunpack.c.h.b16 %v660
    %v1035 = vunpack.c.l.b16 %v661
    %v1036 = vunpack.c.h.b16 %v661
    %v1037 = vunpack.c.l.b16 %v662
    %v1038 = vunpack.c.h.b16 %v662
    %v1039 = vunpack.c.l.b16 %v663
    %v1040 = vunpack.c.h.b16 %v663
    %v1041 = vunpack.c.l.b16 %v664
    %v1042 = vunpack.c.h.b16 %v664
    %v1043 = vunpack.c.l.b16 %v665
    %v1044 = vunpack.c.h.b16 %v665
    %v1045 = vunpack.c.l.b16 %v666
    %v1046 = vunpack.c.h.b16 %v666
    %v1047 = vunpack.c.l.b16 %v667
    %v1048 = vunpack.c.h.b16 %v667
    %v1049 = vunpack.c.l.b16 %v668
    %v1050 = vunpack.c.h.b16 %v668
    %v1051 = vunpack.c.l.b16 %v669
    %v1052 = vunpack.c.h.b16 %v669
    %v1053 = vunpack.c.l.b16 %v670
    %v1054 = vunpack.c.h.b16 %v670
    %v1055 = vunpack.c.l.b16 %v671
    %v1056 = vunpack.c.h.b16 %v671
    %v1057 = vunpack.c.l.b16 %v672
    %v1058 = vunpack.c.h.b16 %v672
    %v1059 = vunpack.c.l.b16 %v673
    %v1060 = vunpack.c.h.b16 %v673
    %v1061 = vunpack.c.l.b16 %v674
    %v1062 = vunpack.c.h.b16 %v674
    %v1063 = vunpack.c.l.b16 %v675
    %v1064 = vunpack.c.h.b16 %v675
    %v1065 = vunpack.c.l.b16 %v676
    %v1066 = vunpack.c.h.b16 %v676
    %v1067 = vunpack.c.l.b16 %v677
    %v1068 = vunpack.c.h.b16 %v677
    %v1069 = vunpack.c.l.b16 %v678
    %v1070 = vunpack.c.h.b16 %v678
    %v1071 = vunpack.c.l.b16 %v679
    %v1072 = vunpack.c.h.b16 %v679
    %v1073 = vunpack.c.l.b16 %v680
    %v1074 = vunpack.c.h.b16 %v680
    %v1075 = vunpack.c.l.b16 %v681
    %v1076 = vunpack.c.h.b16 %v681
    %v1077 = vunpack.c.l.b16 %v682
    %v1078 = vunpack.c.h.b16 %v682
    %v1079 = vunpack.c.l.b16 %v683
    %v1080 = vunpack.c.h.b16 %v683
    %v1081 = vunpack.c.l.b16 %v684
    %v1082 = vunpack.c.h.b16 %v684
    %v1083 = vunpack.c.l.b16 %v685
    %v1084 = vunpack.c.h.b16 %v685
    %v1085 = vunpack.c.l.b16 %v686
    %v1086 = vunpack.c.h.b16 %v686
    %v1087 = vunpack.c.l.b16 %v687
    %v1088 = vunpack.c.h.b16 %v687
    %v1089 = vunpack.c.l.b16 %v688
    %v1090 = vunpack.c.h.b16 %v688
    %v1091 = vunpack.c.l.b16 %v689
    %v1092 = vunpack.c.h.b16 %v689
    %v1093 = vunpack.c.l.b16 %v690
    %v1094 = vunpack.c.h.b16 %v690
    %v1095 = vunpack.c.l.b16 %v691
    %v1096 = vunpack.c.h.b16 %v691
    %v1097 = vunpack.c.l.b16 %v692
    %v1098 = vunpack.c.h.b16 %v692
    %v1099 = vunpack.c.l.b16 %v693
    %v1100 = vunpack.c.h.b16 %v693
    %v1101 = vunpack.c.l.b16 %v694
    %v1102 = vunpack.c.h.b16 %v694
    %v1103 = vunpack.c.l.b16 %v695
    %v1104 = vunpack.c.h.b16 %v695
    %v1105 = vunpack.c.l.b16 %v696
    %v1106 = vunpack.c.h.b16 %v696
    %v1107 = vunpack.c.l.b16 %v697
    %v1108 = vunpack.c.h.b16 %v697
    %v1109 = vunpack.c.l.b16 %v698
    %v1110 = vunpack.c.h.b16 %v698
    %v1111 = vunpack.c.l.b16 %v699
    %v1112 = vunpack.c.h.b16 %v699
    %v1113 = vunpack.c.l.b16 %v700
    %v1114 = vunpack.c.h.b16 %v700
    %v1115 = vunpack.c.l.b16 %v701
    %v1116 = vunpack.c.h.b16 %v701
    %v1117 = vunpack.c.l.b16 %v702
    %v1118 = vunpack.c.h.b16 %v702
    %v1119 = vunpack.c.l.b16 %v703
    %v1120 = vunpack.c.h.b16 %v703
    %v1121 = vunpack.c.l.b16 %v704
    %v1122 = vunpack.c.h.b16 %v704
    %v1123 = vunpack.c.l.b16 %v705
    %v1124 = vunpack.c.h.b16 %v705
    %v1125 = vunpack.c.l.b16 %v706
    %v1126 = vunpack.c.h.b16 %v706
    %v1127 = vunpack.c.l.b16 %v707
    %v1128 = vunpack.c.h.b16 %v707
    %v1129 = vunpack.c.l.b16 %v708
    %v1130 = vunpack.c.h.b16 %v708
    %v1131 = vunpack.c.l.b16 %v709
    %v1132 = vunpack.c.h.b16 %v709
    %v1133 = vunpack.c.l.b16 %v710
    %v1134 = vunpack.c.h.b16 %v710
    %v1135 = vunpack.c.l.b16 %v711
    %v1136 = vunpack.c.h.b16 %v711
    %v1137 = vunpack.c.l.b16 %v712
    %v1138 = vunpack.c.h.b16 %v712
    %v1139 = vunpack.c.l.b16 %v713
    %v1140 = vunpack.c.h.b16 %v713
    %v1141 = vunpack.c.l.b16 %v714
    %v1142 = vunpack.c.h.b16 %v714
    %v1143 = vunpack.c.l.b16 %v715
    %v1144 = vunpack.c.h.b16 %v715
    %v1145 = vunpack.c.l.b16 %v716
    %v1146 = vunpack.c.h.b16 %v716
    %v1147 = vunpack.c.l.b16 %v717
    %v1148 = vunpack.c.h.b16 %v717
    %v1149 = vunpack.c.l.b16 %v718
    %v1150 = vunpack.c.h.b16 %v718
    %v1151 = vunpack.c.l.b16 %v719
    %v1152 = vunpack.c.h.b16 %v719
    %v1153 = vunpack.c.l.b16 %v720
    %v1154 = vunpack.c.h.b16 %v720
    %v1155 = vunpack.c.l.b16 %v721
    %v1156 = vunpack.c.h.b16 %v721
    %v1157 = vunpack.c.l.b16 %v722
    %v1158 = vunpack.c.h.b16 %v722
    %v1159 = vunpack.c.l.b16 %v723
    %v1160 = vunpack.c.h.b16 %v723
    %v1161 = vunpack.c.l.b16 %v724
    %v1162 = vunpack.c.h.b16 %v724
    %v1163 = vunpack.c.l.b16 %v725
    %v1164 = vunpack.c.h.b16 %v725
    %v1165 = vunpack.c.l.b16 %v726
    %v1166 = vunpack.c.h.b16 %v726
    %v1167 = vunpack.c.l.b16 %v727
    %v1168 = vunpack.c.h.b16 %v727
    %v1169 = vunpack.c.l.b16 %v728
    %v1170 = vunpack.c.h.b16 %v728
    %v1171 = vunpack.c.l.b16 %v729
    %v1172 = vunpack.c.h.b16 %v729
    %v1173 = vunpack.c.l.b16 %v730
    %v1174 = vunpack.c.h.b16 %v730
    %v1175 = vunpack.c.l.b16 %v731
    %v1176 = vunpack.c.h.b16 %v731
    %v1177 = vunpack.c.l.b16 %v732
    %v1178 = vunpack.c.h.b16 %v732
    %v1179 = vunpack.c.l.b16 %v733
    %v1180 = vunpack.c.h.b16 %v733
    %v1181 = vunpack.c.l.b16 %v734
    %v1182 = vunpack.c.h.b16 %v734
    %v1183 = vunpack.c.l.b16 %v735
    %v1184 = vunpack.c.h.b16 %v735
    %v1185 = vunpack.c.l.b16 %v736
    %v1186 = vunpack.c.h.b16 %v736
    %v1187 = vunpack.c.l.b16 %v737
    %v1188 = vunpack.c.h.b16 %v737
    %v1189 = vunpack.c.l.b16 %v738
    %v1190 = vunpack.c.h.b16 %v738
    %v1191 = vunpack.c.l.b16 %v739
    %v1192 = vunpack.c.h.b16 %v739
    %v1193 = vunpack.c.l.b16 %v740
    %v1194 = vunpack.c.h.b16 %v740
    %v1195 = vunpack.c.l.b16 %v741
    %v1196 = vunpack.c.h.b16 %v741
    %v1197 = vunpack.c.l.b16 %v742
    %v1198 = vunpack.c.h.b16 %v742
    %v1199 = vunpack.c.l.b16 %v743
    %v1200 = vunpack.c.h.b16 %v743
    %v1201 = vunpack.c.l.b16 %v744
    %v1202 = vunpack.c.h.b16 %v744
    %v1203 = vunpack.c.l.b16 %v745
    %v1204 = vunpack.c.h.b16 %v745
    %v1205 = vunpack.c.l.b16 %v746
    %v1206 = vunpack.c.h.b16 %v746
    %v1207 = vunpack.c.l.b16 %v747
    %v1208 = vunpack.c.h.b16 %v747
    %v1209 = vunpack.c.l.b16 %v748
    %v1210 = vunpack.c.h.b16 %v748
    %v1211 = vunpack.c.l.b16 %v749
    %v1212 = vunpack.c.h.b16 %v749
    %v1213 = vunpack.c.l.b16 %v750
    %v1214 = vunpack.c.h.b16 %v750
    %v1215 = vunpack.c.l.b16 %v751
    %v1216 = vunpack.c.h.b16 %v751
    %v1217 = vunpack.c.l.b16 %v752
    %v1218 = vunpack.c.h.b16 %v752
    %v1219 = vunpack.c.l.b16 %v753
    %v1220 = vunpack.c.h.b16 %v753
    %v1221 = vunpack.c.l.b16 %v754
    %v1222 = vunpack.c.h.b16 %v754
    %v1223 = vpack.c.b16 %v983, %v967
    %v1224 = vpack.c.b16 %v984, %v968
    %v1225 = vpack.c.b16 %v985, %v969
    %v1226 = vpack.c.b16 %v986, %v970
    %v1227 = vpack.c.b16 %v987, %v971
    %v1228 = vpack.c.b16 %v988, %v972
    %v1229 = vpack.c.b16 %v989, %v973
    %v1230 = vpack.c.b16 %v990, %v974
    %v1231 = vpack.c.b16 %v991, %v975
    %v1232 = vpack.c.b16 %v992, %v976
    %v1233 = vpack.c.b16 %v993, %v977
    %v1234 = vpack.c.b16 %v994, %v978
    %v1235 = vpack.c.b16 %v995, %v979
    %v1236 = vpack.c.b16 %v996, %v980
    %v1237 = vpack.c.b16 %v997, %v981
    %v1238 = vpack.c.b16 %v998, %v982
    %v1239 = vpack.c.b16 %v1015, %v999
    %v1240 = vpack.c.b16 %v1016, %v1000
    %v1241 = vpack.c.b16 %v1017, %v1001
    %v1242 = vpack.c.b16 %v1018, %v1002
    %v1243 = vpack.c.b16 %v1019, %v1003
    %v1244 = vpack.c.b16 %v1020, %v1004
    %v1245 = vpack.c.b16 %v1021, %v1005
    %v1246 = vpack.c.b16 %v1022, %v1006
    %v1247 = vpack.c.b16 %v1023, %v1007
    %v1248 = vpack.c.b16 %v1024, %v1008
    %v1249 = vpack.c.b16 %v1025, %v1009
    %v1250 = vpack.c.b16 %v1026, %v1010
    %v1251 = vpack.c.b16 %v1027, %v1011
    %v1252 = vpack.c.b16 %v1028, %v1012
    %v1253 = vpack.c.b16 %v1029, %v1013
    %v1254 = vpack.c.b16 %v1030, %v1014
    %v1255 = vpack.c.b16 %v1047, %v1031
    %v1256 = vpack.c.b16 %v1048, %v1032
    %v1257 = vpack.c.b16 %v1049, %v1033
    %v1258 = vpack.c.b16 %v1050, %v1034
    %v1259 = vpack.c.b16 %v1051, %v1035
    %v1260 = vpack.c.b16 %v1052, %v1036
    %v1261 = vpack.c.b16 %v1053, %v1037
    %v1262 = vpack.c.b16 %v1054, %v1038
    %v1263 = vpack.c.b16 %v1055, %v1039
    %v1264 = vpack.c.b16 %v1056, %v1040
    %v1265 = vpack.c.b16 %v1057, %v1041
    %v1266 = vpack.c.b16 %v1058, %v1042
    %v1267 = vpack.c.b16 %v1059, %v1043
    %v1268 = vpack.c.b16 %v1060, %v1044
    %v1269 = vpack.c.b16 %v1061, %v1045
    %v1270 = vpack.c.b16 %v1062, %v1046
    %v1271 = vpack.c.b16 %v1079, %v1063
    %v1272 = vpack.c.b16 %v1080, %v1064
    %v1273 = vpack.c.b16 %v1081, %v1065
    %v1274 = vpack.c.b16 %v1082, %v1066
    %v1275 = vpack.c.b16 %v1083, %v1067
    %v1276 = vpack.c.b16 %v1084, %v1068
    %v1277 = vpack.c.b16 %v1085, %v1069
    %v1278 = vpack.c.b16 %v1086, %v1070
    %v1279 = vpack.c.b16 %v1087, %v1071
    %v1280 = vpack.c.b16 %v1088, %v1072
    %v1281 = vpack.c.b16 %v1089, %v1073
    %v1282 = vpack.c.b16 %v1090, %v1074
    %v1283 = vpack.c.b16 %v1091, %v1075
    %v1284 = vpack.c.b16 %v1092, %v1076
    %v1285 = vpack.c.b16 %v1093, %v1077
    %v1286 = vpack.c.b16 %v1094, %v1078
    %v1287 = vpack.c.b16 %v1111, %v1095
    %v1288 = vpack.c.b16 %v1112, %v1096
    %v1289 = vpack.c.b16 %v1113, %v1097
    %v1290 = vpack.c.b16 %v1114, %v1098
    %v1291 = vpack.c.b16 %v1115, %v1099
    %v1292 = vpack.c.b16 %v1116, %v1100
    %v1293 = vpack.c.b16 %v1117, %v1101
    %v1294 = vpack.c.b16 %v1118, %v1102
    %v1295 = vpack.c.b16 %v1119, %v1103
    %v1296 = vpack.c.b16 %v1120, %v1104
    %v1297 = vpack.c.b16 %v1121, %v1105
    %v1298 = vpack.c.b16 %v1122, %v1106
    %v1299 = vpack.c.b16 %v1123, %v1107
    %v1300 = vpack.c.b16 %v1124, %v1108
    %v1301 = vpack.c.b16 %v1125, %v1109
    %v1302 = vpack.c.b16 %v1126, %v1110
    %v1303 = vpack.c.b16 %v1143, %v1127
    %v1304 = vpack.c.b16 %v1144, %v1128
    %v1305 = vpack.c.b16 %v1145, %v1129
    %v1306 = vpack.c.b16 %v1146, %v1130
    %v1307 = vpack.c.b16 %v1147, %v1131
    %v1308 = vpack.c.b16 %v1148, %v1132
    %v1309 = vpack.c.b16 %v1149, %v1133
    %v1310 = vpack.c.b16 %v1150, %v1134
    %v1311 = vpack.c.b16 %v1151, %v1135
    %v1312 = vpack.c.b16 %v1152, %v1136
    %v1313 = vpack.c.b16 %v1153, %v1137
    %v1314 = vpack.c.b16 %v1154, %v1138
    %v1315 = vpack.c.b16 %v1155, %v1139
    %v1316 = vpack.c.b16 %v1156, %v1140
    %v1317 = vpack.c.b16 %v1157, %v1141
    %v1318 = vpack.c.b16 %v1158, %v1142
    %v1319 = vpack.c.b16 %v1175, %v1159
    %v1320 = vpack.c.b16 %v1176, %v1160
    %v1321 = vpack.c.b16 %v1177, %v1161
    %v1322 = vpack.c.b16 %v1178, %v1162
    %v1323 = vpack.c.b16 %v1179, %v1163
    %v1324 = vpack.c.b16 %v1180, %v1164
    %v1325 = vpack.c.b16 %v1181, %v1165
    %v1326 = vpack.c.b16 %v1182, %v1166
    %v1327 = vpack.c.b16 %v1183, %v1167
    %v1328 = vpack.c.b16 %v1184, %v1168
    %v1329 = vpack.c.b16 %v1185, %v1169
    %v1330 = vpack.c.b16 %v1186, %v1170
    %v1331 = vpack.c.b16 %v1187, %v1171
    %v1332 = vpack.c.b16 %v1188, %v1172
    %v1333 = vpack.c.b16 %v1189, %v1173
    %v1334 = vpack.c.b16 %v1190, %v1174
    %v1335 = vpack.c.b16 %v1207, %v1191
    %v1336 = vpack.c.b16 %v1208, %v1192
    %v1337 = vpack.c.b16 %v1209, %v1193
    %v1338 = vpack.c.b16 %v1210, %v1194
    %v1339 = vpack.c.b16 %v1211, %v1195
    %v1340 = vpack.c.b16 %v1212, %v1196
    %v1341 = vpack.c.b16 %v1213, %v1197
    %v1342 = vpack.c.b16 %v1214, %v1198
    %v1343 = vpack.c.b16 %v1215, %v1199
    %v1344 = vpack.c.b16 %v1216, %v1200
    %v1345 = vpack.c.b16 %v1217, %v1201
    %v1346 = vpack.c.b16 %v1218, %v1202
    %v1347 = vpack.c.b16 %v1219, %v1203
    %v1348 = vpack.c.b16 %v1220, %v1204
    %v1349 = vpack.c.b16 %v1221, %v1205
    %v1350 = vpack.c.b16 %v1222, %v1206
    %1479 = vmatprep.subr.bf16.mxu0 %v1224
    %1480 = vmatpush1.bf16.msra.mxu0 %v1223
    %1481 = vmatprep.subr.bf16.mxu0 %v1240
    %1482 = vmatpush1.bf16.msra.mxu0 %v1239
    %1483 = vmatprep.subr.bf16.mxu0 %v1256
    %1484 = vmatpush1.bf16.msra.mxu0 %v1255
    %1485 = vmatprep.subr.bf16.mxu0 %v1272
    %1486 = vmatpush1.bf16.msra.mxu0 %v1271
    %1487 = vmatprep.subr.bf16.mxu0 %v1288
    %1488 = vmatpush1.bf16.msra.mxu0 %v1287
    %1489 = vmatprep.subr.bf16.mxu0 %v1304
    %1490 = vmatpush1.bf16.msra.mxu0 %v1303
    %1491 = vmatprep.subr.bf16.mxu0 %v1320
    %1492 = vmatpush1.bf16.msra.mxu0 %v1319
    %1493 = vmatprep.subr.bf16.mxu0 %v1336
    %1494 = vmatpush1.bf16.msra.mxu0 %v1335
    %1495 = vmatprep.subr.bf16.mxu0 0
    %1496 = vmatpush1.bf16.msra.mxu0 0
    %1497 = vmatprep.subr.bf16.mxu0 0
    %1498 = vmatpush1.bf16.msra.mxu0 0
    %1499 = vmatprep.subr.bf16.mxu0 0
    %1500 = vmatpush1.bf16.msra.mxu0 0
    %1501 = vmatprep.subr.bf16.mxu0 0
    %1502 = vmatpush1.bf16.msra.mxu0 0
    %1503 = vmatprep.subr.bf16.mxu0 0
    %1504 = vmatpush1.bf16.msra.mxu0 0
    %1505 = vmatprep.subr.bf16.mxu0 0
    %1506 = vmatpush1.bf16.msra.mxu0 0
    %1507 = vmatprep.subr.bf16.mxu0 0
    %1508 = vmatpush1.bf16.msra.mxu0 0
    %1509 = vmatprep.subr.bf16.mxu0 0
    %1510 = vmatpush1.bf16.msra.mxu0 0
    %1511 = vmatprep.mubr.bf16.mxu0 0
    %1512 = vmatmul.mubr.bf16.gmra.mrb[0].mxu0 %v626
    %v1513 = vpop.f32.mrb[0].mxu0
    %v1514 = vadd.f32 %v762, %v1513
    %v1515 = vpop.f32.mrb[0].mxu0
    %v1516 = vadd.f32 %v766, %v1515
    %v1517 = vpop.f32.mrb[0].mxu0
    %v1518 = vadd.f32 %v762, %v1517
    %v1519 = vpop.f32.mrb[0].mxu0
    %v1520 = vadd.f32 %v766, %v1519
    %1521 = vdwg.mxu0
    %1522 = vmatprep.subr.bf16.mxu0 %v1226
    %1523 = vmatpush1.bf16.msra.mxu0 %v1225
    %1524 = vmatprep.subr.bf16.mxu0 %v1242
    %1525 = vmatpush1.bf16.msra.mxu0 %v1241
    %1526 = vmatprep.subr.bf16.mxu0 %v1258
    %1527 = vmatpush1.bf16.msra.mxu0 %v1257
    %1528 = vmatprep.subr.bf16.mxu0 %v1274
    %1529 = vmatpush1.bf16.msra.mxu0 %v1273
    %1530 = vmatprep.subr.bf16.mxu0 %v1290
    %1531 = vmatpush1.bf16.msra.mxu0 %v1289
    %1532 = vmatprep.subr.bf16.mxu0 %v1306
    %1533 = vmatpush1.bf16.msra.mxu0 %v1305
    %1534 = vmatprep.subr.bf16.mxu0 %v1322
    %1535 = vmatpush1.bf16.msra.mxu0 %v1321
    %1536 = vmatprep.subr.bf16.mxu0 %v1338
    %1537 = vmatpush1.bf16.msra.mxu0 %v1337
    %1538 = vmatprep.subr.bf16.mxu0 0
    %1539 = vmatpush1.bf16.msra.mxu0 0
    %1540 = vmatprep.subr.bf16.mxu0 0
    %1541 = vmatpush1.bf16.msra.mxu0 0
    %1542 = vmatprep.subr.bf16.mxu0 0
    %1543 = vmatpush1.bf16.msra.mxu0 0
    %1544 = vmatprep.subr.bf16.mxu0 0
    %1545 = vmatpush1.bf16.msra.mxu0 0
    %1546 = vmatprep.subr.bf16.mxu0 0
    %1547 = vmatpush1.bf16.msra.mxu0 0
    %1548 = vmatprep.subr.bf16.mxu0 0
    %1549 = vmatpush1.bf16.msra.mxu0 0
    %1550 = vmatprep.subr.bf16.mxu0 0
    %1551 = vmatpush1.bf16.msra.mxu0 0
    %1552 = vmatprep.subr.bf16.mxu0 0
    %1553 = vmatpush1.bf16.msra.mxu0 0
    %1554 = vmatprep.mubr.bf16.mxu0 0
    %1555 = vmatmul.mubr.bf16.gmra.mrb[0].mxu0 %v626
    %v1556 = vpop.f32.mrb[0].mxu0
    %v1557 = vadd.f32 %v770, %v1556
    %v1558 = vpop.f32.mrb[0].mxu0
    %v1559 = vadd.f32 %v774, %v1558
    %v1560 = vpop.f32.mrb[0].mxu0
    %v1561 = vadd.f32 %v770, %v1560
    %v1562 = vpop.f32.mrb[0].mxu0
    %v1563 = vadd.f32 %v774, %v1562
    %1564 = vdwg.mxu0
    %1565 = vmatprep.subr.bf16.mxu0 %v1228
    %1566 = vmatpush1.bf16.msra.mxu0 %v1227
    %1567 = vmatprep.subr.bf16.mxu0 %v1244
    %1568 = vmatpush1.bf16.msra.mxu0 %v1243
    %1569 = vmatprep.subr.bf16.mxu0 %v1260
    %1570 = vmatpush1.bf16.msra.mxu0 %v1259
    %1571 = vmatprep.subr.bf16.mxu0 %v1276
    %1572 = vmatpush1.bf16.msra.mxu0 %v1275
    %1573 = vmatprep.subr.bf16.mxu0 %v1292
    %1574 = vmatpush1.bf16.msra.mxu0 %v1291
    %1575 = vmatprep.subr.bf16.mxu0 %v1308
    %1576 = vmatpush1.bf16.msra.mxu0 %v1307
    %1577 = vmatprep.subr.bf16.mxu0 %v1324
    %1578 = vmatpush1.bf16.msra.mxu0 %v1323
    %1579 = vmatprep.subr.bf16.mxu0 %v1340
    %1580 = vmatpush1.bf16.msra.mxu0 %v1339
    %1581 = vmatprep.subr.bf16.mxu0 0
    %1582 = vmatpush1.bf16.msra.mxu0 0
    %1583 = vmatprep.subr.bf16.mxu0 0
    %1584 = vmatpush1.bf16.msra.mxu0 0
    %1585 = vmatprep.subr.bf16.mxu0 0
    %1586 = vmatpush1.bf16.msra.mxu0 0
    %1587 = vmatprep.subr.bf16.mxu0 0
    %1588 = vmatpush1.bf16.msra.mxu0 0
    %1589 = vmatprep.subr.bf16.mxu0 0
    %1590 = vmatpush1.bf16.msra.mxu0 0
    %1591 = vmatprep.subr.bf16.mxu0 0
    %1592 = vmatpush1.bf16.msra.mxu0 0
    %1593 = vmatprep.subr.bf16.mxu0 0
    %1594 = vmatpush1.bf16.msra.mxu0 0
    %1595 = vmatprep.subr.bf16.mxu0 0
    %1596 = vmatpush1.bf16.msra.mxu0 0
    %1597 = vmatprep.mubr.bf16.mxu0 0
    %1598 = vmatmul.mubr.bf16.gmra.mrb[0].mxu0 %v626
    %v1599 = vpop.f32.mrb[0].mxu0
    %v1600 = vadd.f32 %v778, %v1599
    %v1601 = vpop.f32.mrb[0].mxu0
    %v1602 = vadd.f32 %v782, %v1601
    %v1603 = vpop.f32.mrb[0].mxu0
    %v1604 = vadd.f32 %v778, %v1603
    %v1605 = vpop.f32.mrb[0].mxu0
    %v1606 = vadd.f32 %v782, %v1605
    %1607 = vdwg.mxu0
    %1608 = vmatprep.subr.bf16.mxu0 %v1230
    %1609 = vmatpush1.bf16.msra.mxu0 %v1229
    %1610 = vmatprep.subr.bf16.mxu0 %v1246
    %1611 = vmatpush1.bf16.msra.mxu0 %v1245
    %1612 = vmatprep.subr.bf16.mxu0 %v1262
    %1613 = vmatpush1.bf16.msra.mxu0 %v1261
    %1614 = vmatprep.subr.bf16.mxu0 %v1278
    %1615 = vmatpush1.bf16.msra.mxu0 %v1277
    %1616 = vmatprep.subr.bf16.mxu0 %v1294
    %1617 = vmatpush1.bf16.msra.mxu0 %v1293
    %1618 = vmatprep.subr.bf16.mxu0 %v1310
    %1619 = vmatpush1.bf16.msra.mxu0 %v1309
    %1620 = vmatprep.subr.bf16.mxu0 %v1326
    %1621 = vmatpush1.bf16.msra.mxu0 %v1325
    %1622 = vmatprep.subr.bf16.mxu0 %v1342
    %1623 = vmatpush1.bf16.msra.mxu0 %v1341
    %1624 = vmatprep.subr.bf16.mxu0 0
    %1625 = vmatpush1.bf16.msra.mxu0 0
    %1626 = vmatprep.subr.bf16.mxu0 0
    %1627 = vmatpush1.bf16.msra.mxu0 0
    %1628 = vmatprep.subr.bf16.mxu0 0
    %1629 = vmatpush1.bf16.msra.mxu0 0
    %1630 = vmatprep.subr.bf16.mxu0 0
    %1631 = vmatpush1.bf16.msra.mxu0 0
    %1632 = vmatprep.subr.bf16.mxu0 0
    %1633 = vmatpush1.bf16.msra.mxu0 0
    %1634 = vmatprep.subr.bf16.mxu0 0
    %1635 = vmatpush1.bf16.msra.mxu0 0
    %1636 = vmatprep.subr.bf16.mxu0 0
    %1637 = vmatpush1.bf16.msra.mxu0 0
    %1638 = vmatprep.subr.bf16.mxu0 0
    %1639 = vmatpush1.bf16.msra.mxu0 0
    %1640 = vmatprep.mubr.bf16.mxu0 0
    %1641 = vmatmul.mubr.bf16.gmra.mrb[0].mxu0 %v626
    %v1642 = vpop.f32.mrb[0].mxu0
    %v1643 = vadd.f32 %v786, %v1642
    %v1644 = vpop.f32.mrb[0].mxu0
    %v1645 = vadd.f32 %v790, %v1644
    %v1646 = vpop.f32.mrb[0].mxu0
    %v1647 = vadd.f32 %v786, %v1646
    %v1648 = vpop.f32.mrb[0].mxu0
    %v1649 = vadd.f32 %v790, %v1648
    %1650 = vdwg.mxu0
    %1651 = vmatprep.subr.bf16.mxu0 %v1232
    %1652 = vmatpush1.bf16.msra.mxu0 %v1231
    %1653 = vmatprep.subr.bf16.mxu0 %v1248
    %1654 = vmatpush1.bf16.msra.mxu0 %v1247
    %1655 = vmatprep.subr.bf16.mxu0 %v1264
    %1656 = vmatpush1.bf16.msra.mxu0 %v1263
    %1657 = vmatprep.subr.bf16.mxu0 %v1280
    %1658 = vmatpush1.bf16.msra.mxu0 %v1279
    %1659 = vmatprep.subr.bf16.mxu0 %v1296
    %1660 = vmatpush1.bf16.msra.mxu0 %v1295
    %1661 = vmatprep.subr.bf16.mxu0 %v1312
    %1662 = vmatpush1.bf16.msra.mxu0 %v1311
    %1663 = vmatprep.subr.bf16.mxu0 %v1328
    %1664 = vmatpush1.bf16.msra.mxu0 %v1327
    %1665 = vmatprep.subr.bf16.mxu0 %v1344
    %1666 = vmatpush1.bf16.msra.mxu0 %v1343
    %1667 = vmatprep.subr.bf16.mxu0 0
    %1668 = vmatpush1.bf16.msra.mxu0 0
    %1669 = vmatprep.subr.bf16.mxu0 0
    %1670 = vmatpush1.bf16.msra.mxu0 0
    %1671 = vmatprep.subr.bf16.mxu0 0
    %1672 = vmatpush1.bf16.msra.mxu0 0
    %1673 = vmatprep.subr.bf16.mxu0 0
    %1674 = vmatpush1.bf16.msra.mxu0 0
    %1675 = vmatprep.subr.bf16.mxu0 0
    %1676 = vmatpush1.bf16.msra.mxu0 0
    %1677 = vmatprep.subr.bf16.mxu0 0
    %1678 = vmatpush1.bf16.msra.mxu0 0
    %1679 = vmatprep.subr.bf16.mxu0 0
    %1680 = vmatpush1.bf16.msra.mxu0 0
    %1681 = vmatprep.subr.bf16.mxu0 0
    %1682 = vmatpush1.bf16.msra.mxu0 0
    %1683 = vmatprep.mubr.bf16.mxu0 0
    %1684 = vmatmul.mubr.bf16.gmra.mrb[0].mxu0 %v626
    %v1685 = vpop.f32.mrb[0].mxu0
    %v1686 = vadd.f32 %v794, %v1685
    %v1687 = vpop.f32.mrb[0].mxu0
    %v1688 = vadd.f32 %v798, %v1687
    %v1689 = vpop.f32.mrb[0].mxu0
    %v1690 = vadd.f32 %v794, %v1689
    %v1691 = vpop.f32.mrb[0].mxu0
    %v1692 = vadd.f32 %v798, %v1691
    %1693 = vdwg.mxu0
    %1694 = vmatprep.subr.bf16.mxu0 %v1234
    %1695 = vmatpush1.bf16.msra.mxu0 %v1233
    %1696 = vmatprep.subr.bf16.mxu0 %v1250
    %1697 = vmatpush1.bf16.msra.mxu0 %v1249
    %1698 = vmatprep.subr.bf16.mxu0 %v1266
    %1699 = vmatpush1.bf16.msra.mxu0 %v1265
    %1700 = vmatprep.subr.bf16.mxu0 %v1282
    %1701 = vmatpush1.bf16.msra.mxu0 %v1281
    %1702 = vmatprep.subr.bf16.mxu0 %v1298
    %1703 = vmatpush1.bf16.msra.mxu0 %v1297
    %1704 = vmatprep.subr.bf16.mxu0 %v1314
    %1705 = vmatpush1.bf16.msra.mxu0 %v1313
    %1706 = vmatprep.subr.bf16.mxu0 %v1330
    %1707 = vmatpush1.bf16.msra.mxu0 %v1329
    %1708 = vmatprep.subr.bf16.mxu0 %v1346
    %1709 = vmatpush1.bf16.msra.mxu0 %v1345
    %1710 = vmatprep.subr.bf16.mxu0 0
    %1711 = vmatpush1.bf16.msra.mxu0 0
    %1712 = vmatprep.subr.bf16.mxu0 0
    %1713 = vmatpush1.bf16.msra.mxu0 0
    %1714 = vmatprep.subr.bf16.mxu0 0
    %1715 = vmatpush1.bf16.msra.mxu0 0
    %1716 = vmatprep.subr.bf16.mxu0 0
    %1717 = vmatpush1.bf16.msra.mxu0 0
    %1718 = vmatprep.subr.bf16.mxu0 0
    %1719 = vmatpush1.bf16.msra.mxu0 0
    %1720 = vmatprep.subr.bf16.mxu0 0
    %1721 = vmatpush1.bf16.msra.mxu0 0
    %1722 = vmatprep.subr.bf16.mxu0 0
    %1723 = vmatpush1.bf16.msra.mxu0 0
    %1724 = vmatprep.subr.bf16.mxu0 0
    %1725 = vmatpush1.bf16.msra.mxu0 0
    %1726 = vmatprep.mubr.bf16.mxu0 0
    %1727 = vmatmul.mubr.bf16.gmra.mrb[0].mxu0 %v626
    %v1728 = vpop.f32.mrb[0].mxu0
    %v1729 = vadd.f32 %v802, %v1728
    %v1730 = vpop.f32.mrb[0].mxu0
    %v1731 = vadd.f32 %v806, %v1730
    %v1732 = vpop.f32.mrb[0].mxu0
    %v1733 = vadd.f32 %v802, %v1732
    %v1734 = vpop.f32.mrb[0].mxu0
    %v1735 = vadd.f32 %v806, %v1734
    %1736 = vdwg.mxu0
    %1737 = vmatprep.subr.bf16.mxu0 %v1236
    %1738 = vmatpush1.bf16.msra.mxu0 %v1235
    %1739 = vmatprep.subr.bf16.mxu0 %v1252
    %1740 = vmatpush1.bf16.msra.mxu0 %v1251
    %1741 = vmatprep.subr.bf16.mxu0 %v1268
    %1742 = vmatpush1.bf16.msra.mxu0 %v1267
    %1743 = vmatprep.subr.bf16.mxu0 %v1284
    %1744 = vmatpush1.bf16.msra.mxu0 %v1283
    %1745 = vmatprep.subr.bf16.mxu0 %v1300
    %1746 = vmatpush1.bf16.msra.mxu0 %v1299
    %1747 = vmatprep.subr.bf16.mxu0 %v1316
    %1748 = vmatpush1.bf16.msra.mxu0 %v1315
    %1749 = vmatprep.subr.bf16.mxu0 %v1332
    %1750 = vmatpush1.bf16.msra.mxu0 %v1331
    %1751 = vmatprep.subr.bf16.mxu0 %v1348
    %1752 = vmatpush1.bf16.msra.mxu0 %v1347
    %1753 = vmatprep.subr.bf16.mxu0 0
    %1754 = vmatpush1.bf16.msra.mxu0 0
    %1755 = vmatprep.subr.bf16.mxu0 0
    %1756 = vmatpush1.bf16.msra.mxu0 0
    %1757 = vmatprep.subr.bf16.mxu0 0
    %1758 = vmatpush1.bf16.msra.mxu0 0
    %1759 = vmatprep.subr.bf16.mxu0 0
    %1760 = vmatpush1.bf16.msra.mxu0 0
    %1761 = vmatprep.subr.bf16.mxu0 0
    %1762 = vmatpush1.bf16.msra.mxu0 0
    %1763 = vmatprep.subr.bf16.mxu0 0
    %1764 = vmatpush1.bf16.msra.mxu0 0
    %1765 = vmatprep.subr.bf16.mxu0 0
    %1766 = vmatpush1.bf16.msra.mxu0 0
    %1767 = vmatprep.subr.bf16.mxu0 0
    %1768 = vmatpush1.bf16.msra.mxu0 0
    %1769 = vmatprep.mubr.bf16.mxu0 0
    %1770 = vmatmul.mubr.bf16.gmra.mrb[0].mxu0 %v626
    %v1771 = vpop.f32.mrb[0].mxu0
    %v1772 = vadd.f32 %v810, %v1771
    %v1773 = vpop.f32.mrb[0].mxu0
    %v1774 = vadd.f32 %v814, %v1773
    %v1775 = vpop.f32.mrb[0].mxu0
    %v1776 = vadd.f32 %v810, %v1775
    %v1777 = vpop.f32.mrb[0].mxu0
    %v1778 = vadd.f32 %v814, %v1777
    %1779 = vdwg.mxu0
    %1780 = vmatprep.subr.bf16.mxu0 %v1238
    %1781 = vmatpush1.bf16.msra.mxu0 %v1237
    %1782 = vmatprep.subr.bf16.mxu0 %v1254
    %1783 = vmatpush1.bf16.msra.mxu0 %v1253
    %1784 = vmatprep.subr.bf16.mxu0 %v1270
    %1785 = vmatpush1.bf16.msra.mxu0 %v1269
    %1786 = vmatprep.subr.bf16.mxu0 %v1286
    %1787 = vmatpush1.bf16.msra.mxu0 %v1285
    %1788 = vmatprep.subr.bf16.mxu0 %v1302
    %1789 = vmatpush1.bf16.msra.mxu0 %v1301
    %1790 = vmatprep.subr.bf16.mxu0 %v1318
    %1791 = vmatpush1.bf16.msra.mxu0 %v1317
    %1792 = vmatprep.subr.bf16.mxu0 %v1334
    %1793 = vmatpush1.bf16.msra.mxu0 %v1333
    %1794 = vmatprep.subr.bf16.mxu0 %v1350
    %1795 = vmatpush1.bf16.msra.mxu0 %v1349
    %1796 = vmatprep.subr.bf16.mxu0 0
    %1797 = vmatpush1.bf16.msra.mxu0 0
    %1798 = vmatprep.subr.bf16.mxu0 0
    %1799 = vmatpush1.bf16.msra.mxu0 0
    %1800 = vmatprep.subr.bf16.mxu0 0
    %1801 = vmatpush1.bf16.msra.mxu0 0
    %1802 = vmatprep.subr.bf16.mxu0 0
    %1803 = vmatpush1.bf16.msra.mxu0 0
    %1804 = vmatprep.subr.bf16.mxu0 0
    %1805 = vmatpush1.bf16.msra.mxu0 0
    %1806 = vmatprep.subr.bf16.mxu0 0
    %1807 = vmatpush1.bf16.msra.mxu0 0
    %1808 = vmatprep.subr.bf16.mxu0 0
    %1809 = vmatpush1.bf16.msra.mxu0 0
    %1810 = vmatprep.subr.bf16.mxu0 0
    %1811 = vmatpush1.bf16.msra.mxu0 0
    %1812 = vmatprep.mubr.bf16.mxu0 0
    %1813 = vmatmul.mubr.bf16.gmra.mrb[0].mxu0 %v626
    %v1814 = vpop.f32.mrb[0].mxu0
    %v1815 = vadd.f32 %v818, %v1814
    %v1816 = vpop.f32.mrb[0].mxu0
    %v1817 = vadd.f32 %v822, %v1816
    %v1818 = vpop.f32.mrb[0].mxu0
    %v1819 = vadd.f32 %v818, %v1818
    %v1820 = vpop.f32.mrb[0].mxu0
    %v1821 = vadd.f32 %v822, %v1820
    %1822 = vdwg.mxu0
    %v1823 = vmax.f32 %v1514, 0.0
    %v1824 = vmax.f32 %v1516, 0.0
    %v1825 = vmax.f32 %v1557, 0.0
    %v1826 = vmax.f32 %v1559, 0.0
    %v1827 = vmax.f32 %v1600, 0.0
    %v1828 = vmax.f32 %v1602, 0.0
    %v1829 = vmax.f32 %v1643, 0.0
    %v1830 = vmax.f32 %v1645, 0.0
    %v1831 = vmax.f32 %v1686, 0.0
    %v1832 = vmax.f32 %v1688, 0.0
    %v1833 = vmax.f32 %v1729, 0.0
    %v1834 = vmax.f32 %v1731, 0.0
    %v1835 = vmax.f32 %v1772, 0.0
    %v1836 = vmax.f32 %v1774, 0.0
    %v1837 = vmax.f32 %v1815, 0.0
    %v1838 = vmax.f32 %v1817, 0.0
    %v1839 = vmax.f32 %v1518, 0.0
    %v1840 = vmax.f32 %v1520, 0.0
    %v1841 = vmax.f32 %v1561, 0.0
    %v1842 = vmax.f32 %v1563, 0.0
    %v1843 = vmax.f32 %v1604, 0.0
    %v1844 = vmax.f32 %v1606, 0.0
    %v1845 = vmax.f32 %v1647, 0.0
    %v1846 = vmax.f32 %v1649, 0.0
    %v1847 = vmax.f32 %v1690, 0.0
    %v1848 = vmax.f32 %v1692, 0.0
    %v1849 = vmax.f32 %v1733, 0.0
    %v1850 = vmax.f32 %v1735, 0.0
    %v1851 = vmax.f32 %v1776, 0.0
    %v1852 = vmax.f32 %v1778, 0.0
    %v1853 = vmax.f32 %v1819, 0.0
    %v1854 = vmax.f32 %v1821, 0.0
    %v1855 = vpack.c.bf16 %v1839, %v1823
    %v1856 = vpack.c.bf16 %v1840, %v1824
    %v1857 = vpack.c.bf16 %v1841, %v1825
    %v1858 = vpack.c.bf16 %v1842, %v1826
    %v1859 = vpack.c.bf16 %v1843, %v1827
    %v1860 = vpack.c.bf16 %v1844, %v1828
    %v1861 = vpack.c.bf16 %v1845, %v1829
    %v1862 = vpack.c.bf16 %v1846, %v1830
    %v1863 = vpack.c.bf16 %v1847, %v1831
    %v1864 = vpack.c.bf16 %v1848, %v1832
    %v1865 = vpack.c.bf16 %v1849, %v1833
    %v1866 = vpack.c.bf16 %v1850, %v1834
    %v1867 = vpack.c.bf16 %v1851, %v1835
    %v1868 = vpack.c.bf16 %v1852, %v1836
    %v1869 = vpack.c.bf16 %v1853, %v1837
    %v1870 = vpack.c.bf16 %v1854, %v1838
    %v1871 = vld [vmem:[#allocation21] sm:$0xf]
    %v1872 = vld [vmem:[#allocation21 + $0x4] sm:$0xf]
    %v1873 = vld [vmem:[#allocation21 + $0x8] sm:$0xf]
    %v1874 = vld [vmem:[#allocation21 + $0xc] sm:$0xf]
    %v1875 = vld [vmem:[#allocation21 + $0x10] sm:$0xf]
    %v1876 = vld [vmem:[#allocation21 + $0x14] sm:$0xf]
    %v1877 = vld [vmem:[#allocation21 + $0x18] sm:$0xf]
    %v1878 = vld [vmem:[#allocation21 + $0x1c] sm:$0xf]
    %v1879 = vld [vmem:[#allocation21 + $0x20] sm:$0xf]
    %v1880 = vld [vmem:[#allocation21 + $0x24] sm:$0xf]
    %v1881 = vld [vmem:[#allocation21 + $0x28] sm:$0xf]
    %v1882 = vld [vmem:[#allocation21 + $0x2c] sm:$0xf]
    %v1883 = vld [vmem:[#allocation21 + $0x30] sm:$0xf]
    %v1884 = vld [vmem:[#allocation21 + $0x34] sm:$0xf]
    %v1885 = vld [vmem:[#allocation21 + $0x38] sm:$0xf]
    %v1886 = vld [vmem:[#allocation21 + $0x3c] sm:$0xf]
    %v1887 = vld [vmem:[#allocation21 + $0x40] sm:$0xf]
    %v1888 = vld [vmem:[#allocation21 + $0x44] sm:$0xf]
    %v1889 = vld [vmem:[#allocation21 + $0x48] sm:$0xf]
    %v1890 = vld [vmem:[#allocation21 + $0x4c] sm:$0xf]
    %v1891 = vld [vmem:[#allocation21 + $0x50] sm:$0xf]
    %v1892 = vld [vmem:[#allocation21 + $0x54] sm:$0xf]
    %v1893 = vld [vmem:[#allocation21 + $0x58] sm:$0xf]
    %v1894 = vld [vmem:[#allocation21 + $0x5c] sm:$0xf]
    %v1895 = vld [vmem:[#allocation21 + $0x60] sm:$0xf]
    %v1896 = vld [vmem:[#allocation21 + $0x64] sm:$0xf]
    %v1897 = vld [vmem:[#allocation21 + $0x68] sm:$0xf]
    %v1898 = vld [vmem:[#allocation21 + $0x6c] sm:$0xf]
    %v1899 = vld [vmem:[#allocation21 + $0x70] sm:$0xf]
    %v1900 = vld [vmem:[#allocation21 + $0x74] sm:$0xf]
    %v1901 = vld [vmem:[#allocation21 + $0x78] sm:$0xf]
    %v1902 = vld [vmem:[#allocation21 + $0x7c] sm:$0xf]
    %v1903 = vld [vmem:[#allocation21 + $0x80] sm:$0xf]
    %v1904 = vld [vmem:[#allocation21 + $0x84] sm:$0xf]
    %v1905 = vld [vmem:[#allocation21 + $0x88] sm:$0xf]
    %v1906 = vld [vmem:[#allocation21 + $0x8c] sm:$0xf]
    %v1907 = vld [vmem:[#allocation21 + $0x90] sm:$0xf]
    %v1908 = vld [vmem:[#allocation21 + $0x94] sm:$0xf]
    %v1909 = vld [vmem:[#allocation21 + $0x98] sm:$0xf]
    %v1910 = vld [vmem:[#allocation21 + $0x9c] sm:$0xf]
    %v1911 = vld [vmem:[#allocation21 + $0xa0] sm:$0xf]
    %v1912 = vld [vmem:[#allocation21 + $0xa4] sm:$0xf]
    %v1913 = vld [vmem:[#allocation21 + $0xa8] sm:$0xf]
    %v1914 = vld [vmem:[#allocation21 + $0xac] sm:$0xf]
    %v1915 = vld [vmem:[#allocation21 + $0xb0] sm:$0xf]
    %v1916 = vld [vmem:[#allocation21 + $0xb4] sm:$0xf]
    %v1917 = vld [vmem:[#allocation21 + $0xb8] sm:$0xf]
    %v1918 = vld [vmem:[#allocation21 + $0xbc] sm:$0xf]
    %v1919 = vld [vmem:[#allocation21 + $0xc0] sm:$0xf]
    %v1920 = vld [vmem:[#allocation21 + $0xc4] sm:$0xf]
    %v1921 = vld [vmem:[#allocation21 + $0xc8] sm:$0xf]
    %v1922 = vld [vmem:[#allocation21 + $0xcc] sm:$0xf]
    %v1923 = vld [vmem:[#allocation21 + $0xd0] sm:$0xf]
    %v1924 = vld [vmem:[#allocation21 + $0xd4] sm:$0xf]
    %v1925 = vld [vmem:[#allocation21 + $0xd8] sm:$0xf]
    %v1926 = vld [vmem:[#allocation21 + $0xdc] sm:$0xf]
    %v1927 = vld [vmem:[#allocation21 + $0xe0] sm:$0xf]
    %v1928 = vld [vmem:[#allocation21 + $0xe4] sm:$0xf]
    %v1929 = vld [vmem:[#allocation21 + $0xe8] sm:$0xf]
    %v1930 = vld [vmem:[#allocation21 + $0xec] sm:$0xf]
    %v1931 = vld [vmem:[#allocation21 + $0xf0] sm:$0xf]
    %v1932 = vld [vmem:[#allocation21 + $0xf4] sm:$0xf]
    %v1933 = vld [vmem:[#allocation21 + $0xf8] sm:$0xf]
    %v1934 = vld [vmem:[#allocation21 + $0xfc] sm:$0xf]
    %v1935 = vld [vmem:[#allocation21 + $0x100] sm:$0xf]
    %v1936 = vld [vmem:[#allocation21 + $0x104] sm:$0xf]
    %v1937 = vld [vmem:[#allocation21 + $0x108] sm:$0xf]
    %v1938 = vld [vmem:[#allocation21 + $0x10c] sm:$0xf]
    %v1939 = vld [vmem:[#allocation21 + $0x110] sm:$0xf]
    %v1940 = vld [vmem:[#allocation21 + $0x114] sm:$0xf]
    %v1941 = vld [vmem:[#allocation21 + $0x118] sm:$0xf]
    %v1942 = vld [vmem:[#allocation21 + $0x11c] sm:$0xf]
    %v1943 = vld [vmem:[#allocation21 + $0x120] sm:$0xf]
    %v1944 = vld [vmem:[#allocation21 + $0x124] sm:$0xf]
    %v1945 = vld [vmem:[#allocation21 + $0x128] sm:$0xf]
    %v1946 = vld [vmem:[#allocation21 + $0x12c] sm:$0xf]
    %v1947 = vld [vmem:[#allocation21 + $0x130] sm:$0xf]
    %v1948 = vld [vmem:[#allocation21 + $0x134] sm:$0xf]
    %v1949 = vld [vmem:[#allocation21 + $0x138] sm:$0xf]
    %v1950 = vld [vmem:[#allocation21 + $0x13c] sm:$0xf]
    %v1951 = vld [vmem:[#allocation21 + $0x140] sm:$0xf]
    %v1952 = vld [vmem:[#allocation21 + $0x144] sm:$0xf]
    %v1953 = vld [vmem:[#allocation21 + $0x148] sm:$0xf]
    %v1954 = vld [vmem:[#allocation21 + $0x14c] sm:$0xf]
    %v1955 = vld [vmem:[#allocation21 + $0x150] sm:$0xf]
    %v1956 = vld [vmem:[#allocation21 + $0x154] sm:$0xf]
    %v1957 = vld [vmem:[#allocation21 + $0x158] sm:$0xf]
    %v1958 = vld [vmem:[#allocation21 + $0x15c] sm:$0xf]
    %v1959 = vld [vmem:[#allocation21 + $0x160] sm:$0xf]
    %v1960 = vld [vmem:[#allocation21 + $0x164] sm:$0xf]
    %v1961 = vld [vmem:[#allocation21 + $0x168] sm:$0xf]
    %v1962 = vld [vmem:[#allocation21 + $0x16c] sm:$0xf]
    %v1963 = vld [vmem:[#allocation21 + $0x170] sm:$0xf]
    %v1964 = vld [vmem:[#allocation21 + $0x174] sm:$0xf]
    %v1965 = vld [vmem:[#allocation21 + $0x178] sm:$0xf]
    %v1966 = vld [vmem:[#allocation21 + $0x17c] sm:$0xf]
    %v1967 = vld [vmem:[#allocation21 + $0x180] sm:$0xf]
    %v1968 = vld [vmem:[#allocation21 + $0x184] sm:$0xf]
    %v1969 = vld [vmem:[#allocation21 + $0x188] sm:$0xf]
    %v1970 = vld [vmem:[#allocation21 + $0x18c] sm:$0xf]
    %v1971 = vld [vmem:[#allocation21 + $0x190] sm:$0xf]
    %v1972 = vld [vmem:[#allocation21 + $0x194] sm:$0xf]
    %v1973 = vld [vmem:[#allocation21 + $0x198] sm:$0xf]
    %v1974 = vld [vmem:[#allocation21 + $0x19c] sm:$0xf]
    %v1975 = vld [vmem:[#allocation21 + $0x1a0] sm:$0xf]
    %v1976 = vld [vmem:[#allocation21 + $0x1a4] sm:$0xf]
    %v1977 = vld [vmem:[#allocation21 + $0x1a8] sm:$0xf]
    %v1978 = vld [vmem:[#allocation21 + $0x1ac] sm:$0xf]
    %v1979 = vld [vmem:[#allocation21 + $0x1b0] sm:$0xf]
    %v1980 = vld [vmem:[#allocation21 + $0x1b4] sm:$0xf]
    %v1981 = vld [vmem:[#allocation21 + $0x1b8] sm:$0xf]
    %v1982 = vld [vmem:[#allocation21 + $0x1bc] sm:$0xf]
    %v1983 = vld [vmem:[#allocation21 + $0x1c0] sm:$0xf]
    %v1984 = vld [vmem:[#allocation21 + $0x1c4] sm:$0xf]
    %v1985 = vld [vmem:[#allocation21 + $0x1c8] sm:$0xf]
    %v1986 = vld [vmem:[#allocation21 + $0x1cc] sm:$0xf]
    %v1987 = vld [vmem:[#allocation21 + $0x1d0] sm:$0xf]
    %v1988 = vld [vmem:[#allocation21 + $0x1d4] sm:$0xf]
    %v1989 = vld [vmem:[#allocation21 + $0x1d8] sm:$0xf]
    %v1990 = vld [vmem:[#allocation21 + $0x1dc] sm:$0xf]
    %v1991 = vld [vmem:[#allocation21 + $0x1e0] sm:$0xf]
    %v1992 = vld [vmem:[#allocation21 + $0x1e4] sm:$0xf]
    %v1993 = vld [vmem:[#allocation21 + $0x1e8] sm:$0xf]
    %v1994 = vld [vmem:[#allocation21 + $0x1ec] sm:$0xf]
    %v1995 = vld [vmem:[#allocation21 + $0x1f0] sm:$0xf]
    %v1996 = vld [vmem:[#allocation21 + $0x1f4] sm:$0xf]
    %v1997 = vld [vmem:[#allocation21 + $0x1f8] sm:$0xf]
    %v1998 = vld [vmem:[#allocation21 + $0x1fc] sm:$0xf]
    %v1999 = vld [vmem:[#allocation21 + $0x200] sm:$0xf]
    %v2000 = vld [vmem:[#allocation21 + $0x204] sm:$0xf]
    %v2001 = vld [vmem:[#allocation21 + $0x208] sm:$0xf]
    %v2002 = vld [vmem:[#allocation21 + $0x20c] sm:$0xf]
    %v2003 = vld [vmem:[#allocation21 + $0x210] sm:$0xf]
    %v2004 = vld [vmem:[#allocation21 + $0x214] sm:$0xf]
    %v2005 = vld [vmem:[#allocation21 + $0x218] sm:$0xf]
    %v2006 = vld [vmem:[#allocation21 + $0x21c] sm:$0xf]
    %v2007 = vld [vmem:[#allocation21 + $0x220] sm:$0xf]
    %v2008 = vld [vmem:[#allocation21 + $0x224] sm:$0xf]
    %v2009 = vld [vmem:[#allocation21 + $0x228] sm:$0xf]
    %v2010 = vld [vmem:[#allocation21 + $0x22c] sm:$0xf]
    %v2011 = vld [vmem:[#allocation21 + $0x230] sm:$0xf]
    %v2012 = vld [vmem:[#allocation21 + $0x234] sm:$0xf]
    %v2013 = vld [vmem:[#allocation21 + $0x238] sm:$0xf]
    %v2014 = vld [vmem:[#allocation21 + $0x23c] sm:$0xf]
    %v2015 = vld [vmem:[#allocation21 + $0x240] sm:$0xf]
    %v2016 = vld [vmem:[#allocation21 + $0x244] sm:$0xf]
    %v2017 = vld [vmem:[#allocation21 + $0x248] sm:$0xf]
    %v2018 = vld [vmem:[#allocation21 + $0x24c] sm:$0xf]
    %v2019 = vld [vmem:[#allocation21 + $0x250] sm:$0xf]
    %v2020 = vld [vmem:[#allocation21 + $0x254] sm:$0xf]
    %v2021 = vld [vmem:[#allocation21 + $0x258] sm:$0xf]
    %v2022 = vld [vmem:[#allocation21 + $0x25c] sm:$0xf]
    %v2023 = vld [vmem:[#allocation21 + $0x260] sm:$0xf]
    %v2024 = vld [vmem:[#allocation21 + $0x264] sm:$0xf]
    %v2025 = vld [vmem:[#allocation21 + $0x268] sm:$0xf]
    %v2026 = vld [vmem:[#allocation21 + $0x26c] sm:$0xf]
    %v2027 = vld [vmem:[#allocation21 + $0x270] sm:$0xf]
    %v2028 = vld [vmem:[#allocation21 + $0x274] sm:$0xf]
    %v2029 = vld [vmem:[#allocation21 + $0x278] sm:$0xf]
    %v2030 = vld [vmem:[#allocation21 + $0x27c] sm:$0xf]
    %v2031 = vld [vmem:[#allocation21 + $0x280] sm:$0xf]
    %v2032 = vld [vmem:[#allocation21 + $0x284] sm:$0xf]
    %v2033 = vld [vmem:[#allocation21 + $0x288] sm:$0xf]
    %v2034 = vld [vmem:[#allocation21 + $0x28c] sm:$0xf]
    %v2035 = vld [vmem:[#allocation21 + $0x290] sm:$0xf]
    %v2036 = vld [vmem:[#allocation21 + $0x294] sm:$0xf]
    %v2037 = vld [vmem:[#allocation21 + $0x298] sm:$0xf]
    %v2038 = vld [vmem:[#allocation21 + $0x29c] sm:$0xf]
    %v2039 = vld [vmem:[#allocation21 + $0x2a0] sm:$0xf]
    %v2040 = vld [vmem:[#allocation21 + $0x2a4] sm:$0xf]
    %v2041 = vld [vmem:[#allocation21 + $0x2a8] sm:$0xf]
    %v2042 = vld [vmem:[#allocation21 + $0x2ac] sm:$0xf]
    %v2043 = vld [vmem:[#allocation21 + $0x2b0] sm:$0xf]
    %v2044 = vld [vmem:[#allocation21 + $0x2b4] sm:$0xf]
    %v2045 = vld [vmem:[#allocation21 + $0x2b8] sm:$0xf]
    %v2046 = vld [vmem:[#allocation21 + $0x2bc] sm:$0xf]
    %v2047 = vld [vmem:[#allocation21 + $0x2c0] sm:$0xf]
    %v2048 = vld [vmem:[#allocation21 + $0x2c4] sm:$0xf]
    %v2049 = vld [vmem:[#allocation21 + $0x2c8] sm:$0xf]
    %v2050 = vld [vmem:[#allocation21 + $0x2cc] sm:$0xf]
    %v2051 = vld [vmem:[#allocation21 + $0x2d0] sm:$0xf]
    %v2052 = vld [vmem:[#allocation21 + $0x2d4] sm:$0xf]
    %v2053 = vld [vmem:[#allocation21 + $0x2d8] sm:$0xf]
    %v2054 = vld [vmem:[#allocation21 + $0x2dc] sm:$0xf]
    %v2055 = vld [vmem:[#allocation21 + $0x2e0] sm:$0xf]
    %v2056 = vld [vmem:[#allocation21 + $0x2e4] sm:$0xf]
    %v2057 = vld [vmem:[#allocation21 + $0x2e8] sm:$0xf]
    %v2058 = vld [vmem:[#allocation21 + $0x2ec] sm:$0xf]
    %v2059 = vld [vmem:[#allocation21 + $0x2f0] sm:$0xf]
    %v2060 = vld [vmem:[#allocation21 + $0x2f4] sm:$0xf]
    %v2061 = vld [vmem:[#allocation21 + $0x2f8] sm:$0xf]
    %v2062 = vld [vmem:[#allocation21 + $0x2fc] sm:$0xf]
    %v2063 = vld [vmem:[#allocation21 + $0x300] sm:$0xf]
    %v2064 = vld [vmem:[#allocation21 + $0x304] sm:$0xf]
    %v2065 = vld [vmem:[#allocation21 + $0x308] sm:$0xf]
    %v2066 = vld [vmem:[#allocation21 + $0x30c] sm:$0xf]
    %v2067 = vld [vmem:[#allocation21 + $0x310] sm:$0xf]
    %v2068 = vld [vmem:[#allocation21 + $0x314] sm:$0xf]
    %v2069 = vld [vmem:[#allocation21 + $0x318] sm:$0xf]
    %v2070 = vld [vmem:[#allocation21 + $0x31c] sm:$0xf]
    %v2071 = vld [vmem:[#allocation21 + $0x320] sm:$0xf]
    %v2072 = vld [vmem:[#allocation21 + $0x324] sm:$0xf]
    %v2073 = vld [vmem:[#allocation21 + $0x328] sm:$0xf]
    %v2074 = vld [vmem:[#allocation21 + $0x32c] sm:$0xf]
    %v2075 = vld [vmem:[#allocation21 + $0x330] sm:$0xf]
    %v2076 = vld [vmem:[#allocation21 + $0x334] sm:$0xf]
    %v2077 = vld [vmem:[#allocation21 + $0x338] sm:$0xf]
    %v2078 = vld [vmem:[#allocation21 + $0x33c] sm:$0xf]
    %v2079 = vld [vmem:[#allocation21 + $0x340] sm:$0xf]
    %v2080 = vld [vmem:[#allocation21 + $0x344] sm:$0xf]
    %v2081 = vld [vmem:[#allocation21 + $0x348] sm:$0xf]
    %v2082 = vld [vmem:[#allocation21 + $0x34c] sm:$0xf]
    %v2083 = vld [vmem:[#allocation21 + $0x350] sm:$0xf]
    %v2084 = vld [vmem:[#allocation21 + $0x354] sm:$0xf]
    %v2085 = vld [vmem:[#allocation21 + $0x358] sm:$0xf]
    %v2086 = vld [vmem:[#allocation21 + $0x35c] sm:$0xf]
    %v2087 = vld [vmem:[#allocation21 + $0x360] sm:$0xf]
    %v2088 = vld [vmem:[#allocation21 + $0x364] sm:$0xf]
    %v2089 = vld [vmem:[#allocation21 + $0x368] sm:$0xf]
    %v2090 = vld [vmem:[#allocation21 + $0x36c] sm:$0xf]
    %v2091 = vld [vmem:[#allocation21 + $0x370] sm:$0xf]
    %v2092 = vld [vmem:[#allocation21 + $0x374] sm:$0xf]
    %v2093 = vld [vmem:[#allocation21 + $0x378] sm:$0xf]
    %v2094 = vld [vmem:[#allocation21 + $0x37c] sm:$0xf]
    %v2095 = vld [vmem:[#allocation21 + $0x380] sm:$0xf]
    %v2096 = vld [vmem:[#allocation21 + $0x384] sm:$0xf]
    %v2097 = vld [vmem:[#allocation21 + $0x388] sm:$0xf]
    %v2098 = vld [vmem:[#allocation21 + $0x38c] sm:$0xf]
    %v2099 = vld [vmem:[#allocation21 + $0x390] sm:$0xf]
    %v2100 = vld [vmem:[#allocation21 + $0x394] sm:$0xf]
    %v2101 = vld [vmem:[#allocation21 + $0x398] sm:$0xf]
    %v2102 = vld [vmem:[#allocation21 + $0x39c] sm:$0xf]
    %v2103 = vld [vmem:[#allocation21 + $0x3a0] sm:$0xf]
    %v2104 = vld [vmem:[#allocation21 + $0x3a4] sm:$0xf]
    %v2105 = vld [vmem:[#allocation21 + $0x3a8] sm:$0xf]
    %v2106 = vld [vmem:[#allocation21 + $0x3ac] sm:$0xf]
    %v2107 = vld [vmem:[#allocation21 + $0x3b0] sm:$0xf]
    %v2108 = vld [vmem:[#allocation21 + $0x3b4] sm:$0xf]
    %v2109 = vld [vmem:[#allocation21 + $0x3b8] sm:$0xf]
    %v2110 = vld [vmem:[#allocation21 + $0x3bc] sm:$0xf]
    %v2111 = vld [vmem:[#allocation21 + $0x3c0] sm:$0xf]
    %v2112 = vld [vmem:[#allocation21 + $0x3c4] sm:$0xf]
    %v2113 = vld [vmem:[#allocation21 + $0x3c8] sm:$0xf]
    %v2114 = vld [vmem:[#allocation21 + $0x3cc] sm:$0xf]
    %v2115 = vld [vmem:[#allocation21 + $0x3d0] sm:$0xf]
    %v2116 = vld [vmem:[#allocation21 + $0x3d4] sm:$0xf]
    %v2117 = vld [vmem:[#allocation21 + $0x3d8] sm:$0xf]
    %v2118 = vld [vmem:[#allocation21 + $0x3dc] sm:$0xf]
    %v2119 = vld [vmem:[#allocation21 + $0x3e0] sm:$0xf]
    %v2120 = vld [vmem:[#allocation21 + $0x3e4] sm:$0xf]
    %v2121 = vld [vmem:[#allocation21 + $0x3e8] sm:$0xf]
    %v2122 = vld [vmem:[#allocation21 + $0x3ec] sm:$0xf]
    %v2123 = vld [vmem:[#allocation21 + $0x3f0] sm:$0xf]
    %v2124 = vld [vmem:[#allocation21 + $0x3f4] sm:$0xf]
    %v2125 = vld [vmem:[#allocation21 + $0x3f8] sm:$0xf]
    %v2126 = vld [vmem:[#allocation21 + $0x3fc] sm:$0xf]
    %v2127 = vld [vmem:[#allocation23] sm:$0x1]
    %v2129 = vlaneseq
    %v2130 = vshrl.u32 %v2129, 7
    %v2131 = vsub.s32 0, %v2130
    %v2132 = vrot.slane %v2127, %v2131
    %v2390 = vunpack.c.l.b16 %v1871
    %v2391 = vunpack.c.l.b16 %v1872
    %v2392 = vunpack.c.l.b16 %v1873
    %v2393 = vunpack.c.l.b16 %v1874
    %v2394 = vunpack.c.l.b16 %v1875
    %v2395 = vunpack.c.l.b16 %v1876
    %v2396 = vunpack.c.l.b16 %v1877
    %v2397 = vunpack.c.l.b16 %v1878
    %v2398 = vunpack.c.l.b16 %v1879
    %v2399 = vunpack.c.l.b16 %v1880
    %v2400 = vunpack.c.l.b16 %v1881
    %v2401 = vunpack.c.l.b16 %v1882
    %v2402 = vunpack.c.l.b16 %v1883
    %v2403 = vunpack.c.l.b16 %v1884
    %v2404 = vunpack.c.l.b16 %v1885
    %v2405 = vunpack.c.l.b16 %v1886
    %v2406 = vunpack.c.l.b16 %v1887
    %v2407 = vunpack.c.l.b16 %v1888
    %v2408 = vunpack.c.l.b16 %v1889
    %v2409 = vunpack.c.l.b16 %v1890
    %v2410 = vunpack.c.l.b16 %v1891
    %v2411 = vunpack.c.l.b16 %v1892
    %v2412 = vunpack.c.l.b16 %v1893
    %v2413 = vunpack.c.l.b16 %v1894
    %v2414 = vunpack.c.l.b16 %v1895
    %v2415 = vunpack.c.l.b16 %v1896
    %v2416 = vunpack.c.l.b16 %v1897
    %v2417 = vunpack.c.l.b16 %v1898
    %v2418 = vunpack.c.l.b16 %v1899
    %v2419 = vunpack.c.l.b16 %v1900
    %v2420 = vunpack.c.l.b16 %v1901
    %v2421 = vunpack.c.l.b16 %v1902
    %v2422 = vunpack.c.l.b16 %v1903
    %v2423 = vunpack.c.l.b16 %v1904
    %v2424 = vunpack.c.l.b16 %v1905
    %v2425 = vunpack.c.l.b16 %v1906
    %v2426 = vunpack.c.l.b16 %v1907
    %v2427 = vunpack.c.l.b16 %v1908
    %v2428 = vunpack.c.l.b16 %v1909
    %v2429 = vunpack.c.l.b16 %v1910
    %v2430 = vunpack.c.l.b16 %v1911
    %v2431 = vunpack.c.l.b16 %v1912
    %v2432 = vunpack.c.l.b16 %v1913
    %v2433 = vunpack.c.l.b16 %v1914
    %v2434 = vunpack.c.l.b16 %v1915
    %v2435 = vunpack.c.l.b16 %v1916
    %v2436 = vunpack.c.l.b16 %v1917
    %v2437 = vunpack.c.l.b16 %v1918
    %v2438 = vunpack.c.l.b16 %v1919
    %v2439 = vunpack.c.l.b16 %v1920
    %v2440 = vunpack.c.l.b16 %v1921
    %v2441 = vunpack.c.l.b16 %v1922
    %v2442 = vunpack.c.l.b16 %v1923
    %v2443 = vunpack.c.l.b16 %v1924
    %v2444 = vunpack.c.l.b16 %v1925
    %v2445 = vunpack.c.l.b16 %v1926
    %v2446 = vunpack.c.l.b16 %v1927
    %v2447 = vunpack.c.l.b16 %v1928
    %v2448 = vunpack.c.l.b16 %v1929
    %v2449 = vunpack.c.l.b16 %v1930
    %v2450 = vunpack.c.l.b16 %v1931
    %v2451 = vunpack.c.l.b16 %v1932
    %v2452 = vunpack.c.l.b16 %v1933
    %v2453 = vunpack.c.l.b16 %v1934
    %v2454 = vunpack.c.l.b16 %v1935
    %v2455 = vunpack.c.l.b16 %v1936
    %v2456 = vunpack.c.l.b16 %v1937
    %v2457 = vunpack.c.l.b16 %v1938
    %v2458 = vunpack.c.l.b16 %v1939
    %v2459 = vunpack.c.l.b16 %v1940
    %v2460 = vunpack.c.l.b16 %v1941
    %v2461 = vunpack.c.l.b16 %v1942
    %v2462 = vunpack.c.l.b16 %v1943
    %v2463 = vunpack.c.l.b16 %v1944
    %v2464 = vunpack.c.l.b16 %v1945
    %v2465 = vunpack.c.l.b16 %v1946
    %v2466 = vunpack.c.l.b16 %v1947
    %v2467 = vunpack.c.l.b16 %v1948
    %v2468 = vunpack.c.l.b16 %v1949
    %v2469 = vunpack.c.l.b16 %v1950
    %v2470 = vunpack.c.l.b16 %v1951
    %v2471 = vunpack.c.l.b16 %v1952
    %v2472 = vunpack.c.l.b16 %v1953
    %v2473 = vunpack.c.l.b16 %v1954
    %v2474 = vunpack.c.l.b16 %v1955
    %v2475 = vunpack.c.l.b16 %v1956
    %v2476 = vunpack.c.l.b16 %v1957
    %v2477 = vunpack.c.l.b16 %v1958
    %v2478 = vunpack.c.l.b16 %v1959
    %v2479 = vunpack.c.l.b16 %v1960
    %v2480 = vunpack.c.l.b16 %v1961
    %v2481 = vunpack.c.l.b16 %v1962
    %v2482 = vunpack.c.l.b16 %v1963
    %v2483 = vunpack.c.l.b16 %v1964
    %v2484 = vunpack.c.l.b16 %v1965
    %v2485 = vunpack.c.l.b16 %v1966
    %v2486 = vunpack.c.l.b16 %v1967
    %v2487 = vunpack.c.l.b16 %v1968
    %v2488 = vunpack.c.l.b16 %v1969
    %v2489 = vunpack.c.l.b16 %v1970
    %v2490 = vunpack.c.l.b16 %v1971
    %v2491 = vunpack.c.l.b16 %v1972
    %v2492 = vunpack.c.l.b16 %v1973
    %v2493 = vunpack.c.l.b16 %v1974
    %v2494 = vunpack.c.l.b16 %v1975
    %v2495 = vunpack.c.l.b16 %v1976
    %v2496 = vunpack.c.l.b16 %v1977
    %v2497 = vunpack.c.l.b16 %v1978
    %v2498 = vunpack.c.l.b16 %v1979
    %v2499 = vunpack.c.l.b16 %v1980
    %v2500 = vunpack.c.l.b16 %v1981
    %v2501 = vunpack.c.l.b16 %v1982
    %v2502 = vunpack.c.l.b16 %v1983
    %v2503 = vunpack.c.l.b16 %v1984
    %v2504 = vunpack.c.l.b16 %v1985
    %v2505 = vunpack.c.l.b16 %v1986
    %v2506 = vunpack.c.l.b16 %v1987
    %v2507 = vunpack.c.l.b16 %v1988
    %v2508 = vunpack.c.l.b16 %v1989
    %v2509 = vunpack.c.l.b16 %v1990
    %v2510 = vunpack.c.l.b16 %v1991
    %v2511 = vunpack.c.l.b16 %v1992
    %v2512 = vunpack.c.l.b16 %v1993
    %v2513 = vunpack.c.l.b16 %v1994
    %v2514 = vunpack.c.l.b16 %v1995
    %v2515 = vunpack.c.l.b16 %v1996
    %v2516 = vunpack.c.l.b16 %v1997
    %v2517 = vunpack.c.l.b16 %v1998
    %v2518 = vunpack.c.l.b16 %v1999
    %v2519 = vunpack.c.l.b16 %v2000
    %v2520 = vunpack.c.l.b16 %v2001
    %v2521 = vunpack.c.l.b16 %v2002
    %v2522 = vunpack.c.l.b16 %v2003
    %v2523 = vunpack.c.l.b16 %v2004
    %v2524 = vunpack.c.l.b16 %v2005
    %v2525 = vunpack.c.l.b16 %v2006
    %v2526 = vunpack.c.l.b16 %v2007
    %v2527 = vunpack.c.l.b16 %v2008
    %v2528 = vunpack.c.l.b16 %v2009
    %v2529 = vunpack.c.l.b16 %v2010
    %v2530 = vunpack.c.l.b16 %v2011
    %v2531 = vunpack.c.l.b16 %v2012
    %v2532 = vunpack.c.l.b16 %v2013
    %v2533 = vunpack.c.l.b16 %v2014
    %v2534 = vunpack.c.l.b16 %v2015
    %v2535 = vunpack.c.l.b16 %v2016
    %v2536 = vunpack.c.l.b16 %v2017
    %v2537 = vunpack.c.l.b16 %v2018
    %v2538 = vunpack.c.l.b16 %v2019
    %v2539 = vunpack.c.l.b16 %v2020
    %v2540 = vunpack.c.l.b16 %v2021
    %v2541 = vunpack.c.l.b16 %v2022
    %v2542 = vunpack.c.l.b16 %v2023
    %v2543 = vunpack.c.l.b16 %v2024
    %v2544 = vunpack.c.l.b16 %v2025
    %v2545 = vunpack.c.l.b16 %v2026
    %v2546 = vunpack.c.l.b16 %v2027
    %v2547 = vunpack.c.l.b16 %v2028
    %v2548 = vunpack.c.l.b16 %v2029
    %v2549 = vunpack.c.l.b16 %v2030
    %v2550 = vunpack.c.l.b16 %v2031
    %v2551 = vunpack.c.l.b16 %v2032
    %v2552 = vunpack.c.l.b16 %v2033
    %v2553 = vunpack.c.l.b16 %v2034
    %v2554 = vunpack.c.l.b16 %v2035
    %v2555 = vunpack.c.l.b16 %v2036
    %v2556 = vunpack.c.l.b16 %v2037
    %v2557 = vunpack.c.l.b16 %v2038
    %v2558 = vunpack.c.l.b16 %v2039
    %v2559 = vunpack.c.l.b16 %v2040
    %v2560 = vunpack.c.l.b16 %v2041
    %v2561 = vunpack.c.l.b16 %v2042
    %v2562 = vunpack.c.l.b16 %v2043
    %v2563 = vunpack.c.l.b16 %v2044
    %v2564 = vunpack.c.l.b16 %v2045
    %v2565 = vunpack.c.l.b16 %v2046
    %v2566 = vunpack.c.l.b16 %v2047
    %v2567 = vunpack.c.l.b16 %v2048
    %v2568 = vunpack.c.l.b16 %v2049
    %v2569 = vunpack.c.l.b16 %v2050
    %v2570 = vunpack.c.l.b16 %v2051
    %v2571 = vunpack.c.l.b16 %v2052
    %v2572 = vunpack.c.l.b16 %v2053
    %v2573 = vunpack.c.l.b16 %v2054
    %v2574 = vunpack.c.l.b16 %v2055
    %v2575 = vunpack.c.l.b16 %v2056
    %v2576 = vunpack.c.l.b16 %v2057
    %v2577 = vunpack.c.l.b16 %v2058
    %v2578 = vunpack.c.l.b16 %v2059
    %v2579 = vunpack.c.l.b16 %v2060
    %v2580 = vunpack.c.l.b16 %v2061
    %v2581 = vunpack.c.l.b16 %v2062
    %v2582 = vunpack.c.l.b16 %v2063
    %v2583 = vunpack.c.l.b16 %v2064
    %v2584 = vunpack.c.l.b16 %v2065
    %v2585 = vunpack.c.l.b16 %v2066
    %v2586 = vunpack.c.l.b16 %v2067
    %v2587 = vunpack.c.l.b16 %v2068
    %v2588 = vunpack.c.l.b16 %v2069
    %v2589 = vunpack.c.l.b16 %v2070
    %v2590 = vunpack.c.l.b16 %v2071
    %v2591 = vunpack.c.l.b16 %v2072
    %v2592 = vunpack.c.l.b16 %v2073
    %v2593 = vunpack.c.l.b16 %v2074
    %v2594 = vunpack.c.l.b16 %v2075
    %v2595 = vunpack.c.l.b16 %v2076
    %v2596 = vunpack.c.l.b16 %v2077
    %v2597 = vunpack.c.l.b16 %v2078
    %v2598 = vunpack.c.l.b16 %v2079
    %v2599 = vunpack.c.l.b16 %v2080
    %v2600 = vunpack.c.l.b16 %v2081
    %v2601 = vunpack.c.l.b16 %v2082
    %v2602 = vunpack.c.l.b16 %v2083
    %v2603 = vunpack.c.l.b16 %v2084
    %v2604 = vunpack.c.l.b16 %v2085
    %v2605 = vunpack.c.l.b16 %v2086
    %v2606 = vunpack.c.l.b16 %v2087
    %v2607 = vunpack.c.l.b16 %v2088
    %v2608 = vunpack.c.l.b16 %v2089
    %v2609 = vunpack.c.l.b16 %v2090
    %v2610 = vunpack.c.l.b16 %v2091
    %v2611 = vunpack.c.l.b16 %v2092
    %v2612 = vunpack.c.l.b16 %v2093
    %v2613 = vunpack.c.l.b16 %v2094
    %v2614 = vunpack.c.l.b16 %v2095
    %v2615 = vunpack.c.l.b16 %v2096
    %v2616 = vunpack.c.l.b16 %v2097
    %v2617 = vunpack.c.l.b16 %v2098
    %v2618 = vunpack.c.l.b16 %v2099
    %v2619 = vunpack.c.l.b16 %v2100
    %v2620 = vunpack.c.l.b16 %v2101
    %v2621 = vunpack.c.l.b16 %v2102
    %v2622 = vunpack.c.l.b16 %v2103
    %v2623 = vunpack.c.l.b16 %v2104
    %v2624 = vunpack.c.l.b16 %v2105
    %v2625 = vunpack.c.l.b16 %v2106
    %v2626 = vunpack.c.l.b16 %v2107
    %v2627 = vunpack.c.l.b16 %v2108
    %v2628 = vunpack.c.l.b16 %v2109
    %v2629 = vunpack.c.l.b16 %v2110
    %v2630 = vunpack.c.l.b16 %v2111
    %v2631 = vunpack.c.l.b16 %v2112
    %v2632 = vunpack.c.l.b16 %v2113
    %v2633 = vunpack.c.l.b16 %v2114
    %v2634 = vunpack.c.l.b16 %v2115
    %v2635 = vunpack.c.l.b16 %v2116
    %v2636 = vunpack.c.l.b16 %v2117
    %v2637 = vunpack.c.l.b16 %v2118
    %v2638 = vunpack.c.l.b16 %v2119
    %v2639 = vunpack.c.l.b16 %v2120
    %v2640 = vunpack.c.l.b16 %v2121
    %v2641 = vunpack.c.l.b16 %v2122
    %v2642 = vunpack.c.l.b16 %v2123
    %v2643 = vunpack.c.l.b16 %v2124
    %v2644 = vunpack.c.l.b16 %v2125
    %v2645 = vunpack.c.l.b16 %v2126
    %v2646 = vpack.c.b16 %v2391, %v2390
    %v2647 = vpack.c.b16 %v2393, %v2392
    %v2648 = vpack.c.b16 %v2395, %v2394
    %v2649 = vpack.c.b16 %v2397, %v2396
    %v2650 = vpack.c.b16 %v2399, %v2398
    %v2651 = vpack.c.b16 %v2401, %v2400
    %v2652 = vpack.c.b16 %v2403, %v2402
    %v2653 = vpack.c.b16 %v2405, %v2404
    %v2654 = vpack.c.b16 %v2407, %v2406
    %v2655 = vpack.c.b16 %v2409, %v2408
    %v2656 = vpack.c.b16 %v2411, %v2410
    %v2657 = vpack.c.b16 %v2413, %v2412
    %v2658 = vpack.c.b16 %v2415, %v2414
    %v2659 = vpack.c.b16 %v2417, %v2416
    %v2660 = vpack.c.b16 %v2419, %v2418
    %v2661 = vpack.c.b16 %v2421, %v2420
    %v2662 = vpack.c.b16 %v2423, %v2422
    %v2663 = vpack.c.b16 %v2425, %v2424
    %v2664 = vpack.c.b16 %v2427, %v2426
    %v2665 = vpack.c.b16 %v2429, %v2428
    %v2666 = vpack.c.b16 %v2431, %v2430
    %v2667 = vpack.c.b16 %v2433, %v2432
    %v2668 = vpack.c.b16 %v2435, %v2434
    %v2669 = vpack.c.b16 %v2437, %v2436
    %v2670 = vpack.c.b16 %v2439, %v2438
    %v2671 = vpack.c.b16 %v2441, %v2440
    %v2672 = vpack.c.b16 %v2443, %v2442
    %v2673 = vpack.c.b16 %v2445, %v2444
    %v2674 = vpack.c.b16 %v2447, %v2446
    %v2675 = vpack.c.b16 %v2449, %v2448
    %v2676 = vpack.c.b16 %v2451, %v2450
    %v2677 = vpack.c.b16 %v2453, %v2452
    %v2678 = vpack.c.b16 %v2455, %v2454
    %v2679 = vpack.c.b16 %v2457, %v2456
    %v2680 = vpack.c.b16 %v2459, %v2458
    %v2681 = vpack.c.b16 %v2461, %v2460
    %v2682 = vpack.c.b16 %v2463, %v2462
    %v2683 = vpack.c.b16 %v2465, %v2464
    %v2684 = vpack.c.b16 %v2467, %v2466
    %v2685 = vpack.c.b16 %v2469, %v2468
    %v2686 = vpack.c.b16 %v2471, %v2470
    %v2687 = vpack.c.b16 %v2473, %v2472
    %v2688 = vpack.c.b16 %v2475, %v2474
    %v2689 = vpack.c.b16 %v2477, %v2476
    %v2690 = vpack.c.b16 %v2479, %v2478
    %v2691 = vpack.c.b16 %v2481, %v2480
    %v2692 = vpack.c.b16 %v2483, %v2482
    %v2693 = vpack.c.b16 %v2485, %v2484
    %v2694 = vpack.c.b16 %v2487, %v2486
    %v2695 = vpack.c.b16 %v2489, %v2488
    %v2696 = vpack.c.b16 %v2491, %v2490
    %v2697 = vpack.c.b16 %v2493, %v2492
    %v2698 = vpack.c.b16 %v2495, %v2494
    %v2699 = vpack.c.b16 %v2497, %v2496
    %v2700 = vpack.c.b16 %v2499, %v2498
    %v2701 = vpack.c.b16 %v2501, %v2500
    %v2702 = vpack.c.b16 %v2503, %v2502
    %v2703 = vpack.c.b16 %v2505, %v2504
    %v2704 = vpack.c.b16 %v2507, %v2506
    %v2705 = vpack.c.b16 %v2509, %v2508
    %v2706 = vpack.c.b16 %v2511, %v2510
    %v2707 = vpack.c.b16 %v2513, %v2512
    %v2708 = vpack.c.b16 %v2515, %v2514
    %v2709 = vpack.c.b16 %v2517, %v2516
    %v2710 = vpack.c.b16 %v2519, %v2518
    %v2711 = vpack.c.b16 %v2521, %v2520
    %v2712 = vpack.c.b16 %v2523, %v2522
    %v2713 = vpack.c.b16 %v2525, %v2524
    %v2714 = vpack.c.b16 %v2527, %v2526
    %v2715 = vpack.c.b16 %v2529, %v2528
    %v2716 = vpack.c.b16 %v2531, %v2530
    %v2717 = vpack.c.b16 %v2533, %v2532
    %v2718 = vpack.c.b16 %v2535, %v2534
    %v2719 = vpack.c.b16 %v2537, %v2536
    %v2720 = vpack.c.b16 %v2539, %v2538
    %v2721 = vpack.c.b16 %v2541, %v2540
    %v2722 = vpack.c.b16 %v2543, %v2542
    %v2723 = vpack.c.b16 %v2545, %v2544
    %v2724 = vpack.c.b16 %v2547, %v2546
    %v2725 = vpack.c.b16 %v2549, %v2548
    %v2726 = vpack.c.b16 %v2551, %v2550
    %v2727 = vpack.c.b16 %v2553, %v2552
    %v2728 = vpack.c.b16 %v2555, %v2554
    %v2729 = vpack.c.b16 %v2557, %v2556
    %v2730 = vpack.c.b16 %v2559, %v2558
    %v2731 = vpack.c.b16 %v2561, %v2560
    %v2732 = vpack.c.b16 %v2563, %v2562
    %v2733 = vpack.c.b16 %v2565, %v2564
    %v2734 = vpack.c.b16 %v2567, %v2566
    %v2735 = vpack.c.b16 %v2569, %v2568
    %v2736 = vpack.c.b16 %v2571, %v2570
    %v2737 = vpack.c.b16 %v2573, %v2572
    %v2738 = vpack.c.b16 %v2575, %v2574
    %v2739 = vpack.c.b16 %v2577, %v2576
    %v2740 = vpack.c.b16 %v2579, %v2578
    %v2741 = vpack.c.b16 %v2581, %v2580
    %v2742 = vpack.c.b16 %v2583, %v2582
    %v2743 = vpack.c.b16 %v2585, %v2584
    %v2744 = vpack.c.b16 %v2587, %v2586
    %v2745 = vpack.c.b16 %v2589, %v2588
    %v2746 = vpack.c.b16 %v2591, %v2590
    %v2747 = vpack.c.b16 %v2593, %v2592
    %v2748 = vpack.c.b16 %v2595, %v2594
    %v2749 = vpack.c.b16 %v2597, %v2596
    %v2750 = vpack.c.b16 %v2599, %v2598
    %v2751 = vpack.c.b16 %v2601, %v2600
    %v2752 = vpack.c.b16 %v2603, %v2602
    %v2753 = vpack.c.b16 %v2605, %v2604
    %v2754 = vpack.c.b16 %v2607, %v2606
    %v2755 = vpack.c.b16 %v2609, %v2608
    %v2756 = vpack.c.b16 %v2611, %v2610
    %v2757 = vpack.c.b16 %v2613, %v2612
    %v2758 = vpack.c.b16 %v2615, %v2614
    %v2759 = vpack.c.b16 %v2617, %v2616
    %v2760 = vpack.c.b16 %v2619, %v2618
    %v2761 = vpack.c.b16 %v2621, %v2620
    %v2762 = vpack.c.b16 %v2623, %v2622
    %v2763 = vpack.c.b16 %v2625, %v2624
    %v2764 = vpack.c.b16 %v2627, %v2626
    %v2765 = vpack.c.b16 %v2629, %v2628
    %v2766 = vpack.c.b16 %v2631, %v2630
    %v2767 = vpack.c.b16 %v2633, %v2632
    %v2768 = vpack.c.b16 %v2635, %v2634
    %v2769 = vpack.c.b16 %v2637, %v2636
    %v2770 = vpack.c.b16 %v2639, %v2638
    %v2771 = vpack.c.b16 %v2641, %v2640
    %v2772 = vpack.c.b16 %v2643, %v2642
    %v2773 = vpack.c.b16 %v2645, %v2644
    %2902 = vmatprep.subr.bf16.mxu0 0
    %2903 = vmatpush1.bf16.msra.mxu0 %v2646
    %2904 = vmatprep.subr.bf16.mxu0 0
    %2905 = vmatpush1.bf16.msra.mxu0 %v2647
    %2906 = vmatprep.subr.bf16.mxu0 0
    %2907 = vmatpush1.bf16.msra.mxu0 %v2648
    %2908 = vmatprep.subr.bf16.mxu0 0
    %2909 = vmatpush1.bf16.msra.mxu0 %v2649
    %2910 = vmatprep.subr.bf16.mxu0 0
    %2911 = vmatpush1.bf16.msra.mxu0 %v2650
    %2912 = vmatprep.subr.bf16.mxu0 0
    %2913 = vmatpush1.bf16.msra.mxu0 %v2651
    %2914 = vmatprep.subr.bf16.mxu0 0
    %2915 = vmatpush1.bf16.msra.mxu0 %v2652
    %2916 = vmatprep.subr.bf16.mxu0 0
    %2917 = vmatpush1.bf16.msra.mxu0 %v2653
    %2918 = vmatprep.subr.bf16.mxu0 0
    %2919 = vmatpush1.bf16.msra.mxu0 %v2654
    %2920 = vmatprep.subr.bf16.mxu0 0
    %2921 = vmatpush1.bf16.msra.mxu0 %v2655
    %2922 = vmatprep.subr.bf16.mxu0 0
    %2923 = vmatpush1.bf16.msra.mxu0 %v2656
    %2924 = vmatprep.subr.bf16.mxu0 0
    %2925 = vmatpush1.bf16.msra.mxu0 %v2657
    %2926 = vmatprep.subr.bf16.mxu0 0
    %2927 = vmatpush1.bf16.msra.mxu0 %v2658
    %2928 = vmatprep.subr.bf16.mxu0 0
    %2929 = vmatpush1.bf16.msra.mxu0 %v2659
    %2930 = vmatprep.subr.bf16.mxu0 0
    %2931 = vmatpush1.bf16.msra.mxu0 %v2660
    %2932 = vmatprep.subr.bf16.mxu0 0
    %2933 = vmatpush1.bf16.msra.mxu0 %v2661
    %2934 = vmatprep.mubr.bf16.mxu0 %v1856
    %2935 = vmatmul.mubr.bf16.gmra.mrb[0].mxu0 %v1855
    %v2936 = vpop.f32.mrb[0].mxu0
    %v2937 = vadd.f32 %v2132, %v2936
    %v2938 = vpop.f32.mrb[0].mxu0
    %v2939 = vpop.f32.mrb[0].mxu0
    %v2940 = vadd.f32 %v2132, %v2939
    %v2941 = vpop.f32.mrb[0].mxu0
    %2942 = vdwg.mxu0
    %2943 = vmatprep.subr.bf16.mxu0 0
    %2944 = vmatpush1.bf16.msra.mxu0 %v2662
    %2945 = vmatprep.subr.bf16.mxu0 0
    %2946 = vmatpush1.bf16.msra.mxu0 %v2663
    %2947 = vmatprep.subr.bf16.mxu0 0
    %2948 = vmatpush1.bf16.msra.mxu0 %v2664
    %2949 = vmatprep.subr.bf16.mxu0 0
    %2950 = vmatpush1.bf16.msra.mxu0 %v2665
    %2951 = vmatprep.subr.bf16.mxu0 0
    %2952 = vmatpush1.bf16.msra.mxu0 %v2666
    %2953 = vmatprep.subr.bf16.mxu0 0
    %2954 = vmatpush1.bf16.msra.mxu0 %v2667
    %2955 = vmatprep.subr.bf16.mxu0 0
    %2956 = vmatpush1.bf16.msra.mxu0 %v2668
    %2957 = vmatprep.subr.bf16.mxu0 0
    %2958 = vmatpush1.bf16.msra.mxu0 %v2669
    %2959 = vmatprep.subr.bf16.mxu0 0
    %2960 = vmatpush1.bf16.msra.mxu0 %v2670
    %2961 = vmatprep.subr.bf16.mxu0 0
    %2962 = vmatpush1.bf16.msra.mxu0 %v2671
    %2963 = vmatprep.subr.bf16.mxu0 0
    %2964 = vmatpush1.bf16.msra.mxu0 %v2672
    %2965 = vmatprep.subr.bf16.mxu0 0
    %2966 = vmatpush1.bf16.msra.mxu0 %v2673
    %2967 = vmatprep.subr.bf16.mxu0 0
    %2968 = vmatpush1.bf16.msra.mxu0 %v2674
    %2969 = vmatprep.subr.bf16.mxu0 0
    %2970 = vmatpush1.bf16.msra.mxu0 %v2675
    %2971 = vmatprep.subr.bf16.mxu0 0
    %2972 = vmatpush1.bf16.msra.mxu0 %v2676
    %2973 = vmatprep.subr.bf16.mxu0 0
    %2974 = vmatpush1.bf16.msra.mxu0 %v2677
    %2975 = vmatprep.mubr.bf16.mxu0 %v1858
    %2976 = vmatmul.mubr.bf16.gmra.mrb[0].mxu0 %v1857
    %v2977 = vpop.f32.mrb[0].mxu0
    %v2978 = vadd.f32 %v2937, %v2977
    %v2979 = vpop.f32.mrb[0].mxu0
    %v2980 = vpop.f32.mrb[0].mxu0
    %v2981 = vadd.f32 %v2940, %v2980
    %v2982 = vpop.f32.mrb[0].mxu0
    %2983 = vdwg.mxu0
    %2984 = vmatprep.subr.bf16.mxu0 0
    %2985 = vmatpush1.bf16.msra.mxu0 %v2678
    %2986 = vmatprep.subr.bf16.mxu0 0
    %2987 = vmatpush1.bf16.msra.mxu0 %v2679
    %2988 = vmatprep.subr.bf16.mxu0 0
    %2989 = vmatpush1.bf16.msra.mxu0 %v2680
    %2990 = vmatprep.subr.bf16.mxu0 0
    %2991 = vmatpush1.bf16.msra.mxu0 %v2681
    %2992 = vmatprep.subr.bf16.mxu0 0
    %2993 = vmatpush1.bf16.msra.mxu0 %v2682
    %2994 = vmatprep.subr.bf16.mxu0 0
    %2995 = vmatpush1.bf16.msra.mxu0 %v2683
    %2996 = vmatprep.subr.bf16.mxu0 0
    %2997 = vmatpush1.bf16.msra.mxu0 %v2684
    %2998 = vmatprep.subr.bf16.mxu0 0
    %2999 = vmatpush1.bf16.msra.mxu0 %v2685
    %3000 = vmatprep.subr.bf16.mxu0 0
    %3001 = vmatpush1.bf16.msra.mxu0 %v2686
    %3002 = vmatprep.subr.bf16.mxu0 0
    %3003 = vmatpush1.bf16.msra.mxu0 %v2687
    %3004 = vmatprep.subr.bf16.mxu0 0
    %3005 = vmatpush1.bf16.msra.mxu0 %v2688
    %3006 = vmatprep.subr.bf16.mxu0 0
    %3007 = vmatpush1.bf16.msra.mxu0 %v2689
    %3008 = vmatprep.subr.bf16.mxu0 0
    %3009 = vmatpush1.bf16.msra.mxu0 %v2690
    %3010 = vmatprep.subr.bf16.mxu0 0
    %3011 = vmatpush1.bf16.msra.mxu0 %v2691
    %3012 = vmatprep.subr.bf16.mxu0 0
    %3013 = vmatpush1.bf16.msra.mxu0 %v2692
    %3014 = vmatprep.subr.bf16.mxu0 0
    %3015 = vmatpush1.bf16.msra.mxu0 %v2693
    %3016 = vmatprep.mubr.bf16.mxu0 %v1860
    %3017 = vmatmul.mubr.bf16.gmra.mrb[0].mxu0 %v1859
    %v3018 = vpop.f32.mrb[0].mxu0
    %v3019 = vadd.f32 %v2978, %v3018
    %v3020 = vpop.f32.mrb[0].mxu0
    %v3021 = vpop.f32.mrb[0].mxu0
    %v3022 = vadd.f32 %v2981, %v3021
    %v3023 = vpop.f32.mrb[0].mxu0
    %3024 = vdwg.mxu0
    %3025 = vmatprep.subr.bf16.mxu0 0
    %3026 = vmatpush1.bf16.msra.mxu0 %v2694
    %3027 = vmatprep.subr.bf16.mxu0 0
    %3028 = vmatpush1.bf16.msra.mxu0 %v2695
    %3029 = vmatprep.subr.bf16.mxu0 0
    %3030 = vmatpush1.bf16.msra.mxu0 %v2696
    %3031 = vmatprep.subr.bf16.mxu0 0
    %3032 = vmatpush1.bf16.msra.mxu0 %v2697
    %3033 = vmatprep.subr.bf16.mxu0 0
    %3034 = vmatpush1.bf16.msra.mxu0 %v2698
    %3035 = vmatprep.subr.bf16.mxu0 0
    %3036 = vmatpush1.bf16.msra.mxu0 %v2699
    %3037 = vmatprep.subr.bf16.mxu0 0
    %3038 = vmatpush1.bf16.msra.mxu0 %v2700
    %3039 = vmatprep.subr.bf16.mxu0 0
    %3040 = vmatpush1.bf16.msra.mxu0 %v2701
    %3041 = vmatprep.subr.bf16.mxu0 0
    %3042 = vmatpush1.bf16.msra.mxu0 %v2702
    %3043 = vmatprep.subr.bf16.mxu0 0
    %3044 = vmatpush1.bf16.msra.mxu0 %v2703
    %3045 = vmatprep.subr.bf16.mxu0 0
    %3046 = vmatpush1.bf16.msra.mxu0 %v2704
    %3047 = vmatprep.subr.bf16.mxu0 0
    %3048 = vmatpush1.bf16.msra.mxu0 %v2705
    %3049 = vmatprep.subr.bf16.mxu0 0
    %3050 = vmatpush1.bf16.msra.mxu0 %v2706
    %3051 = vmatprep.subr.bf16.mxu0 0
    %3052 = vmatpush1.bf16.msra.mxu0 %v2707
    %3053 = vmatprep.subr.bf16.mxu0 0
    %3054 = vmatpush1.bf16.msra.mxu0 %v2708
    %3055 = vmatprep.subr.bf16.mxu0 0
    %3056 = vmatpush1.bf16.msra.mxu0 %v2709
    %3057 = vmatprep.mubr.bf16.mxu0 %v1862
    %3058 = vmatmul.mubr.bf16.gmra.mrb[0].mxu0 %v1861
    %v3059 = vpop.f32.mrb[0].mxu0
    %v3060 = vadd.f32 %v3019, %v3059
    %v3061 = vpop.f32.mrb[0].mxu0
    %v3062 = vpop.f32.mrb[0].mxu0
    %v3063 = vadd.f32 %v3022, %v3062
    %v3064 = vpop.f32.mrb[0].mxu0
    %3065 = vdwg.mxu0
    %3066 = vmatprep.subr.bf16.mxu0 0
    %3067 = vmatpush1.bf16.msra.mxu0 %v2710
    %3068 = vmatprep.subr.bf16.mxu0 0
    %3069 = vmatpush1.bf16.msra.mxu0 %v2711
    %3070 = vmatprep.subr.bf16.mxu0 0
    %3071 = vmatpush1.bf16.msra.mxu0 %v2712
    %3072 = vmatprep.subr.bf16.mxu0 0
    %3073 = vmatpush1.bf16.msra.mxu0 %v2713
    %3074 = vmatprep.subr.bf16.mxu0 0
    %3075 = vmatpush1.bf16.msra.mxu0 %v2714
    %3076 = vmatprep.subr.bf16.mxu0 0
    %3077 = vmatpush1.bf16.msra.mxu0 %v2715
    %3078 = vmatprep.subr.bf16.mxu0 0
    %3079 = vmatpush1.bf16.msra.mxu0 %v2716
    %3080 = vmatprep.subr.bf16.mxu0 0
    %3081 = vmatpush1.bf16.msra.mxu0 %v2717
    %3082 = vmatprep.subr.bf16.mxu0 0
    %3083 = vmatpush1.bf16.msra.mxu0 %v2718
    %3084 = vmatprep.subr.bf16.mxu0 0
    %3085 = vmatpush1.bf16.msra.mxu0 %v2719
    %3086 = vmatprep.subr.bf16.mxu0 0
    %3087 = vmatpush1.bf16.msra.mxu0 %v2720
    %3088 = vmatprep.subr.bf16.mxu0 0
    %3089 = vmatpush1.bf16.msra.mxu0 %v2721
    %3090 = vmatprep.subr.bf16.mxu0 0
    %3091 = vmatpush1.bf16.msra.mxu0 %v2722
    %3092 = vmatprep.subr.bf16.mxu0 0
    %3093 = vmatpush1.bf16.msra.mxu0 %v2723
    %3094 = vmatprep.subr.bf16.mxu0 0
    %3095 = vmatpush1.bf16.msra.mxu0 %v2724
    %3096 = vmatprep.subr.bf16.mxu0 0
    %3097 = vmatpush1.bf16.msra.mxu0 %v2725
    %3098 = vmatprep.mubr.bf16.mxu0 %v1864
    %3099 = vmatmul.mubr.bf16.gmra.mrb[0].mxu0 %v1863
    %v3100 = vpop.f32.mrb[0].mxu0
    %v3101 = vadd.f32 %v3060, %v3100
    %v3102 = vpop.f32.mrb[0].mxu0
    %v3103 = vpop.f32.mrb[0].mxu0
    %v3104 = vadd.f32 %v3063, %v3103
    %v3105 = vpop.f32.mrb[0].mxu0
    %3106 = vdwg.mxu0
    %3107 = vmatprep.subr.bf16.mxu0 0
    %3108 = vmatpush1.bf16.msra.mxu0 %v2726
    %3109 = vmatprep.subr.bf16.mxu0 0
    %3110 = vmatpush1.bf16.msra.mxu0 %v2727
    %3111 = vmatprep.subr.bf16.mxu0 0
    %3112 = vmatpush1.bf16.msra.mxu0 %v2728
    %3113 = vmatprep.subr.bf16.mxu0 0
    %3114 = vmatpush1.bf16.msra.mxu0 %v2729
    %3115 = vmatprep.subr.bf16.mxu0 0
    %3116 = vmatpush1.bf16.msra.mxu0 %v2730
    %3117 = vmatprep.subr.bf16.mxu0 0
    %3118 = vmatpush1.bf16.msra.mxu0 %v2731
    %3119 = vmatprep.subr.bf16.mxu0 0
    %3120 = vmatpush1.bf16.msra.mxu0 %v2732
    %3121 = vmatprep.subr.bf16.mxu0 0
    %3122 = vmatpush1.bf16.msra.mxu0 %v2733
    %3123 = vmatprep.subr.bf16.mxu0 0
    %3124 = vmatpush1.bf16.msra.mxu0 %v2734
    %3125 = vmatprep.subr.bf16.mxu0 0
    %3126 = vmatpush1.bf16.msra.mxu0 %v2735
    %3127 = vmatprep.subr.bf16.mxu0 0
    %3128 = vmatpush1.bf16.msra.mxu0 %v2736
    %3129 = vmatprep.subr.bf16.mxu0 0
    %3130 = vmatpush1.bf16.msra.mxu0 %v2737
    %3131 = vmatprep.subr.bf16.mxu0 0
    %3132 = vmatpush1.bf16.msra.mxu0 %v2738
    %3133 = vmatprep.subr.bf16.mxu0 0
    %3134 = vmatpush1.bf16.msra.mxu0 %v2739
    %3135 = vmatprep.subr.bf16.mxu0 0
    %3136 = vmatpush1.bf16.msra.mxu0 %v2740
    %3137 = vmatprep.subr.bf16.mxu0 0
    %3138 = vmatpush1.bf16.msra.mxu0 %v2741
    %3139 = vmatprep.mubr.bf16.mxu0 %v1866
    %3140 = vmatmul.mubr.bf16.gmra.mrb[0].mxu0 %v1865
    %v3141 = vpop.f32.mrb[0].mxu0
    %v3142 = vadd.f32 %v3101, %v3141
    %v3143 = vpop.f32.mrb[0].mxu0
    %v3144 = vpop.f32.mrb[0].mxu0
    %v3145 = vadd.f32 %v3104, %v3144
    %v3146 = vpop.f32.mrb[0].mxu0
    %3147 = vdwg.mxu0
    %3148 = vmatprep.subr.bf16.mxu0 0
    %3149 = vmatpush1.bf16.msra.mxu0 %v2742
    %3150 = vmatprep.subr.bf16.mxu0 0
    %3151 = vmatpush1.bf16.msra.mxu0 %v2743
    %3152 = vmatprep.subr.bf16.mxu0 0
    %3153 = vmatpush1.bf16.msra.mxu0 %v2744
    %3154 = vmatprep.subr.bf16.mxu0 0
    %3155 = vmatpush1.bf16.msra.mxu0 %v2745
    %3156 = vmatprep.subr.bf16.mxu0 0
    %3157 = vmatpush1.bf16.msra.mxu0 %v2746
    %3158 = vmatprep.subr.bf16.mxu0 0
    %3159 = vmatpush1.bf16.msra.mxu0 %v2747
    %3160 = vmatprep.subr.bf16.mxu0 0
    %3161 = vmatpush1.bf16.msra.mxu0 %v2748
    %3162 = vmatprep.subr.bf16.mxu0 0
    %3163 = vmatpush1.bf16.msra.mxu0 %v2749
    %3164 = vmatprep.subr.bf16.mxu0 0
    %3165 = vmatpush1.bf16.msra.mxu0 %v2750
    %3166 = vmatprep.subr.bf16.mxu0 0
    %3167 = vmatpush1.bf16.msra.mxu0 %v2751
    %3168 = vmatprep.subr.bf16.mxu0 0
    %3169 = vmatpush1.bf16.msra.mxu0 %v2752
    %3170 = vmatprep.subr.bf16.mxu0 0
    %3171 = vmatpush1.bf16.msra.mxu0 %v2753
    %3172 = vmatprep.subr.bf16.mxu0 0
    %3173 = vmatpush1.bf16.msra.mxu0 %v2754
    %3174 = vmatprep.subr.bf16.mxu0 0
    %3175 = vmatpush1.bf16.msra.mxu0 %v2755
    %3176 = vmatprep.subr.bf16.mxu0 0
    %3177 = vmatpush1.bf16.msra.mxu0 %v2756
    %3178 = vmatprep.subr.bf16.mxu0 0
    %3179 = vmatpush1.bf16.msra.mxu0 %v2757
    %3180 = vmatprep.mubr.bf16.mxu0 %v1868
    %3181 = vmatmul.mubr.bf16.gmra.mrb[0].mxu0 %v1867
    %v3182 = vpop.f32.mrb[0].mxu0
    %v3183 = vadd.f32 %v3142, %v3182
    %v3184 = vpop.f32.mrb[0].mxu0
    %v3185 = vpop.f32.mrb[0].mxu0
    %v3186 = vadd.f32 %v3145, %v3185
    %v3187 = vpop.f32.mrb[0].mxu0
    %3188 = vdwg.mxu0
    %3189 = vmatprep.subr.bf16.mxu0 0
    %3190 = vmatpush1.bf16.msra.mxu0 %v2758
    %3191 = vmatprep.subr.bf16.mxu0 0
    %3192 = vmatpush1.bf16.msra.mxu0 %v2759
    %3193 = vmatprep.subr.bf16.mxu0 0
    %3194 = vmatpush1.bf16.msra.mxu0 %v2760
    %3195 = vmatprep.subr.bf16.mxu0 0
    %3196 = vmatpush1.bf16.msra.mxu0 %v2761
    %3197 = vmatprep.subr.bf16.mxu0 0
    %3198 = vmatpush1.bf16.msra.mxu0 %v2762
    %3199 = vmatprep.subr.bf16.mxu0 0
    %3200 = vmatpush1.bf16.msra.mxu0 %v2763
    %3201 = vmatprep.subr.bf16.mxu0 0
    %3202 = vmatpush1.bf16.msra.mxu0 %v2764
    %3203 = vmatprep.subr.bf16.mxu0 0
    %3204 = vmatpush1.bf16.msra.mxu0 %v2765
    %3205 = vmatprep.subr.bf16.mxu0 0
    %3206 = vmatpush1.bf16.msra.mxu0 %v2766
    %3207 = vmatprep.subr.bf16.mxu0 0
    %3208 = vmatpush1.bf16.msra.mxu0 %v2767
    %3209 = vmatprep.subr.bf16.mxu0 0
    %3210 = vmatpush1.bf16.msra.mxu0 %v2768
    %3211 = vmatprep.subr.bf16.mxu0 0
    %3212 = vmatpush1.bf16.msra.mxu0 %v2769
    %3213 = vmatprep.subr.bf16.mxu0 0
    %3214 = vmatpush1.bf16.msra.mxu0 %v2770
    %3215 = vmatprep.subr.bf16.mxu0 0
    %3216 = vmatpush1.bf16.msra.mxu0 %v2771
    %3217 = vmatprep.subr.bf16.mxu0 0
    %3218 = vmatpush1.bf16.msra.mxu0 %v2772
    %3219 = vmatprep.subr.bf16.mxu0 0
    %3220 = vmatpush1.bf16.msra.mxu0 %v2773
    %3221 = vmatprep.mubr.bf16.mxu0 %v1870
    %3222 = vmatmul.mubr.bf16.gmra.mrb[0].mxu0 %v1869
    %v3223 = vpop.f32.mrb[0].mxu0
    %v3224 = vadd.f32 %v3183, %v3223
    %v3225 = vpop.f32.mrb[0].mxu0
    %v3226 = vpop.f32.mrb[0].mxu0
    %v3227 = vadd.f32 %v3186, %v3226
    %v3228 = vpop.f32.mrb[0].mxu0
    %3229 = vdwg.mxu0
    %v3230 = vadd.f32 %v624, %v3224
    %v3231 = vadd.f32 %v625, %v3227
    %v3232 = vld [vmem:[#allocation24] sm:$0x1]
    %v3233 = vld [vmem:[#allocation26] sm:$0x1]
    %3234 = vadd.xlane.f32.xlu0 %v3230
    %v3235 = vpop.xlane.xlu0 %3234
    %3236 = vadd.xlane.f32.xlu0 %v3231
    %v3237 = vpop.xlane.xlu0 %3236
    %v3238 = vmul.f32 %v3235, 0.0078125
    %v3239 = vmul.f32 %v3237, 0.0078125
    %v3240 = vsub.f32 %v3230, %v3238
    %v3241 = vsub.f32 %v3231, %v3239
    %v3242 = vmul.f32 %v3240, %v3240
    %v3243 = vmul.f32 %v3241, %v3241
    %3244 = vadd.xlane.f32.xlu0 %v3242
    %v3245 = vpop.xlane.xlu0 %3244
    %3246 = vadd.xlane.f32.xlu0 %v3243
    %v3247 = vpop.xlane.xlu0 %3246
    %v3248 = vmul.f32 %v3245, 0.0078125
    %v3249 = vmul.f32 %v3247, 0.0078125
    %v3250 = vadd.f32 %v3248, 1e-05
    %v3251 = vadd.f32 %v3249, 1e-05
    %v3252 = vrsqrt.pop %v3250
    %v3253 = vrsqrt.pop %v3251
    %v3254 = vmul.f32 %v3240, %v3252
    %v3255 = vmul.f32 %v3241, %v3253
    %v3257 = vlaneseq
    %v3258 = vshrl.u32 %v3257, 7
    %v3259 = vsub.s32 0, %v3258
    %v3260 = vrot.slane %v3232, %v3259
    %v3262 = vmul.f32 %v3254, %v3260
    %v3263 = vmul.f32 %v3255, %v3260
    %v3265 = vlaneseq
    %v3266 = vshrl.u32 %v3265, 7
    %v3267 = vsub.s32 0, %v3266
    %v3268 = vrot.slane %v3233, %v3267
    %v3270 = vadd.f32 %v3262, %v3268
    %v3271 = vadd.f32 %v3263, %v3268
    %v3272 = vpack.c.bf16 %v3271, %v3270
    %s3273 = scalar_lea.vmem [#allocation9], 64
    %v3274 = vld [vmem:[%s3273] sm:$0xf]
    %v3275 = vld [vmem:[%s3273 + $0x4] sm:$0xf]
    %v3276 = vld [vmem:[%s3273 + $0x8] sm:$0xf]
    %v3277 = vld [vmem:[%s3273 + $0xc] sm:$0xf]
    %v3278 = vld [vmem:[%s3273 + $0x10] sm:$0xf]
    %v3279 = vld [vmem:[%s3273 + $0x14] sm:$0xf]
    %v3280 = vld [vmem:[%s3273 + $0x18] sm:$0xf]
    %v3281 = vld [vmem:[%s3273 + $0x1c] sm:$0xf]
    %v3282 = vld [vmem:[%s3273 + $0x20] sm:$0xf]
    %v3283 = vld [vmem:[%s3273 + $0x24] sm:$0xf]
    %v3284 = vld [vmem:[%s3273 + $0x28] sm:$0xf]
    %v3285 = vld [vmem:[%s3273 + $0x2c] sm:$0xf]
    %v3286 = vld [vmem:[%s3273 + $0x30] sm:$0xf]
    %v3287 = vld [vmem:[%s3273 + $0x34] sm:$0xf]
    %v3288 = vld [vmem:[%s3273 + $0x38] sm:$0xf]
    %v3289 = vld [vmem:[%s3273 + $0x3c] sm:$0xf]
    %s3290 = scalar_lea.vmem [#allocation11], 1
    %v3291 = vld [vmem:[%s3290] sm:$0x1]
    %v3293 = vlaneseq
    %v3294 = vshrl.u32 %v3293, 7
    %v3295 = vsub.s32 0, %v3294
    %v3296 = vrot.slane %v3291, %v3295
    %v3314 = vunpack.c.l.b16 %v3274
    %v3315 = vunpack.c.l.b16 %v3275
    %v3316 = vunpack.c.l.b16 %v3276
    %v3317 = vunpack.c.l.b16 %v3277
    %v3318 = vunpack.c.l.b16 %v3278
    %v3319 = vunpack.c.l.b16 %v3279
    %v3320 = vunpack.c.l.b16 %v3280
    %v3321 = vunpack.c.l.b16 %v3281
    %v3322 = vunpack.c.l.b16 %v3282
    %v3323 = vunpack.c.l.b16 %v3283
    %v3324 = vunpack.c.l.b16 %v3284
    %v3325 = vunpack.c.l.b16 %v3285
    %v3326 = vunpack.c.l.b16 %v3286
    %v3327 = vunpack.c.l.b16 %v3287
    %v3328 = vunpack.c.l.b16 %v3288
    %v3329 = vunpack.c.l.b16 %v3289
    %v3330 = vpack.c.b16 %v3315, %v3314
    %v3331 = vpack.c.b16 %v3317, %v3316
    %v3332 = vpack.c.b16 %v3319, %v3318
    %v3333 = vpack.c.b16 %v3321, %v3320
    %v3334 = vpack.c.b16 %v3323, %v3322
    %v3335 = vpack.c.b16 %v3325, %v3324
    %v3336 = vpack.c.b16 %v3327, %v3326
    %v3337 = vpack.c.b16 %v3329, %v3328
    %3346 = vmatprep.subr.bf16.mxu0 0
    %3347 = vmatpush1.bf16.msra.mxu0 %v3330
    %3348 = vmatprep.subr.bf16.mxu0 0
    %3349 = vmatpush1.bf16.msra.mxu0 %v3331
    %3350 = vmatprep.subr.bf16.mxu0 0
    %3351 = vmatpush1.bf16.msra.mxu0 %v3332
    %3352 = vmatprep.subr.bf16.mxu0 0
    %3353 = vmatpush1.bf16.msra.mxu0 %v3333
    %3354 = vmatprep.subr.bf16.mxu0 0
    %3355 = vmatpush1.bf16.msra.mxu0 %v3334
    %3356 = vmatprep.subr.bf16.mxu0 0
    %3357 = vmatpush1.bf16.msra.mxu0 %v3335
    %3358 = vmatprep.subr.bf16.mxu0 0
    %3359 = vmatpush1.bf16.msra.mxu0 %v3336
    %3360 = vmatprep.subr.bf16.mxu0 0
    %3361 = vmatpush1.bf16.msra.mxu0 %v3337
    %3362 = vmatprep.subr.bf16.mxu0 0
    %3363 = vmatpush1.bf16.msra.mxu0 0
    %3364 = vmatprep.subr.bf16.mxu0 0
    %3365 = vmatpush1.bf16.msra.mxu0 0
    %3366 = vmatprep.subr.bf16.mxu0 0
    %3367 = vmatpush1.bf16.msra.mxu0 0
    %3368 = vmatprep.subr.bf16.mxu0 0
    %3369 = vmatpush1.bf16.msra.mxu0 0
    %3370 = vmatprep.subr.bf16.mxu0 0
    %3371 = vmatpush1.bf16.msra.mxu0 0
    %3372 = vmatprep.subr.bf16.mxu0 0
    %3373 = vmatpush1.bf16.msra.mxu0 0
    %3374 = vmatprep.subr.bf16.mxu0 0
    %3375 = vmatpush1.bf16.msra.mxu0 0
    %3376 = vmatprep.subr.bf16.mxu0 0
    %3377 = vmatpush1.bf16.msra.mxu0 0
    %3378 = vmatprep.mubr.bf16.mxu0 0
    %3379 = vmatmul.mubr.bf16.gmra.mrb[0].mxu0 %v3272
    %v3380 = vpop.f32.mrb[0].mxu0
    %v3381 = vadd.f32 %v3296, %v3380
    %v3382 = vpop.f32.mrb[0].mxu0
    %v3383 = vpop.f32.mrb[0].mxu0
    %v3384 = vadd.f32 %v3296, %v3383
    %v3385 = vpop.f32.mrb[0].mxu0
    %3386 = vdwg.mxu0
    %v3387 = vpack.c.bf16 %v3384, %v3381
    %s3388 = scalar_lea.vmem [#allocation12], 64
    %v3389 = vld [vmem:[%s3388] sm:$0xf]
    %v3390 = vld [vmem:[%s3388 + $0x4] sm:$0xf]
    %v3391 = vld [vmem:[%s3388 + $0x8] sm:$0xf]
    %v3392 = vld [vmem:[%s3388 + $0xc] sm:$0xf]
    %v3393 = vld [vmem:[%s3388 + $0x10] sm:$0xf]
    %v3394 = vld [vmem:[%s3388 + $0x14] sm:$0xf]
    %v3395 = vld [vmem:[%s3388 + $0x18] sm:$0xf]
    %v3396 = vld [vmem:[%s3388 + $0x1c] sm:$0xf]
    %v3397 = vld [vmem:[%s3388 + $0x20] sm:$0xf]
    %v3398 = vld [vmem:[%s3388 + $0x24] sm:$0xf]
    %v3399 = vld [vmem:[%s3388 + $0x28] sm:$0xf]
    %v3400 = vld [vmem:[%s3388 + $0x2c] sm:$0xf]
    %v3401 = vld [vmem:[%s3388 + $0x30] sm:$0xf]
    %v3402 = vld [vmem:[%s3388 + $0x34] sm:$0xf]
    %v3403 = vld [vmem:[%s3388 + $0x38] sm:$0xf]
    %v3404 = vld [vmem:[%s3388 + $0x3c] sm:$0xf]
    %s3405 = scalar_lea.vmem [#allocation14], 1
    %v3406 = vld [vmem:[%s3405] sm:$0x1]
    %v3408 = vlaneseq
    %v3409 = vshrl.u32 %v3408, 7
    %v3410 = vsub.s32 0, %v3409
    %v3411 = vrot.slane %v3406, %v3410
    %v3429 = vunpack.c.l.b16 %v3389
    %v3430 = vunpack.c.l.b16 %v3390
    %v3431 = vunpack.c.l.b16 %v3391
    %v3432 = vunpack.c.l.b16 %v3392
    %v3433 = vunpack.c.l.b16 %v3393
    %v3434 = vunpack.c.l.b16 %v3394
    %v3435 = vunpack.c.l.b16 %v3395
    %v3436 = vunpack.c.l.b16 %v3396
    %v3437 = vunpack.c.l.b16 %v3397
    %v3438 = vunpack.c.l.b16 %v3398
    %v3439 = vunpack.c.l.b16 %v3399
    %v3440 = vunpack.c.l.b16 %v3400
    %v3441 = vunpack.c.l.b16 %v3401
    %v3442 = vunpack.c.l.b16 %v3402
    %v3443 = vunpack.c.l.b16 %v3403
    %v3444 = vunpack.c.l.b16 %v3404
    %v3445 = vpack.c.b16 %v3430, %v3429
    %v3446 = vpack.c.b16 %v3432, %v3431
    %v3447 = vpack.c.b16 %v3434, %v3433
    %v3448 = vpack.c.b16 %v3436, %v3435
    %v3449 = vpack.c.b16 %v3438, %v3437
    %v3450 = vpack.c.b16 %v3440, %v3439
    %v3451 = vpack.c.b16 %v3442, %v3441
    %v3452 = vpack.c.b16 %v3444, %v3443
    %3461 = vmatprep.subr.bf16.mxu0 0
    %3462 = vmatpush1.bf16.msra.mxu0 %v3445
    %3463 = vmatprep.subr.bf16.mxu0 0
    %3464 = vmatpush1.bf16.msra.mxu0 %v3446
    %3465 = vmatprep.subr.bf16.mxu0 0
    %3466 = vmatpush1.bf16.msra.mxu0 %v3447
    %3467 = vmatprep.subr.bf16.mxu0 0
    %3468 = vmatpush1.bf16.msra.mxu0 %v3448
    %3469 = vmatprep.subr.bf16.mxu0 0
    %3470 = vmatpush1.bf16.msra.mxu0 %v3449
    %3471 = vmatprep.subr.bf16.mxu0 0
    %3472 = vmatpush1.bf16.msra.mxu0 %v3450
    %3473 = vmatprep.subr.bf16.mxu0 0
    %3474 = vmatpush1.bf16.msra.mxu0 %v3451
    %3475 = vmatprep.subr.bf16.mxu0 0
    %3476 = vmatpush1.bf16.msra.mxu0 %v3452
    %3477 = vmatprep.subr.bf16.mxu0 0
    %3478 = vmatpush1.bf16.msra.mxu0 0
    %3479 = vmatprep.subr.bf16.mxu0 0
    %3480 = vmatpush1.bf16.msra.mxu0 0
    %3481 = vmatprep.subr.bf16.mxu0 0
    %3482 = vmatpush1.bf16.msra.mxu0 0
    %3483 = vmatprep.subr.bf16.mxu0 0
    %3484 = vmatpush1.bf16.msra.mxu0 0
    %3485 = vmatprep.subr.bf16.mxu0 0
    %3486 = vmatpush1.bf16.msra.mxu0 0
    %3487 = vmatprep.subr.bf16.mxu0 0
    %3488 = vmatpush1.bf16.msra.mxu0 0
    %3489 = vmatprep.subr.bf16.mxu0 0
    %3490 = vmatpush1.bf16.msra.mxu0 0
    %3491 = vmatprep.subr.bf16.mxu0 0
    %3492 = vmatpush1.bf16.msra.mxu0 0
    %3493 = vmatprep.mubr.bf16.mxu0 0
    %3494 = vmatmul.mubr.bf16.gmra.mrb[0].mxu0 %v3387
    %v3495 = vpop.f32.mrb[0].mxu0
    %v3496 = vadd.f32 %v3411, %v3495
    %v3497 = vpop.f32.mrb[0].mxu0
    %v3498 = vpop.f32.mrb[0].mxu0
    %v3499 = vadd.f32 %v3411, %v3498
    %v3500 = vpop.f32.mrb[0].mxu0
    %3501 = vdwg.mxu0
    %v3502 = vadd.f32 %v3270, %v3496
    %v3503 = vadd.f32 %v3271, %v3499
    %s3504 = scalar_lea.vmem [#allocation15], 1
    %v3505 = vld [vmem:[%s3504] sm:$0x1]
    %s3506 = scalar_lea.vmem [#allocation17], 1
    %v3507 = vld [vmem:[%s3506] sm:$0x1]
    %3508 = vadd.xlane.f32.xlu0 %v3502
    %v3509 = vpop.xlane.xlu0 %3508
    %3510 = vadd.xlane.f32.xlu0 %v3503
    %v3511 = vpop.xlane.xlu0 %3510
    %v3512 = vmul.f32 %v3509, 0.0078125
    %v3513 = vmul.f32 %v3511, 0.0078125
    %v3514 = vsub.f32 %v3502, %v3512
    %v3515 = vsub.f32 %v3503, %v3513
    %v3516 = vmul.f32 %v3514, %v3514
    %v3517 = vmul.f32 %v3515, %v3515
    %3518 = vadd.xlane.f32.xlu0 %v3516
    %v3519 = vpop.xlane.xlu0 %3518
    %3520 = vadd.xlane.f32.xlu0 %v3517
    %v3521 = vpop.xlane.xlu0 %3520
    %v3522 = vmul.f32 %v3519, 0.0078125
    %v3523 = vmul.f32 %v3521, 0.0078125
    %v3524 = vadd.f32 %v3522, 1e-05
    %v3525 = vadd.f32 %v3523, 1e-05
    %v3526 = vrsqrt.pop %v3524
    %v3527 = vrsqrt.pop %v3525
    %v3528 = vmul.f32 %v3514, %v3526
    %v3529 = vmul.f32 %v3515, %v3527
    %v3531 = vlaneseq
    %v3532 = vshrl.u32 %v3531, 7
    %v3533 = vsub.s32 0, %v3532
    %v3534 = vrot.slane %v3505, %v3533
    %v3536 = vmul.f32 %v3528, %v3534
    %v3537 = vmul.f32 %v3529, %v3534
    %v3539 = vlaneseq
    %v3540 = vshrl.u32 %v3539, 7
    %v3541 = vsub.s32 0, %v3540
    %v3542 = vrot.slane %v3507, %v3541
    %v3544 = vadd.f32 %v3536, %v3542
    %v3545 = vadd.f32 %v3537, %v3542
    %v3546 = vpack.c.bf16 %v3545, %v3544
    %s3547 = scalar_lea.vmem [#allocation18], 1024
    %v3548 = vld [vmem:[%s3547] sm:$0xff]
    %v3549 = vld [vmem:[%s3547 + $0x8] sm:$0xff]
    %v3550 = vld [vmem:[%s3547 + $0x10] sm:$0xff]
    %v3551 = vld [vmem:[%s3547 + $0x18] sm:$0xff]
    %v3552 = vld [vmem:[%s3547 + $0x20] sm:$0xff]
    %v3553 = vld [vmem:[%s3547 + $0x28] sm:$0xff]
    %v3554 = vld [vmem:[%s3547 + $0x30] sm:$0xff]
    %v3555 = vld [vmem:[%s3547 + $0x38] sm:$0xff]
    %v3556 = vld [vmem:[%s3547 + $0x40] sm:$0xff]
    %v3557 = vld [vmem:[%s3547 + $0x48] sm:$0xff]
    %v3558 = vld [vmem:[%s3547 + $0x50] sm:$0xff]
    %v3559 = vld [vmem:[%s3547 + $0x58] sm:$0xff]
    %v3560 = vld [vmem:[%s3547 + $0x60] sm:$0xff]
    %v3561 = vld [vmem:[%s3547 + $0x68] sm:$0xff]
    %v3562 = vld [vmem:[%s3547 + $0x70] sm:$0xff]
    %v3563 = vld [vmem:[%s3547 + $0x78] sm:$0xff]
    %v3564 = vld [vmem:[%s3547 + $0x80] sm:$0xff]
    %v3565 = vld [vmem:[%s3547 + $0x88] sm:$0xff]
    %v3566 = vld [vmem:[%s3547 + $0x90] sm:$0xff]
    %v3567 = vld [vmem:[%s3547 + $0x98] sm:$0xff]
    %v3568 = vld [vmem:[%s3547 + $0xa0] sm:$0xff]
    %v3569 = vld [vmem:[%s3547 + $0xa8] sm:$0xff]
    %v3570 = vld [vmem:[%s3547 + $0xb0] sm:$0xff]
    %v3571 = vld [vmem:[%s3547 + $0xb8] sm:$0xff]
    %v3572 = vld [vmem:[%s3547 + $0xc0] sm:$0xff]
    %v3573 = vld [vmem:[%s3547 + $0xc8] sm:$0xff]
    %v3574 = vld [vmem:[%s3547 + $0xd0] sm:$0xff]
    %v3575 = vld [vmem:[%s3547 + $0xd8] sm:$0xff]
    %v3576 = vld [vmem:[%s3547 + $0xe0] sm:$0xff]
    %v3577 = vld [vmem:[%s3547 + $0xe8] sm:$0xff]
    %v3578 = vld [vmem:[%s3547 + $0xf0] sm:$0xff]
    %v3579 = vld [vmem:[%s3547 + $0xf8] sm:$0xff]
    %v3580 = vld [vmem:[%s3547 + $0x100] sm:$0xff]
    %v3581 = vld [vmem:[%s3547 + $0x108] sm:$0xff]
    %v3582 = vld [vmem:[%s3547 + $0x110] sm:$0xff]
    %v3583 = vld [vmem:[%s3547 + $0x118] sm:$0xff]
    %v3584 = vld [vmem:[%s3547 + $0x120] sm:$0xff]
    %v3585 = vld [vmem:[%s3547 + $0x128] sm:$0xff]
    %v3586 = vld [vmem:[%s3547 + $0x130] sm:$0xff]
    %v3587 = vld [vmem:[%s3547 + $0x138] sm:$0xff]
    %v3588 = vld [vmem:[%s3547 + $0x140] sm:$0xff]
    %v3589 = vld [vmem:[%s3547 + $0x148] sm:$0xff]
    %v3590 = vld [vmem:[%s3547 + $0x150] sm:$0xff]
    %v3591 = vld [vmem:[%s3547 + $0x158] sm:$0xff]
    %v3592 = vld [vmem:[%s3547 + $0x160] sm:$0xff]
    %v3593 = vld [vmem:[%s3547 + $0x168] sm:$0xff]
    %v3594 = vld [vmem:[%s3547 + $0x170] sm:$0xff]
    %v3595 = vld [vmem:[%s3547 + $0x178] sm:$0xff]
    %v3596 = vld [vmem:[%s3547 + $0x180] sm:$0xff]
    %v3597 = vld [vmem:[%s3547 + $0x188] sm:$0xff]
    %v3598 = vld [vmem:[%s3547 + $0x190] sm:$0xff]
    %v3599 = vld [vmem:[%s3547 + $0x198] sm:$0xff]
    %v3600 = vld [vmem:[%s3547 + $0x1a0] sm:$0xff]
    %v3601 = vld [vmem:[%s3547 + $0x1a8] sm:$0xff]
    %v3602 = vld [vmem:[%s3547 + $0x1b0] sm:$0xff]
    %v3603 = vld [vmem:[%s3547 + $0x1b8] sm:$0xff]
    %v3604 = vld [vmem:[%s3547 + $0x1c0] sm:$0xff]
    %v3605 = vld [vmem:[%s3547 + $0x1c8] sm:$0xff]
    %v3606 = vld [vmem:[%s3547 + $0x1d0] sm:$0xff]
    %v3607 = vld [vmem:[%s3547 + $0x1d8] sm:$0xff]
    %v3608 = vld [vmem:[%s3547 + $0x1e0] sm:$0xff]
    %v3609 = vld [vmem:[%s3547 + $0x1e8] sm:$0xff]
    %v3610 = vld [vmem:[%s3547 + $0x1f0] sm:$0xff]
    %v3611 = vld [vmem:[%s3547 + $0x1f8] sm:$0xff]
    %v3612 = vld [vmem:[%s3547 + $0x200] sm:$0xff]
    %v3613 = vld [vmem:[%s3547 + $0x208] sm:$0xff]
    %v3614 = vld [vmem:[%s3547 + $0x210] sm:$0xff]
    %v3615 = vld [vmem:[%s3547 + $0x218] sm:$0xff]
    %v3616 = vld [vmem:[%s3547 + $0x220] sm:$0xff]
    %v3617 = vld [vmem:[%s3547 + $0x228] sm:$0xff]
    %v3618 = vld [vmem:[%s3547 + $0x230] sm:$0xff]
    %v3619 = vld [vmem:[%s3547 + $0x238] sm:$0xff]
    %v3620 = vld [vmem:[%s3547 + $0x240] sm:$0xff]
    %v3621 = vld [vmem:[%s3547 + $0x248] sm:$0xff]
    %v3622 = vld [vmem:[%s3547 + $0x250] sm:$0xff]
    %v3623 = vld [vmem:[%s3547 + $0x258] sm:$0xff]
    %v3624 = vld [vmem:[%s3547 + $0x260] sm:$0xff]
    %v3625 = vld [vmem:[%s3547 + $0x268] sm:$0xff]
    %v3626 = vld [vmem:[%s3547 + $0x270] sm:$0xff]
    %v3627 = vld [vmem:[%s3547 + $0x278] sm:$0xff]
    %v3628 = vld [vmem:[%s3547 + $0x280] sm:$0xff]
    %v3629 = vld [vmem:[%s3547 + $0x288] sm:$0xff]
    %v3630 = vld [vmem:[%s3547 + $0x290] sm:$0xff]
    %v3631 = vld [vmem:[%s3547 + $0x298] sm:$0xff]
    %v3632 = vld [vmem:[%s3547 + $0x2a0] sm:$0xff]
    %v3633 = vld [vmem:[%s3547 + $0x2a8] sm:$0xff]
    %v3634 = vld [vmem:[%s3547 + $0x2b0] sm:$0xff]
    %v3635 = vld [vmem:[%s3547 + $0x2b8] sm:$0xff]
    %v3636 = vld [vmem:[%s3547 + $0x2c0] sm:$0xff]
    %v3637 = vld [vmem:[%s3547 + $0x2c8] sm:$0xff]
    %v3638 = vld [vmem:[%s3547 + $0x2d0] sm:$0xff]
    %v3639 = vld [vmem:[%s3547 + $0x2d8] sm:$0xff]
    %v3640 = vld [vmem:[%s3547 + $0x2e0] sm:$0xff]
    %v3641 = vld [vmem:[%s3547 + $0x2e8] sm:$0xff]
    %v3642 = vld [vmem:[%s3547 + $0x2f0] sm:$0xff]
    %v3643 = vld [vmem:[%s3547 + $0x2f8] sm:$0xff]
    %v3644 = vld [vmem:[%s3547 + $0x300] sm:$0xff]
    %v3645 = vld [vmem:[%s3547 + $0x308] sm:$0xff]
    %v3646 = vld [vmem:[%s3547 + $0x310] sm:$0xff]
    %v3647 = vld [vmem:[%s3547 + $0x318] sm:$0xff]
    %v3648 = vld [vmem:[%s3547 + $0x320] sm:$0xff]
    %v3649 = vld [vmem:[%s3547 + $0x328] sm:$0xff]
    %v3650 = vld [vmem:[%s3547 + $0x330] sm:$0xff]
    %v3651 = vld [vmem:[%s3547 + $0x338] sm:$0xff]
    %v3652 = vld [vmem:[%s3547 + $0x340] sm:$0xff]
    %v3653 = vld [vmem:[%s3547 + $0x348] sm:$0xff]
    %v3654 = vld [vmem:[%s3547 + $0x350] sm:$0xff]
    %v3655 = vld [vmem:[%s3547 + $0x358] sm:$0xff]
    %v3656 = vld [vmem:[%s3547 + $0x360] sm:$0xff]
    %v3657 = vld [vmem:[%s3547 + $0x368] sm:$0xff]
    %v3658 = vld [vmem:[%s3547 + $0x370] sm:$0xff]
    %v3659 = vld [vmem:[%s3547 + $0x378] sm:$0xff]
    %v3660 = vld [vmem:[%s3547 + $0x380] sm:$0xff]
    %v3661 = vld [vmem:[%s3547 + $0x388] sm:$0xff]
    %v3662 = vld [vmem:[%s3547 + $0x390] sm:$0xff]
    %v3663 = vld [vmem:[%s3547 + $0x398] sm:$0xff]
    %v3664 = vld [vmem:[%s3547 + $0x3a0] sm:$0xff]
    %v3665 = vld [vmem:[%s3547 + $0x3a8] sm:$0xff]
    %v3666 = vld [vmem:[%s3547 + $0x3b0] sm:$0xff]
    %v3667 = vld [vmem:[%s3547 + $0x3b8] sm:$0xff]
    %v3668 = vld [vmem:[%s3547 + $0x3c0] sm:$0xff]
    %v3669 = vld [vmem:[%s3547 + $0x3c8] sm:$0xff]
    %v3670 = vld [vmem:[%s3547 + $0x3d0] sm:$0xff]
    %v3671 = vld [vmem:[%s3547 + $0x3d8] sm:$0xff]
    %v3672 = vld [vmem:[%s3547 + $0x3e0] sm:$0xff]
    %v3673 = vld [vmem:[%s3547 + $0x3e8] sm:$0xff]
    %v3674 = vld [vmem:[%s3547 + $0x3f0] sm:$0xff]
    %v3675 = vld [vmem:[%s3547 + $0x3f8] sm:$0xff]
    %s3676 = scalar_lea.vmem [#allocation20], 16
    %v3677 = vld [vmem:[%s3676] sm:$0xff]
    %v3678 = vld [vmem:[%s3676 + $0x8] sm:$0xff]
    %v3681 = vlaneseq
    %v3682 = vshrl.u32 %v3681, 7
    %v3683 = vsub.s32 0, %v3682
    %v3684 = vrot.slane %v3677, %v3683
    %v3685 = vlaneseq
    %v3686 = vshrl.u32 %v3685, 7
    %v3687 = vsub.s32 1, %v3686
    %v3688 = vrot.slane %v3677, %v3687
    %v3689 = vlaneseq
    %v3690 = vshrl.u32 %v3689, 7
    %v3691 = vsub.s32 2, %v3690
    %v3692 = vrot.slane %v3677, %v3691
    %v3693 = vlaneseq
    %v3694 = vshrl.u32 %v3693, 7
    %v3695 = vsub.s32 3, %v3694
    %v3696 = vrot.slane %v3677, %v3695
    %v3697 = vlaneseq
    %v3698 = vshrl.u32 %v3697, 7
    %v3699 = vsub.s32 4, %v3698
    %v3700 = vrot.slane %v3677, %v3699
    %v3701 = vlaneseq
    %v3702 = vshrl.u32 %v3701, 7
    %v3703 = vsub.s32 5, %v3702
    %v3704 = vrot.slane %v3677, %v3703
    %v3705 = vlaneseq
    %v3706 = vshrl.u32 %v3705, 7
    %v3707 = vsub.s32 6, %v3706
    %v3708 = vrot.slane %v3677, %v3707
    %v3709 = vlaneseq
    %v3710 = vshrl.u32 %v3709, 7
    %v3711 = vsub.s32 7, %v3710
    %v3712 = vrot.slane %v3677, %v3711
    %v3713 = vlaneseq
    %v3714 = vshrl.u32 %v3713, 7
    %v3715 = vsub.s32 0, %v3714
    %v3716 = vrot.slane %v3678, %v3715
    %v3717 = vlaneseq
    %v3718 = vshrl.u32 %v3717, 7
    %v3719 = vsub.s32 1, %v3718
    %v3720 = vrot.slane %v3678, %v3719
    %v3721 = vlaneseq
    %v3722 = vshrl.u32 %v3721, 7
    %v3723 = vsub.s32 2, %v3722
    %v3724 = vrot.slane %v3678, %v3723
    %v3725 = vlaneseq
    %v3726 = vshrl.u32 %v3725, 7
    %v3727 = vsub.s32 3, %v3726
    %v3728 = vrot.slane %v3678, %v3727
    %v3729 = vlaneseq
    %v3730 = vshrl.u32 %v3729, 7
    %v3731 = vsub.s32 4, %v3730
    %v3732 = vrot.slane %v3678, %v3731
    %v3733 = vlaneseq
    %v3734 = vshrl.u32 %v3733, 7
    %v3735 = vsub.s32 5, %v3734
    %v3736 = vrot.slane %v3678, %v3735
    %v3737 = vlaneseq
    %v3738 = vshrl.u32 %v3737, 7
    %v3739 = vsub.s32 6, %v3738
    %v3740 = vrot.slane %v3678, %v3739
    %v3741 = vlaneseq
    %v3742 = vshrl.u32 %v3741, 7
    %v3743 = vsub.s32 7, %v3742
    %v3744 = vrot.slane %v3678, %v3743
    %v3889 = vunpack.c.l.b16 %v3548
    %v3890 = vunpack.c.h.b16 %v3548
    %v3891 = vunpack.c.l.b16 %v3549
    %v3892 = vunpack.c.h.b16 %v3549
    %v3893 = vunpack.c.l.b16 %v3550
    %v3894 = vunpack.c.h.b16 %v3550
    %v3895 = vunpack.c.l.b16 %v3551
    %v3896 = vunpack.c.h.b16 %v3551
    %v3897 = vunpack.c.l.b16 %v3552
    %v3898 = vunpack.c.h.b16 %v3552
    %v3899 = vunpack.c.l.b16 %v3553
    %v3900 = vunpack.c.h.b16 %v3553
    %v3901 = vunpack.c.l.b16 %v3554
    %v3902 = vunpack.c.h.b16 %v3554
    %v3903 = vunpack.c.l.b16 %v3555
    %v3904 = vunpack.c.h.b16 %v3555
    %v3905 = vunpack.c.l.b16 %v3556
    %v3906 = vunpack.c.h.b16 %v3556
    %v3907 = vunpack.c.l.b16 %v3557
    %v3908 = vunpack.c.h.b16 %v3557
    %v3909 = vunpack.c.l.b16 %v3558
    %v3910 = vunpack.c.h.b16 %v3558
    %v3911 = vunpack.c.l.b16 %v3559
    %v3912 = vunpack.c.h.b16 %v3559
    %v3913 = vunpack.c.l.b16 %v3560
    %v3914 = vunpack.c.h.b16 %v3560
    %v3915 = vunpack.c.l.b16 %v3561
    %v3916 = vunpack.c.h.b16 %v3561
    %v3917 = vunpack.c.l.b16 %v3562
    %v3918 = vunpack.c.h.b16 %v3562
    %v3919 = vunpack.c.l.b16 %v3563
    %v3920 = vunpack.c.h.b16 %v3563
    %v3921 = vunpack.c.l.b16 %v3564
    %v3922 = vunpack.c.h.b16 %v3564
    %v3923 = vunpack.c.l.b16 %v3565
    %v3924 = vunpack.c.h.b16 %v3565
    %v3925 = vunpack.c.l.b16 %v3566
    %v3926 = vunpack.c.h.b16 %v3566
    %v3927 = vunpack.c.l.b16 %v3567
    %v3928 = vunpack.c.h.b16 %v3567
    %v3929 = vunpack.c.l.b16 %v3568
    %v3930 = vunpack.c.h.b16 %v3568
    %v3931 = vunpack.c.l.b16 %v3569
    %v3932 = vunpack.c.h.b16 %v3569
    %v3933 = vunpack.c.l.b16 %v3570
    %v3934 = vunpack.c.h.b16 %v3570
    %v3935 = vunpack.c.l.b16 %v3571
    %v3936 = vunpack.c.h.b16 %v3571
    %v3937 = vunpack.c.l.b16 %v3572
    %v3938 = vunpack.c.h.b16 %v3572
    %v3939 = vunpack.c.l.b16 %v3573
    %v3940 = vunpack.c.h.b16 %v3573
    %v3941 = vunpack.c.l.b16 %v3574
    %v3942 = vunpack.c.h.b16 %v3574
    %v3943 = vunpack.c.l.b16 %v3575
    %v3944 = vunpack.c.h.b16 %v3575
    %v3945 = vunpack.c.l.b16 %v3576
    %v3946 = vunpack.c.h.b16 %v3576
    %v3947 = vunpack.c.l.b16 %v3577
    %v3948 = vunpack.c.h.b16 %v3577
    %v3949 = vunpack.c.l.b16 %v3578
    %v3950 = vunpack.c.h.b16 %v3578
    %v3951 = vunpack.c.l.b16 %v3579
    %v3952 = vunpack.c.h.b16 %v3579
    %v3953 = vunpack.c.l.b16 %v3580
    %v3954 = vunpack.c.h.b16 %v3580
    %v3955 = vunpack.c.l.b16 %v3581
    %v3956 = vunpack.c.h.b16 %v3581
    %v3957 = vunpack.c.l.b16 %v3582
    %v3958 = vunpack.c.h.b16 %v3582
    %v3959 = vunpack.c.l.b16 %v3583
    %v3960 = vunpack.c.h.b16 %v3583
    %v3961 = vunpack.c.l.b16 %v3584
    %v3962 = vunpack.c.h.b16 %v3584
    %v3963 = vunpack.c.l.b16 %v3585
    %v3964 = vunpack.c.h.b16 %v3585
    %v3965 = vunpack.c.l.b16 %v3586
    %v3966 = vunpack.c.h.b16 %v3586
    %v3967 = vunpack.c.l.b16 %v3587
    %v3968 = vunpack.c.h.b16 %v3587
    %v3969 = vunpack.c.l.b16 %v3588
    %v3970 = vunpack.c.h.b16 %v3588
    %v3971 = vunpack.c.l.b16 %v3589
    %v3972 = vunpack.c.h.b16 %v3589
    %v3973 = vunpack.c.l.b16 %v3590
    %v3974 = vunpack.c.h.b16 %v3590
    %v3975 = vunpack.c.l.b16 %v3591
    %v3976 = vunpack.c.h.b16 %v3591
    %v3977 = vunpack.c.l.b16 %v3592
    %v3978 = vunpack.c.h.b16 %v3592
    %v3979 = vunpack.c.l.b16 %v3593
    %v3980 = vunpack.c.h.b16 %v3593
    %v3981 = vunpack.c.l.b16 %v3594
    %v3982 = vunpack.c.h.b16 %v3594
    %v3983 = vunpack.c.l.b16 %v3595
    %v3984 = vunpack.c.h.b16 %v3595
    %v3985 = vunpack.c.l.b16 %v3596
    %v3986 = vunpack.c.h.b16 %v3596
    %v3987 = vunpack.c.l.b16 %v3597
    %v3988 = vunpack.c.h.b16 %v3597
    %v3989 = vunpack.c.l.b16 %v3598
    %v3990 = vunpack.c.h.b16 %v3598
    %v3991 = vunpack.c.l.b16 %v3599
    %v3992 = vunpack.c.h.b16 %v3599
    %v3993 = vunpack.c.l.b16 %v3600
    %v3994 = vunpack.c.h.b16 %v3600
    %v3995 = vunpack.c.l.b16 %v3601
    %v3996 = vunpack.c.h.b16 %v3601
    %v3997 = vunpack.c.l.b16 %v3602
    %v3998 = vunpack.c.h.b16 %v3602
    %v3999 = vunpack.c.l.b16 %v3603
    %v4000 = vunpack.c.h.b16 %v3603
    %v4001 = vunpack.c.l.b16 %v3604
    %v4002 = vunpack.c.h.b16 %v3604
    %v4003 = vunpack.c.l.b16 %v3605
    %v4004 = vunpack.c.h.b16 %v3605
    %v4005 = vunpack.c.l.b16 %v3606
    %v4006 = vunpack.c.h.b16 %v3606
    %v4007 = vunpack.c.l.b16 %v3607
    %v4008 = vunpack.c.h.b16 %v3607
    %v4009 = vunpack.c.l.b16 %v3608
    %v4010 = vunpack.c.h.b16 %v3608
    %v4011 = vunpack.c.l.b16 %v3609
    %v4012 = vunpack.c.h.b16 %v3609
    %v4013 = vunpack.c.l.b16 %v3610
    %v4014 = vunpack.c.h.b16 %v3610
    %v4015 = vunpack.c.l.b16 %v3611
    %v4016 = vunpack.c.h.b16 %v3611
    %v4017 = vunpack.c.l.b16 %v3612
    %v4018 = vunpack.c.h.b16 %v3612
    %v4019 = vunpack.c.l.b16 %v3613
    %v4020 = vunpack.c.h.b16 %v3613
    %v4021 = vunpack.c.l.b16 %v3614
    %v4022 = vunpack.c.h.b16 %v3614
    %v4023 = vunpack.c.l.b16 %v3615
    %v4024 = vunpack.c.h.b16 %v3615
    %v4025 = vunpack.c.l.b16 %v3616
    %v4026 = vunpack.c.h.b16 %v3616
    %v4027 = vunpack.c.l.b16 %v3617
    %v4028 = vunpack.c.h.b16 %v3617
    %v4029 = vunpack.c.l.b16 %v3618
    %v4030 = vunpack.c.h.b16 %v3618
    %v4031 = vunpack.c.l.b16 %v3619
    %v4032 = vunpack.c.h.b16 %v3619
    %v4033 = vunpack.c.l.b16 %v3620
    %v4034 = vunpack.c.h.b16 %v3620
    %v4035 = vunpack.c.l.b16 %v3621
    %v4036 = vunpack.c.h.b16 %v3621
    %v4037 = vunpack.c.l.b16 %v3622
    %v4038 = vunpack.c.h.b16 %v3622
    %v4039 = vunpack.c.l.b16 %v3623
    %v4040 = vunpack.c.h.b16 %v3623
    %v4041 = vunpack.c.l.b16 %v3624
    %v4042 = vunpack.c.h.b16 %v3624
    %v4043 = vunpack.c.l.b16 %v3625
    %v4044 = vunpack.c.h.b16 %v3625
    %v4045 = vunpack.c.l.b16 %v3626
    %v4046 = vunpack.c.h.b16 %v3626
    %v4047 = vunpack.c.l.b16 %v3627
    %v4048 = vunpack.c.h.b16 %v3627
    %v4049 = vunpack.c.l.b16 %v3628
    %v4050 = vunpack.c.h.b16 %v3628
    %v4051 = vunpack.c.l.b16 %v3629
    %v4052 = vunpack.c.h.b16 %v3629
    %v4053 = vunpack.c.l.b16 %v3630
    %v4054 = vunpack.c.h.b16 %v3630
    %v4055 = vunpack.c.l.b16 %v3631
    %v4056 = vunpack.c.h.b16 %v3631
    %v4057 = vunpack.c.l.b16 %v3632
    %v4058 = vunpack.c.h.b16 %v3632
    %v4059 = vunpack.c.l.b16 %v3633
    %v4060 = vunpack.c.h.b16 %v3633
    %v4061 = vunpack.c.l.b16 %v3634
    %v4062 = vunpack.c.h.b16 %v3634
    %v4063 = vunpack.c.l.b16 %v3635
    %v4064 = vunpack.c.h.b16 %v3635
    %v4065 = vunpack.c.l.b16 %v3636
    %v4066 = vunpack.c.h.b16 %v3636
    %v4067 = vunpack.c.l.b16 %v3637
    %v4068 = vunpack.c.h.b16 %v3637
    %v4069 = vunpack.c.l.b16 %v3638
    %v4070 = vunpack.c.h.b16 %v3638
    %v4071 = vunpack.c.l.b16 %v3639
    %v4072 = vunpack.c.h.b16 %v3639
    %v4073 = vunpack.c.l.b16 %v3640
    %v4074 = vunpack.c.h.b16 %v3640
    %v4075 = vunpack.c.l.b16 %v3641
    %v4076 = vunpack.c.h.b16 %v3641
    %v4077 = vunpack.c.l.b16 %v3642
    %v4078 = vunpack.c.h.b16 %v3642
    %v4079 = vunpack.c.l.b16 %v3643
    %v4080 = vunpack.c.h.b16 %v3643
    %v4081 = vunpack.c.l.b16 %v3644
    %v4082 = vunpack.c.h.b16 %v3644
    %v4083 = vunpack.c.l.b16 %v3645
    %v4084 = vunpack.c.h.b16 %v3645
    %v4085 = vunpack.c.l.b16 %v3646
    %v4086 = vunpack.c.h.b16 %v3646
    %v4087 = vunpack.c.l.b16 %v3647
    %v4088 = vunpack.c.h.b16 %v3647
    %v4089 = vunpack.c.l.b16 %v3648
    %v4090 = vunpack.c.h.b16 %v3648
    %v4091 = vunpack.c.l.b16 %v3649
    %v4092 = vunpack.c.h.b16 %v3649
    %v4093 = vunpack.c.l.b16 %v3650
    %v4094 = vunpack.c.h.b16 %v3650
    %v4095 = vunpack.c.l.b16 %v3651
    %v4096 = vunpack.c.h.b16 %v3651
    %v4097 = vunpack.c.l.b16 %v3652
    %v4098 = vunpack.c.h.b16 %v3652
    %v4099 = vunpack.c.l.b16 %v3653
    %v4100 = vunpack.c.h.b16 %v3653
    %v4101 = vunpack.c.l.b16 %v3654
    %v4102 = vunpack.c.h.b16 %v3654
    %v4103 = vunpack.c.l.b16 %v3655
    %v4104 = vunpack.c.h.b16 %v3655
    %v4105 = vunpack.c.l.b16 %v3656
    %v4106 = vunpack.c.h.b16 %v3656
    %v4107 = vunpack.c.l.b16 %v3657
    %v4108 = vunpack.c.h.b16 %v3657
    %v4109 = vunpack.c.l.b16 %v3658
    %v4110 = vunpack.c.h.b16 %v3658
    %v4111 = vunpack.c.l.b16 %v3659
    %v4112 = vunpack.c.h.b16 %v3659
    %v4113 = vunpack.c.l.b16 %v3660
    %v4114 = vunpack.c.h.b16 %v3660
    %v4115 = vunpack.c.l.b16 %v3661
    %v4116 = vunpack.c.h.b16 %v3661
    %v4117 = vunpack.c.l.b16 %v3662
    %v4118 = vunpack.c.h.b16 %v3662
    %v4119 = vunpack.c.l.b16 %v3663
    %v4120 = vunpack.c.h.b16 %v3663
    %v4121 = vunpack.c.l.b16 %v3664
    %v4122 = vunpack.c.h.b16 %v3664
    %v4123 = vunpack.c.l.b16 %v3665
    %v4124 = vunpack.c.h.b16 %v3665
    %v4125 = vunpack.c.l.b16 %v3666
    %v4126 = vunpack.c.h.b16 %v3666
    %v4127 = vunpack.c.l.b16 %v3667
    %v4128 = vunpack.c.h.b16 %v3667
    %v4129 = vunpack.c.l.b16 %v3668
    %v4130 = vunpack.c.h.b16 %v3668
    %v4131 = vunpack.c.l.b16 %v3669
    %v4132 = vunpack.c.h.b16 %v3669
    %v4133 = vunpack.c.l.b16 %v3670
    %v4134 = vunpack.c.h.b16 %v3670
    %v4135 = vunpack.c.l.b16 %v3671
    %v4136 = vunpack.c.h.b16 %v3671
    %v4137 = vunpack.c.l.b16 %v3672
    %v4138 = vunpack.c.h.b16 %v3672
    %v4139 = vunpack.c.l.b16 %v3673
    %v4140 = vunpack.c.h.b16 %v3673
    %v4141 = vunpack.c.l.b16 %v3674
    %v4142 = vunpack.c.h.b16 %v3674
    %v4143 = vunpack.c.l.b16 %v3675
    %v4144 = vunpack.c.h.b16 %v3675
    %v4145 = vpack.c.b16 %v3905, %v3889
    %v4146 = vpack.c.b16 %v3906, %v3890
    %v4147 = vpack.c.b16 %v3907, %v3891
    %v4148 = vpack.c.b16 %v3908, %v3892
    %v4149 = vpack.c.b16 %v3909, %v3893
    %v4150 = vpack.c.b16 %v3910, %v3894
    %v4151 = vpack.c.b16 %v3911, %v3895
    %v4152 = vpack.c.b16 %v3912, %v3896
    %v4153 = vpack.c.b16 %v3913, %v3897
    %v4154 = vpack.c.b16 %v3914, %v3898
    %v4155 = vpack.c.b16 %v3915, %v3899
    %v4156 = vpack.c.b16 %v3916, %v3900
    %v4157 = vpack.c.b16 %v3917, %v3901
    %v4158 = vpack.c.b16 %v3918, %v3902
    %v4159 = vpack.c.b16 %v3919, %v3903
    %v4160 = vpack.c.b16 %v3920, %v3904
    %v4161 = vpack.c.b16 %v3937, %v3921
    %v4162 = vpack.c.b16 %v3938, %v3922
    %v4163 = vpack.c.b16 %v3939, %v3923
    %v4164 = vpack.c.b16 %v3940, %v3924
    %v4165 = vpack.c.b16 %v3941, %v3925
    %v4166 = vpack.c.b16 %v3942, %v3926
    %v4167 = vpack.c.b16 %v3943, %v3927
    %v4168 = vpack.c.b16 %v3944, %v3928
    %v4169 = vpack.c.b16 %v3945, %v3929
    %v4170 = vpack.c.b16 %v3946, %v3930
    %v4171 = vpack.c.b16 %v3947, %v3931
    %v4172 = vpack.c.b16 %v3948, %v3932
    %v4173 = vpack.c.b16 %v3949, %v3933
    %v4174 = vpack.c.b16 %v3950, %v3934
    %v4175 = vpack.c.b16 %v3951, %v3935
    %v4176 = vpack.c.b16 %v3952, %v3936
    %v4177 = vpack.c.b16 %v3969, %v3953
    %v4178 = vpack.c.b16 %v3970, %v3954
    %v4179 = vpack.c.b16 %v3971, %v3955
    %v4180 = vpack.c.b16 %v3972, %v3956
    %v4181 = vpack.c.b16 %v3973, %v3957
    %v4182 = vpack.c.b16 %v3974, %v3958
    %v4183 = vpack.c.b16 %v3975, %v3959
    %v4184 = vpack.c.b16 %v3976, %v3960
    %v4185 = vpack.c.b16 %v3977, %v3961
    %v4186 = vpack.c.b16 %v3978, %v3962
    %v4187 = vpack.c.b16 %v3979, %v3963
    %v4188 = vpack.c.b16 %v3980, %v3964
    %v4189 = vpack.c.b16 %v3981, %v3965
    %v4190 = vpack.c.b16 %v3982, %v3966
    %v4191 = vpack.c.b16 %v3983, %v3967
    %v4192 = vpack.c.b16 %v3984, %v3968
    %v4193 = vpack.c.b16 %v4001, %v3985
    %v4194 = vpack.c.b16 %v4002, %v3986
    %v4195 = vpack.c.b16 %v4003, %v3987
    %v4196 = vpack.c.b16 %v4004, %v3988
    %v4197 = vpack.c.b16 %v4005, %v3989
    %v4198 = vpack.c.b16 %v4006, %v3990
    %v4199 = vpack.c.b16 %v4007, %v3991
    %v4200 = vpack.c.b16 %v4008, %v3992
    %v4201 = vpack.c.b16 %v4009, %v3993
    %v4202 = vpack.c.b16 %v4010, %v3994
    %v4203 = vpack.c.b16 %v4011, %v3995
    %v4204 = vpack.c.b16 %v4012, %v3996
    %v4205 = vpack.c.b16 %v4013, %v3997
    %v4206 = vpack.c.b16 %v4014, %v3998
    %v4207 = vpack.c.b16 %v4015, %v3999
    %v4208 = vpack.c.b16 %v4016, %v4000
    %v4209 = vpack.c.b16 %v4033, %v4017
    %v4210 = vpack.c.b16 %v4034, %v4018
    %v4211 = vpack.c.b16 %v4035, %v4019
    %v4212 = vpack.c.b16 %v4036, %v4020
    %v4213 = vpack.c.b16 %v4037, %v4021
    %v4214 = vpack.c.b16 %v4038, %v4022
    %v4215 = vpack.c.b16 %v4039, %v4023
    %v4216 = vpack.c.b16 %v4040, %v4024
    %v4217 = vpack.c.b16 %v4041, %v4025
    %v4218 = vpack.c.b16 %v4042, %v4026
    %v4219 = vpack.c.b16 %v4043, %v4027
    %v4220 = vpack.c.b16 %v4044, %v4028
    %v4221 = vpack.c.b16 %v4045, %v4029
    %v4222 = vpack.c.b16 %v4046, %v4030
    %v4223 = vpack.c.b16 %v4047, %v4031
    %v4224 = vpack.c.b16 %v4048, %v4032
    %v4225 = vpack.c.b16 %v4065, %v4049
    %v4226 = vpack.c.b16 %v4066, %v4050
    %v4227 = vpack.c.b16 %v4067, %v4051
    %v4228 = vpack.c.b16 %v4068, %v4052
    %v4229 = vpack.c.b16 %v4069, %v4053
    %v4230 = vpack.c.b16 %v4070, %v4054
    %v4231 = vpack.c.b16 %v4071, %v4055
    %v4232 = vpack.c.b16 %v4072, %v4056
    %v4233 = vpack.c.b16 %v4073, %v4057
    %v4234 = vpack.c.b16 %v4074, %v4058
    %v4235 = vpack.c.b16 %v4075, %v4059
    %v4236 = vpack.c.b16 %v4076, %v4060
    %v4237 = vpack.c.b16 %v4077, %v4061
    %v4238 = vpack.c.b16 %v4078, %v4062
    %v4239 = vpack.c.b16 %v4079, %v4063
    %v4240 = vpack.c.b16 %v4080, %v4064
    %v4241 = vpack.c.b16 %v4097, %v4081
    %v4242 = vpack.c.b16 %v4098, %v4082
    %v4243 = vpack.c.b16 %v4099, %v4083
    %v4244 = vpack.c.b16 %v4100, %v4084
    %v4245 = vpack.c.b16 %v4101, %v4085
    %v4246 = vpack.c.b16 %v4102, %v4086
    %v4247 = vpack.c.b16 %v4103, %v4087
    %v4248 = vpack.c.b16 %v4104, %v4088
    %v4249 = vpack.c.b16 %v4105, %v4089
    %v4250 = vpack.c.b16 %v4106, %v4090
    %v4251 = vpack.c.b16 %v4107, %v4091
    %v4252 = vpack.c.b16 %v4108, %v4092
    %v4253 = vpack.c.b16 %v4109, %v4093
    %v4254 = vpack.c.b16 %v4110, %v4094
    %v4255 = vpack.c.b16 %v4111, %v4095
    %v4256 = vpack.c.b16 %v4112, %v4096
    %v4257 = vpack.c.b16 %v4129, %v4113
    %v4258 = vpack.c.b16 %v4130, %v4114
    %v4259 = vpack.c.b16 %v4131, %v4115
    %v4260 = vpack.c.b16 %v4132, %v4116
    %v4261 = vpack.c.b16 %v4133, %v4117
    %v4262 = vpack.c.b16 %v4134, %v4118
    %v4263 = vpack.c.b16 %v4135, %v4119
    %v4264 = vpack.c.b16 %v4136, %v4120
    %v4265 = vpack.c.b16 %v4137, %v4121
    %v4266 = vpack.c.b16 %v4138, %v4122
    %v4267 = vpack.c.b16 %v4139, %v4123
    %v4268 = vpack.c.b16 %v4140, %v4124
    %v4269 = vpack.c.b16 %v4141, %v4125
    %v4270 = vpack.c.b16 %v4142, %v4126
    %v4271 = vpack.c.b16 %v4143, %v4127
    %v4272 = vpack.c.b16 %v4144, %v4128
    %4401 = vmatprep.subr.bf16.mxu0 %v4146
    %4402 = vmatpush1.bf16.msra.mxu0 %v4145
    %4403 = vmatprep.subr.bf16.mxu0 %v4162
    %4404 = vmatpush1.bf16.msra.mxu0 %v4161
    %4405 = vmatprep.subr.bf16.mxu0 %v4178
    %4406 = vmatpush1.bf16.msra.mxu0 %v4177
    %4407 = vmatprep.subr.bf16.mxu0 %v4194
    %4408 = vmatpush1.bf16.msra.mxu0 %v4193
    %4409 = vmatprep.subr.bf16.mxu0 %v4210
    %4410 = vmatpush1.bf16.msra.mxu0 %v4209
    %4411 = vmatprep.subr.bf16.mxu0 %v4226
    %4412 = vmatpush1.bf16.msra.mxu0 %v4225
    %4413 = vmatprep.subr.bf16.mxu0 %v4242
    %4414 = vmatpush1.bf16.msra.mxu0 %v4241
    %4415 = vmatprep.subr.bf16.mxu0 %v4258
    %4416 = vmatpush1.bf16.msra.mxu0 %v4257
    %4417 = vmatprep.subr.bf16.mxu0 0
    %4418 = vmatpush1.bf16.msra.mxu0 0
    %4419 = vmatprep.subr.bf16.mxu0 0
    %4420 = vmatpush1.bf16.msra.mxu0 0
    %4421 = vmatprep.subr.bf16.mxu0 0
    %4422 = vmatpush1.bf16.msra.mxu0 0
    %4423 = vmatprep.subr.bf16.mxu0 0
    %4424 = vmatpush1.bf16.msra.mxu0 0
    %4425 = vmatprep.subr.bf16.mxu0 0
    %4426 = vmatpush1.bf16.msra.mxu0 0
    %4427 = vmatprep.subr.bf16.mxu0 0
    %4428 = vmatpush1.bf16.msra.mxu0 0
    %4429 = vmatprep.subr.bf16.mxu0 0
    %4430 = vmatpush1.bf16.msra.mxu0 0
    %4431 = vmatprep.subr.bf16.mxu0 0
    %4432 = vmatpush1.bf16.msra.mxu0 0
    %4433 = vmatprep.mubr.bf16.mxu0 0
    %4434 = vmatmul.mubr.bf16.gmra.mrb[0].mxu0 %v3546
    %v4435 = vpop.f32.mrb[0].mxu0
    %v4436 = vadd.f32 %v3684, %v4435
    %v4437 = vpop.f32.mrb[0].mxu0
    %v4438 = vadd.f32 %v3688, %v4437
    %v4439 = vpop.f32.mrb[0].mxu0
    %v4440 = vadd.f32 %v3684, %v4439
    %v4441 = vpop.f32.mrb[0].mxu0
    %v4442 = vadd.f32 %v3688, %v4441
    %4443 = vdwg.mxu0
    %4444 = vmatprep.subr.bf16.mxu0 %v4148
    %4445 = vmatpush1.bf16.msra.mxu0 %v4147
    %4446 = vmatprep.subr.bf16.mxu0 %v4164
    %4447 = vmatpush1.bf16.msra.mxu0 %v4163
    %4448 = vmatprep.subr.bf16.mxu0 %v4180
    %4449 = vmatpush1.bf16.msra.mxu0 %v4179
    %4450 = vmatprep.subr.bf16.mxu0 %v4196
    %4451 = vmatpush1.bf16.msra.mxu0 %v4195
    %4452 = vmatprep.subr.bf16.mxu0 %v4212
    %4453 = vmatpush1.bf16.msra.mxu0 %v4211
    %4454 = vmatprep.subr.bf16.mxu0 %v4228
    %4455 = vmatpush1.bf16.msra.mxu0 %v4227
    %4456 = vmatprep.subr.bf16.mxu0 %v4244
    %4457 = vmatpush1.bf16.msra.mxu0 %v4243
    %4458 = vmatprep.subr.bf16.mxu0 %v4260
    %4459 = vmatpush1.bf16.msra.mxu0 %v4259
    %4460 = vmatprep.subr.bf16.mxu0 0
    %4461 = vmatpush1.bf16.msra.mxu0 0
    %4462 = vmatprep.subr.bf16.mxu0 0
    %4463 = vmatpush1.bf16.msra.mxu0 0
    %4464 = vmatprep.subr.bf16.mxu0 0
    %4465 = vmatpush1.bf16.msra.mxu0 0
    %4466 = vmatprep.subr.bf16.mxu0 0
    %4467 = vmatpush1.bf16.msra.mxu0 0
    %4468 = vmatprep.subr.bf16.mxu0 0
    %4469 = vmatpush1.bf16.msra.mxu0 0
    %4470 = vmatprep.subr.bf16.mxu0 0
    %4471 = vmatpush1.bf16.msra.mxu0 0
    %4472 = vmatprep.subr.bf16.mxu0 0
    %4473 = vmatpush1.bf16.msra.mxu0 0
    %4474 = vmatprep.subr.bf16.mxu0 0
    %4475 = vmatpush1.bf16.msra.mxu0 0
    %4476 = vmatprep.mubr.bf16.mxu0 0
    %4477 = vmatmul.mubr.bf16.gmra.mrb[0].mxu0 %v3546
    %v4478 = vpop.f32.mrb[0].mxu0
    %v4479 = vadd.f32 %v3692, %v4478
    %v4480 = vpop.f32.mrb[0].mxu0
    %v4481 = vadd.f32 %v3696, %v4480
    %v4482 = vpop.f32.mrb[0].mxu0
    %v4483 = vadd.f32 %v3692, %v4482
    %v4484 = vpop.f32.mrb[0].mxu0
    %v4485 = vadd.f32 %v3696, %v4484
    %4486 = vdwg.mxu0
    %4487 = vmatprep.subr.bf16.mxu0 %v4150
    %4488 = vmatpush1.bf16.msra.mxu0 %v4149
    %4489 = vmatprep.subr.bf16.mxu0 %v4166
    %4490 = vmatpush1.bf16.msra.mxu0 %v4165
    %4491 = vmatprep.subr.bf16.mxu0 %v4182
    %4492 = vmatpush1.bf16.msra.mxu0 %v4181
    %4493 = vmatprep.subr.bf16.mxu0 %v4198
    %4494 = vmatpush1.bf16.msra.mxu0 %v4197
    %4495 = vmatprep.subr.bf16.mxu0 %v4214
    %4496 = vmatpush1.bf16.msra.mxu0 %v4213
    %4497 = vmatprep.subr.bf16.mxu0 %v4230
    %4498 = vmatpush1.bf16.msra.mxu0 %v4229
    %4499 = vmatprep.subr.bf16.mxu0 %v4246
    %4500 = vmatpush1.bf16.msra.mxu0 %v4245
    %4501 = vmatprep.subr.bf16.mxu0 %v4262
    %4502 = vmatpush1.bf16.msra.mxu0 %v4261
    %4503 = vmatprep.subr.bf16.mxu0 0
    %4504 = vmatpush1.bf16.msra.mxu0 0
    %4505 = vmatprep.subr.bf16.mxu0 0
    %4506 = vmatpush1.bf16.msra.mxu0 0
    %4507 = vmatprep.subr.bf16.mxu0 0
    %4508 = vmatpush1.bf16.msra.mxu0 0
    %4509 = vmatprep.subr.bf16.mxu0 0
    %4510 = vmatpush1.bf16.msra.mxu0 0
    %4511 = vmatprep.subr.bf16.mxu0 0
    %4512 = vmatpush1.bf16.msra.mxu0 0
    %4513 = vmatprep.subr.bf16.mxu0 0
    %4514 = vmatpush1.bf16.msra.mxu0 0
    %4515 = vmatprep.subr.bf16.mxu0 0
    %4516 = vmatpush1.bf16.msra.mxu0 0
    %4517 = vmatprep.subr.bf16.mxu0 0
    %4518 = vmatpush1.bf16.msra.mxu0 0
    %4519 = vmatprep.mubr.bf16.mxu0 0
    %4520 = vmatmul.mubr.bf16.gmra.mrb[0].mxu0 %v3546
    %v4521 = vpop.f32.mrb[0].mxu0
    %v4522 = vadd.f32 %v3700, %v4521
    %v4523 = vpop.f32.mrb[0].mxu0
    %v4524 = vadd.f32 %v3704, %v4523
    %v4525 = vpop.f32.mrb[0].mxu0
    %v4526 = vadd.f32 %v3700, %v4525
    %v4527 = vpop.f32.mrb[0].mxu0
    %v4528 = vadd.f32 %v3704, %v4527
    %4529 = vdwg.mxu0
    %4530 = vmatprep.subr.bf16.mxu0 %v4152
    %4531 = vmatpush1.bf16.msra.mxu0 %v4151
    %4532 = vmatprep.subr.bf16.mxu0 %v4168
    %4533 = vmatpush1.bf16.msra.mxu0 %v4167
    %4534 = vmatprep.subr.bf16.mxu0 %v4184
    %4535 = vmatpush1.bf16.msra.mxu0 %v4183
    %4536 = vmatprep.subr.bf16.mxu0 %v4200
    %4537 = vmatpush1.bf16.msra.mxu0 %v4199
    %4538 = vmatprep.subr.bf16.mxu0 %v4216
    %4539 = vmatpush1.bf16.msra.mxu0 %v4215
    %4540 = vmatprep.subr.bf16.mxu0 %v4232
    %4541 = vmatpush1.bf16.msra.mxu0 %v4231
    %4542 = vmatprep.subr.bf16.mxu0 %v4248
    %4543 = vmatpush1.bf16.msra.mxu0 %v4247
    %4544 = vmatprep.subr.bf16.mxu0 %v4264
    %4545 = vmatpush1.bf16.msra.mxu0 %v4263
    %4546 = vmatprep.subr.bf16.mxu0 0
    %4547 = vmatpush1.bf16.msra.mxu0 0
    %4548 = vmatprep.subr.bf16.mxu0 0
    %4549 = vmatpush1.bf16.msra.mxu0 0
    %4550 = vmatprep.subr.bf16.mxu0 0
    %4551 = vmatpush1.bf16.msra.mxu0 0
    %4552 = vmatprep.subr.bf16.mxu0 0
    %4553 = vmatpush1.bf16.msra.mxu0 0
    %4554 = vmatprep.subr.bf16.mxu0 0
    %4555 = vmatpush1.bf16.msra.mxu0 0
    %4556 = vmatprep.subr.bf16.mxu0 0
    %4557 = vmatpush1.bf16.msra.mxu0 0
    %4558 = vmatprep.subr.bf16.mxu0 0
    %4559 = vmatpush1.bf16.msra.mxu0 0
    %4560 = vmatprep.subr.bf16.mxu0 0
    %4561 = vmatpush1.bf16.msra.mxu0 0
    %4562 = vmatprep.mubr.bf16.mxu0 0
    %4563 = vmatmul.mubr.bf16.gmra.mrb[0].mxu0 %v3546
    %v4564 = vpop.f32.mrb[0].mxu0
    %v4565 = vadd.f32 %v3708, %v4564
    %v4566 = vpop.f32.mrb[0].mxu0
    %v4567 = vadd.f32 %v3712, %v4566
    %v4568 = vpop.f32.mrb[0].mxu0
    %v4569 = vadd.f32 %v3708, %v4568
    %v4570 = vpop.f32.mrb[0].mxu0
    %v4571 = vadd.f32 %v3712, %v4570
    %4572 = vdwg.mxu0
    %4573 = vmatprep.subr.bf16.mxu0 %v4154
    %4574 = vmatpush1.bf16.msra.mxu0 %v4153
    %4575 = vmatprep.subr.bf16.mxu0 %v4170
    %4576 = vmatpush1.bf16.msra.mxu0 %v4169
    %4577 = vmatprep.subr.bf16.mxu0 %v4186
    %4578 = vmatpush1.bf16.msra.mxu0 %v4185
    %4579 = vmatprep.subr.bf16.mxu0 %v4202
    %4580 = vmatpush1.bf16.msra.mxu0 %v4201
    %4581 = vmatprep.subr.bf16.mxu0 %v4218
    %4582 = vmatpush1.bf16.msra.mxu0 %v4217
    %4583 = vmatprep.subr.bf16.mxu0 %v4234
    %4584 = vmatpush1.bf16.msra.mxu0 %v4233
    %4585 = vmatprep.subr.bf16.mxu0 %v4250
    %4586 = vmatpush1.bf16.msra.mxu0 %v4249
    %4587 = vmatprep.subr.bf16.mxu0 %v4266
    %4588 = vmatpush1.bf16.msra.mxu0 %v4265
    %4589 = vmatprep.subr.bf16.mxu0 0
    %4590 = vmatpush1.bf16.msra.mxu0 0
    %4591 = vmatprep.subr.bf16.mxu0 0
    %4592 = vmatpush1.bf16.msra.mxu0 0
    %4593 = vmatprep.subr.bf16.mxu0 0
    %4594 = vmatpush1.bf16.msra.mxu0 0
    %4595 = vmatprep.subr.bf16.mxu0 0
    %4596 = vmatpush1.bf16.msra.mxu0 0
    %4597 = vmatprep.subr.bf16.mxu0 0
    %4598 = vmatpush1.bf16.msra.mxu0 0
    %4599 = vmatprep.subr.bf16.mxu0 0
    %4600 = vmatpush1.bf16.msra.mxu0 0
    %4601 = vmatprep.subr.bf16.mxu0 0
    %4602 = vmatpush1.bf16.msra.mxu0 0
    %4603 = vmatprep.subr.bf16.mxu0 0
    %4604 = vmatpush1.bf16.msra.mxu0 0
    %4605 = vmatprep.mubr.bf16.mxu0 0
    %4606 = vmatmul.mubr.bf16.gmra.mrb[0].mxu0 %v3546
    %v4607 = vpop.f32.mrb[0].mxu0
    %v4608 = vadd.f32 %v3716, %v4607
    %v4609 = vpop.f32.mrb[0].mxu0
    %v4610 = vadd.f32 %v3720, %v4609
    %v4611 = vpop.f32.mrb[0].mxu0
    %v4612 = vadd.f32 %v3716, %v4611
    %v4613 = vpop.f32.mrb[0].mxu0
    %v4614 = vadd.f32 %v3720, %v4613
    %4615 = vdwg.mxu0
    %4616 = vmatprep.subr.bf16.mxu0 %v4156
    %4617 = vmatpush1.bf16.msra.mxu0 %v4155
    %4618 = vmatprep.subr.bf16.mxu0 %v4172
    %4619 = vmatpush1.bf16.msra.mxu0 %v4171
    %4620 = vmatprep.subr.bf16.mxu0 %v4188
    %4621 = vmatpush1.bf16.msra.mxu0 %v4187
    %4622 = vmatprep.subr.bf16.mxu0 %v4204
    %4623 = vmatpush1.bf16.msra.mxu0 %v4203
    %4624 = vmatprep.subr.bf16.mxu0 %v4220
    %4625 = vmatpush1.bf16.msra.mxu0 %v4219
    %4626 = vmatprep.subr.bf16.mxu0 %v4236
    %4627 = vmatpush1.bf16.msra.mxu0 %v4235
    %4628 = vmatprep.subr.bf16.mxu0 %v4252
    %4629 = vmatpush1.bf16.msra.mxu0 %v4251
    %4630 = vmatprep.subr.bf16.mxu0 %v4268
    %4631 = vmatpush1.bf16.msra.mxu0 %v4267
    %4632 = vmatprep.subr.bf16.mxu0 0
    %4633 = vmatpush1.bf16.msra.mxu0 0
    %4634 = vmatprep.subr.bf16.mxu0 0
    %4635 = vmatpush1.bf16.msra.mxu0 0
    %4636 = vmatprep.subr.bf16.mxu0 0
    %4637 = vmatpush1.bf16.msra.mxu0 0
    %4638 = vmatprep.subr.bf16.mxu0 0
    %4639 = vmatpush1.bf16.msra.mxu0 0
    %4640 = vmatprep.subr.bf16.mxu0 0
    %4641 = vmatpush1.bf16.msra.mxu0 0
    %4642 = vmatprep.subr.bf16.mxu0 0
    %4643 = vmatpush1.bf16.msra.mxu0 0
    %4644 = vmatprep.subr.bf16.mxu0 0
    %4645 = vmatpush1.bf16.msra.mxu0 0
    %4646 = vmatprep.subr.bf16.mxu0 0
    %4647 = vmatpush1.bf16.msra.mxu0 0
    %4648 = vmatprep.mubr.bf16.mxu0 0
    %4649 = vmatmul.mubr.bf16.gmra.mrb[0].mxu0 %v3546
    %v4650 = vpop.f32.mrb[0].mxu0
    %v4651 = vadd.f32 %v3724, %v4650
    %v4652 = vpop.f32.mrb[0].mxu0
    %v4653 = vadd.f32 %v3728, %v4652
    %v4654 = vpop.f32.mrb[0].mxu0
    %v4655 = vadd.f32 %v3724, %v4654
    %v4656 = vpop.f32.mrb[0].mxu0
    %v4657 = vadd.f32 %v3728, %v4656
    %4658 = vdwg.mxu0
    %4659 = vmatprep.subr.bf16.mxu0 %v4158
    %4660 = vmatpush1.bf16.msra.mxu0 %v4157
    %4661 = vmatprep.subr.bf16.mxu0 %v4174
    %4662 = vmatpush1.bf16.msra.mxu0 %v4173
    %4663 = vmatprep.subr.bf16.mxu0 %v4190
    %4664 = vmatpush1.bf16.msra.mxu0 %v4189
    %4665 = vmatprep.subr.bf16.mxu0 %v4206
    %4666 = vmatpush1.bf16.msra.mxu0 %v4205
    %4667 = vmatprep.subr.bf16.mxu0 %v4222
    %4668 = vmatpush1.bf16.msra.mxu0 %v4221
    %4669 = vmatprep.subr.bf16.mxu0 %v4238
    %4670 = vmatpush1.bf16.msra.mxu0 %v4237
    %4671 = vmatprep.subr.bf16.mxu0 %v4254
    %4672 = vmatpush1.bf16.msra.mxu0 %v4253
    %4673 = vmatprep.subr.bf16.mxu0 %v4270
    %4674 = vmatpush1.bf16.msra.mxu0 %v4269
    %4675 = vmatprep.subr.bf16.mxu0 0
    %4676 = vmatpush1.bf16.msra.mxu0 0
    %4677 = vmatprep.subr.bf16.mxu0 0
    %4678 = vmatpush1.bf16.msra.mxu0 0
    %4679 = vmatprep.subr.bf16.mxu0 0
    %4680 = vmatpush1.bf16.msra.mxu0 0
    %4681 = vmatprep.subr.bf16.mxu0 0
    %4682 = vmatpush1.bf16.msra.mxu0 0
    %4683 = vmatprep.subr.bf16.mxu0 0
    %4684 = vmatpush1.bf16.msra.mxu0 0
    %4685 = vmatprep.subr.bf16.mxu0 0
    %4686 = vmatpush1.bf16.msra.mxu0 0
    %4687 = vmatprep.subr.bf16.mxu0 0
    %4688 = vmatpush1.bf16.msra.mxu0 0
    %4689 = vmatprep.subr.bf16.mxu0 0
    %4690 = vmatpush1.bf16.msra.mxu0 0
    %4691 = vmatprep.mubr.bf16.mxu0 0
    %4692 = vmatmul.mubr.bf16.gmra.mrb[0].mxu0 %v3546
    %v4693 = vpop.f32.mrb[0].mxu0
    %v4694 = vadd.f32 %v3732, %v4693
    %v4695 = vpop.f32.mrb[0].mxu0
    %v4696 = vadd.f32 %v3736, %v4695
    %v4697 = vpop.f32.mrb[0].mxu0
    %v4698 = vadd.f32 %v3732, %v4697
    %v4699 = vpop.f32.mrb[0].mxu0
    %v4700 = vadd.f32 %v3736, %v4699
    %4701 = vdwg.mxu0
    %4702 = vmatprep.subr.bf16.mxu0 %v4160
    %4703 = vmatpush1.bf16.msra.mxu0 %v4159
    %4704 = vmatprep.subr.bf16.mxu0 %v4176
    %4705 = vmatpush1.bf16.msra.mxu0 %v4175
    %4706 = vmatprep.subr.bf16.mxu0 %v4192
    %4707 = vmatpush1.bf16.msra.mxu0 %v4191
    %4708 = vmatprep.subr.bf16.mxu0 %v4208
    %4709 = vmatpush1.bf16.msra.mxu0 %v4207
    %4710 = vmatprep.subr.bf16.mxu0 %v4224
    %4711 = vmatpush1.bf16.msra.mxu0 %v4223
    %4712 = vmatprep.subr.bf16.mxu0 %v4240
    %4713 = vmatpush1.bf16.msra.mxu0 %v4239
    %4714 = vmatprep.subr.bf16.mxu0 %v4256
    %4715 = vmatpush1.bf16.msra.mxu0 %v4255
    %4716 = vmatprep.subr.bf16.mxu0 %v4272
    %4717 = vmatpush1.bf16.msra.mxu0 %v4271
    %4718 = vmatprep.subr.bf16.mxu0 0
    %4719 = vmatpush1.bf16.msra.mxu0 0
    %4720 = vmatprep.subr.bf16.mxu0 0
    %4721 = vmatpush1.bf16.msra.mxu0 0
    %4722 = vmatprep.subr.bf16.mxu0 0
    %4723 = vmatpush1.bf16.msra.mxu0 0
    %4724 = vmatprep.subr.bf16.mxu0 0
    %4725 = vmatpush1.bf16.msra.mxu0 0
    %4726 = vmatprep.subr.bf16.mxu0 0
    %4727 = vmatpush1.bf16.msra.mxu0 0
    %4728 = vmatprep.subr.bf16.mxu0 0
    %4729 = vmatpush1.bf16.msra.mxu0 0
    %4730 = vmatprep.subr.bf16.mxu0 0
    %4731 = vmatpush1.bf16.msra.mxu0 0
    %4732 = vmatprep.subr.bf16.mxu0 0
    %4733 = vmatpush1.bf16.msra.mxu0 0
    %4734 = vmatprep.mubr.bf16.mxu0 0
    %4735 = vmatmul.mubr.bf16.gmra.mrb[0].mxu0 %v3546
    %v4736 = vpop.f32.mrb[0].mxu0
    %v4737 = vadd.f32 %v3740, %v4736
    %v4738 = vpop.f32.mrb[0].mxu0
    %v4739 = vadd.f32 %v3744, %v4738
    %v4740 = vpop.f32.mrb[0].mxu0
    %v4741 = vadd.f32 %v3740, %v4740
    %v4742 = vpop.f32.mrb[0].mxu0
    %v4743 = vadd.f32 %v3744, %v4742
    %4744 = vdwg.mxu0
    %v4745 = vmax.f32 %v4436, 0.0
    %v4746 = vmax.f32 %v4438, 0.0
    %v4747 = vmax.f32 %v4479, 0.0
    %v4748 = vmax.f32 %v4481, 0.0
    %v4749 = vmax.f32 %v4522, 0.0
    %v4750 = vmax.f32 %v4524, 0.0
    %v4751 = vmax.f32 %v4565, 0.0
    %v4752 = vmax.f32 %v4567, 0.0
    %v4753 = vmax.f32 %v4608, 0.0
    %v4754 = vmax.f32 %v4610, 0.0
    %v4755 = vmax.f32 %v4651, 0.0
    %v4756 = vmax.f32 %v4653, 0.0
    %v4757 = vmax.f32 %v4694, 0.0
    %v4758 = vmax.f32 %v4696, 0.0
    %v4759 = vmax.f32 %v4737, 0.0
    %v4760 = vmax.f32 %v4739, 0.0
    %v4761 = vmax.f32 %v4440, 0.0
    %v4762 = vmax.f32 %v4442, 0.0
    %v4763 = vmax.f32 %v4483, 0.0
    %v4764 = vmax.f32 %v4485, 0.0
    %v4765 = vmax.f32 %v4526, 0.0
    %v4766 = vmax.f32 %v4528, 0.0
    %v4767 = vmax.f32 %v4569, 0.0
    %v4768 = vmax.f32 %v4571, 0.0
    %v4769 = vmax.f32 %v4612, 0.0
    %v4770 = vmax.f32 %v4614, 0.0
    %v4771 = vmax.f32 %v4655, 0.0
    %v4772 = vmax.f32 %v4657, 0.0
    %v4773 = vmax.f32 %v4698, 0.0
    %v4774 = vmax.f32 %v4700, 0.0
    %v4775 = vmax.f32 %v4741, 0.0
    %v4776 = vmax.f32 %v4743, 0.0
    %v4777 = vpack.c.bf16 %v4761, %v4745
    %v4778 = vpack.c.bf16 %v4762, %v4746
    %v4779 = vpack.c.bf16 %v4763, %v4747
    %v4780 = vpack.c.bf16 %v4764, %v4748
    %v4781 = vpack.c.bf16 %v4765, %v4749
    %v4782 = vpack.c.bf16 %v4766, %v4750
    %v4783 = vpack.c.bf16 %v4767, %v4751
    %v4784 = vpack.c.bf16 %v4768, %v4752
    %v4785 = vpack.c.bf16 %v4769, %v4753
    %v4786 = vpack.c.bf16 %v4770, %v4754
    %v4787 = vpack.c.bf16 %v4771, %v4755
    %v4788 = vpack.c.bf16 %v4772, %v4756
    %v4789 = vpack.c.bf16 %v4773, %v4757
    %v4790 = vpack.c.bf16 %v4774, %v4758
    %v4791 = vpack.c.bf16 %v4775, %v4759
    %v4792 = vpack.c.bf16 %v4776, %v4760
    %s4793 = scalar_lea.vmem [#allocation21], 1024
    %v4794 = vld [vmem:[%s4793] sm:$0xf]
    %v4795 = vld [vmem:[%s4793 + $0x4] sm:$0xf]
    %v4796 = vld [vmem:[%s4793 + $0x8] sm:$0xf]
    %v4797 = vld [vmem:[%s4793 + $0xc] sm:$0xf]
    %v4798 = vld [vmem:[%s4793 + $0x10] sm:$0xf]
    %v4799 = vld [vmem:[%s4793 + $0x14] sm:$0xf]
    %v4800 = vld [vmem:[%s4793 + $0x18] sm:$0xf]
    %v4801 = vld [vmem:[%s4793 + $0x1c] sm:$0xf]
    %v4802 = vld [vmem:[%s4793 + $0x20] sm:$0xf]
    %v4803 = vld [vmem:[%s4793 + $0x24] sm:$0xf]
    %v4804 = vld [vmem:[%s4793 + $0x28] sm:$0xf]
    %v4805 = vld [vmem:[%s4793 + $0x2c] sm:$0xf]
    %v4806 = vld [vmem:[%s4793 + $0x30] sm:$0xf]
    %v4807 = vld [vmem:[%s4793 + $0x34] sm:$0xf]
    %v4808 = vld [vmem:[%s4793 + $0x38] sm:$0xf]
    %v4809 = vld [vmem:[%s4793 + $0x3c] sm:$0xf]
    %v4810 = vld [vmem:[%s4793 + $0x40] sm:$0xf]
    %v4811 = vld [vmem:[%s4793 + $0x44] sm:$0xf]
    %v4812 = vld [vmem:[%s4793 + $0x48] sm:$0xf]
    %v4813 = vld [vmem:[%s4793 + $0x4c] sm:$0xf]
    %v4814 = vld [vmem:[%s4793 + $0x50] sm:$0xf]
    %v4815 = vld [vmem:[%s4793 + $0x54] sm:$0xf]
    %v4816 = vld [vmem:[%s4793 + $0x58] sm:$0xf]
    %v4817 = vld [vmem:[%s4793 + $0x5c] sm:$0xf]
    %v4818 = vld [vmem:[%s4793 + $0x60] sm:$0xf]
    %v4819 = vld [vmem:[%s4793 + $0x64] sm:$0xf]
    %v4820 = vld [vmem:[%s4793 + $0x68] sm:$0xf]
    %v4821 = vld [vmem:[%s4793 + $0x6c] sm:$0xf]
    %v4822 = vld [vmem:[%s4793 + $0x70] sm:$0xf]
    %v4823 = vld [vmem:[%s4793 + $0x74] sm:$0xf]
    %v4824 = vld [vmem:[%s4793 + $0x78] sm:$0xf]
    %v4825 = vld [vmem:[%s4793 + $0x7c] sm:$0xf]
    %v4826 = vld [vmem:[%s4793 + $0x80] sm:$0xf]
    %v4827 = vld [vmem:[%s4793 + $0x84] sm:$0xf]
    %v4828 = vld [vmem:[%s4793 + $0x88] sm:$0xf]
    %v4829 = vld [vmem:[%s4793 + $0x8c] sm:$0xf]
    %v4830 = vld [vmem:[%s4793 + $0x90] sm:$0xf]
    %v4831 = vld [vmem:[%s4793 + $0x94] sm:$0xf]
    %v4832 = vld [vmem:[%s4793 + $0x98] sm:$0xf]
    %v4833 = vld [vmem:[%s4793 + $0x9c] sm:$0xf]
    %v4834 = vld [vmem:[%s4793 + $0xa0] sm:$0xf]
    %v4835 = vld [vmem:[%s4793 + $0xa4] sm:$0xf]
    %v4836 = vld [vmem:[%s4793 + $0xa8] sm:$0xf]
    %v4837 = vld [vmem:[%s4793 + $0xac] sm:$0xf]
    %v4838 = vld [vmem:[%s4793 + $0xb0] sm:$0xf]
    %v4839 = vld [vmem:[%s4793 + $0xb4] sm:$0xf]
    %v4840 = vld [vmem:[%s4793 + $0xb8] sm:$0xf]
    %v4841 = vld [vmem:[%s4793 + $0xbc] sm:$0xf]
    %v4842 = vld [vmem:[%s4793 + $0xc0] sm:$0xf]
    %v4843 = vld [vmem:[%s4793 + $0xc4] sm:$0xf]
    %v4844 = vld [vmem:[%s4793 + $0xc8] sm:$0xf]
    %v4845 = vld [vmem:[%s4793 + $0xcc] sm:$0xf]
    %v4846 = vld [vmem:[%s4793 + $0xd0] sm:$0xf]
    %v4847 = vld [vmem:[%s4793 + $0xd4] sm:$0xf]
    %v4848 = vld [vmem:[%s4793 + $0xd8] sm:$0xf]
    %v4849 = vld [vmem:[%s4793 + $0xdc] sm:$0xf]
    %v4850 = vld [vmem:[%s4793 + $0xe0] sm:$0xf]
    %v4851 = vld [vmem:[%s4793 + $0xe4] sm:$0xf]
    %v4852 = vld [vmem:[%s4793 + $0xe8] sm:$0xf]
    %v4853 = vld [vmem:[%s4793 + $0xec] sm:$0xf]
    %v4854 = vld [vmem:[%s4793 + $0xf0] sm:$0xf]
    %v4855 = vld [vmem:[%s4793 + $0xf4] sm:$0xf]
    %v4856 = vld [vmem:[%s4793 + $0xf8] sm:$0xf]
    %v4857 = vld [vmem:[%s4793 + $0xfc] sm:$0xf]
    %v4858 = vld [vmem:[%s4793 + $0x100] sm:$0xf]
    %v4859 = vld [vmem:[%s4793 + $0x104] sm:$0xf]
    %v4860 = vld [vmem:[%s4793 + $0x108] sm:$0xf]
    %v4861 = vld [vmem:[%s4793 + $0x10c] sm:$0xf]
    %v4862 = vld [vmem:[%s4793 + $0x110] sm:$0xf]
    %v4863 = vld [vmem:[%s4793 + $0x114] sm:$0xf]
    %v4864 = vld [vmem:[%s4793 + $0x118] sm:$0xf]
    %v4865 = vld [vmem:[%s4793 + $0x11c] sm:$0xf]
    %v4866 = vld [vmem:[%s4793 + $0x120] sm:$0xf]
    %v4867 = vld [vmem:[%s4793 + $0x124] sm:$0xf]
    %v4868 = vld [vmem:[%s4793 + $0x128] sm:$0xf]
    %v4869 = vld [vmem:[%s4793 + $0x12c] sm:$0xf]
    %v4870 = vld [vmem:[%s4793 + $0x130] sm:$0xf]
    %v4871 = vld [vmem:[%s4793 + $0x134] sm:$0xf]
    %v4872 = vld [vmem:[%s4793 + $0x138] sm:$0xf]
    %v4873 = vld [vmem:[%s4793 + $0x13c] sm:$0xf]
    %v4874 = vld [vmem:[%s4793 + $0x140] sm:$0xf]
    %v4875 = vld [vmem:[%s4793 + $0x144] sm:$0xf]
    %v4876 = vld [vmem:[%s4793 + $0x148] sm:$0xf]
    %v4877 = vld [vmem:[%s4793 + $0x14c] sm:$0xf]
    %v4878 = vld [vmem:[%s4793 + $0x150] sm:$0xf]
    %v4879 = vld [vmem:[%s4793 + $0x154] sm:$0xf]
    %v4880 = vld [vmem:[%s4793 + $0x158] sm:$0xf]
    %v4881 = vld [vmem:[%s4793 + $0x15c] sm:$0xf]
    %v4882 = vld [vmem:[%s4793 + $0x160] sm:$0xf]
    %v4883 = vld [vmem:[%s4793 + $0x164] sm:$0xf]
    %v4884 = vld [vmem:[%s4793 + $0x168] sm:$0xf]
    %v4885 = vld [vmem:[%s4793 + $0x16c] sm:$0xf]
    %v4886 = vld [vmem:[%s4793 + $0x170] sm:$0xf]
    %v4887 = vld [vmem:[%s4793 + $0x174] sm:$0xf]
    %v4888 = vld [vmem:[%s4793 + $0x178] sm:$0xf]
    %v4889 = vld [vmem:[%s4793 + $0x17c] sm:$0xf]
    %v4890 = vld [vmem:[%s4793 + $0x180] sm:$0xf]
    %v4891 = vld [vmem:[%s4793 + $0x184] sm:$0xf]
    %v4892 = vld [vmem:[%s4793 + $0x188] sm:$0xf]
    %v4893 = vld [vmem:[%s4793 + $0x18c] sm:$0xf]
    %v4894 = vld [vmem:[%s4793 + $0x190] sm:$0xf]
    %v4895 = vld [vmem:[%s4793 + $0x194] sm:$0xf]
    %v4896 = vld [vmem:[%s4793 + $0x198] sm:$0xf]
    %v4897 = vld [vmem:[%s4793 + $0x19c] sm:$0xf]
    %v4898 = vld [vmem:[%s4793 + $0x1a0] sm:$0xf]
    %v4899 = vld [vmem:[%s4793 + $0x1a4] sm:$0xf]
    %v4900 = vld [vmem:[%s4793 + $0x1a8] sm:$0xf]
    %v4901 = vld [vmem:[%s4793 + $0x1ac] sm:$0xf]
    %v4902 = vld [vmem:[%s4793 + $0x1b0] sm:$0xf]
    %v4903 = vld [vmem:[%s4793 + $0x1b4] sm:$0xf]
    %v4904 = vld [vmem:[%s4793 + $0x1b8] sm:$0xf]
    %v4905 = vld [vmem:[%s4793 + $0x1bc] sm:$0xf]
    %v4906 = vld [vmem:[%s4793 + $0x1c0] sm:$0xf]
    %v4907 = vld [vmem:[%s4793 + $0x1c4] sm:$0xf]
    %v4908 = vld [vmem:[%s4793 + $0x1c8] sm:$0xf]
    %v4909 = vld [vmem:[%s4793 + $0x1cc] sm:$0xf]
    %v4910 = vld [vmem:[%s4793 + $0x1d0] sm:$0xf]
    %v4911 = vld [vmem:[%s4793 + $0x1d4] sm:$0xf]
    %v4912 = vld [vmem:[%s4793 + $0x1d8] sm:$0xf]
    %v4913 = vld [vmem:[%s4793 + $0x1dc] sm:$0xf]
    %v4914 = vld [vmem:[%s4793 + $0x1e0] sm:$0xf]
    %v4915 = vld [vmem:[%s4793 + $0x1e4] sm:$0xf]
    %v4916 = vld [vmem:[%s4793 + $0x1e8] sm:$0xf]
    %v4917 = vld [vmem:[%s4793 + $0x1ec] sm:$0xf]
    %v4918 = vld [vmem:[%s4793 + $0x1f0] sm:$0xf]
    %v4919 = vld [vmem:[%s4793 + $0x1f4] sm:$0xf]
    %v4920 = vld [vmem:[%s4793 + $0x1f8] sm:$0xf]
    %v4921 = vld [vmem:[%s4793 + $0x1fc] sm:$0xf]
    %v4922 = vld [vmem:[%s4793 + $0x200] sm:$0xf]
    %v4923 = vld [vmem:[%s4793 + $0x204] sm:$0xf]
    %v4924 = vld [vmem:[%s4793 + $0x208] sm:$0xf]
    %v4925 = vld [vmem:[%s4793 + $0x20c] sm:$0xf]
    %v4926 = vld [vmem:[%s4793 + $0x210] sm:$0xf]
    %v4927 = vld [vmem:[%s4793 + $0x214] sm:$0xf]
    %v4928 = vld [vmem:[%s4793 + $0x218] sm:$0xf]
    %v4929 = vld [vmem:[%s4793 + $0x21c] sm:$0xf]
    %v4930 = vld [vmem:[%s4793 + $0x220] sm:$0xf]
    %v4931 = vld [vmem:[%s4793 + $0x224] sm:$0xf]
    %v4932 = vld [vmem:[%s4793 + $0x228] sm:$0xf]
    %v4933 = vld [vmem:[%s4793 + $0x22c] sm:$0xf]
    %v4934 = vld [vmem:[%s4793 + $0x230] sm:$0xf]
    %v4935 = vld [vmem:[%s4793 + $0x234] sm:$0xf]
    %v4936 = vld [vmem:[%s4793 + $0x238] sm:$0xf]
    %v4937 = vld [vmem:[%s4793 + $0x23c] sm:$0xf]
    %v4938 = vld [vmem:[%s4793 + $0x240] sm:$0xf]
    %v4939 = vld [vmem:[%s4793 + $0x244] sm:$0xf]
    %v4940 = vld [vmem:[%s4793 + $0x248] sm:$0xf]
    %v4941 = vld [vmem:[%s4793 + $0x24c] sm:$0xf]
    %v4942 = vld [vmem:[%s4793 + $0x250] sm:$0xf]
    %v4943 = vld [vmem:[%s4793 + $0x254] sm:$0xf]
    %v4944 = vld [vmem:[%s4793 + $0x258] sm:$0xf]
    %v4945 = vld [vmem:[%s4793 + $0x25c] sm:$0xf]
    %v4946 = vld [vmem:[%s4793 + $0x260] sm:$0xf]
    %v4947 = vld [vmem:[%s4793 + $0x264] sm:$0xf]
    %v4948 = vld [vmem:[%s4793 + $0x268] sm:$0xf]
    %v4949 = vld [vmem:[%s4793 + $0x26c] sm:$0xf]
    %v4950 = vld [vmem:[%s4793 + $0x270] sm:$0xf]
    %v4951 = vld [vmem:[%s4793 + $0x274] sm:$0xf]
    %v4952 = vld [vmem:[%s4793 + $0x278] sm:$0xf]
    %v4953 = vld [vmem:[%s4793 + $0x27c] sm:$0xf]
    %v4954 = vld [vmem:[%s4793 + $0x280] sm:$0xf]
    %v4955 = vld [vmem:[%s4793 + $0x284] sm:$0xf]
    %v4956 = vld [vmem:[%s4793 + $0x288] sm:$0xf]
    %v4957 = vld [vmem:[%s4793 + $0x28c] sm:$0xf]
    %v4958 = vld [vmem:[%s4793 + $0x290] sm:$0xf]
    %v4959 = vld [vmem:[%s4793 + $0x294] sm:$0xf]
    %v4960 = vld [vmem:[%s4793 + $0x298] sm:$0xf]
    %v4961 = vld [vmem:[%s4793 + $0x29c] sm:$0xf]
    %v4962 = vld [vmem:[%s4793 + $0x2a0] sm:$0xf]
    %v4963 = vld [vmem:[%s4793 + $0x2a4] sm:$0xf]
    %v4964 = vld [vmem:[%s4793 + $0x2a8] sm:$0xf]
    %v4965 = vld [vmem:[%s4793 + $0x2ac] sm:$0xf]
    %v4966 = vld [vmem:[%s4793 + $0x2b0] sm:$0xf]
    %v4967 = vld [vmem:[%s4793 + $0x2b4] sm:$0xf]
    %v4968 = vld [vmem:[%s4793 + $0x2b8] sm:$0xf]
    %v4969 = vld [vmem:[%s4793 + $0x2bc] sm:$0xf]
    %v4970 = vld [vmem:[%s4793 + $0x2c0] sm:$0xf]
    %v4971 = vld [vmem:[%s4793 + $0x2c4] sm:$0xf]
    %v4972 = vld [vmem:[%s4793 + $0x2c8] sm:$0xf]
    %v4973 = vld [vmem:[%s4793 + $0x2cc] sm:$0xf]
    %v4974 = vld [vmem:[%s4793 + $0x2d0] sm:$0xf]
    %v4975 = vld [vmem:[%s4793 + $0x2d4] sm:$0xf]
    %v4976 = vld [vmem:[%s4793 + $0x2d8] sm:$0xf]
    %v4977 = vld [vmem:[%s4793 + $0x2dc] sm:$0xf]
    %v4978 = vld [vmem:[%s4793 + $0x2e0] sm:$0xf]
    %v4979 = vld [vmem:[%s4793 + $0x2e4] sm:$0xf]
    %v4980 = vld [vmem:[%s4793 + $0x2e8] sm:$0xf]
    %v4981 = vld [vmem:[%s4793 + $0x2ec] sm:$0xf]
    %v4982 = vld [vmem:[%s4793 + $0x2f0] sm:$0xf]
    %v4983 = vld [vmem:[%s4793 + $0x2f4] sm:$0xf]
    %v4984 = vld [vmem:[%s4793 + $0x2f8] sm:$0xf]
    %v4985 = vld [vmem:[%s4793 + $0x2fc] sm:$0xf]
    %v4986 = vld [vmem:[%s4793 + $0x300] sm:$0xf]
    %v4987 = vld [vmem:[%s4793 + $0x304] sm:$0xf]
    %v4988 = vld [vmem:[%s4793 + $0x308] sm:$0xf]
    %v4989 = vld [vmem:[%s4793 + $0x30c] sm:$0xf]
    %v4990 = vld [vmem:[%s4793 + $0x310] sm:$0xf]
    %v4991 = vld [vmem:[%s4793 + $0x314] sm:$0xf]
    %v4992 = vld [vmem:[%s4793 + $0x318] sm:$0xf]
    %v4993 = vld [vmem:[%s4793 + $0x31c] sm:$0xf]
    %v4994 = vld [vmem:[%s4793 + $0x320] sm:$0xf]
    %v4995 = vld [vmem:[%s4793 + $0x324] sm:$0xf]
    %v4996 = vld [vmem:[%s4793 + $0x328] sm:$0xf]
    %v4997 = vld [vmem:[%s4793 + $0x32c] sm:$0xf]
    %v4998 = vld [vmem:[%s4793 + $0x330] sm:$0xf]
    %v4999 = vld [vmem:[%s4793 + $0x334] sm:$0xf]
    %v5000 = vld [vmem:[%s4793 + $0x338] sm:$0xf]
    %v5001 = vld [vmem:[%s4793 + $0x33c] sm:$0xf]
    %v5002 = vld [vmem:[%s4793 + $0x340] sm:$0xf]
    %v5003 = vld [vmem:[%s4793 + $0x344] sm:$0xf]
    %v5004 = vld [vmem:[%s4793 + $0x348] sm:$0xf]
    %v5005 = vld [vmem:[%s4793 + $0x34c] sm:$0xf]
    %v5006 = vld [vmem:[%s4793 + $0x350] sm:$0xf]
    %v5007 = vld [vmem:[%s4793 + $0x354] sm:$0xf]
    %v5008 = vld [vmem:[%s4793 + $0x358] sm:$0xf]
    %v5009 = vld [vmem:[%s4793 + $0x35c] sm:$0xf]
    %v5010 = vld [vmem:[%s4793 + $0x360] sm:$0xf]
    %v5011 = vld [vmem:[%s4793 + $0x364] sm:$0xf]
    %v5012 = vld [vmem:[%s4793 + $0x368] sm:$0xf]
    %v5013 = vld [vmem:[%s4793 + $0x36c] sm:$0xf]
    %v5014 = vld [vmem:[%s4793 + $0x370] sm:$0xf]
    %v5015 = vld [vmem:[%s4793 + $0x374] sm:$0xf]
    %v5016 = vld [vmem:[%s4793 + $0x378] sm:$0xf]
    %v5017 = vld [vmem:[%s4793 + $0x37c] sm:$0xf]
    %v5018 = vld [vmem:[%s4793 + $0x380] sm:$0xf]
    %v5019 = vld [vmem:[%s4793 + $0x384] sm:$0xf]
    %v5020 = vld [vmem:[%s4793 + $0x388] sm:$0xf]
    %v5021 = vld [vmem:[%s4793 + $0x38c] sm:$0xf]
    %v5022 = vld [vmem:[%s4793 + $0x390] sm:$0xf]
    %v5023 = vld [vmem:[%s4793 + $0x394] sm:$0xf]
    %v5024 = vld [vmem:[%s4793 + $0x398] sm:$0xf]
    %v5025 = vld [vmem:[%s4793 + $0x39c] sm:$0xf]
    %v5026 = vld [vmem:[%s4793 + $0x3a0] sm:$0xf]
    %v5027 = vld [vmem:[%s4793 + $0x3a4] sm:$0xf]
    %v5028 = vld [vmem:[%s4793 + $0x3a8] sm:$0xf]
    %v5029 = vld [vmem:[%s4793 + $0x3ac] sm:$0xf]
    %v5030 = vld [vmem:[%s4793 + $0x3b0] sm:$0xf]
    %v5031 = vld [vmem:[%s4793 + $0x3b4] sm:$0xf]
    %v5032 = vld [vmem:[%s4793 + $0x3b8] sm:$0xf]
    %v5033 = vld [vmem:[%s4793 + $0x3bc] sm:$0xf]
    %v5034 = vld [vmem:[%s4793 + $0x3c0] sm:$0xf]
    %v5035 = vld [vmem:[%s4793 + $0x3c4] sm:$0xf]
    %v5036 = vld [vmem:[%s4793 + $0x3c8] sm:$0xf]
    %v5037 = vld [vmem:[%s4793 + $0x3cc] sm:$0xf]
    %v5038 = vld [vmem:[%s4793 + $0x3d0] sm:$0xf]
    %v5039 = vld [vmem:[%s4793 + $0x3d4] sm:$0xf]
    %v5040 = vld [vmem:[%s4793 + $0x3d8] sm:$0xf]
    %v5041 = vld [vmem:[%s4793 + $0x3dc] sm:$0xf]
    %v5042 = vld [vmem:[%s4793 + $0x3e0] sm:$0xf]
    %v5043 = vld [vmem:[%s4793 + $0x3e4] sm:$0xf]
    %v5044 = vld [vmem:[%s4793 + $0x3e8] sm:$0xf]
    %v5045 = vld [vmem:[%s4793 + $0x3ec] sm:$0xf]
    %v5046 = vld [vmem:[%s4793 + $0x3f0] sm:$0xf]
    %v5047 = vld [vmem:[%s4793 + $0x3f4] sm:$0xf]
    %v5048 = vld [vmem:[%s4793 + $0x3f8] sm:$0xf]
    %v5049 = vld [vmem:[%s4793 + $0x3fc] sm:$0xf]
    %s5050 = scalar_lea.vmem [#allocation23], 1
    %v5051 = vld [vmem:[%s5050] sm:$0x1]
    %v5053 = vlaneseq
    %v5054 = vshrl.u32 %v5053, 7
    %v5055 = vsub.s32 0, %v5054
    %v5056 = vrot.slane %v5051, %v5055
    %v5314 = vunpack.c.l.b16 %v4794
    %v5315 = vunpack.c.l.b16 %v4795
    %v5316 = vunpack.c.l.b16 %v4796
    %v5317 = vunpack.c.l.b16 %v4797
    %v5318 = vunpack.c.l.b16 %v4798
    %v5319 = vunpack.c.l.b16 %v4799
    %v5320 = vunpack.c.l.b16 %v4800
    %v5321 = vunpack.c.l.b16 %v4801
    %v5322 = vunpack.c.l.b16 %v4802
    %v5323 = vunpack.c.l.b16 %v4803
    %v5324 = vunpack.c.l.b16 %v4804
    %v5325 = vunpack.c.l.b16 %v4805
    %v5326 = vunpack.c.l.b16 %v4806
    %v5327 = vunpack.c.l.b16 %v4807
    %v5328 = vunpack.c.l.b16 %v4808
    %v5329 = vunpack.c.l.b16 %v4809
    %v5330 = vunpack.c.l.b16 %v4810
    %v5331 = vunpack.c.l.b16 %v4811
    %v5332 = vunpack.c.l.b16 %v4812
    %v5333 = vunpack.c.l.b16 %v4813
    %v5334 = vunpack.c.l.b16 %v4814
    %v5335 = vunpack.c.l.b16 %v4815
    %v5336 = vunpack.c.l.b16 %v4816
    %v5337 = vunpack.c.l.b16 %v4817
    %v5338 = vunpack.c.l.b16 %v4818
    %v5339 = vunpack.c.l.b16 %v4819
    %v5340 = vunpack.c.l.b16 %v4820
    %v5341 = vunpack.c.l.b16 %v4821
    %v5342 = vunpack.c.l.b16 %v4822
    %v5343 = vunpack.c.l.b16 %v4823
    %v5344 = vunpack.c.l.b16 %v4824
    %v5345 = vunpack.c.l.b16 %v4825
    %v5346 = vunpack.c.l.b16 %v4826
    %v5347 = vunpack.c.l.b16 %v4827
    %v5348 = vunpack.c.l.b16 %v4828
    %v5349 = vunpack.c.l.b16 %v4829
    %v5350 = vunpack.c.l.b16 %v4830
    %v5351 = vunpack.c.l.b16 %v4831
    %v5352 = vunpack.c.l.b16 %v4832
    %v5353 = vunpack.c.l.b16 %v4833
    %v5354 = vunpack.c.l.b16 %v4834
    %v5355 = vunpack.c.l.b16 %v4835
    %v5356 = vunpack.c.l.b16 %v4836
    %v5357 = vunpack.c.l.b16 %v4837
    %v5358 = vunpack.c.l.b16 %v4838
    %v5359 = vunpack.c.l.b16 %v4839
    %v5360 = vunpack.c.l.b16 %v4840
    %v5361 = vunpack.c.l.b16 %v4841
    %v5362 = vunpack.c.l.b16 %v4842
    %v5363 = vunpack.c.l.b16 %v4843
    %v5364 = vunpack.c.l.b16 %v4844
    %v5365 = vunpack.c.l.b16 %v4845
    %v5366 = vunpack.c.l.b16 %v4846
    %v5367 = vunpack.c.l.b16 %v4847
    %v5368 = vunpack.c.l.b16 %v4848
    %v5369 = vunpack.c.l.b16 %v4849
    %v5370 = vunpack.c.l.b16 %v4850
    %v5371 = vunpack.c.l.b16 %v4851
    %v5372 = vunpack.c.l.b16 %v4852
    %v5373 = vunpack.c.l.b16 %v4853
    %v5374 = vunpack.c.l.b16 %v4854
    %v5375 = vunpack.c.l.b16 %v4855
    %v5376 = vunpack.c.l.b16 %v4856
    %v5377 = vunpack.c.l.b16 %v4857
    %v5378 = vunpack.c.l.b16 %v4858
    %v5379 = vunpack.c.l.b16 %v4859
    %v5380 = vunpack.c.l.b16 %v4860
    %v5381 = vunpack.c.l.b16 %v4861
    %v5382 = vunpack.c.l.b16 %v4862
    %v5383 = vunpack.c.l.b16 %v4863
    %v5384 = vunpack.c.l.b16 %v4864
    %v5385 = vunpack.c.l.b16 %v4865
    %v5386 = vunpack.c.l.b16 %v4866
    %v5387 = vunpack.c.l.b16 %v4867
    %v5388 = vunpack.c.l.b16 %v4868
    %v5389 = vunpack.c.l.b16 %v4869
    %v5390 = vunpack.c.l.b16 %v4870
    %v5391 = vunpack.c.l.b16 %v4871
    %v5392 = vunpack.c.l.b16 %v4872
    %v5393 = vunpack.c.l.b16 %v4873
    %v5394 = vunpack.c.l.b16 %v4874
    %v5395 = vunpack.c.l.b16 %v4875
    %v5396 = vunpack.c.l.b16 %v4876
    %v5397 = vunpack.c.l.b16 %v4877
    %v5398 = vunpack.c.l.b16 %v4878
    %v5399 = vunpack.c.l.b16 %v4879
    %v5400 = vunpack.c.l.b16 %v4880
    %v5401 = vunpack.c.l.b16 %v4881
    %v5402 = vunpack.c.l.b16 %v4882
    %v5403 = vunpack.c.l.b16 %v4883
    %v5404 = vunpack.c.l.b16 %v4884
    %v5405 = vunpack.c.l.b16 %v4885
    %v5406 = vunpack.c.l.b16 %v4886
    %v5407 = vunpack.c.l.b16 %v4887
    %v5408 = vunpack.c.l.b16 %v4888
    %v5409 = vunpack.c.l.b16 %v4889
    %v5410 = vunpack.c.l.b16 %v4890
    %v5411 = vunpack.c.l.b16 %v4891
    %v5412 = vunpack.c.l.b16 %v4892
    %v5413 = vunpack.c.l.b16 %v4893
    %v5414 = vunpack.c.l.b16 %v4894
    %v5415 = vunpack.c.l.b16 %v4895
    %v5416 = vunpack.c.l.b16 %v4896
    %v5417 = vunpack.c.l.b16 %v4897
    %v5418 = vunpack.c.l.b16 %v4898
    %v5419 = vunpack.c.l.b16 %v4899
    %v5420 = vunpack.c.l.b16 %v4900
    %v5421 = vunpack.c.l.b16 %v4901
    %v5422 = vunpack.c.l.b16 %v4902
    %v5423 = vunpack.c.l.b16 %v4903
    %v5424 = vunpack.c.l.b16 %v4904
    %v5425 = vunpack.c.l.b16 %v4905
    %v5426 = vunpack.c.l.b16 %v4906
    %v5427 = vunpack.c.l.b16 %v4907
    %v5428 = vunpack.c.l.b16 %v4908
    %v5429 = vunpack.c.l.b16 %v4909
    %v5430 = vunpack.c.l.b16 %v4910
    %v5431 = vunpack.c.l.b16 %v4911
    %v5432 = vunpack.c.l.b16 %v4912
    %v5433 = vunpack.c.l.b16 %v4913
    %v5434 = vunpack.c.l.b16 %v4914
    %v5435 = vunpack.c.l.b16 %v4915
    %v5436 = vunpack.c.l.b16 %v4916
    %v5437 = vunpack.c.l.b16 %v4917
    %v5438 = vunpack.c.l.b16 %v4918
    %v5439 = vunpack.c.l.b16 %v4919
    %v5440 = vunpack.c.l.b16 %v4920
    %v5441 = vunpack.c.l.b16 %v4921
    %v5442 = vunpack.c.l.b16 %v4922
    %v5443 = vunpack.c.l.b16 %v4923
    %v5444 = vunpack.c.l.b16 %v4924
    %v5445 = vunpack.c.l.b16 %v4925
    %v5446 = vunpack.c.l.b16 %v4926
    %v5447 = vunpack.c.l.b16 %v4927
    %v5448 = vunpack.c.l.b16 %v4928
    %v5449 = vunpack.c.l.b16 %v4929
    %v5450 = vunpack.c.l.b16 %v4930
    %v5451 = vunpack.c.l.b16 %v4931
    %v5452 = vunpack.c.l.b16 %v4932
    %v5453 = vunpack.c.l.b16 %v4933
    %v5454 = vunpack.c.l.b16 %v4934
    %v5455 = vunpack.c.l.b16 %v4935
    %v5456 = vunpack.c.l.b16 %v4936
    %v5457 = vunpack.c.l.b16 %v4937
    %v5458 = vunpack.c.l.b16 %v4938
    %v5459 = vunpack.c.l.b16 %v4939
    %v5460 = vunpack.c.l.b16 %v4940
    %v5461 = vunpack.c.l.b16 %v4941
    %v5462 = vunpack.c.l.b16 %v4942
    %v5463 = vunpack.c.l.b16 %v4943
    %v5464 = vunpack.c.l.b16 %v4944
    %v5465 = vunpack.c.l.b16 %v4945
    %v5466 = vunpack.c.l.b16 %v4946
    %v5467 = vunpack.c.l.b16 %v4947
    %v5468 = vunpack.c.l.b16 %v4948
    %v5469 = vunpack.c.l.b16 %v4949
    %v5470 = vunpack.c.l.b16 %v4950
    %v5471 = vunpack.c.l.b16 %v4951
    %v5472 = vunpack.c.l.b16 %v4952
    %v5473 = vunpack.c.l.b16 %v4953
    %v5474 = vunpack.c.l.b16 %v4954
    %v5475 = vunpack.c.l.b16 %v4955
    %v5476 = vunpack.c.l.b16 %v4956
    %v5477 = vunpack.c.l.b16 %v4957
    %v5478 = vunpack.c.l.b16 %v4958
    %v5479 = vunpack.c.l.b16 %v4959
    %v5480 = vunpack.c.l.b16 %v4960
    %v5481 = vunpack.c.l.b16 %v4961
    %v5482 = vunpack.c.l.b16 %v4962
    %v5483 = vunpack.c.l.b16 %v4963
    %v5484 = vunpack.c.l.b16 %v4964
    %v5485 = vunpack.c.l.b16 %v4965
    %v5486 = vunpack.c.l.b16 %v4966
    %v5487 = vunpack.c.l.b16 %v4967
    %v5488 = vunpack.c.l.b16 %v4968
    %v5489 = vunpack.c.l.b16 %v4969
    %v5490 = vunpack.c.l.b16 %v4970
    %v5491 = vunpack.c.l.b16 %v4971
    %v5492 = vunpack.c.l.b16 %v4972
    %v5493 = vunpack.c.l.b16 %v4973
    %v5494 = vunpack.c.l.b16 %v4974
    %v5495 = vunpack.c.l.b16 %v4975
    %v5496 = vunpack.c.l.b16 %v4976
    %v5497 = vunpack.c.l.b16 %v4977
    %v5498 = vunpack.c.l.b16 %v4978
    %v5499 = vunpack.c.l.b16 %v4979
    %v5500 = vunpack.c.l.b16 %v4980
    %v5501 = vunpack.c.l.b16 %v4981
    %v5502 = vunpack.c.l.b16 %v4982
    %v5503 = vunpack.c.l.b16 %v4983
    %v5504 = vunpack.c.l.b16 %v4984
    %v5505 = vunpack.c.l.b16 %v4985
    %v5506 = vunpack.c.l.b16 %v4986
    %v5507 = vunpack.c.l.b16 %v4987
    %v5508 = vunpack.c.l.b16 %v4988
    %v5509 = vunpack.c.l.b16 %v4989
    %v5510 = vunpack.c.l.b16 %v4990
    %v5511 = vunpack.c.l.b16 %v4991
    %v5512 = vunpack.c.l.b16 %v4992
    %v5513 = vunpack.c.l.b16 %v4993
    %v5514 = vunpack.c.l.b16 %v4994
    %v5515 = vunpack.c.l.b16 %v4995
    %v5516 = vunpack.c.l.b16 %v4996
    %v5517 = vunpack.c.l.b16 %v4997
    %v5518 = vunpack.c.l.b16 %v4998
    %v5519 = vunpack.c.l.b16 %v4999
    %v5520 = vunpack.c.l.b16 %v5000
    %v5521 = vunpack.c.l.b16 %v5001
    %v5522 = vunpack.c.l.b16 %v5002
    %v5523 = vunpack.c.l.b16 %v5003
    %v5524 = vunpack.c.l.b16 %v5004
    %v5525 = vunpack.c.l.b16 %v5005
    %v5526 = vunpack.c.l.b16 %v5006
    %v5527 = vunpack.c.l.b16 %v5007
    %v5528 = vunpack.c.l.b16 %v5008
    %v5529 = vunpack.c.l.b16 %v5009
    %v5530 = vunpack.c.l.b16 %v5010
    %v5531 = vunpack.c.l.b16 %v5011
    %v5532 = vunpack.c.l.b16 %v5012
    %v5533 = vunpack.c.l.b16 %v5013
    %v5534 = vunpack.c.l.b16 %v5014
    %v5535 = vunpack.c.l.b16 %v5015
    %v5536 = vunpack.c.l.b16 %v5016
    %v5537 = vunpack.c.l.b16 %v5017
    %v5538 = vunpack.c.l.b16 %v5018
    %v5539 = vunpack.c.l.b16 %v5019
    %v5540 = vunpack.c.l.b16 %v5020
    %v5541 = vunpack.c.l.b16 %v5021
    %v5542 = vunpack.c.l.b16 %v5022
    %v5543 = vunpack.c.l.b16 %v5023
    %v5544 = vunpack.c.l.b16 %v5024
    %v5545 = vunpack.c.l.b16 %v5025
    %v5546 = vunpack.c.l.b16 %v5026
    %v5547 = vunpack.c.l.b16 %v5027
    %v5548 = vunpack.c.l.b16 %v5028
    %v5549 = vunpack.c.l.b16 %v5029
    %v5550 = vunpack.c.l.b16 %v5030
    %v5551 = vunpack.c.l.b16 %v5031
    %v5552 = vunpack.c.l.b16 %v5032
    %v5553 = vunpack.c.l.b16 %v5033
    %v5554 = vunpack.c.l.b16 %v5034
    %v5555 = vunpack.c.l.b16 %v5035
    %v5556 = vunpack.c.l.b16 %v5036
    %v5557 = vunpack.c.l.b16 %v5037
    %v5558 = vunpack.c.l.b16 %v5038
    %v5559 = vunpack.c.l.b16 %v5039
    %v5560 = vunpack.c.l.b16 %v5040
    %v5561 = vunpack.c.l.b16 %v5041
    %v5562 = vunpack.c.l.b16 %v5042
    %v5563 = vunpack.c.l.b16 %v5043
    %v5564 = vunpack.c.l.b16 %v5044
    %v5565 = vunpack.c.l.b16 %v5045
    %v5566 = vunpack.c.l.b16 %v5046
    %v5567 = vunpack.c.l.b16 %v5047
    %v5568 = vunpack.c.l.b16 %v5048
    %v5569 = vunpack.c.l.b16 %v5049
    %v5570 = vpack.c.b16 %v5315, %v5314
    %v5571 = vpack.c.b16 %v5317, %v5316
    %v5572 = vpack.c.b16 %v5319, %v5318
    %v5573 = vpack.c.b16 %v5321, %v5320
    %v5574 = vpack.c.b16 %v5323, %v5322
    %v5575 = vpack.c.b16 %v5325, %v5324
    %v5576 = vpack.c.b16 %v5327, %v5326
    %v5577 = vpack.c.b16 %v5329, %v5328
    %v5578 = vpack.c.b16 %v5331, %v5330
    %v5579 = vpack.c.b16 %v5333, %v5332
    %v5580 = vpack.c.b16 %v5335, %v5334
    %v5581 = vpack.c.b16 %v5337, %v5336
    %v5582 = vpack.c.b16 %v5339, %v5338
    %v5583 = vpack.c.b16 %v5341, %v5340
    %v5584 = vpack.c.b16 %v5343, %v5342
    %v5585 = vpack.c.b16 %v5345, %v5344
    %v5586 = vpack.c.b16 %v5347, %v5346
    %v5587 = vpack.c.b16 %v5349, %v5348
    %v5588 = vpack.c.b16 %v5351, %v5350
    %v5589 = vpack.c.b16 %v5353, %v5352
    %v5590 = vpack.c.b16 %v5355, %v5354
    %v5591 = vpack.c.b16 %v5357, %v5356
    %v5592 = vpack.c.b16 %v5359, %v5358
    %v5593 = vpack.c.b16 %v5361, %v5360
    %v5594 = vpack.c.b16 %v5363, %v5362
    %v5595 = vpack.c.b16 %v5365, %v5364
    %v5596 = vpack.c.b16 %v5367, %v5366
    %v5597 = vpack.c.b16 %v5369, %v5368
    %v5598 = vpack.c.b16 %v5371, %v5370
    %v5599 = vpack.c.b16 %v5373, %v5372
    %v5600 = vpack.c.b16 %v5375, %v5374
    %v5601 = vpack.c.b16 %v5377, %v5376
    %v5602 = vpack.c.b16 %v5379, %v5378
    %v5603 = vpack.c.b16 %v5381, %v5380
    %v5604 = vpack.c.b16 %v5383, %v5382
    %v5605 = vpack.c.b16 %v5385, %v5384
    %v5606 = vpack.c.b16 %v5387, %v5386
    %v5607 = vpack.c.b16 %v5389, %v5388
    %v5608 = vpack.c.b16 %v5391, %v5390
    %v5609 = vpack.c.b16 %v5393, %v5392
    %v5610 = vpack.c.b16 %v5395, %v5394
    %v5611 = vpack.c.b16 %v5397, %v5396
    %v5612 = vpack.c.b16 %v5399, %v5398
    %v5613 = vpack.c.b16 %v5401, %v5400
    %v5614 = vpack.c.b16 %v5403, %v5402
    %v5615 = vpack.c.b16 %v5405, %v5404
    %v5616 = vpack.c.b16 %v5407, %v5406
    %v5617 = vpack.c.b16 %v5409, %v5408
    %v5618 = vpack.c.b16 %v5411, %v5410
    %v5619 = vpack.c.b16 %v5413, %v5412
    %v5620 = vpack.c.b16 %v5415, %v5414
    %v5621 = vpack.c.b16 %v5417, %v5416
    %v5622 = vpack.c.b16 %v5419, %v5418
    %v5623 = vpack.c.b16 %v5421, %v5420
    %v5624 = vpack.c.b16 %v5423, %v5422
    %v5625 = vpack.c.b16 %v5425, %v5424
    %v5626 = vpack.c.b16 %v5427, %v5426
    %v5627 = vpack.c.b16 %v5429, %v5428
    %v5628 = vpack.c.b16 %v5431, %v5430
    %v5629 = vpack.c.b16 %v5433, %v5432
    %v5630 = vpack.c.b16 %v5435, %v5434
    %v5631 = vpack.c.b16 %v5437, %v5436
    %v5632 = vpack.c.b16 %v5439, %v5438
    %v5633 = vpack.c.b16 %v5441, %v5440
    %v5634 = vpack.c.b16 %v5443, %v5442
    %v5635 = vpack.c.b16 %v5445, %v5444
    %v5636 = vpack.c.b16 %v5447, %v5446
    %v5637 = vpack.c.b16 %v5449, %v5448
    %v5638 = vpack.c.b16 %v5451, %v5450
    %v5639 = vpack.c.b16 %v5453, %v5452
    %v5640 = vpack.c.b16 %v5455, %v5454
    %v5641 = vpack.c.b16 %v5457, %v5456
    %v5642 = vpack.c.b16 %v5459, %v5458
    %v5643 = vpack.c.b16 %v5461, %v5460
    %v5644 = vpack.c.b16 %v5463, %v5462
    %v5645 = vpack.c.b16 %v5465, %v5464
    %v5646 = vpack.c.b16 %v5467, %v5466
    %v5647 = vpack.c.b16 %v5469, %v5468
    %v5648 = vpack.c.b16 %v5471, %v5470
    %v5649 = vpack.c.b16 %v5473, %v5472
    %v5650 = vpack.c.b16 %v5475, %v5474
    %v5651 = vpack.c.b16 %v5477, %v5476
    %v5652 = vpack.c.b16 %v5479, %v5478
    %v5653 = vpack.c.b16 %v5481, %v5480
    %v5654 = vpack.c.b16 %v5483, %v5482
    %v5655 = vpack.c.b16 %v5485, %v5484
    %v5656 = vpack.c.b16 %v5487, %v5486
    %v5657 = vpack.c.b16 %v5489, %v5488
    %v5658 = vpack.c.b16 %v5491, %v5490
    %v5659 = vpack.c.b16 %v5493, %v5492
    %v5660 = vpack.c.b16 %v5495, %v5494
    %v5661 = vpack.c.b16 %v5497, %v5496
    %v5662 = vpack.c.b16 %v5499, %v5498
    %v5663 = vpack.c.b16 %v5501, %v5500
    %v5664 = vpack.c.b16 %v5503, %v5502
    %v5665 = vpack.c.b16 %v5505, %v5504
    %v5666 = vpack.c.b16 %v5507, %v5506
    %v5667 = vpack.c.b16 %v5509, %v5508
    %v5668 = vpack.c.b16 %v5511, %v5510
    %v5669 = vpack.c.b16 %v5513, %v5512
    %v5670 = vpack.c.b16 %v5515, %v5514
    %v5671 = vpack.c.b16 %v5517, %v5516
    %v5672 = vpack.c.b16 %v5519, %v5518
    %v5673 = vpack.c.b16 %v5521, %v5520
    %v5674 = vpack.c.b16 %v5523, %v5522
    %v5675 = vpack.c.b16 %v5525, %v5524
    %v5676 = vpack.c.b16 %v5527, %v5526
    %v5677 = vpack.c.b16 %v5529, %v5528
    %v5678 = vpack.c.b16 %v5531, %v5530
    %v5679 = vpack.c.b16 %v5533, %v5532
    %v5680 = vpack.c.b16 %v5535, %v5534
    %v5681 = vpack.c.b16 %v5537, %v5536
    %v5682 = vpack.c.b16 %v5539, %v5538
    %v5683 = vpack.c.b16 %v5541, %v5540
    %v5684 = vpack.c.b16 %v5543, %v5542
    %v5685 = vpack.c.b16 %v5545, %v5544
    %v5686 = vpack.c.b16 %v5547, %v5546
    %v5687 = vpack.c.b16 %v5549, %v5548
    %v5688 = vpack.c.b16 %v5551, %v5550
    %v5689 = vpack.c.b16 %v5553, %v5552
    %v5690 = vpack.c.b16 %v5555, %v5554
    %v5691 = vpack.c.b16 %v5557, %v5556
    %v5692 = vpack.c.b16 %v5559, %v5558
    %v5693 = vpack.c.b16 %v5561, %v5560
    %v5694 = vpack.c.b16 %v5563, %v5562
    %v5695 = vpack.c.b16 %v5565, %v5564
    %v5696 = vpack.c.b16 %v5567, %v5566
    %v5697 = vpack.c.b16 %v5569, %v5568
    %5826 = vmatprep.subr.bf16.mxu0 0
    %5827 = vmatpush1.bf16.msra.mxu0 %v5570
    %5828 = vmatprep.subr.bf16.mxu0 0
    %5829 = vmatpush1.bf16.msra.mxu0 %v5571
    %5830 = vmatprep.subr.bf16.mxu0 0
    %5831 = vmatpush1.bf16.msra.mxu0 %v5572
    %5832 = vmatprep.subr.bf16.mxu0 0
    %5833 = vmatpush1.bf16.msra.mxu0 %v5573
    %5834 = vmatprep.subr.bf16.mxu0 0
    %5835 = vmatpush1.bf16.msra.mxu0 %v5574
    %5836 = vmatprep.subr.bf16.mxu0 0
    %5837 = vmatpush1.bf16.msra.mxu0 %v5575
    %5838 = vmatprep.subr.bf16.mxu0 0
    %5839 = vmatpush1.bf16.msra.mxu0 %v5576
    %5840 = vmatprep.subr.bf16.mxu0 0
    %5841 = vmatpush1.bf16.msra.mxu0 %v5577
    %5842 = vmatprep.subr.bf16.mxu0 0
    %5843 = vmatpush1.bf16.msra.mxu0 %v5578
    %5844 = vmatprep.subr.bf16.mxu0 0
    %5845 = vmatpush1.bf16.msra.mxu0 %v5579
    %5846 = vmatprep.subr.bf16.mxu0 0
    %5847 = vmatpush1.bf16.msra.mxu0 %v5580
    %5848 = vmatprep.subr.bf16.mxu0 0
    %5849 = vmatpush1.bf16.msra.mxu0 %v5581
    %5850 = vmatprep.subr.bf16.mxu0 0
    %5851 = vmatpush1.bf16.msra.mxu0 %v5582
    %5852 = vmatprep.subr.bf16.mxu0 0
    %5853 = vmatpush1.bf16.msra.mxu0 %v5583
    %5854 = vmatprep.subr.bf16.mxu0 0
    %5855 = vmatpush1.bf16.msra.mxu0 %v5584
    %5856 = vmatprep.subr.bf16.mxu0 0
    %5857 = vmatpush1.bf16.msra.mxu0 %v5585
    %5858 = vmatprep.mubr.bf16.mxu0 %v4778
    %5859 = vmatmul.mubr.bf16.gmra.mrb[0].mxu0 %v4777
    %v5860 = vpop.f32.mrb[0].mxu0
    %v5861 = vadd.f32 %v5056, %v5860
    %v5862 = vpop.f32.mrb[0].mxu0
    %v5863 = vpop.f32.mrb[0].mxu0
    %v5864 = vadd.f32 %v5056, %v5863
    %v5865 = vpop.f32.mrb[0].mxu0
    %5866 = vdwg.mxu0
    %5867 = vmatprep.subr.bf16.mxu0 0
    %5868 = vmatpush1.bf16.msra.mxu0 %v5586
    %5869 = vmatprep.subr.bf16.mxu0 0
    %5870 = vmatpush1.bf16.msra.mxu0 %v5587
    %5871 = vmatprep.subr.bf16.mxu0 0
    %5872 = vmatpush1.bf16.msra.mxu0 %v5588
    %5873 = vmatprep.subr.bf16.mxu0 0
    %5874 = vmatpush1.bf16.msra.mxu0 %v5589
    %5875 = vmatprep.subr.bf16.mxu0 0
    %5876 = vmatpush1.bf16.msra.mxu0 %v5590
    %5877 = vmatprep.subr.bf16.mxu0 0
    %5878 = vmatpush1.bf16.msra.mxu0 %v5591
    %5879 = vmatprep.subr.bf16.mxu0 0
    %5880 = vmatpush1.bf16.msra.mxu0 %v5592
    %5881 = vmatprep.subr.bf16.mxu0 0
    %5882 = vmatpush1.bf16.msra.mxu0 %v5593
    %5883 = vmatprep.subr.bf16.mxu0 0
    %5884 = vmatpush1.bf16.msra.mxu0 %v5594
    %5885 = vmatprep.subr.bf16.mxu0 0
    %5886 = vmatpush1.bf16.msra.mxu0 %v5595
    %5887 = vmatprep.subr.bf16.mxu0 0
    %5888 = vmatpush1.bf16.msra.mxu0 %v5596
    %5889 = vmatprep.subr.bf16.mxu0 0
    %5890 = vmatpush1.bf16.msra.mxu0 %v5597
    %5891 = vmatprep.subr.bf16.mxu0 0
    %5892 = vmatpush1.bf16.msra.mxu0 %v5598
    %5893 = vmatprep.subr.bf16.mxu0 0
    %5894 = vmatpush1.bf16.msra.mxu0 %v5599
    %5895 = vmatprep.subr.bf16.mxu0 0
    %5896 = vmatpush1.bf16.msra.mxu0 %v5600
    %5897 = vmatprep.subr.bf16.mxu0 0
    %5898 = vmatpush1.bf16.msra.mxu0 %v5601
    %5899 = vmatprep.mubr.bf16.mxu0 %v4780
    %5900 = vmatmul.mubr.bf16.gmra.mrb[0].mxu0 %v4779
    %v5901 = vpop.f32.mrb[0].mxu0
    %v5902 = vadd.f32 %v5861, %v5901
    %v5903 = vpop.f32.mrb[0].mxu0
    %v5904 = vpop.f32.mrb[0].mxu0
    %v5905 = vadd.f32 %v5864, %v5904
    %v5906 = vpop.f32.mrb[0].mxu0
    %5907 = vdwg.mxu0
    %5908 = vmatprep.subr.bf16.mxu0 0
    %5909 = vmatpush1.bf16.msra.mxu0 %v5602
    %5910 = vmatprep.subr.bf16.mxu0 0
    %5911 = vmatpush1.bf16.msra.mxu0 %v5603
    %5912 = vmatprep.subr.bf16.mxu0 0
    %5913 = vmatpush1.bf16.msra.mxu0 %v5604
    %5914 = vmatprep.subr.bf16.mxu0 0
    %5915 = vmatpush1.bf16.msra.mxu0 %v5605
    %5916 = vmatprep.subr.bf16.mxu0 0
    %5917 = vmatpush1.bf16.msra.mxu0 %v5606
    %5918 = vmatprep.subr.bf16.mxu0 0
    %5919 = vmatpush1.bf16.msra.mxu0 %v5607
    %5920 = vmatprep.subr.bf16.mxu0 0
    %5921 = vmatpush1.bf16.msra.mxu0 %v5608
    %5922 = vmatprep.subr.bf16.mxu0 0
    %5923 = vmatpush1.bf16.msra.mxu0 %v5609
    %5924 = vmatprep.subr.bf16.mxu0 0
    %5925 = vmatpush1.bf16.msra.mxu0 %v5610
    %5926 = vmatprep.subr.bf16.mxu0 0
    %5927 = vmatpush1.bf16.msra.mxu0 %v5611
    %5928 = vmatprep.subr.bf16.mxu0 0
    %5929 = vmatpush1.bf16.msra.mxu0 %v5612
    %5930 = vmatprep.subr.bf16.mxu0 0
    %5931 = vmatpush1.bf16.msra.mxu0 %v5613
    %5932 = vmatprep.subr.bf16.mxu0 0
    %5933 = vmatpush1.bf16.msra.mxu0 %v5614
    %5934 = vmatprep.subr.bf16.mxu0 0
    %5935 = vmatpush1.bf16.msra.mxu0 %v5615
    %5936 = vmatprep.subr.bf16.mxu0 0
    %5937 = vmatpush1.bf16.msra.mxu0 %v5616
    %5938 = vmatprep.subr.bf16.mxu0 0
    %5939 = vmatpush1.bf16.msra.mxu0 %v5617
    %5940 = vmatprep.mubr.bf16.mxu0 %v4782
    %5941 = vmatmul.mubr.bf16.gmra.mrb[0].mxu0 %v4781
    %v5942 = vpop.f32.mrb[0].mxu0
    %v5943 = vadd.f32 %v5902, %v5942
    %v5944 = vpop.f32.mrb[0].mxu0
    %v5945 = vpop.f32.mrb[0].mxu0
    %v5946 = vadd.f32 %v5905, %v5945
    %v5947 = vpop.f32.mrb[0].mxu0
    %5948 = vdwg.mxu0
    %5949 = vmatprep.subr.bf16.mxu0 0
    %5950 = vmatpush1.bf16.msra.mxu0 %v5618
    %5951 = vmatprep.subr.bf16.mxu0 0
    %5952 = vmatpush1.bf16.msra.mxu0 %v5619
    %5953 = vmatprep.subr.bf16.mxu0 0
    %5954 = vmatpush1.bf16.msra.mxu0 %v5620
    %5955 = vmatprep.subr.bf16.mxu0 0
    %5956 = vmatpush1.bf16.msra.mxu0 %v5621
    %5957 = vmatprep.subr.bf16.mxu0 0
    %5958 = vmatpush1.bf16.msra.mxu0 %v5622
    %5959 = vmatprep.subr.bf16.mxu0 0
    %5960 = vmatpush1.bf16.msra.mxu0 %v5623
    %5961 = vmatprep.subr.bf16.mxu0 0
    %5962 = vmatpush1.bf16.msra.mxu0 %v5624
    %5963 = vmatprep.subr.bf16.mxu0 0
    %5964 = vmatpush1.bf16.msra.mxu0 %v5625
    %5965 = vmatprep.subr.bf16.mxu0 0
    %5966 = vmatpush1.bf16.msra.mxu0 %v5626
    %5967 = vmatprep.subr.bf16.mxu0 0
    %5968 = vmatpush1.bf16.msra.mxu0 %v5627
    %5969 = vmatprep.subr.bf16.mxu0 0
    %5970 = vmatpush1.bf16.msra.mxu0 %v5628
    %5971 = vmatprep.subr.bf16.mxu0 0
    %5972 = vmatpush1.bf16.msra.mxu0 %v5629
    %5973 = vmatprep.subr.bf16.mxu0 0
    %5974 = vmatpush1.bf16.msra.mxu0 %v5630
    %5975 = vmatprep.subr.bf16.mxu0 0
    %5976 = vmatpush1.bf16.msra.mxu0 %v5631
    %5977 = vmatprep.subr.bf16.mxu0 0
    %5978 = vmatpush1.bf16.msra.mxu0 %v5632
    %5979 = vmatprep.subr.bf16.mxu0 0
    %5980 = vmatpush1.bf16.msra.mxu0 %v5633
    %5981 = vmatprep.mubr.bf16.mxu0 %v4784
    %5982 = vmatmul.mubr.bf16.gmra.mrb[0].mxu0 %v4783
    %v5983 = vpop.f32.mrb[0].mxu0
    %v5984 = vadd.f32 %v5943, %v5983
    %v5985 = vpop.f32.mrb[0].mxu0
    %v5986 = vpop.f32.mrb[0].mxu0
    %v5987 = vadd.f32 %v5946, %v5986
    %v5988 = vpop.f32.mrb[0].mxu0
    %5989 = vdwg.mxu0
    %5990 = vmatprep.subr.bf16.mxu0 0
    %5991 = vmatpush1.bf16.msra.mxu0 %v5634
    %5992 = vmatprep.subr.bf16.mxu0 0
    %5993 = vmatpush1.bf16.msra.mxu0 %v5635
    %5994 = vmatprep.subr.bf16.mxu0 0
    %5995 = vmatpush1.bf16.msra.mxu0 %v5636
    %5996 = vmatprep.subr.bf16.mxu0 0
    %5997 = vmatpush1.bf16.msra.mxu0 %v5637
    %5998 = vmatprep.subr.bf16.mxu0 0
    %5999 = vmatpush1.bf16.msra.mxu0 %v5638
    %6000 = vmatprep.subr.bf16.mxu0 0
    %6001 = vmatpush1.bf16.msra.mxu0 %v5639
    %6002 = vmatprep.subr.bf16.mxu0 0
    %6003 = vmatpush1.bf16.msra.mxu0 %v5640
    %6004 = vmatprep.subr.bf16.mxu0 0
    %6005 = vmatpush1.bf16.msra.mxu0 %v5641
    %6006 = vmatprep.subr.bf16.mxu0 0
    %6007 = vmatpush1.bf16.msra.mxu0 %v5642
    %6008 = vmatprep.subr.bf16.mxu0 0
    %6009 = vmatpush1.bf16.msra.mxu0 %v5643
    %6010 = vmatprep.subr.bf16.mxu0 0
    %6011 = vmatpush1.bf16.msra.mxu0 %v5644
    %6012 = vmatprep.subr.bf16.mxu0 0
    %6013 = vmatpush1.bf16.msra.mxu0 %v5645
    %6014 = vmatprep.subr.bf16.mxu0 0
    %6015 = vmatpush1.bf16.msra.mxu0 %v5646
    %6016 = vmatprep.subr.bf16.mxu0 0
    %6017 = vmatpush1.bf16.msra.mxu0 %v5647
    %6018 = vmatprep.subr.bf16.mxu0 0
    %6019 = vmatpush1.bf16.msra.mxu0 %v5648
    %6020 = vmatprep.subr.bf16.mxu0 0
    %6021 = vmatpush1.bf16.msra.mxu0 %v5649
    %6022 = vmatprep.mubr.bf16.mxu0 %v4786
    %6023 = vmatmul.mubr.bf16.gmra.mrb[0].mxu0 %v4785
    %v6024 = vpop.f32.mrb[0].mxu0
    %v6025 = vadd.f32 %v5984, %v6024
    %v6026 = vpop.f32.mrb[0].mxu0
    %v6027 = vpop.f32.mrb[0].mxu0
    %v6028 = vadd.f32 %v5987, %v6027
    %v6029 = vpop.f32.mrb[0].mxu0
    %6030 = vdwg.mxu0
    %6031 = vmatprep.subr.bf16.mxu0 0
    %6032 = vmatpush1.bf16.msra.mxu0 %v5650
    %6033 = vmatprep.subr.bf16.mxu0 0
    %6034 = vmatpush1.bf16.msra.mxu0 %v5651
    %6035 = vmatprep.subr.bf16.mxu0 0
    %6036 = vmatpush1.bf16.msra.mxu0 %v5652
    %6037 = vmatprep.subr.bf16.mxu0 0
    %6038 = vmatpush1.bf16.msra.mxu0 %v5653
    %6039 = vmatprep.subr.bf16.mxu0 0
    %6040 = vmatpush1.bf16.msra.mxu0 %v5654
    %6041 = vmatprep.subr.bf16.mxu0 0
    %6042 = vmatpush1.bf16.msra.mxu0 %v5655
    %6043 = vmatprep.subr.bf16.mxu0 0
    %6044 = vmatpush1.bf16.msra.mxu0 %v5656
    %6045 = vmatprep.subr.bf16.mxu0 0
    %6046 = vmatpush1.bf16.msra.mxu0 %v5657
    %6047 = vmatprep.subr.bf16.mxu0 0
    %6048 = vmatpush1.bf16.msra.mxu0 %v5658
    %6049 = vmatprep.subr.bf16.mxu0 0
    %6050 = vmatpush1.bf16.msra.mxu0 %v5659
    %6051 = vmatprep.subr.bf16.mxu0 0
    %6052 = vmatpush1.bf16.msra.mxu0 %v5660
    %6053 = vmatprep.subr.bf16.mxu0 0
    %6054 = vmatpush1.bf16.msra.mxu0 %v5661
    %6055 = vmatprep.subr.bf16.mxu0 0
    %6056 = vmatpush1.bf16.msra.mxu0 %v5662
    %6057 = vmatprep.subr.bf16.mxu0 0
    %6058 = vmatpush1.bf16.msra.mxu0 %v5663
    %6059 = vmatprep.subr.bf16.mxu0 0
    %6060 = vmatpush1.bf16.msra.mxu0 %v5664
    %6061 = vmatprep.subr.bf16.mxu0 0
    %6062 = vmatpush1.bf16.msra.mxu0 %v5665
    %6063 = vmatprep.mubr.bf16.mxu0 %v4788
    %6064 = vmatmul.mubr.bf16.gmra.mrb[0].mxu0 %v4787
    %v6065 = vpop.f32.mrb[0].mxu0
    %v6066 = vadd.f32 %v6025, %v6065
    %v6067 = vpop.f32.mrb[0].mxu0
    %v6068 = vpop.f32.mrb[0].mxu0
    %v6069 = vadd.f32 %v6028, %v6068
    %v6070 = vpop.f32.mrb[0].mxu0
    %6071 = vdwg.mxu0
    %6072 = vmatprep.subr.bf16.mxu0 0
    %6073 = vmatpush1.bf16.msra.mxu0 %v5666
    %6074 = vmatprep.subr.bf16.mxu0 0
    %6075 = vmatpush1.bf16.msra.mxu0 %v5667
    %6076 = vmatprep.subr.bf16.mxu0 0
    %6077 = vmatpush1.bf16.msra.mxu0 %v5668
    %6078 = vmatprep.subr.bf16.mxu0 0
    %6079 = vmatpush1.bf16.msra.mxu0 %v5669
    %6080 = vmatprep.subr.bf16.mxu0 0
    %6081 = vmatpush1.bf16.msra.mxu0 %v5670
    %6082 = vmatprep.subr.bf16.mxu0 0
    %6083 = vmatpush1.bf16.msra.mxu0 %v5671
    %6084 = vmatprep.subr.bf16.mxu0 0
    %6085 = vmatpush1.bf16.msra.mxu0 %v5672
    %6086 = vmatprep.subr.bf16.mxu0 0
    %6087 = vmatpush1.bf16.msra.mxu0 %v5673
    %6088 = vmatprep.subr.bf16.mxu0 0
    %6089 = vmatpush1.bf16.msra.mxu0 %v5674
    %6090 = vmatprep.subr.bf16.mxu0 0
    %6091 = vmatpush1.bf16.msra.mxu0 %v5675
    %6092 = vmatprep.subr.bf16.mxu0 0
    %6093 = vmatpush1.bf16.msra.mxu0 %v5676
    %6094 = vmatprep.subr.bf16.mxu0 0
    %6095 = vmatpush1.bf16.msra.mxu0 %v5677
    %6096 = vmatprep.subr.bf16.mxu0 0
    %6097 = vmatpush1.bf16.msra.mxu0 %v5678
    %6098 = vmatprep.subr.bf16.mxu0 0
    %6099 = vmatpush1.bf16.msra.mxu0 %v5679
    %6100 = vmatprep.subr.bf16.mxu0 0
    %6101 = vmatpush1.bf16.msra.mxu0 %v5680
    %6102 = vmatprep.subr.bf16.mxu0 0
    %6103 = vmatpush1.bf16.msra.mxu0 %v5681
    %6104 = vmatprep.mubr.bf16.mxu0 %v4790
    %6105 = vmatmul.mubr.bf16.gmra.mrb[0].mxu0 %v4789
    %v6106 = vpop.f32.mrb[0].mxu0
    %v6107 = vadd.f32 %v6066, %v6106
    %v6108 = vpop.f32.mrb[0].mxu0
    %v6109 = vpop.f32.mrb[0].mxu0
    %v6110 = vadd.f32 %v6069, %v6109
    %v6111 = vpop.f32.mrb[0].mxu0
    %6112 = vdwg.mxu0
    %6113 = vmatprep.subr.bf16.mxu0 0
    %6114 = vmatpush1.bf16.msra.mxu0 %v5682
    %6115 = vmatprep.subr.bf16.mxu0 0
    %6116 = vmatpush1.bf16.msra.mxu0 %v5683
    %6117 = vmatprep.subr.bf16.mxu0 0
    %6118 = vmatpush1.bf16.msra.mxu0 %v5684
    %6119 = vmatprep.subr.bf16.mxu0 0
    %6120 = vmatpush1.bf16.msra.mxu0 %v5685
    %6121 = vmatprep.subr.bf16.mxu0 0
    %6122 = vmatpush1.bf16.msra.mxu0 %v5686
    %6123 = vmatprep.subr.bf16.mxu0 0
    %6124 = vmatpush1.bf16.msra.mxu0 %v5687
    %6125 = vmatprep.subr.bf16.mxu0 0
    %6126 = vmatpush1.bf16.msra.mxu0 %v5688
    %6127 = vmatprep.subr.bf16.mxu0 0
    %6128 = vmatpush1.bf16.msra.mxu0 %v5689
    %6129 = vmatprep.subr.bf16.mxu0 0
    %6130 = vmatpush1.bf16.msra.mxu0 %v5690
    %6131 = vmatprep.subr.bf16.mxu0 0
    %6132 = vmatpush1.bf16.msra.mxu0 %v5691
    %6133 = vmatprep.subr.bf16.mxu0 0
    %6134 = vmatpush1.bf16.msra.mxu0 %v5692
    %6135 = vmatprep.subr.bf16.mxu0 0
    %6136 = vmatpush1.bf16.msra.mxu0 %v5693
    %6137 = vmatprep.subr.bf16.mxu0 0
    %6138 = vmatpush1.bf16.msra.mxu0 %v5694
    %6139 = vmatprep.subr.bf16.mxu0 0
    %6140 = vmatpush1.bf16.msra.mxu0 %v5695
    %6141 = vmatprep.subr.bf16.mxu0 0
    %6142 = vmatpush1.bf16.msra.mxu0 %v5696
    %6143 = vmatprep.subr.bf16.mxu0 0
    %6144 = vmatpush1.bf16.msra.mxu0 %v5697
    %6145 = vmatprep.mubr.bf16.mxu0 %v4792
    %6146 = vmatmul.mubr.bf16.gmra.mrb[0].mxu0 %v4791
    %v6147 = vpop.f32.mrb[0].mxu0
    %v6148 = vadd.f32 %v6107, %v6147
    %v6149 = vpop.f32.mrb[0].mxu0
    %v6150 = vpop.f32.mrb[0].mxu0
    %v6151 = vadd.f32 %v6110, %v6150
    %v6152 = vpop.f32.mrb[0].mxu0
    %6153 = vdwg.mxu0
    %v6154 = vadd.f32 %v3544, %v6148
    %v6155 = vadd.f32 %v3545, %v6151
    %s6156 = scalar_lea.vmem [#allocation24], 1
    %v6157 = vld [vmem:[%s6156] sm:$0x1]
    %s6158 = scalar_lea.vmem [#allocation26], 1
    %v6159 = vld [vmem:[%s6158] sm:$0x1]
    %6160 = vadd.xlane.f32.xlu0 %v6154
    %v6161 = vpop.xlane.xlu0 %6160
    %6162 = vadd.xlane.f32.xlu0 %v6155
    %v6163 = vpop.xlane.xlu0 %6162
    %v6164 = vmul.f32 %v6161, 0.0078125
    %v6165 = vmul.f32 %v6163, 0.0078125
    %v6166 = vsub.f32 %v6154, %v6164
    %v6167 = vsub.f32 %v6155, %v6165
    %v6168 = vmul.f32 %v6166, %v6166
    %v6169 = vmul.f32 %v6167, %v6167
    %6170 = vadd.xlane.f32.xlu0 %v6168
    %v6171 = vpop.xlane.xlu0 %6170
    %6172 = vadd.xlane.f32.xlu0 %v6169
    %v6173 = vpop.xlane.xlu0 %6172
    %v6174 = vmul.f32 %v6171, 0.0078125
    %v6175 = vmul.f32 %v6173, 0.0078125
    %v6176 = vadd.f32 %v6174, 1e-05
    %v6177 = vadd.f32 %v6175, 1e-05
    %v6178 = vrsqrt.pop %v6176
    %v6179 = vrsqrt.pop %v6177
    %v6180 = vmul.f32 %v6166, %v6178
    %v6181 = vmul.f32 %v6167, %v6179
    %v6183 = vlaneseq
    %v6184 = vshrl.u32 %v6183, 7
    %v6185 = vsub.s32 0, %v6184
    %v6186 = vrot.slane %v6157, %v6185
    %v6188 = vmul.f32 %v6180, %v6186
    %v6189 = vmul.f32 %v6181, %v6186
    %v6191 = vlaneseq
    %v6192 = vshrl.u32 %v6191, 7
    %v6193 = vsub.s32 0, %v6192
    %v6194 = vrot.slane %v6159, %v6193
    %v6196 = vadd.f32 %v6188, %v6194
    %v6197 = vadd.f32 %v6189, %v6194
    %v6198 = vld [vmem:[#allocation27] sm:$0x1]
    %v6200 = vlaneseq
    %v6201 = vshrl.u32 %v6200, 7
    %v6202 = vsub.s32 0, %v6201
    %v6203 = vrot.slane %v6198, %v6202
    %v6205 = vmul.f32 %v6196, %v6203
    %v6206 = vmul.f32 %v6197, %v6203
    %6207 = vadd.xlane.f32.xlu0 %v6205
    %v6208 = vpop.xlane.xlu0 %6207
    %6209 = vadd.xlane.f32.xlu0 %v6206
    %v6210 = vpop.xlane.xlu0 %6209
    %v6211 = vld [vmem:[#allocation2] sm:$0x1]
    %v6213 = vlaneseq
    %v6214 = vshrl.u32 %v6213, 7
    %v6215 = vsub.s32 0, %v6214
    %v6216 = vrot.slane %v6211, %v6215
    %v6218 = vadd.f32 %v6208, %v6216
    %v6219 = vadd.f32 %v6210, %v6216
    %6222 = vset.pattern.permute.xlu0 0
    %6223 = vperm.xlu0 %6222, %v6218
    %v6224 = vpop.permute.xlu0 %6223
    %6225 = vset.pattern.permute.xlu0 0
    %6226 = vperm.xlu0 %6225, %v6219
    %v6227 = vpop.permute.xlu0 %6226
    %v6228 = vlaneseq
    %v6229 = vand.u32 %v6228, 127
    %v6230 = vlaneseq
    %v6231 = vshrl.u32 %v6230, 7
    %v6232 = vsub.s32 %v6229, %v6231
    %v6233 = vrot.slane %v6224, %v6232
    %v6234 = vadd.s32 %v6229, 4294967288
    %v6235 = vlaneseq
    %v6236 = vshrl.u32 %v6235, 7
    %v6237 = vsub.s32 %v6234, %v6236
    %v6238 = vrot.slane %v6227, %v6237
    %vm6239 = vcmask 130112
    %v6240 = vsel %vm6239, %v6238, %v6233
    %vm6242 = vcmask 122880
    %6243 = vst.msk [vmem:[#allocation29] sm:$0x1] %vm6242, %v6240
    // Predicated region
    $region134: #{tpu_custom_call.1} parent=1 // pred_check
      _
    $region135: #{tpu_custom_call.1} parent=1 // pred_check_branch
      %6245 = sbr.rel (0) target = $region137
    $region136: #{tpu_custom_call.1} parent=1 // pred_region
      %s6247 = ssub.s32 16, 16
      %6248 = vsyncadd [#allocation5], %s6247
      %s6250 = sshll.u32 [#allocation29], 4
      %s6251 = int_to_ptr.vmem [resolvable:$true] %s6250
      %6253 = dma.vmem_to_hbm [thread:$0]  %s6251, 16, %s17, [#allocation5]
    $region137: #{tpu_custom_call.1} parent=1 // pred_fallthru
      _
    // Predicated region
    $region138: #{tpu_custom_call.1} parent=1 // pred_check
      _
    $region139: #{tpu_custom_call.1} parent=1 // pred_check_branch
      %6255 = sbr.rel (0) target = $region141
    $region140: #{tpu_custom_call.1} parent=1 // pred_region
      %6256 = dma.done [#allocation5], 16
    $region141: #{tpu_custom_call.1} parent=1 // pred_fallthru
      _
    %6257 = vsyncpa [#allocation4], 1
    %6258 = vsyncpa [#allocation7], 1
    %6259 = vsyncpa [#allocation10], 1
    %6260 = vsyncpa [#allocation13], 1
    %6261 = vsyncpa [#allocation16], 1
    %6262 = vsyncpa [#allocation19], 1
    %6263 = vsyncpa [#allocation22], 1
    %6264 = vsyncpa [#allocation25], 1
    %6265 = vsyncpa [#allocation28], 1
    %6266 = vsyncpa [#allocation5], 1

</llo_original>
